<compile_context>
chip_gen: v7x
topology: tpu7x:2x2x1
jax: 0.10.0
libtpu: 0.0.40
codegen_flags: <defaults>
</compile_context>

<pallas_src>
import jax
import jax.numpy as jnp
from jax import lax
from jax.experimental import pallas as pl
from jax.experimental.pallas import tpu as pltpu

TB = 8            # samples per grid step (== sublane tile -> (8,128) output block)
ROWS = 32         # per-sample row pitch inside a block (input height)
BR = TB * ROWS    # 256 input rows per block


# ------------------------------ fused kernel --------------------------------

def _lenet_kernel(x_ref, r1_ref, b1_ref, p1c_ref, r2_ref, b2_ref, p2c_ref,
                  f1s_ref, a1_ref, fb1_ref, w2_ref, fb2_ref, w3_ref, fb3_ref,
                  o_ref):
    f32 = jnp.float32
    x = x_ref[...]                                                   # (256, 32)

    # conv1 (1->6, 5x5, valid) + ReLU: 5 banded matmuls, 8 samples stacked in M.
    h = jnp.dot(x[0:252, :], r1_ref[0], preferred_element_type=f32)
    for ky in range(1, 5):
        h = h + jnp.dot(x[ky:ky + 252, :], r1_ref[ky],
                        preferred_element_type=f32)                  # (252, 168)
    h = jnp.maximum(h + b1_ref[...], 0.0)

    # pool1 (2x2/2): row pairs -> offset-1 slice max; col pairs -> max + selector.
    h = jnp.maximum(h[0:251, :], h[1:252, :])                        # (251, 168)
    h = jnp.maximum(h[:, 0:167], h[:, 1:168])                        # (251, 167)
    p1 = jnp.dot(h, p1c_ref[...], preferred_element_type=f32)        # (251,  84)

    # conv2 (6->16, 5x5, valid) + ReLU: pooled row r+dy sits at offset 2*(r+dy).
    h2 = jnp.dot(p1[0:243, :], r2_ref[0], preferred_element_type=f32)
    for dy in range(1, 5):
        h2 = h2 + jnp.dot(p1[2 * dy:2 * dy + 243, :], r2_ref[dy],
                          preferred_element_type=f32)                # (243, 160)
    h2 = jnp.maximum(h2 + b2_ref[...], 0.0)

    # pool2: conv2 rows 2p / 2p+1 sit at offsets 4p / 4p+2.
    h2 = jnp.maximum(h2[0:241, :], h2[2:243, :])                     # (241, 160)
    h2 = jnp.maximum(h2[:, 0:159], h2[:, 1:160])                     # (241, 159)
    p2 = jnp.dot(h2, p2c_ref[...], preferred_element_type=f32)       # (241,  80)

    # fc1 (400->120) + ReLU: gather pooled row h of every sample with a 0/1
    # selection matmul, then contract against flatten-order-permuted weights.
    y = jnp.dot(jnp.dot(f1s_ref[0], p2, preferred_element_type=f32),
                a1_ref[0], preferred_element_type=f32)               # (8, 128)
    for hh in range(1, 5):
        v = jnp.dot(f1s_ref[hh], p2, preferred_element_type=f32)     # (8, 80)
        y = y + jnp.dot(v, a1_ref[hh], preferred_element_type=f32)
    y = jnp.maximum(y + fb1_ref[...], 0.0)

    # fc2 (120->84) + ReLU, fc3 (84->10); all dims zero-padded to 128 lanes.
    y = jnp.maximum(jnp.dot(y, w2_ref[...], preferred_element_type=f32)
                    + fb2_ref[...], 0.0)
    y = jnp.dot(y, w3_ref[...], preferred_element_type=f32) + fb3_ref[...]

    o_ref[...] = y                                                   # (8, 128)


# ------------------------- one-time weight repacking -------------------------

def prepare_params(p):
    """Repack PyTorch-layout weights into the kernel's operand tuple (one-time)."""
    f32 = jnp.float32
    w1 = p["conv1_w"].astype(f32)            # (6, 1, 5, 5)
    w2 = p["conv2_w"].astype(f32)            # (16, 6, 5, 5)

    # conv1 banded matrices: r1[ky][iw, co*28+ow] = w1[co, 0, ky, iw-ow].
    iw = jnp.arange(32)[:, None]
    ow = jnp.arange(28)[None, :]
    kx = iw - ow
    valid = ((kx >= 0) & (kx <= 4)).astype(f32)
    kxc = jnp.clip(kx, 0, 4)
    r1 = jnp.stack(
        [jnp.transpose(w1[:, 0, ky, :][:, kxc] * valid[None], (1, 0, 2))
             .reshape(32, 6 * 28)
         for ky in range(5)], axis=0)                                # (5, 32, 168)
    b1 = jnp.repeat(p["conv1_b"].astype(f32), 28)[None, :]           # (1, 168)

    # conv2 banded matrices: r2[dy][ci*14+iw, co*10+ow] = w2[co, ci, dy, iw-ow].
    iw2 = jnp.arange(14)[:, None]
    ow2 = jnp.arange(10)[None, :]
    kx2 = iw2 - ow2
    valid2 = ((kx2 >= 0) & (kx2 <= 4)).astype(f32)
    kxc2 = jnp.clip(kx2, 0, 4)
    r2 = jnp.stack(
        [jnp.transpose(w2[:, :, dy, :][:, :, kxc2] * valid2[None, None],
                       (1, 2, 0, 3)).reshape(6 * 14, 16 * 10)
         for dy in range(5)], axis=0)                                # (5, 84, 160)
    b2 = jnp.repeat(p["conv2_b"].astype(f32), 10)[None, :]           # (1, 160)

    # Lane-direction 2x2 max-pool decimation selectors (0/1 matrices).
    c84 = jnp.arange(84)
    p1c = (jnp.arange(167)[:, None]
           == ((c84 // 14) * 28 + 2 * (c84 % 14))[None, :]).astype(f32)  # (167, 84)
    c80 = jnp.arange(80)
    p2c = (jnp.arange(159)[:, None]
           == ((c80 // 5) * 10 + 2 * (c80 % 5))[None, :]).astype(f32)    # (159, 80)

    # fc1 row-gather selectors: pooled row h of sample s sits at row s*32 + 4h
    # of the (241, 80) pool2 activation.
    rows = jnp.arange(TB)[None, :] * ROWS + 4 * jnp.arange(5)[:, None]   # (5, TB)
    f1sel = (jnp.arange(241)[None, None, :]
             == rows[:, :, None]).astype(f32)                            # (5, TB, 241)

    # fc1: permute the 400 input columns to the kernel's (h, co*5+q) flatten
    # order (no in-kernel flatten needed) and zero-pad 120 -> 128 output lanes.
    a1 = (p["fc1_w"].astype(f32).reshape(120, 16, 5, 5)
          .transpose(2, 1, 3, 0).reshape(5, 80, 120))
    a1 = jnp.pad(a1, ((0, 0), (0, 0), (0, 8)))                       # (5, 80, 128)
    fb1 = jnp.pad(p["fc1_b"].astype(f32), (0, 8))[None, :]           # (1, 128)

    w2p = jnp.pad(p["fc2_w"].astype(f32).T, ((0, 8), (0, 44)))       # (128, 128)
    fb2 = jnp.pad(p["fc2_b"].astype(f32), (0, 44))[None, :]          # (1, 128)
    w3p = jnp.pad(p["fc3_w"].astype(f32).T, ((0, 44), (0, 118)))     # (128, 128)
    fb3 = jnp.pad(p["fc3_b"].astype(f32), (0, 118))[None, :]         # (1, 128)

    return (r1, b1, p1c, r2, b2, p2c, f1sel, a1, fb1, w2p, fb2, w3p, fb3)


# ------------------------------ public wrapper -------------------------------

def _whole_array_spec(arr):
    zero = (0,) * arr.ndim
    return pl.BlockSpec(arr.shape, lambda i, _z=zero: _z)


def lenet_apply(x_nchw, ops):
    """x_nchw: (N, 1, 32, 32) float32 -> logits (N, 10)."""
    x = x_nchw[:, 0, :, :].astype(jnp.float32)                       # (N, 32, 32)
    n = x.shape[0]
    nb = pl.cdiv(n, TB)
    n_pad = nb * TB
    if n_pad != n:
        x = jnp.pad(x, ((0, n_pad - n), (0, 0), (0, 0)))
    x2d = x.reshape(n_pad * ROWS, ROWS)                              # (N_pad*32, 32)

    out = pl.pallas_call(
        _lenet_kernel,
        out_shape=jax.ShapeDtypeStruct((n_pad, 128), jnp.float32),
        grid_spec=pltpu.PrefetchScalarGridSpec(
            num_scalar_prefetch=0,
            grid=(nb,),
            in_specs=[pl.BlockSpec((BR, ROWS), lambda i: (i, 0))]
                     + [_whole_array_spec(o) for o in ops],
            out_specs=pl.BlockSpec((TB, 128), lambda i: (i, 0)),
        ),
        compiler_params=pltpu.CompilerParams(
            dimension_semantics=("parallel",)),
    )(x2d, *ops)
    return out[:n, :10]


# --------------------- deterministic parameter init -------------------------

def init_params(key):
    def uniform(k, shape, fan_in):           # PyTorch-style U(-1/sqrt(fan), +)
        bound = 1.0 / (float(fan_in) ** 0.5)
        return jax.random.uniform(k, shape, jnp.float32, -bound, bound)

    ks = jax.random.split(key, 10)
    return {
        "conv1_w": uniform(ks[0], (6, 1, 5, 5), 1 * 5 * 5),
        "conv1_b": uniform(ks[1], (6,), 1 * 5 * 5),
        "conv2_w": uniform(ks[2], (16, 6, 5, 5), 6 * 5 * 5),
        "conv2_b": uniform(ks[3], (16,), 6 * 5 * 5),
        "fc1_w":   uniform(ks[4], (120, 400), 400),
        "fc1_b":   uniform(ks[5], (120,), 400),
        "fc2_w":   uniform(ks[6], (84, 120), 120),
        "fc2_b":   uniform(ks[7], (84,), 120),
        "fc3_w":   uniform(ks[8], (10, 84), 84),
        "fc3_b":   uniform(ks[9], (10,), 84),
    }


# ------------------------- pure-JAX reference -------------------------------

def reference_forward(x_nchw, p):
    hp = lax.Precision.HIGHEST
    x = jnp.transpose(x_nchw, (0, 2, 3, 1))

    def conv(x, w, b):
        w_hwio = jnp.transpose(w, (2, 3, 1, 0))
        y = lax.conv_general_dilated(
            x, w_hwio, (1, 1), "VALID",
            dimension_numbers=("NHWC", "HWIO", "NHWC"), precision=hp)
        return jax.nn.relu(y + b)

    def pool(x):
        return lax.reduce_window(x, -jnp.inf, lax.max,
                                 (1, 2, 2, 1), (1, 2, 2, 1), "VALID")

    y = pool(conv(x, p["conv1_w"], p["conv1_b"]))
    y = pool(conv(y, p["conv2_w"], p["conv2_b"]))
    n = y.shape[0]
    y = jnp.transpose(y, (0, 3, 1, 2)).reshape(n, 16 * 5 * 5)
    y = jax.nn.relu(jnp.dot(y, p["fc1_w"].T, precision=hp) + p["fc1_b"])
    y = jax.nn.relu(jnp.dot(y, p["fc2_w"].T, precision=hp) + p["fc2_b"])
    return jnp.dot(y, p["fc3_w"].T, precision=hp) + p["fc3_b"]


# --------------------------------- main --------------------------------------

if __name__ == "__main__":
    key = jax.random.PRNGKey(0)
    k_x, k_p = jax.random.split(key)
    # LeNet geometry requires 32x32 single-channel input; batch 16 -> 2 grid
    # blocks of 8 so both v7x TensorCores get work.
    x = jax.random.normal(k_x, (16, 1, 32, 32), jnp.float32)
    params = init_params(k_p)

    ops = prepare_params(params)            # one-time weight repack (plain JAX)
    fwd = jax.jit(lenet_apply)
    out = jax.block_until_ready(fwd(x, ops))
    assert out.shape == (16, 10) and out.dtype == jnp.float32

    ref = reference_forward(x, params)
    max_err = float(jnp.max(jnp.abs(out - ref)))
    # Tightened from 1e-2 (all-f32 operand path); 1e-3 leaves margin for MXU
    # f32 pass-splitting vs the HIGHEST-precision XLA reference.
    assert max_err < 1e-3, f"mismatch vs pure-JAX reference: {max_err}"

    print("KERNEL_OK")
</pallas_src>

<mosaic_0001>
module attributes {stable_mosaic.version = 11 : i64} {
  func.func @_lenet_kernel(%arg0: i32, %arg1: memref<256x32xf32, #tpu.memory_space<vmem>>, %arg2: memref<5x32x168xf32, #tpu.memory_space<vmem>>, %arg3: memref<1x168xf32, #tpu.memory_space<vmem>>, %arg4: memref<167x84xf32, #tpu.memory_space<vmem>>, %arg5: memref<5x84x160xf32, #tpu.memory_space<vmem>>, %arg6: memref<1x160xf32, #tpu.memory_space<vmem>>, %arg7: memref<159x80xf32, #tpu.memory_space<vmem>>, %arg8: memref<5x8x241xf32, #tpu.memory_space<vmem>>, %arg9: memref<5x80x128xf32, #tpu.memory_space<vmem>>, %arg10: memref<1x128xf32, #tpu.memory_space<vmem>>, %arg11: memref<128x128xf32, #tpu.memory_space<vmem>>, %arg12: memref<1x128xf32, #tpu.memory_space<vmem>>, %arg13: memref<128x128xf32, #tpu.memory_space<vmem>>, %arg14: memref<1x128xf32, #tpu.memory_space<vmem>>, %arg15: memref<8x128xf32, #tpu.memory_space<vmem>>) attributes {dimension_semantics = [#tpu.dimension_semantics<parallel>], iteration_bounds = array<i64: 2>, scalar_prefetch = 0 : i64, scratch_operands = 0 : i64, tpu.core_type = #tpu.core_type<tc>, window_params = [{transform_indices = @transform_0, window_bounds = array<i64: 256, 32>}, {pipeline_mode = #tpu.pipeline_mode<synchronous>, transform_indices = @transform_1, window_bounds = array<i64: 5, 32, 168>}, {pipeline_mode = #tpu.pipeline_mode<synchronous>, transform_indices = @transform_2, window_bounds = array<i64: 1, 168>}, {pipeline_mode = #tpu.pipeline_mode<synchronous>, transform_indices = @transform_3, window_bounds = array<i64: 167, 84>}, {pipeline_mode = #tpu.pipeline_mode<synchronous>, transform_indices = @transform_4, window_bounds = array<i64: 5, 84, 160>}, {pipeline_mode = #tpu.pipeline_mode<synchronous>, transform_indices = @transform_5, window_bounds = array<i64: 1, 160>}, {pipeline_mode = #tpu.pipeline_mode<synchronous>, transform_indices = @transform_6, window_bounds = array<i64: 159, 80>}, {pipeline_mode = #tpu.pipeline_mode<synchronous>, transform_indices = @transform_7, window_bounds = array<i64: 5, 8, 241>}, {pipeline_mode = #tpu.pipeline_mode<synchronous>, transform_indices = @transform_8, window_bounds = array<i64: 5, 80, 128>}, {pipeline_mode = #tpu.pipeline_mode<synchronous>, transform_indices = @transform_9, window_bounds = array<i64: 1, 128>}, {pipeline_mode = #tpu.pipeline_mode<synchronous>, transform_indices = @transform_10, window_bounds = array<i64: 128, 128>}, {pipeline_mode = #tpu.pipeline_mode<synchronous>, transform_indices = @transform_11, window_bounds = array<i64: 1, 128>}, {pipeline_mode = #tpu.pipeline_mode<synchronous>, transform_indices = @transform_12, window_bounds = array<i64: 128, 128>}, {pipeline_mode = #tpu.pipeline_mode<synchronous>, transform_indices = @transform_13, window_bounds = array<i64: 1, 128>}, {transform_indices = @transform_14, window_bounds = array<i64: 8, 128>}]} {
    %c0 = arith.constant 0 : index
    %c0_0 = arith.constant 0 : index
    %0 = vector.load %arg1[%c0, %c0_0] : memref<256x32xf32, #tpu.memory_space<vmem>>, vector<256x32xf32>
    %1 = vector.extract_strided_slice %0 {offsets = [0, 0], sizes = [252, 32], strides = [1, 1]} : vector<256x32xf32> to vector<252x32xf32>
    %c0_1 = arith.constant 0 : index
    %c0_2 = arith.constant 0 : index
    %c0_3 = arith.constant 0 : index
    %2 = vector.load %arg2[%c0_1, %c0_2, %c0_3] : memref<5x32x168xf32, #tpu.memory_space<vmem>>, vector<1x32x168xf32>
    %3 = vector.shape_cast %2 : vector<1x32x168xf32> to vector<32x168xf32>
    %cst = arith.constant dense<0.000000e+00> : vector<252x168xf32>
    %4 = tpu.matmul %1, %3, %cst {dimension_numbers = #tpu.dot_dimension_numbers<[1], [0], [0], [1], [0, 0, 1, 1], [], []>} : vector<252x32xf32>, vector<32x168xf32>, vector<252x168xf32> -> vector<252x168xf32>
    %5 = vector.extract_strided_slice %0 {offsets = [1, 0], sizes = [252, 32], strides = [1, 1]} : vector<256x32xf32> to vector<252x32xf32>
    %c1 = arith.constant 1 : index
    %c0_4 = arith.constant 0 : index
    %c0_5 = arith.constant 0 : index
    %6 = vector.load %arg2[%c1, %c0_4, %c0_5] : memref<5x32x168xf32, #tpu.memory_space<vmem>>, vector<1x32x168xf32>
    %7 = vector.shape_cast %6 : vector<1x32x168xf32> to vector<32x168xf32>
    %cst_6 = arith.constant dense<0.000000e+00> : vector<252x168xf32>
    %8 = tpu.matmul %5, %7, %cst_6 {dimension_numbers = #tpu.dot_dimension_numbers<[1], [0], [0], [1], [0, 0, 1, 1], [], []>} : vector<252x32xf32>, vector<32x168xf32>, vector<252x168xf32> -> vector<252x168xf32>
    %9 = arith.addf %4, %8 : vector<252x168xf32>
    %10 = vector.extract_strided_slice %0 {offsets = [2, 0], sizes = [252, 32], strides = [1, 1]} : vector<256x32xf32> to vector<252x32xf32>
    %c2 = arith.constant 2 : index
    %c0_7 = arith.constant 0 : index
    %c0_8 = arith.constant 0 : index
    %11 = vector.load %arg2[%c2, %c0_7, %c0_8] : memref<5x32x168xf32, #tpu.memory_space<vmem>>, vector<1x32x168xf32>
    %12 = vector.shape_cast %11 : vector<1x32x168xf32> to vector<32x168xf32>
    %cst_9 = arith.constant dense<0.000000e+00> : vector<252x168xf32>
    %13 = tpu.matmul %10, %12, %cst_9 {dimension_numbers = #tpu.dot_dimension_numbers<[1], [0], [0], [1], [0, 0, 1, 1], [], []>} : vector<252x32xf32>, vector<32x168xf32>, vector<252x168xf32> -> vector<252x168xf32>
    %14 = arith.addf %9, %13 : vector<252x168xf32>
    %15 = vector.extract_strided_slice %0 {offsets = [3, 0], sizes = [252, 32], strides = [1, 1]} : vector<256x32xf32> to vector<252x32xf32>
    %c3 = arith.constant 3 : index
    %c0_10 = arith.constant 0 : index
    %c0_11 = arith.constant 0 : index
    %16 = vector.load %arg2[%c3, %c0_10, %c0_11] : memref<5x32x168xf32, #tpu.memory_space<vmem>>, vector<1x32x168xf32>
    %17 = vector.shape_cast %16 : vector<1x32x168xf32> to vector<32x168xf32>
    %cst_12 = arith.constant dense<0.000000e+00> : vector<252x168xf32>
    %18 = tpu.matmul %15, %17, %cst_12 {dimension_numbers = #tpu.dot_dimension_numbers<[1], [0], [0], [1], [0, 0, 1, 1], [], []>} : vector<252x32xf32>, vector<32x168xf32>, vector<252x168xf32> -> vector<252x168xf32>
    %19 = arith.addf %14, %18 : vector<252x168xf32>
    %20 = vector.extract_strided_slice %0 {offsets = [4, 0], sizes = [252, 32], strides = [1, 1]} : vector<256x32xf32> to vector<252x32xf32>
    %c4 = arith.constant 4 : index
    %c0_13 = arith.constant 0 : index
    %c0_14 = arith.constant 0 : index
    %21 = vector.load %arg2[%c4, %c0_13, %c0_14] : memref<5x32x168xf32, #tpu.memory_space<vmem>>, vector<1x32x168xf32>
    %22 = vector.shape_cast %21 : vector<1x32x168xf32> to vector<32x168xf32>
    %cst_15 = arith.constant dense<0.000000e+00> : vector<252x168xf32>
    %23 = tpu.matmul %20, %22, %cst_15 {dimension_numbers = #tpu.dot_dimension_numbers<[1], [0], [0], [1], [0, 0, 1, 1], [], []>} : vector<252x32xf32>, vector<32x168xf32>, vector<252x168xf32> -> vector<252x168xf32>
    %24 = arith.addf %19, %23 : vector<252x168xf32>
    %c0_16 = arith.constant 0 : index
    %c0_17 = arith.constant 0 : index
    %25 = vector.load %arg3[%c0_16, %c0_17] : memref<1x168xf32, #tpu.memory_space<vmem>>, vector<1x168xf32>
    %26 = vector.broadcast %25 : vector<1x168xf32> to vector<252x168xf32>
    %27 = arith.addf %24, %26 : vector<252x168xf32>
    %cst_18 = arith.constant 0.000000e+00 : f32
    %28 = vector.broadcast %cst_18 : f32 to vector<252x168xf32>
    %29 = arith.maximumf %27, %28 : vector<252x168xf32>
    %30 = vector.extract_strided_slice %29 {offsets = [0, 0], sizes = [251, 168], strides = [1, 1]} : vector<252x168xf32> to vector<251x168xf32>
    %31 = vector.extract_strided_slice %29 {offsets = [1, 0], sizes = [251, 168], strides = [1, 1]} : vector<252x168xf32> to vector<251x168xf32>
    %32 = arith.maximumf %30, %31 : vector<251x168xf32>
    %33 = vector.extract_strided_slice %32 {offsets = [0, 0], sizes = [251, 167], strides = [1, 1]} : vector<251x168xf32> to vector<251x167xf32>
    %34 = vector.extract_strided_slice %32 {offsets = [0, 1], sizes = [251, 167], strides = [1, 1]} : vector<251x168xf32> to vector<251x167xf32>
    %35 = arith.maximumf %33, %34 : vector<251x167xf32>
    %c0_19 = arith.constant 0 : index
    %c0_20 = arith.constant 0 : index
    %36 = vector.load %arg4[%c0_19, %c0_20] : memref<167x84xf32, #tpu.memory_space<vmem>>, vector<167x84xf32>
    %cst_21 = arith.constant dense<0.000000e+00> : vector<251x84xf32>
    %37 = tpu.matmul %35, %36, %cst_21 {dimension_numbers = #tpu.dot_dimension_numbers<[1], [0], [0], [1], [0, 0, 1, 1], [], []>} : vector<251x167xf32>, vector<167x84xf32>, vector<251x84xf32> -> vector<251x84xf32>
    %38 = vector.extract_strided_slice %37 {offsets = [0, 0], sizes = [243, 84], strides = [1, 1]} : vector<251x84xf32> to vector<243x84xf32>
    %c0_22 = arith.constant 0 : index
    %c0_23 = arith.constant 0 : index
    %c0_24 = arith.constant 0 : index
    %39 = vector.load %arg5[%c0_22, %c0_23, %c0_24] : memref<5x84x160xf32, #tpu.memory_space<vmem>>, vector<1x84x160xf32>
    %40 = vector.shape_cast %39 : vector<1x84x160xf32> to vector<84x160xf32>
    %cst_25 = arith.constant dense<0.000000e+00> : vector<243x160xf32>
    %41 = tpu.matmul %38, %40, %cst_25 {dimension_numbers = #tpu.dot_dimension_numbers<[1], [0], [0], [1], [0, 0, 1, 1], [], []>} : vector<243x84xf32>, vector<84x160xf32>, vector<243x160xf32> -> vector<243x160xf32>
    %42 = vector.extract_strided_slice %37 {offsets = [2, 0], sizes = [243, 84], strides = [1, 1]} : vector<251x84xf32> to vector<243x84xf32>
    %c1_26 = arith.constant 1 : index
    %c0_27 = arith.constant 0 : index
    %c0_28 = arith.constant 0 : index
    %43 = vector.load %arg5[%c1_26, %c0_27, %c0_28] : memref<5x84x160xf32, #tpu.memory_space<vmem>>, vector<1x84x160xf32>
    %44 = vector.shape_cast %43 : vector<1x84x160xf32> to vector<84x160xf32>
    %cst_29 = arith.constant dense<0.000000e+00> : vector<243x160xf32>
    %45 = tpu.matmul %42, %44, %cst_29 {dimension_numbers = #tpu.dot_dimension_numbers<[1], [0], [0], [1], [0, 0, 1, 1], [], []>} : vector<243x84xf32>, vector<84x160xf32>, vector<243x160xf32> -> vector<243x160xf32>
    %46 = arith.addf %41, %45 : vector<243x160xf32>
    %47 = vector.extract_strided_slice %37 {offsets = [4, 0], sizes = [243, 84], strides = [1, 1]} : vector<251x84xf32> to vector<243x84xf32>
    %c2_30 = arith.constant 2 : index
    %c0_31 = arith.constant 0 : index
    %c0_32 = arith.constant 0 : index
    %48 = vector.load %arg5[%c2_30, %c0_31, %c0_32] : memref<5x84x160xf32, #tpu.memory_space<vmem>>, vector<1x84x160xf32>
    %49 = vector.shape_cast %48 : vector<1x84x160xf32> to vector<84x160xf32>
    %cst_33 = arith.constant dense<0.000000e+00> : vector<243x160xf32>
    %50 = tpu.matmul %47, %49, %cst_33 {dimension_numbers = #tpu.dot_dimension_numbers<[1], [0], [0], [1], [0, 0, 1, 1], [], []>} : vector<243x84xf32>, vector<84x160xf32>, vector<243x160xf32> -> vector<243x160xf32>
    %51 = arith.addf %46, %50 : vector<243x160xf32>
    %52 = vector.extract_strided_slice %37 {offsets = [6, 0], sizes = [243, 84], strides = [1, 1]} : vector<251x84xf32> to vector<243x84xf32>
    %c3_34 = arith.constant 3 : index
    %c0_35 = arith.constant 0 : index
    %c0_36 = arith.constant 0 : index
    %53 = vector.load %arg5[%c3_34, %c0_35, %c0_36] : memref<5x84x160xf32, #tpu.memory_space<vmem>>, vector<1x84x160xf32>
    %54 = vector.shape_cast %53 : vector<1x84x160xf32> to vector<84x160xf32>
    %cst_37 = arith.constant dense<0.000000e+00> : vector<243x160xf32>
    %55 = tpu.matmul %52, %54, %cst_37 {dimension_numbers = #tpu.dot_dimension_numbers<[1], [0], [0], [1], [0, 0, 1, 1], [], []>} : vector<243x84xf32>, vector<84x160xf32>, vector<243x160xf32> -> vector<243x160xf32>
    %56 = arith.addf %51, %55 : vector<243x160xf32>
    %57 = vector.extract_strided_slice %37 {offsets = [8, 0], sizes = [243, 84], strides = [1, 1]} : vector<251x84xf32> to vector<243x84xf32>
    %c4_38 = arith.constant 4 : index
    %c0_39 = arith.constant 0 : index
    %c0_40 = arith.constant 0 : index
    %58 = vector.load %arg5[%c4_38, %c0_39, %c0_40] : memref<5x84x160xf32, #tpu.memory_space<vmem>>, vector<1x84x160xf32>
    %59 = vector.shape_cast %58 : vector<1x84x160xf32> to vector<84x160xf32>
    %cst_41 = arith.constant dense<0.000000e+00> : vector<243x160xf32>
    %60 = tpu.matmul %57, %59, %cst_41 {dimension_numbers = #tpu.dot_dimension_numbers<[1], [0], [0], [1], [0, 0, 1, 1], [], []>} : vector<243x84xf32>, vector<84x160xf32>, vector<243x160xf32> -> vector<243x160xf32>
    %61 = arith.addf %56, %60 : vector<243x160xf32>
    %c0_42 = arith.constant 0 : index
    %c0_43 = arith.constant 0 : index
    %62 = vector.load %arg6[%c0_42, %c0_43] : memref<1x160xf32, #tpu.memory_space<vmem>>, vector<1x160xf32>
    %63 = vector.broadcast %62 : vector<1x160xf32> to vector<243x160xf32>
    %64 = arith.addf %61, %63 : vector<243x160xf32>
    %cst_44 = arith.constant 0.000000e+00 : f32
    %65 = vector.broadcast %cst_44 : f32 to vector<243x160xf32>
    %66 = arith.maximumf %64, %65 : vector<243x160xf32>
    %67 = vector.extract_strided_slice %66 {offsets = [0, 0], sizes = [241, 160], strides = [1, 1]} : vector<243x160xf32> to vector<241x160xf32>
    %68 = vector.extract_strided_slice %66 {offsets = [2, 0], sizes = [241, 160], strides = [1, 1]} : vector<243x160xf32> to vector<241x160xf32>
    %69 = arith.maximumf %67, %68 : vector<241x160xf32>
    %70 = vector.extract_strided_slice %69 {offsets = [0, 0], sizes = [241, 159], strides = [1, 1]} : vector<241x160xf32> to vector<241x159xf32>
    %71 = vector.extract_strided_slice %69 {offsets = [0, 1], sizes = [241, 159], strides = [1, 1]} : vector<241x160xf32> to vector<241x159xf32>
    %72 = arith.maximumf %70, %71 : vector<241x159xf32>
    %c0_45 = arith.constant 0 : index
    %c0_46 = arith.constant 0 : index
    %73 = vector.load %arg7[%c0_45, %c0_46] : memref<159x80xf32, #tpu.memory_space<vmem>>, vector<159x80xf32>
    %cst_47 = arith.constant dense<0.000000e+00> : vector<241x80xf32>
    %74 = tpu.matmul %72, %73, %cst_47 {dimension_numbers = #tpu.dot_dimension_numbers<[1], [0], [0], [1], [0, 0, 1, 1], [], []>} : vector<241x159xf32>, vector<159x80xf32>, vector<241x80xf32> -> vector<241x80xf32>
    %c0_48 = arith.constant 0 : index
    %c0_49 = arith.constant 0 : index
    %c0_50 = arith.constant 0 : index
    %75 = vector.load %arg8[%c0_48, %c0_49, %c0_50] : memref<5x8x241xf32, #tpu.memory_space<vmem>>, vector<1x8x241xf32>
    %76 = vector.shape_cast %75 : vector<1x8x241xf32> to vector<8x241xf32>
    %cst_51 = arith.constant dense<0.000000e+00> : vector<8x80xf32>
    %77 = tpu.matmul %76, %74, %cst_51 {dimension_numbers = #tpu.dot_dimension_numbers<[1], [0], [0], [1], [0, 0, 1, 1], [], []>} : vector<8x241xf32>, vector<241x80xf32>, vector<8x80xf32> -> vector<8x80xf32>
    %c0_52 = arith.constant 0 : index
    %c0_53 = arith.constant 0 : index
    %c0_54 = arith.constant 0 : index
    %78 = vector.load %arg9[%c0_52, %c0_53, %c0_54] : memref<5x80x128xf32, #tpu.memory_space<vmem>>, vector<1x80x128xf32>
    %79 = vector.shape_cast %78 : vector<1x80x128xf32> to vector<80x128xf32>
    %cst_55 = arith.constant dense<0.000000e+00> : vector<8x128xf32>
    %80 = tpu.matmul %77, %79, %cst_55 {dimension_numbers = #tpu.dot_dimension_numbers<[1], [0], [0], [1], [0, 0, 1, 1], [], []>} : vector<8x80xf32>, vector<80x128xf32>, vector<8x128xf32> -> vector<8x128xf32>
    %c1_56 = arith.constant 1 : index
    %c0_57 = arith.constant 0 : index
    %c0_58 = arith.constant 0 : index
    %81 = vector.load %arg8[%c1_56, %c0_57, %c0_58] : memref<5x8x241xf32, #tpu.memory_space<vmem>>, vector<1x8x241xf32>
    %82 = vector.shape_cast %81 : vector<1x8x241xf32> to vector<8x241xf32>
    %cst_59 = arith.constant dense<0.000000e+00> : vector<8x80xf32>
    %83 = tpu.matmul %82, %74, %cst_59 {dimension_numbers = #tpu.dot_dimension_numbers<[1], [0], [0], [1], [0, 0, 1, 1], [], []>} : vector<8x241xf32>, vector<241x80xf32>, vector<8x80xf32> -> vector<8x80xf32>
    %c1_60 = arith.constant 1 : index
    %c0_61 = arith.constant 0 : index
    %c0_62 = arith.constant 0 : index
    %84 = vector.load %arg9[%c1_60, %c0_61, %c0_62] : memref<5x80x128xf32, #tpu.memory_space<vmem>>, vector<1x80x128xf32>
    %85 = vector.shape_cast %84 : vector<1x80x128xf32> to vector<80x128xf32>
    %cst_63 = arith.constant dense<0.000000e+00> : vector<8x128xf32>
    %86 = tpu.matmul %83, %85, %cst_63 {dimension_numbers = #tpu.dot_dimension_numbers<[1], [0], [0], [1], [0, 0, 1, 1], [], []>} : vector<8x80xf32>, vector<80x128xf32>, vector<8x128xf32> -> vector<8x128xf32>
    %87 = arith.addf %80, %86 : vector<8x128xf32>
    %c2_64 = arith.constant 2 : index
    %c0_65 = arith.constant 0 : index
    %c0_66 = arith.constant 0 : index
    %88 = vector.load %arg8[%c2_64, %c0_65, %c0_66] : memref<5x8x241xf32, #tpu.memory_space<vmem>>, vector<1x8x241xf32>
    %89 = vector.shape_cast %88 : vector<1x8x241xf32> to vector<8x241xf32>
    %cst_67 = arith.constant dense<0.000000e+00> : vector<8x80xf32>
    %90 = tpu.matmul %89, %74, %cst_67 {dimension_numbers = #tpu.dot_dimension_numbers<[1], [0], [0], [1], [0, 0, 1, 1], [], []>} : vector<8x241xf32>, vector<241x80xf32>, vector<8x80xf32> -> vector<8x80xf32>
    %c2_68 = arith.constant 2 : index
    %c0_69 = arith.constant 0 : index
    %c0_70 = arith.constant 0 : index
    %91 = vector.load %arg9[%c2_68, %c0_69, %c0_70] : memref<5x80x128xf32, #tpu.memory_space<vmem>>, vector<1x80x128xf32>
    %92 = vector.shape_cast %91 : vector<1x80x128xf32> to vector<80x128xf32>
    %cst_71 = arith.constant dense<0.000000e+00> : vector<8x128xf32>
    %93 = tpu.matmul %90, %92, %cst_71 {dimension_numbers = #tpu.dot_dimension_numbers<[1], [0], [0], [1], [0, 0, 1, 1], [], []>} : vector<8x80xf32>, vector<80x128xf32>, vector<8x128xf32> -> vector<8x128xf32>
    %94 = arith.addf %87, %93 : vector<8x128xf32>
    %c3_72 = arith.constant 3 : index
    %c0_73 = arith.constant 0 : index
    %c0_74 = arith.constant 0 : index
    %95 = vector.load %arg8[%c3_72, %c0_73, %c0_74] : memref<5x8x241xf32, #tpu.memory_space<vmem>>, vector<1x8x241xf32>
    %96 = vector.shape_cast %95 : vector<1x8x241xf32> to vector<8x241xf32>
    %cst_75 = arith.constant dense<0.000000e+00> : vector<8x80xf32>
    %97 = tpu.matmul %96, %74, %cst_75 {dimension_numbers = #tpu.dot_dimension_numbers<[1], [0], [0], [1], [0, 0, 1, 1], [], []>} : vector<8x241xf32>, vector<241x80xf32>, vector<8x80xf32> -> vector<8x80xf32>
    %c3_76 = arith.constant 3 : index
    %c0_77 = arith.constant 0 : index
    %c0_78 = arith.constant 0 : index
    %98 = vector.load %arg9[%c3_76, %c0_77, %c0_78] : memref<5x80x128xf32, #tpu.memory_space<vmem>>, vector<1x80x128xf32>
    %99 = vector.shape_cast %98 : vector<1x80x128xf32> to vector<80x128xf32>
    %cst_79 = arith.constant dense<0.000000e+00> : vector<8x128xf32>
    %100 = tpu.matmul %97, %99, %cst_79 {dimension_numbers = #tpu.dot_dimension_numbers<[1], [0], [0], [1], [0, 0, 1, 1], [], []>} : vector<8x80xf32>, vector<80x128xf32>, vector<8x128xf32> -> vector<8x128xf32>
    %101 = arith.addf %94, %100 : vector<8x128xf32>
    %c4_80 = arith.constant 4 : index
    %c0_81 = arith.constant 0 : index
    %c0_82 = arith.constant 0 : index
    %102 = vector.load %arg8[%c4_80, %c0_81, %c0_82] : memref<5x8x241xf32, #tpu.memory_space<vmem>>, vector<1x8x241xf32>
    %103 = vector.shape_cast %102 : vector<1x8x241xf32> to vector<8x241xf32>
    %cst_83 = arith.constant dense<0.000000e+00> : vector<8x80xf32>
    %104 = tpu.matmul %103, %74, %cst_83 {dimension_numbers = #tpu.dot_dimension_numbers<[1], [0], [0], [1], [0, 0, 1, 1], [], []>} : vector<8x241xf32>, vector<241x80xf32>, vector<8x80xf32> -> vector<8x80xf32>
    %c4_84 = arith.constant 4 : index
    %c0_85 = arith.constant 0 : index
    %c0_86 = arith.constant 0 : index
    %105 = vector.load %arg9[%c4_84, %c0_85, %c0_86] : memref<5x80x128xf32, #tpu.memory_space<vmem>>, vector<1x80x128xf32>
    %106 = vector.shape_cast %105 : vector<1x80x128xf32> to vector<80x128xf32>
    %cst_87 = arith.constant dense<0.000000e+00> : vector<8x128xf32>
    %107 = tpu.matmul %104, %106, %cst_87 {dimension_numbers = #tpu.dot_dimension_numbers<[1], [0], [0], [1], [0, 0, 1, 1], [], []>} : vector<8x80xf32>, vector<80x128xf32>, vector<8x128xf32> -> vector<8x128xf32>
    %108 = arith.addf %101, %107 : vector<8x128xf32>
    %c0_88 = arith.constant 0 : index
    %c0_89 = arith.constant 0 : index
    %109 = vector.load %arg10[%c0_88, %c0_89] : memref<1x128xf32, #tpu.memory_space<vmem>>, vector<1x128xf32>
    %110 = vector.broadcast %109 : vector<1x128xf32> to vector<8x128xf32>
    %111 = arith.addf %108, %110 : vector<8x128xf32>
    %cst_90 = arith.constant 0.000000e+00 : f32
    %112 = vector.broadcast %cst_90 : f32 to vector<8x128xf32>
    %113 = arith.maximumf %111, %112 : vector<8x128xf32>
    %c0_91 = arith.constant 0 : index
    %c0_92 = arith.constant 0 : index
    %114 = vector.load %arg11[%c0_91, %c0_92] : memref<128x128xf32, #tpu.memory_space<vmem>>, vector<128x128xf32>
    %cst_93 = arith.constant dense<0.000000e+00> : vector<8x128xf32>
    %115 = tpu.matmul %113, %114, %cst_93 {dimension_numbers = #tpu.dot_dimension_numbers<[1], [0], [0], [1], [0, 0, 1, 1], [], []>} : vector<8x128xf32>, vector<128x128xf32>, vector<8x128xf32> -> vector<8x128xf32>
    %c0_94 = arith.constant 0 : index
    %c0_95 = arith.constant 0 : index
    %116 = vector.load %arg12[%c0_94, %c0_95] : memref<1x128xf32, #tpu.memory_space<vmem>>, vector<1x128xf32>
    %117 = vector.broadcast %116 : vector<1x128xf32> to vector<8x128xf32>
    %118 = arith.addf %115, %117 : vector<8x128xf32>
    %cst_96 = arith.constant 0.000000e+00 : f32
    %119 = vector.broadcast %cst_96 : f32 to vector<8x128xf32>
    %120 = arith.maximumf %118, %119 : vector<8x128xf32>
    %c0_97 = arith.constant 0 : index
    %c0_98 = arith.constant 0 : index
    %121 = vector.load %arg13[%c0_97, %c0_98] : memref<128x128xf32, #tpu.memory_space<vmem>>, vector<128x128xf32>
    %cst_99 = arith.constant dense<0.000000e+00> : vector<8x128xf32>
    %122 = tpu.matmul %120, %121, %cst_99 {dimension_numbers = #tpu.dot_dimension_numbers<[1], [0], [0], [1], [0, 0, 1, 1], [], []>} : vector<8x128xf32>, vector<128x128xf32>, vector<8x128xf32> -> vector<8x128xf32>
    %c0_100 = arith.constant 0 : index
    %c0_101 = arith.constant 0 : index
    %123 = vector.load %arg14[%c0_100, %c0_101] : memref<1x128xf32, #tpu.memory_space<vmem>>, vector<1x128xf32>
    %124 = vector.broadcast %123 : vector<1x128xf32> to vector<8x128xf32>
    %125 = arith.addf %122, %124 : vector<8x128xf32>
    %c0_102 = arith.constant 0 : index
    %c0_103 = arith.constant 0 : index
    %126 = vector.load %arg15[%c0_102, %c0_103] : memref<8x128xf32, #tpu.memory_space<vmem>>, vector<8x128xf32>
    tpu.vector_store %arg15[%c0_102, %c0_103], %125 {strides = array<i32>} : memref<8x128xf32, #tpu.memory_space<vmem>>, vector<8x128xf32>,
    return
  }
  func.func @transform_0(%arg0: i32) -> (i32, i32) {
    %c0_i32 = arith.constant 0 : i32
    %c0_i32_0 = arith.constant 0 : i32
    return %arg0, %c0_i32 : i32, i32
  }
  func.func @transform_1(%arg0: i32) -> (i32, i32, i32) {
    %c0_i32 = arith.constant 0 : i32
    %c0_i32_0 = arith.constant 0 : i32
    %c0_i32_1 = arith.constant 0 : i32
    %c0_i32_2 = arith.constant 0 : i32
    return %c0_i32, %c0_i32_0, %c0_i32_1 : i32, i32, i32
  }
  func.func @transform_2(%arg0: i32) -> (i32, i32) {
    %c0_i32 = arith.constant 0 : i32
    %c0_i32_0 = arith.constant 0 : i32
    %c0_i32_1 = arith.constant 0 : i32
    return %c0_i32, %c0_i32_0 : i32, i32
  }
  func.func @transform_3(%arg0: i32) -> (i32, i32) {
    %c0_i32 = arith.constant 0 : i32
    %c0_i32_0 = arith.constant 0 : i32
    %c0_i32_1 = arith.constant 0 : i32
    return %c0_i32, %c0_i32_0 : i32, i32
  }
  func.func @transform_4(%arg0: i32) -> (i32, i32, i32) {
    %c0_i32 = arith.constant 0 : i32
    %c0_i32_0 = arith.constant 0 : i32
    %c0_i32_1 = arith.constant 0 : i32
    %c0_i32_2 = arith.constant 0 : i32
    return %c0_i32, %c0_i32_0, %c0_i32_1 : i32, i32, i32
  }
  func.func @transform_5(%arg0: i32) -> (i32, i32) {
    %c0_i32 = arith.constant 0 : i32
    %c0_i32_0 = arith.constant 0 : i32
    %c0_i32_1 = arith.constant 0 : i32
    return %c0_i32, %c0_i32_0 : i32, i32
  }
  func.func @transform_6(%arg0: i32) -> (i32, i32) {
    %c0_i32 = arith.constant 0 : i32
    %c0_i32_0 = arith.constant 0 : i32
    %c0_i32_1 = arith.constant 0 : i32
    return %c0_i32, %c0_i32_0 : i32, i32
  }
  func.func @transform_7(%arg0: i32) -> (i32, i32, i32) {
    %c0_i32 = arith.constant 0 : i32
    %c0_i32_0 = arith.constant 0 : i32
    %c0_i32_1 = arith.constant 0 : i32
    %c0_i32_2 = arith.constant 0 : i32
    return %c0_i32, %c0_i32_0, %c0_i32_1 : i32, i32, i32
  }
  func.func @transform_8(%arg0: i32) -> (i32, i32, i32) {
    %c0_i32 = arith.constant 0 : i32
    %c0_i32_0 = arith.constant 0 : i32
    %c0_i32_1 = arith.constant 0 : i32
    %c0_i32_2 = arith.constant 0 : i32
    return %c0_i32, %c0_i32_0, %c0_i32_1 : i32, i32, i32
  }
  func.func @transform_9(%arg0: i32) -> (i32, i32) {
    %c0_i32 = arith.constant 0 : i32
    %c0_i32_0 = arith.constant 0 : i32
    %c0_i32_1 = arith.constant 0 : i32
    return %c0_i32, %c0_i32_0 : i32, i32
  }
  func.func @transform_10(%arg0: i32) -> (i32, i32) {
    %c0_i32 = arith.constant 0 : i32
    %c0_i32_0 = arith.constant 0 : i32
    %c0_i32_1 = arith.constant 0 : i32
    return %c0_i32, %c0_i32_0 : i32, i32
  }
  func.func @transform_11(%arg0: i32) -> (i32, i32) {
    %c0_i32 = arith.constant 0 : i32
    %c0_i32_0 = arith.constant 0 : i32
    %c0_i32_1 = arith.constant 0 : i32
    return %c0_i32, %c0_i32_0 : i32, i32
  }
  func.func @transform_12(%arg0: i32) -> (i32, i32) {
    %c0_i32 = arith.constant 0 : i32
    %c0_i32_0 = arith.constant 0 : i32
    %c0_i32_1 = arith.constant 0 : i32
    return %c0_i32, %c0_i32_0 : i32, i32
  }
  func.func @transform_13(%arg0: i32) -> (i32, i32) {
    %c0_i32 = arith.constant 0 : i32
    %c0_i32_0 = arith.constant 0 : i32
    %c0_i32_1 = arith.constant 0 : i32
    return %c0_i32, %c0_i32_0 : i32, i32
  }
  func.func @transform_14(%arg0: i32) -> (i32, i32) {
    %c0_i32 = arith.constant 0 : i32
    %c0_i32_0 = arith.constant 0 : i32
    return %arg0, %c0_i32 : i32, i32
  }
}

</mosaic_0001>

<llo_original>
// kernel: lenet_apply.1
$region0: #{lenet_apply.1}
  #allocation0 [shape = 'u32[]', space=smem, size = 0x4, offset = 0x4, fixed_abs, tag = 'smem constant byte address 0x4 - core index']
  #allocation1 [shape = 'u32[144,128]{1,0:T(1,128)}', space=vmem, size = 0x12000, scoped, tag = 'internal scratch']
  %s0 = inlined_call_operand.vmem [shape: f32[512,32], index: 0, kind: input, shape index: {}]
  %s1 = inlined_call_operand.vmem [shape: f32[5,32,168], index: 1, kind: input, shape index: {}]
  %s2 = inlined_call_operand.vmem [shape: f32[1,168], index: 2, kind: input, shape index: {}]
  %s3 = inlined_call_operand.vmem [shape: f32[167,84], index: 3, kind: input, shape index: {}]
  %s4 = inlined_call_operand.vmem [shape: f32[5,84,160], index: 4, kind: input, shape index: {}]
  %s5 = inlined_call_operand.vmem [shape: f32[1,160], index: 5, kind: input, shape index: {}]
  %s6 = inlined_call_operand.vmem [shape: f32[159,80], index: 6, kind: input, shape index: {}]
  %s7 = inlined_call_operand.hbm [shape: f32[5,8,241], index: 7, kind: input, shape index: {}]
  %s8 = inlined_call_operand.vmem [shape: f32[5,80,128], index: 8, kind: input, shape index: {}]
  %s9 = inlined_call_operand.vmem [shape: f32[1,128], index: 9, kind: input, shape index: {}]
  %s10 = inlined_call_operand.vmem [shape: f32[128,128], index: 10, kind: input, shape index: {}]
  %s11 = inlined_call_operand.vmem [shape: f32[1,128], index: 11, kind: input, shape index: {}]
  %s12 = inlined_call_operand.hbm [shape: f32[128,128], index: 12, kind: input, shape index: {}]
  %s13 = inlined_call_operand.vmem [shape: f32[1,128], index: 13, kind: input, shape index: {}]
  %s14 = inlined_call_operand.hbm [shape: f32[16,128], index: 14, kind: output, shape index: {}]
  %s15 = sld [smem:[#allocation0]]
  $region97: #{lenet_apply.1} parent=0
    _
  %s17 = ssub.s32 1, %s15
  %s18 = scalar_select 0, %s17, %s15
  $region1: #{lenet_apply.1} parent=0
    #allocation2 [shape = 'u8[40960]{0}', space=vmem, size = 0xa000, scoped, tag = 'input window, operand 7, single buffered']
    #allocation3 [shape = 's32[2]{0}', space=sflag, size = 0x8, scoped, tag = 'scoped memory for lenet_apply.1']
    #allocation4 [shape = 's32[2]{0}', space=sflag, size = 0x8, scoped, tag = 'scoped memory for lenet_apply.1']
    #allocation5 [shape = 'u8[65536]{0}', space=vmem, size = 0x10000, scoped, tag = 'input window, operand 12, single buffered']
    #allocation6 [shape = 's32[1]{0}', space=sflag, size = 0x4, scoped, tag = 'scoped memory for lenet_apply.1']
    #allocation7 [shape = 'u8[8192]{0}', space=vmem, size = 0x2000, scoped, tag = 'output window, operand 0']
    %19 = vsyncpa [#allocation3], 0
    %20 = vsyncpa [#allocation6], 0
    %21 = vsyncpa [#allocation4], 0
    %s22 = scalar_lea.sflag [#allocation4], 1
    %23 = vsyncpa %s22, 0
    loop: start=0, step=1, limit=4
    $region2: #{lenet_apply.1} parent=1 // loop_pre_header
      _
    $region3: #{lenet_apply.1} parent=1 // loop_header
      %s25 = sphi 0, %s29
      %p26 = scmp.ge.s32.totalorder %s25, 4
      %s35 = sphi 0, %s37
      %s38 = sphi 0, %s35
      %s39 = sphi 0, %s38
      %s55 = sphi 0, %s39
      %s59 = sphi 0, %s59
      %s61 = sphi 0, %s59
      %s62 = sphi 0, %s61
      %s76 = sphi 0, %s62
      %s80 = sphi 0, %s80
      %s82 = sphi 0, %s80
      %s83 = sphi 0, %s82
      %s97 = sphi 0, %s83
      %s101 = sphi 0, %s101
      %s103 = sphi 0, %s101
      %s104 = sphi 0, %s103
      %s118 = sphi 0, %s104
      %s122 = sphi 0, %s122
      %s124 = sphi 0, %s122
      %s125 = sphi 0, %s124
      %s139 = sphi 0, %s125
      %s143 = sphi 0, %s143
      %s145 = sphi 0, %s143
      %s146 = sphi 0, %s145
      %s160 = sphi 0, %s146
      %s164 = sphi 0, %s164
      %s166 = sphi 0, %s164
      %s167 = sphi 0, %s166
      %s181 = sphi 0, %s167
      %s185 = sphi 0, %s185
      %s187 = sphi 0, %s185
      %s188 = sphi 0, %s187
      %s202 = sphi 0, %s188
      %s206 = sphi 0, %s206
      %s208 = sphi 0, %s206
      %s209 = sphi 0, %s208
      %s223 = sphi 0, %s209
      %s227 = sphi 0, %s227
      %s229 = sphi 0, %s227
      %s230 = sphi 0, %s229
      %s244 = sphi 0, %s230
      %s248 = sphi 0, %s248
      %s250 = sphi 0, %s248
      %s251 = sphi 0, %s250
      %s265 = sphi 0, %s251
      %s269 = sphi 0, %s269
      %s271 = sphi 0, %s269
      %s272 = sphi 0, %s271
      %s286 = sphi 0, %s272
      %s290 = sphi 0, %s290
      %s292 = sphi 0, %s290
      %s293 = sphi 0, %s292
      %s307 = sphi 0, %s293
      %s311 = sphi 0, %s311
      %s313 = sphi 0, %s311
      %s314 = sphi 0, %s313
      %s328 = sphi 0, %s314
      %s334 = sphi 0, %s336
      %s337 = sphi 0, %s334
      %s338 = sphi 0, %s337
      %s354 = sphi 0, %s338
    $region4: #{lenet_apply.1} parent=1 // loop_header_branch
      %28 = sbr.rel (%p26) target = $region8
    $region5: #{lenet_apply.1} parent=1 // loop_body
      %s30 = ssub.s32 %s25, 1
      %s31 = ssub.s32 %s25, 2
      %s32 = sadd.s32 %s25, 1
      %s33 = ssub.s32 %s25, %s32
      %p34 = scmp.eq.s32.totalorder %s33, 0
      %s36 = sadd.s32 %s35, 1
      %s37 = scalar_select %p34, %s35, %s36
      %p40 = pneg %p34
      %p41 = scmp.eq.s32.totalorder %s25, 1
      %p42 = por %p40, %p41
      %p43 = scmp.ne.s32.totalorder %s35, %s38
      %p44 = scmp.eq.s32.totalorder %s25, 0
      %p45 = por %p43, %p44
      %p46 = scmp.ne.s32.totalorder %s35, %s38
      %p47 = scmp.eq.s32.totalorder %s30, 1
      %p48 = por %p46, %p47
      %p49 = scmp.ne.s32.totalorder %s38, %s39
      %p50 = scmp.eq.s32.totalorder %s30, 0
      %p51 = por %p49, %p50
      %p52 = scmp.ne.s32.totalorder %s38, %s39
      %p53 = scmp.eq.s32.totalorder %s31, 1
      %p54 = por %p52, %p53
      %p56 = scmp.ne.s32.totalorder %s39, %s55
      %p57 = scmp.eq.s32.totalorder %s31, 0
      %p58 = por %p56, %p57
      %s60 = sadd.s32 %s59, 1
      %p63 = scmp.eq.s32.totalorder %s25, 1
      %p64 = scmp.ne.s32.totalorder %s59, %s61
      %p65 = scmp.eq.s32.totalorder %s25, 0
      %p66 = por %p64, %p65
      %p67 = scmp.ne.s32.totalorder %s59, %s61
      %p68 = scmp.eq.s32.totalorder %s30, 1
      %p69 = por %p67, %p68
      %p70 = scmp.ne.s32.totalorder %s61, %s62
      %p71 = scmp.eq.s32.totalorder %s30, 0
      %p72 = por %p70, %p71
      %p73 = scmp.ne.s32.totalorder %s61, %s62
      %p74 = scmp.eq.s32.totalorder %s31, 1
      %p75 = por %p73, %p74
      %p77 = scmp.ne.s32.totalorder %s62, %s76
      %p78 = scmp.eq.s32.totalorder %s31, 0
      %p79 = por %p77, %p78
      %s81 = sadd.s32 %s80, 1
      %p84 = scmp.eq.s32.totalorder %s25, 1
      %p85 = scmp.ne.s32.totalorder %s80, %s82
      %p86 = scmp.eq.s32.totalorder %s25, 0
      %p87 = por %p85, %p86
      %p88 = scmp.ne.s32.totalorder %s80, %s82
      %p89 = scmp.eq.s32.totalorder %s30, 1
      %p90 = por %p88, %p89
      %p91 = scmp.ne.s32.totalorder %s82, %s83
      %p92 = scmp.eq.s32.totalorder %s30, 0
      %p93 = por %p91, %p92
      %p94 = scmp.ne.s32.totalorder %s82, %s83
      %p95 = scmp.eq.s32.totalorder %s31, 1
      %p96 = por %p94, %p95
      %p98 = scmp.ne.s32.totalorder %s83, %s97
      %p99 = scmp.eq.s32.totalorder %s31, 0
      %p100 = por %p98, %p99
      %s102 = sadd.s32 %s101, 1
      %p105 = scmp.eq.s32.totalorder %s25, 1
      %p106 = scmp.ne.s32.totalorder %s101, %s103
      %p107 = scmp.eq.s32.totalorder %s25, 0
      %p108 = por %p106, %p107
      %p109 = scmp.ne.s32.totalorder %s101, %s103
      %p110 = scmp.eq.s32.totalorder %s30, 1
      %p111 = por %p109, %p110
      %p112 = scmp.ne.s32.totalorder %s103, %s104
      %p113 = scmp.eq.s32.totalorder %s30, 0
      %p114 = por %p112, %p113
      %p115 = scmp.ne.s32.totalorder %s103, %s104
      %p116 = scmp.eq.s32.totalorder %s31, 1
      %p117 = por %p115, %p116
      %p119 = scmp.ne.s32.totalorder %s104, %s118
      %p120 = scmp.eq.s32.totalorder %s31, 0
      %p121 = por %p119, %p120
      %s123 = sadd.s32 %s122, 1
      %p126 = scmp.eq.s32.totalorder %s25, 1
      %p127 = scmp.ne.s32.totalorder %s122, %s124
      %p128 = scmp.eq.s32.totalorder %s25, 0
      %p129 = por %p127, %p128
      %p130 = scmp.ne.s32.totalorder %s122, %s124
      %p131 = scmp.eq.s32.totalorder %s30, 1
      %p132 = por %p130, %p131
      %p133 = scmp.ne.s32.totalorder %s124, %s125
      %p134 = scmp.eq.s32.totalorder %s30, 0
      %p135 = por %p133, %p134
      %p136 = scmp.ne.s32.totalorder %s124, %s125
      %p137 = scmp.eq.s32.totalorder %s31, 1
      %p138 = por %p136, %p137
      %p140 = scmp.ne.s32.totalorder %s125, %s139
      %p141 = scmp.eq.s32.totalorder %s31, 0
      %p142 = por %p140, %p141
      %s144 = sadd.s32 %s143, 1
      %p147 = scmp.eq.s32.totalorder %s25, 1
      %p148 = scmp.ne.s32.totalorder %s143, %s145
      %p149 = scmp.eq.s32.totalorder %s25, 0
      %p150 = por %p148, %p149
      %p151 = scmp.ne.s32.totalorder %s143, %s145
      %p152 = scmp.eq.s32.totalorder %s30, 1
      %p153 = por %p151, %p152
      %p154 = scmp.ne.s32.totalorder %s145, %s146
      %p155 = scmp.eq.s32.totalorder %s30, 0
      %p156 = por %p154, %p155
      %p157 = scmp.ne.s32.totalorder %s145, %s146
      %p158 = scmp.eq.s32.totalorder %s31, 1
      %p159 = por %p157, %p158
      %p161 = scmp.ne.s32.totalorder %s146, %s160
      %p162 = scmp.eq.s32.totalorder %s31, 0
      %p163 = por %p161, %p162
      %s165 = sadd.s32 %s164, 1
      %p168 = scmp.eq.s32.totalorder %s25, 1
      %p169 = scmp.ne.s32.totalorder %s164, %s166
      %p170 = scmp.eq.s32.totalorder %s25, 0
      %p171 = por %p169, %p170
      %p172 = scmp.ne.s32.totalorder %s164, %s166
      %p173 = scmp.eq.s32.totalorder %s30, 1
      %p174 = por %p172, %p173
      %p175 = scmp.ne.s32.totalorder %s166, %s167
      %p176 = scmp.eq.s32.totalorder %s30, 0
      %p177 = por %p175, %p176
      %p178 = scmp.ne.s32.totalorder %s166, %s167
      %p179 = scmp.eq.s32.totalorder %s31, 1
      %p180 = por %p178, %p179
      %p182 = scmp.ne.s32.totalorder %s167, %s181
      %p183 = scmp.eq.s32.totalorder %s31, 0
      %p184 = por %p182, %p183
      %s186 = sadd.s32 %s185, 1
      %p189 = scmp.eq.s32.totalorder %s25, 1
      %p190 = scmp.ne.s32.totalorder %s185, %s187
      %p191 = scmp.eq.s32.totalorder %s25, 0
      %p192 = por %p190, %p191
      %p193 = scmp.ne.s32.totalorder %s185, %s187
      %p194 = scmp.eq.s32.totalorder %s30, 1
      %p195 = por %p193, %p194
      %p196 = scmp.ne.s32.totalorder %s187, %s188
      %p197 = scmp.eq.s32.totalorder %s30, 0
      %p198 = por %p196, %p197
      %p199 = scmp.ne.s32.totalorder %s187, %s188
      %p200 = scmp.eq.s32.totalorder %s31, 1
      %p201 = por %p199, %p200
      %p203 = scmp.ne.s32.totalorder %s188, %s202
      %p204 = scmp.eq.s32.totalorder %s31, 0
      %p205 = por %p203, %p204
      %s207 = sadd.s32 %s206, 1
      %p210 = scmp.eq.s32.totalorder %s25, 1
      %p211 = scmp.ne.s32.totalorder %s206, %s208
      %p212 = scmp.eq.s32.totalorder %s25, 0
      %p213 = por %p211, %p212
      %p214 = scmp.ne.s32.totalorder %s206, %s208
      %p215 = scmp.eq.s32.totalorder %s30, 1
      %p216 = por %p214, %p215
      %p217 = scmp.ne.s32.totalorder %s208, %s209
      %p218 = scmp.eq.s32.totalorder %s30, 0
      %p219 = por %p217, %p218
      %p220 = scmp.ne.s32.totalorder %s208, %s209
      %p221 = scmp.eq.s32.totalorder %s31, 1
      %p222 = por %p220, %p221
      %p224 = scmp.ne.s32.totalorder %s209, %s223
      %p225 = scmp.eq.s32.totalorder %s31, 0
      %p226 = por %p224, %p225
      %s228 = sadd.s32 %s227, 1
      %p231 = scmp.eq.s32.totalorder %s25, 1
      %p232 = scmp.ne.s32.totalorder %s227, %s229
      %p233 = scmp.eq.s32.totalorder %s25, 0
      %p234 = por %p232, %p233
      %p235 = scmp.ne.s32.totalorder %s227, %s229
      %p236 = scmp.eq.s32.totalorder %s30, 1
      %p237 = por %p235, %p236
      %p238 = scmp.ne.s32.totalorder %s229, %s230
      %p239 = scmp.eq.s32.totalorder %s30, 0
      %p240 = por %p238, %p239
      %p241 = scmp.ne.s32.totalorder %s229, %s230
      %p242 = scmp.eq.s32.totalorder %s31, 1
      %p243 = por %p241, %p242
      %p245 = scmp.ne.s32.totalorder %s230, %s244
      %p246 = scmp.eq.s32.totalorder %s31, 0
      %p247 = por %p245, %p246
      %s249 = sadd.s32 %s248, 1
      %p252 = scmp.eq.s32.totalorder %s25, 1
      %p253 = scmp.ne.s32.totalorder %s248, %s250
      %p254 = scmp.eq.s32.totalorder %s25, 0
      %p255 = por %p253, %p254
      %p256 = scmp.ne.s32.totalorder %s248, %s250
      %p257 = scmp.eq.s32.totalorder %s30, 1
      %p258 = por %p256, %p257
      %p259 = scmp.ne.s32.totalorder %s250, %s251
      %p260 = scmp.eq.s32.totalorder %s30, 0
      %p261 = por %p259, %p260
      %p262 = scmp.ne.s32.totalorder %s250, %s251
      %p263 = scmp.eq.s32.totalorder %s31, 1
      %p264 = por %p262, %p263
      %p266 = scmp.ne.s32.totalorder %s251, %s265
      %p267 = scmp.eq.s32.totalorder %s31, 0
      %p268 = por %p266, %p267
      %s270 = sadd.s32 %s269, 1
      %p273 = scmp.eq.s32.totalorder %s25, 1
      %p274 = scmp.ne.s32.totalorder %s269, %s271
      %p275 = scmp.eq.s32.totalorder %s25, 0
      %p276 = por %p274, %p275
      %p277 = scmp.ne.s32.totalorder %s269, %s271
      %p278 = scmp.eq.s32.totalorder %s30, 1
      %p279 = por %p277, %p278
      %p280 = scmp.ne.s32.totalorder %s271, %s272
      %p281 = scmp.eq.s32.totalorder %s30, 0
      %p282 = por %p280, %p281
      %p283 = scmp.ne.s32.totalorder %s271, %s272
      %p284 = scmp.eq.s32.totalorder %s31, 1
      %p285 = por %p283, %p284
      %p287 = scmp.ne.s32.totalorder %s272, %s286
      %p288 = scmp.eq.s32.totalorder %s31, 0
      %p289 = por %p287, %p288
      %s291 = sadd.s32 %s290, 1
      %p294 = scmp.eq.s32.totalorder %s25, 1
      %p295 = scmp.ne.s32.totalorder %s290, %s292
      %p296 = scmp.eq.s32.totalorder %s25, 0
      %p297 = por %p295, %p296
      %p298 = scmp.ne.s32.totalorder %s290, %s292
      %p299 = scmp.eq.s32.totalorder %s30, 1
      %p300 = por %p298, %p299
      %p301 = scmp.ne.s32.totalorder %s292, %s293
      %p302 = scmp.eq.s32.totalorder %s30, 0
      %p303 = por %p301, %p302
      %p304 = scmp.ne.s32.totalorder %s292, %s293
      %p305 = scmp.eq.s32.totalorder %s31, 1
      %p306 = por %p304, %p305
      %p308 = scmp.ne.s32.totalorder %s293, %s307
      %p309 = scmp.eq.s32.totalorder %s31, 0
      %p310 = por %p308, %p309
      %s312 = sadd.s32 %s311, 1
      %p315 = scmp.eq.s32.totalorder %s25, 1
      %p316 = scmp.ne.s32.totalorder %s311, %s313
      %p317 = scmp.eq.s32.totalorder %s25, 0
      %p318 = por %p316, %p317
      %p319 = scmp.ne.s32.totalorder %s311, %s313
      %p320 = scmp.eq.s32.totalorder %s30, 1
      %p321 = por %p319, %p320
      %p322 = scmp.ne.s32.totalorder %s313, %s314
      %p323 = scmp.eq.s32.totalorder %s30, 0
      %p324 = por %p322, %p323
      %p325 = scmp.ne.s32.totalorder %s313, %s314
      %p326 = scmp.eq.s32.totalorder %s31, 1
      %p327 = por %p325, %p326
      %p329 = scmp.ne.s32.totalorder %s314, %s328
      %p330 = scmp.eq.s32.totalorder %s31, 0
      %p331 = por %p329, %p330
      %s332 = ssub.s32 %s25, %s32
      %p333 = scmp.eq.s32.totalorder %s332, 0
      %s335 = sadd.s32 %s334, 1
      %s336 = scalar_select %p333, %s334, %s335
      %p339 = pneg %p333
      %p340 = scmp.eq.s32.totalorder %s25, 1
      %p341 = por %p339, %p340
      %p342 = scmp.ne.s32.totalorder %s334, %s337
      %p343 = scmp.eq.s32.totalorder %s25, 0
      %p344 = por %p342, %p343
      %p345 = scmp.ne.s32.totalorder %s334, %s337
      %p346 = scmp.eq.s32.totalorder %s30, 1
      %p347 = por %p345, %p346
      %p348 = scmp.ne.s32.totalorder %s337, %s338
      %p349 = scmp.eq.s32.totalorder %s30, 0
      %p350 = por %p348, %p349
      %p351 = scmp.ne.s32.totalorder %s337, %s338
      %p352 = scmp.eq.s32.totalorder %s31, 1
      %p353 = por %p351, %p352
      %p355 = scmp.ne.s32.totalorder %s338, %s354
      %p356 = scmp.eq.s32.totalorder %s31, 0
      %p357 = por %p355, %p356
      %p358 = scmp.le.s32.totalorder 1, %s25
      %p359 = scmp.lt.s32.totalorder %s25, 3
      %p360 = pnand %p358, %p359
      %p361 = pneg %p360
      // Predicated region
      $region9: #{lenet_apply.1} parent=5 // pred_check
        _
      $region10: #{lenet_apply.1} parent=5 // pred_check_branch
        %363 = sbr.rel (%p360) target = $region12
      $region11: #{lenet_apply.1} parent=5 // pred_region
        %s364 = ssub.s32 %s25, 1
        // Predicated region
        $region13: #{lenet_apply.1} parent=11 // pred_check
          %p365 = pneg %p72
        $region14: #{lenet_apply.1} parent=11 // pred_check_branch
          %367 = sbr.rel (%p365) target = $region16
        $region15: #{lenet_apply.1} parent=11 // pred_region
          _
        $region16: #{lenet_apply.1} parent=11 // pred_fallthru
          _
        // Predicated region
        $region17: #{lenet_apply.1} parent=11 // pred_check
          %p368 = pneg %p93
        $region18: #{lenet_apply.1} parent=11 // pred_check_branch
          %370 = sbr.rel (%p368) target = $region20
        $region19: #{lenet_apply.1} parent=11 // pred_region
          _
        $region20: #{lenet_apply.1} parent=11 // pred_fallthru
          _
        // Predicated region
        $region21: #{lenet_apply.1} parent=11 // pred_check
          %p371 = pneg %p114
        $region22: #{lenet_apply.1} parent=11 // pred_check_branch
          %373 = sbr.rel (%p371) target = $region24
        $region23: #{lenet_apply.1} parent=11 // pred_region
          _
        $region24: #{lenet_apply.1} parent=11 // pred_fallthru
          _
        // Predicated region
        $region25: #{lenet_apply.1} parent=11 // pred_check
          %p374 = pneg %p135
        $region26: #{lenet_apply.1} parent=11 // pred_check_branch
          %376 = sbr.rel (%p374) target = $region28
        $region27: #{lenet_apply.1} parent=11 // pred_region
          _
        $region28: #{lenet_apply.1} parent=11 // pred_fallthru
          _
        // Predicated region
        $region29: #{lenet_apply.1} parent=11 // pred_check
          %p377 = pneg %p156
        $region30: #{lenet_apply.1} parent=11 // pred_check_branch
          %379 = sbr.rel (%p377) target = $region32
        $region31: #{lenet_apply.1} parent=11 // pred_region
          _
        $region32: #{lenet_apply.1} parent=11 // pred_fallthru
          _
        // Predicated region
        $region33: #{lenet_apply.1} parent=11 // pred_check
          %p380 = pneg %p177
        $region34: #{lenet_apply.1} parent=11 // pred_check_branch
          %382 = sbr.rel (%p380) target = $region36
        $region35: #{lenet_apply.1} parent=11 // pred_region
          _
        $region36: #{lenet_apply.1} parent=11 // pred_fallthru
          _
        // Predicated region
        $region37: #{lenet_apply.1} parent=11 // pred_check
          %p383 = pneg %p198
        $region38: #{lenet_apply.1} parent=11 // pred_check_branch
          %385 = sbr.rel (%p383) target = $region40
        $region39: #{lenet_apply.1} parent=11 // pred_region
          %s387 = ssub.s32 1280, 1280
          %388 = vsyncadd [#allocation3], %s387
          %s389 = sshll.u32 [#allocation2], 4
          %s390 = int_to_ptr.vmem [resolvable:$true] %s389
          %395 = dma.hbm_to_vmem [thread:$0]  %s7, 1280, %s390, [#allocation3], 256, 256, 16
        $region40: #{lenet_apply.1} parent=11 // pred_fallthru
          _
        // Predicated region
        $region41: #{lenet_apply.1} parent=11 // pred_check
          %p396 = pneg %p219
        $region42: #{lenet_apply.1} parent=11 // pred_check_branch
          %398 = sbr.rel (%p396) target = $region44
        $region43: #{lenet_apply.1} parent=11 // pred_region
          _
        $region44: #{lenet_apply.1} parent=11 // pred_fallthru
          _
        // Predicated region
        $region45: #{lenet_apply.1} parent=11 // pred_check
          %p399 = pneg %p240
        $region46: #{lenet_apply.1} parent=11 // pred_check_branch
          %401 = sbr.rel (%p399) target = $region48
        $region47: #{lenet_apply.1} parent=11 // pred_region
          _
        $region48: #{lenet_apply.1} parent=11 // pred_fallthru
          _
        // Predicated region
        $region49: #{lenet_apply.1} parent=11 // pred_check
          %p402 = pneg %p261
        $region50: #{lenet_apply.1} parent=11 // pred_check_branch
          %404 = sbr.rel (%p402) target = $region52
        $region51: #{lenet_apply.1} parent=11 // pred_region
          _
        $region52: #{lenet_apply.1} parent=11 // pred_fallthru
          _
        // Predicated region
        $region53: #{lenet_apply.1} parent=11 // pred_check
          %p405 = pneg %p282
        $region54: #{lenet_apply.1} parent=11 // pred_check_branch
          %407 = sbr.rel (%p405) target = $region56
        $region55: #{lenet_apply.1} parent=11 // pred_region
          _
        $region56: #{lenet_apply.1} parent=11 // pred_fallthru
          _
        // Predicated region
        $region57: #{lenet_apply.1} parent=11 // pred_check
          %p408 = pneg %p303
        $region58: #{lenet_apply.1} parent=11 // pred_check_branch
          %410 = sbr.rel (%p408) target = $region60
        $region59: #{lenet_apply.1} parent=11 // pred_region
          %s412 = ssub.s32 2048, 2048
          %413 = vsyncadd [#allocation6], %s412
          %s414 = sshll.u32 [#allocation5], 4
          %s415 = int_to_ptr.vmem [resolvable:$true] %s414
          %420 = dma.hbm_to_vmem [thread:$0]  %s12, 2048, %s415, [#allocation6], 128, 128, 8
        $region60: #{lenet_apply.1} parent=11 // pred_fallthru
          _
        // Predicated region
        $region61: #{lenet_apply.1} parent=11 // pred_check
          %p421 = pneg %p324
        $region62: #{lenet_apply.1} parent=11 // pred_check_branch
          %423 = sbr.rel (%p421) target = $region64
        $region63: #{lenet_apply.1} parent=11 // pred_region
          _
        $region64: #{lenet_apply.1} parent=11 // pred_fallthru
          _
      $region12: #{lenet_apply.1} parent=5 // pred_fallthru
        _
      %p424 = scmp.lt.s32.totalorder %s25, 2
      // Predicated region
      $region65: #{lenet_apply.1} parent=5 // pred_check
        %p425 = pneg %p424
      $region66: #{lenet_apply.1} parent=5 // pred_check_branch
        %427 = sbr.rel (%p425) target = $region68
      $region67: #{lenet_apply.1} parent=5 // pred_region
        // Predicated region
        $region69: #{lenet_apply.1} parent=67 // pred_check
          %p428 = pneg %p45
        $region70: #{lenet_apply.1} parent=67 // pred_check_branch
          %430 = sbr.rel (%p428) target = $region72
        $region71: #{lenet_apply.1} parent=67 // pred_region
          %s431 = smul.u32 32, %s25
          %p432 = scmp.lt.s32.totalorder %s431, 63
          %s433 = scalar_select %p432, %s431, 63
          %s434 = smul.addr %s433, 8
          %s435 = scalar_lea.vmem %s0, %s434
          %s436 = smul.u32 32, %s25
        $region72: #{lenet_apply.1} parent=67 // pred_fallthru
          _
      $region68: #{lenet_apply.1} parent=5 // pred_fallthru
        _
      %p437 = scmp.le.s32.totalorder 1, %s25
      %p438 = scmp.lt.s32.totalorder %s25, 3
      %p439 = pnand %p437, %p438
      %p440 = pneg %p439
      // Predicated region
      $region73: #{lenet_apply.1} parent=5 // pred_check
        _
      $region74: #{lenet_apply.1} parent=5 // pred_check_branch
        %442 = sbr.rel (%p439) target = $region76
      $region75: #{lenet_apply.1} parent=5 // pred_region
        %s443 = ssub.s32 %s25, 1
        // Predicated region
        $region77: #{lenet_apply.1} parent=75 // pred_check
          %p444 = pneg %p198
        $region78: #{lenet_apply.1} parent=75 // pred_check_branch
          %446 = sbr.rel (%p444) target = $region80
        $region79: #{lenet_apply.1} parent=75 // pred_region
          %447 = dma.done [#allocation3], 1280
        $region80: #{lenet_apply.1} parent=75 // pred_fallthru
          _
        // Predicated region
        $region81: #{lenet_apply.1} parent=75 // pred_check
          %p448 = pneg %p303
        $region82: #{lenet_apply.1} parent=75 // pred_check_branch
          %450 = sbr.rel (%p448) target = $region84
        $region83: #{lenet_apply.1} parent=75 // pred_region
          %451 = dma.done [#allocation6], 2048
        $region84: #{lenet_apply.1} parent=75 // pred_fallthru
          _
        %s452 = smul.u32 32, %s30
        %p453 = scmp.lt.s32.totalorder %s452, 63
        %s454 = scalar_select %p453, %s452, 63
        %s455 = smul.addr %s454, 8
        %s456 = scalar_lea.vmem %s0, %s455
        %p457 = pneg %p51
        %p458 = pneg %p48
        %p459 = pneg %p72
        %p460 = pneg %p69
        %p461 = pneg %p93
        %p462 = pneg %p90
        %p463 = pneg %p114
        %p464 = pneg %p111
        %p465 = pneg %p135
        %p466 = pneg %p132
        %p467 = pneg %p156
        %p468 = pneg %p153
        %p469 = pneg %p177
        %p470 = pneg %p174
        %p471 = pneg %p198
        %p472 = pneg %p195
        %p473 = pneg %p219
        %p474 = pneg %p216
        %p475 = pneg %p240
        %p476 = pneg %p237
        %p477 = pneg %p261
        %p478 = pneg %p258
        %p479 = pneg %p282
        %p480 = pneg %p279
        %p481 = pneg %p303
        %p482 = pneg %p300
        %p483 = pneg %p324
        %p484 = pneg %p321
        %p485 = pneg %p350
        %p486 = pneg %p347
        %s487 = sand.u32 %s337, 1
        %s488 = scalar_lea.sflag [#allocation4], %s487
        %s489 = sand.u32 %s337, 1
        %s490 = smul.addr %s489, 8
        %s491 = scalar_lea.vmem [#allocation7], %s490
        %s492 = smul.u32 32, %s30
        %p493 = scmp.lt.s32.totalorder %s492, 63
        %s494 = scalar_select %p493, %s492, 63
        %s495 = smul.addr %s494, 8
        %s496 = scalar_lea.vmem %s0, %s495
        %s497 = smul.u32 32, %s30
        %v498 = vld [vmem:[%s496] sm:$0xff]
        %v499 = vld [vmem:[%s496 + $0x8] sm:$0xff]
        %v500 = vld [vmem:[%s496 + $0x10] sm:$0xff]
        %v501 = vld [vmem:[%s496 + $0x18] sm:$0xff]
        %v502 = vld [vmem:[%s496 + $0x20] sm:$0xff]
        %v503 = vld [vmem:[%s496 + $0x28] sm:$0xff]
        %v504 = vld [vmem:[%s496 + $0x30] sm:$0xff]
        %v505 = vld [vmem:[%s496 + $0x38] sm:$0xff]
        %v506 = vld [vmem:[%s496 + $0x40] sm:$0xff]
        %v507 = vld [vmem:[%s496 + $0x48] sm:$0xff]
        %v508 = vld [vmem:[%s496 + $0x50] sm:$0xff]
        %v509 = vld [vmem:[%s496 + $0x58] sm:$0xff]
        %v510 = vld [vmem:[%s496 + $0x60] sm:$0xff]
        %v511 = vld [vmem:[%s496 + $0x68] sm:$0xff]
        %v512 = vld [vmem:[%s496 + $0x70] sm:$0xff]
        %v513 = vld [vmem:[%s496 + $0x78] sm:$0xff]
        %v514 = vld [vmem:[%s496 + $0x80] sm:$0xff]
        %v515 = vld [vmem:[%s496 + $0x88] sm:$0xff]
        %v516 = vld [vmem:[%s496 + $0x90] sm:$0xff]
        %v517 = vld [vmem:[%s496 + $0x98] sm:$0xff]
        %v518 = vld [vmem:[%s496 + $0xa0] sm:$0xff]
        %v519 = vld [vmem:[%s496 + $0xa8] sm:$0xff]
        %v520 = vld [vmem:[%s496 + $0xb0] sm:$0xff]
        %v521 = vld [vmem:[%s496 + $0xb8] sm:$0xff]
        %v522 = vld [vmem:[%s496 + $0xc0] sm:$0xff]
        %v523 = vld [vmem:[%s496 + $0xc8] sm:$0xff]
        %v524 = vld [vmem:[%s496 + $0xd0] sm:$0xff]
        %v525 = vld [vmem:[%s496 + $0xd8] sm:$0xff]
        %v526 = vld [vmem:[%s496 + $0xe0] sm:$0xff]
        %v527 = vld [vmem:[%s496 + $0xe8] sm:$0xff]
        %v528 = vld [vmem:[%s496 + $0xf0] sm:$0xff]
        %v529 = vld [vmem:[%s496 + $0xf8] sm:$0xff]
        %v530 = vld [vmem:[%s1] sm:$0xff]
        %v531 = vld [vmem:[%s1 + $0x8] sm:$0xff]
        %v532 = vld [vmem:[%s1 + $0x10] sm:$0xff]
        %v533 = vld [vmem:[%s1 + $0x18] sm:$0xff]
        %v534 = vld [vmem:[%s1 + $0x20] sm:$0xff]
        %v535 = vld [vmem:[%s1 + $0x28] sm:$0xff]
        %v536 = vld [vmem:[%s1 + $0x30] sm:$0xff]
        %v537 = vld [vmem:[%s1 + $0x38] sm:$0xff]
        %s538 = scalar_lea.vmem %s1, 64
        %v539 = vld [vmem:[%s538] sm:$0xff]
        %v540 = vld [vmem:[%s538 + $0x8] sm:$0xff]
        %v541 = vld [vmem:[%s538 + $0x10] sm:$0xff]
        %v542 = vld [vmem:[%s538 + $0x18] sm:$0xff]
        %v543 = vld [vmem:[%s538 + $0x20] sm:$0xff]
        %v544 = vld [vmem:[%s538 + $0x28] sm:$0xff]
        %v545 = vld [vmem:[%s538 + $0x30] sm:$0xff]
        %v546 = vld [vmem:[%s538 + $0x38] sm:$0xff]
        %vm579 = vcmask 1046528
        %v580 = vrot.slane %v498, 1
        %v581 = vrot.slane %v499, 1
        %v582 = vsel %vm579, %v580, %v581
        %v583 = vrot.slane %v500, 1
        %v584 = vsel %vm579, %v581, %v583
        %v585 = vrot.slane %v501, 1
        %v586 = vsel %vm579, %v583, %v585
        %v587 = vrot.slane %v502, 1
        %v588 = vsel %vm579, %v585, %v587
        %v589 = vrot.slane %v503, 1
        %v590 = vsel %vm579, %v587, %v589
        %v591 = vrot.slane %v504, 1
        %v592 = vsel %vm579, %v589, %v591
        %v593 = vrot.slane %v505, 1
        %v594 = vsel %vm579, %v591, %v593
        %v595 = vrot.slane %v506, 1
        %v596 = vsel %vm579, %v593, %v595
        %v597 = vrot.slane %v507, 1
        %v598 = vsel %vm579, %v595, %v597
        %v599 = vrot.slane %v508, 1
        %v600 = vsel %vm579, %v597, %v599
        %v601 = vrot.slane %v509, 1
        %v602 = vsel %vm579, %v599, %v601
        %v603 = vrot.slane %v510, 1
        %v604 = vsel %vm579, %v601, %v603
        %v605 = vrot.slane %v511, 1
        %v606 = vsel %vm579, %v603, %v605
        %v607 = vrot.slane %v512, 1
        %v608 = vsel %vm579, %v605, %v607
        %v609 = vrot.slane %v513, 1
        %v610 = vsel %vm579, %v607, %v609
        %v611 = vrot.slane %v514, 1
        %v612 = vsel %vm579, %v609, %v611
        %v613 = vrot.slane %v515, 1
        %v614 = vsel %vm579, %v611, %v613
        %v615 = vrot.slane %v516, 1
        %v616 = vsel %vm579, %v613, %v615
        %v617 = vrot.slane %v517, 1
        %v618 = vsel %vm579, %v615, %v617
        %v619 = vrot.slane %v518, 1
        %v620 = vsel %vm579, %v617, %v619
        %v621 = vrot.slane %v519, 1
        %v622 = vsel %vm579, %v619, %v621
        %v623 = vrot.slane %v520, 1
        %v624 = vsel %vm579, %v621, %v623
        %v625 = vrot.slane %v521, 1
        %v626 = vsel %vm579, %v623, %v625
        %v627 = vrot.slane %v522, 1
        %v628 = vsel %vm579, %v625, %v627
        %v629 = vrot.slane %v523, 1
        %v630 = vsel %vm579, %v627, %v629
        %v631 = vrot.slane %v524, 1
        %v632 = vsel %vm579, %v629, %v631
        %v633 = vrot.slane %v525, 1
        %v634 = vsel %vm579, %v631, %v633
        %v635 = vrot.slane %v526, 1
        %v636 = vsel %vm579, %v633, %v635
        %v637 = vrot.slane %v527, 1
        %v638 = vsel %vm579, %v635, %v637
        %v639 = vrot.slane %v528, 1
        %v640 = vsel %vm579, %v637, %v639
        %v641 = vrot.slane %v529, 1
        %v642 = vsel %vm579, %v639, %v641
        %vm643 = vcmask 261120
        %v644 = vsel %vm643, %v582, 0
        %v646 = vsel %vm643, %v584, 0
        %v648 = vsel %vm643, %v586, 0
        %v650 = vsel %vm643, %v588, 0
        %v652 = vsel %vm643, %v590, 0
        %v654 = vsel %vm643, %v592, 0
        %v656 = vsel %vm643, %v594, 0
        %v658 = vsel %vm643, %v596, 0
        %v660 = vsel %vm643, %v598, 0
        %v662 = vsel %vm643, %v600, 0
        %v664 = vsel %vm643, %v602, 0
        %v666 = vsel %vm643, %v604, 0
        %v668 = vsel %vm643, %v606, 0
        %v670 = vsel %vm643, %v608, 0
        %v672 = vsel %vm643, %v610, 0
        %v674 = vsel %vm643, %v612, 0
        %v676 = vsel %vm643, %v614, 0
        %v678 = vsel %vm643, %v616, 0
        %v680 = vsel %vm643, %v618, 0
        %v682 = vsel %vm643, %v620, 0
        %v684 = vsel %vm643, %v622, 0
        %v686 = vsel %vm643, %v624, 0
        %v688 = vsel %vm643, %v626, 0
        %v690 = vsel %vm643, %v628, 0
        %v692 = vsel %vm643, %v630, 0
        %v694 = vsel %vm643, %v632, 0
        %v696 = vsel %vm643, %v634, 0
        %v698 = vsel %vm643, %v636, 0
        %v700 = vsel %vm643, %v638, 0
        %v702 = vsel %vm643, %v640, 0
        %v704 = vsel %vm643, %v642, 0
        %v706 = vsel %vm643, %v641, 0
        %708 = vmatprep.subr.mxu0 %v540
        %709 = vmatpush1.msra.mxu0 %v539
        %710 = vmatprep.subr.mxu0 %v542
        %711 = vmatpush1.msra.mxu0 %v541
        %712 = vmatprep.subr.mxu0 %v544
        %713 = vmatpush1.msra.mxu0 %v543
        %714 = vmatprep.subr.mxu0 %v546
        %715 = vmatpush1.msra.mxu0 %v545
        %716 = vmatprep.subr.mxu0 0.0
        %717 = vmatpush1.msra.mxu0 0.0
        %718 = vmatprep.subr.mxu0 0.0
        %719 = vmatpush1.msra.mxu0 0.0
        %720 = vmatprep.subr.mxu0 0.0
        %721 = vmatpush1.msra.mxu0 0.0
        %722 = vmatprep.subr.mxu0 0.0
        %723 = vmatpush1.msra.mxu0 0.0
        %724 = vmatprep.subr.mxu0 0.0
        %725 = vmatpush1.msra.mxu0 0.0
        %726 = vmatprep.subr.mxu0 0.0
        %727 = vmatpush1.msra.mxu0 0.0
        %728 = vmatprep.subr.mxu0 0.0
        %729 = vmatpush1.msra.mxu0 0.0
        %730 = vmatprep.subr.mxu0 0.0
        %731 = vmatpush1.msra.mxu0 0.0
        %732 = vmatprep.subr.mxu0 0.0
        %733 = vmatpush1.msra.mxu0 0.0
        %734 = vmatprep.subr.mxu0 0.0
        %735 = vmatpush1.msra.mxu0 0.0
        %736 = vmatprep.subr.mxu0 0.0
        %737 = vmatpush1.msra.mxu0 0.0
        %738 = vmatprep.subr.mxu0 0.0
        %739 = vmatpush1.msra.mxu0 0.0
        %740 = vmatprep.subr.mxu0 0.0
        %741 = vmatpush1.msra.mxu0 0.0
        %742 = vmatprep.subr.mxu0 0.0
        %743 = vmatpush1.msra.mxu0 0.0
        %744 = vmatprep.subr.mxu0 0.0
        %745 = vmatpush1.msra.mxu0 0.0
        %746 = vmatprep.subr.mxu0 0.0
        %747 = vmatpush1.msra.mxu0 0.0
        %748 = vmatprep.subr.mxu0 0.0
        %749 = vmatpush1.msra.mxu0 0.0
        %750 = vmatprep.subr.mxu0 0.0
        %751 = vmatpush1.msra.mxu0 0.0
        %752 = vmatprep.subr.mxu0 0.0
        %753 = vmatpush1.msra.mxu0 0.0
        %754 = vmatprep.subr.mxu0 0.0
        %755 = vmatpush1.msra.mxu0 0.0
        %756 = vmatprep.subr.mxu0 0.0
        %757 = vmatpush1.msra.mxu0 0.0
        %758 = vmatprep.subr.mxu0 0.0
        %759 = vmatpush1.msra.mxu0 0.0
        %760 = vmatprep.subr.mxu0 0.0
        %761 = vmatpush1.msra.mxu0 0.0
        %762 = vmatprep.subr.mxu0 0.0
        %763 = vmatpush1.msra.mxu0 0.0
        %764 = vmatprep.subr.mxu0 0.0
        %765 = vmatpush1.msra.mxu0 0.0
        %766 = vmatprep.subr.mxu0 0.0
        %767 = vmatpush1.msra.mxu0 0.0
        %768 = vmatprep.subr.mxu0 0.0
        %769 = vmatpush1.msra.mxu0 0.0
        %770 = vmatprep.subr.mxu0 0.0
        %771 = vmatpush1.msra.mxu0 0.0
        %772 = vmatprep.mubr.f32.mxu0 0.0
        %773 = vmatmul.mubr.f32.gmra.mrb[0].mxu0 %v644
        %v774 = vpop.f32.mrb[0].mxu0
        %v775 = vadd.f32 0.0, %v774
        %v776 = vpop.f32.mrb[0].mxu0
        %v777 = vadd.f32 0.0, %v776
        %778 = vmatprep.mubr.f32.mxu0 0.0
        %779 = vmatmul.mubr.f32.gmra.mrb[0].mxu0 %v646
        %v780 = vpop.f32.mrb[0].mxu0
        %v781 = vadd.f32 0.0, %v780
        %v782 = vpop.f32.mrb[0].mxu0
        %v783 = vadd.f32 0.0, %v782
        %784 = vmatprep.mubr.f32.mxu0 0.0
        %785 = vmatmul.mubr.f32.gmra.mrb[0].mxu0 %v648
        %v786 = vpop.f32.mrb[0].mxu0
        %v787 = vadd.f32 0.0, %v786
        %v788 = vpop.f32.mrb[0].mxu0
        %v789 = vadd.f32 0.0, %v788
        %790 = vmatprep.mubr.f32.mxu0 0.0
        %791 = vmatmul.mubr.f32.gmra.mrb[0].mxu0 %v650
        %v792 = vpop.f32.mrb[0].mxu0
        %v793 = vadd.f32 0.0, %v792
        %v794 = vpop.f32.mrb[0].mxu0
        %v795 = vadd.f32 0.0, %v794
        %796 = vmatprep.mubr.f32.mxu0 0.0
        %797 = vmatmul.mubr.f32.gmra.mrb[0].mxu0 %v652
        %v798 = vpop.f32.mrb[0].mxu0
        %v799 = vadd.f32 0.0, %v798
        %v800 = vpop.f32.mrb[0].mxu0
        %v801 = vadd.f32 0.0, %v800
        %802 = vmatprep.mubr.f32.mxu0 0.0
        %803 = vmatmul.mubr.f32.gmra.mrb[0].mxu0 %v654
        %v804 = vpop.f32.mrb[0].mxu0
        %v805 = vadd.f32 0.0, %v804
        %v806 = vpop.f32.mrb[0].mxu0
        %v807 = vadd.f32 0.0, %v806
        %808 = vmatprep.mubr.f32.mxu0 0.0
        %809 = vmatmul.mubr.f32.gmra.mrb[0].mxu0 %v656
        %v810 = vpop.f32.mrb[0].mxu0
        %v811 = vadd.f32 0.0, %v810
        %v812 = vpop.f32.mrb[0].mxu0
        %v813 = vadd.f32 0.0, %v812
        %814 = vmatprep.mubr.f32.mxu0 0.0
        %815 = vmatmul.mubr.f32.gmra.mrb[0].mxu0 %v658
        %v816 = vpop.f32.mrb[0].mxu0
        %v817 = vadd.f32 0.0, %v816
        %v818 = vpop.f32.mrb[0].mxu0
        %v819 = vadd.f32 0.0, %v818
        %820 = vmatprep.mubr.f32.mxu0 0.0
        %821 = vmatmul.mubr.f32.gmra.mrb[0].mxu0 %v660
        %v822 = vpop.f32.mrb[0].mxu0
        %v823 = vadd.f32 0.0, %v822
        %v824 = vpop.f32.mrb[0].mxu0
        %v825 = vadd.f32 0.0, %v824
        %826 = vmatprep.mubr.f32.mxu0 0.0
        %827 = vmatmul.mubr.f32.gmra.mrb[0].mxu0 %v662
        %v828 = vpop.f32.mrb[0].mxu0
        %v829 = vadd.f32 0.0, %v828
        %v830 = vpop.f32.mrb[0].mxu0
        %v831 = vadd.f32 0.0, %v830
        %832 = vmatprep.mubr.f32.mxu0 0.0
        %833 = vmatmul.mubr.f32.gmra.mrb[0].mxu0 %v664
        %v834 = vpop.f32.mrb[0].mxu0
        %v835 = vadd.f32 0.0, %v834
        %v836 = vpop.f32.mrb[0].mxu0
        %v837 = vadd.f32 0.0, %v836
        %838 = vmatprep.mubr.f32.mxu0 0.0
        %839 = vmatmul.mubr.f32.gmra.mrb[0].mxu0 %v666
        %v840 = vpop.f32.mrb[0].mxu0
        %v841 = vadd.f32 0.0, %v840
        %v842 = vpop.f32.mrb[0].mxu0
        %v843 = vadd.f32 0.0, %v842
        %844 = vmatprep.mubr.f32.mxu0 0.0
        %845 = vmatmul.mubr.f32.gmra.mrb[0].mxu0 %v668
        %v846 = vpop.f32.mrb[0].mxu0
        %v847 = vadd.f32 0.0, %v846
        %v848 = vpop.f32.mrb[0].mxu0
        %v849 = vadd.f32 0.0, %v848
        %850 = vmatprep.mubr.f32.mxu0 0.0
        %851 = vmatmul.mubr.f32.gmra.mrb[0].mxu0 %v670
        %v852 = vpop.f32.mrb[0].mxu0
        %v853 = vadd.f32 0.0, %v852
        %v854 = vpop.f32.mrb[0].mxu0
        %v855 = vadd.f32 0.0, %v854
        %856 = vmatprep.mubr.f32.mxu0 0.0
        %857 = vmatmul.mubr.f32.gmra.mrb[0].mxu0 %v672
        %v858 = vpop.f32.mrb[0].mxu0
        %v859 = vadd.f32 0.0, %v858
        %v860 = vpop.f32.mrb[0].mxu0
        %v861 = vadd.f32 0.0, %v860
        %862 = vmatprep.mubr.f32.mxu0 0.0
        %863 = vmatmul.mubr.f32.gmra.mrb[0].mxu0 %v674
        %v864 = vpop.f32.mrb[0].mxu0
        %v865 = vadd.f32 0.0, %v864
        %v866 = vpop.f32.mrb[0].mxu0
        %v867 = vadd.f32 0.0, %v866
        %868 = vmatprep.mubr.f32.mxu0 0.0
        %869 = vmatmul.mubr.f32.gmra.mrb[0].mxu0 %v676
        %v870 = vpop.f32.mrb[0].mxu0
        %v871 = vadd.f32 0.0, %v870
        %v872 = vpop.f32.mrb[0].mxu0
        %v873 = vadd.f32 0.0, %v872
        %874 = vmatprep.mubr.f32.mxu0 0.0
        %875 = vmatmul.mubr.f32.gmra.mrb[0].mxu0 %v678
        %v876 = vpop.f32.mrb[0].mxu0
        %v877 = vadd.f32 0.0, %v876
        %v878 = vpop.f32.mrb[0].mxu0
        %v879 = vadd.f32 0.0, %v878
        %880 = vmatprep.mubr.f32.mxu0 0.0
        %881 = vmatmul.mubr.f32.gmra.mrb[0].mxu0 %v680
        %v882 = vpop.f32.mrb[0].mxu0
        %v883 = vadd.f32 0.0, %v882
        %v884 = vpop.f32.mrb[0].mxu0
        %v885 = vadd.f32 0.0, %v884
        %886 = vmatprep.mubr.f32.mxu0 0.0
        %887 = vmatmul.mubr.f32.gmra.mrb[0].mxu0 %v682
        %v888 = vpop.f32.mrb[0].mxu0
        %v889 = vadd.f32 0.0, %v888
        %v890 = vpop.f32.mrb[0].mxu0
        %v891 = vadd.f32 0.0, %v890
        %892 = vmatprep.mubr.f32.mxu0 0.0
        %893 = vmatmul.mubr.f32.gmra.mrb[0].mxu0 %v684
        %v894 = vpop.f32.mrb[0].mxu0
        %v895 = vadd.f32 0.0, %v894
        %v896 = vpop.f32.mrb[0].mxu0
        %v897 = vadd.f32 0.0, %v896
        %898 = vmatprep.mubr.f32.mxu0 0.0
        %899 = vmatmul.mubr.f32.gmra.mrb[0].mxu0 %v686
        %v900 = vpop.f32.mrb[0].mxu0
        %v901 = vadd.f32 0.0, %v900
        %v902 = vpop.f32.mrb[0].mxu0
        %v903 = vadd.f32 0.0, %v902
        %904 = vmatprep.mubr.f32.mxu0 0.0
        %905 = vmatmul.mubr.f32.gmra.mrb[0].mxu0 %v688
        %v906 = vpop.f32.mrb[0].mxu0
        %v907 = vadd.f32 0.0, %v906
        %v908 = vpop.f32.mrb[0].mxu0
        %v909 = vadd.f32 0.0, %v908
        %910 = vmatprep.mubr.f32.mxu0 0.0
        %911 = vmatmul.mubr.f32.gmra.mrb[0].mxu0 %v690
        %v912 = vpop.f32.mrb[0].mxu0
        %v913 = vadd.f32 0.0, %v912
        %v914 = vpop.f32.mrb[0].mxu0
        %v915 = vadd.f32 0.0, %v914
        %916 = vmatprep.mubr.f32.mxu0 0.0
        %917 = vmatmul.mubr.f32.gmra.mrb[0].mxu0 %v692
        %v918 = vpop.f32.mrb[0].mxu0
        %v919 = vadd.f32 0.0, %v918
        %v920 = vpop.f32.mrb[0].mxu0
        %v921 = vadd.f32 0.0, %v920
        %922 = vmatprep.mubr.f32.mxu0 0.0
        %923 = vmatmul.mubr.f32.gmra.mrb[0].mxu0 %v694
        %v924 = vpop.f32.mrb[0].mxu0
        %v925 = vadd.f32 0.0, %v924
        %v926 = vpop.f32.mrb[0].mxu0
        %v927 = vadd.f32 0.0, %v926
        %928 = vmatprep.mubr.f32.mxu0 0.0
        %929 = vmatmul.mubr.f32.gmra.mrb[0].mxu0 %v696
        %v930 = vpop.f32.mrb[0].mxu0
        %v931 = vadd.f32 0.0, %v930
        %v932 = vpop.f32.mrb[0].mxu0
        %v933 = vadd.f32 0.0, %v932
        %934 = vmatprep.mubr.f32.mxu0 0.0
        %935 = vmatmul.mubr.f32.gmra.mrb[0].mxu0 %v698
        %v936 = vpop.f32.mrb[0].mxu0
        %v937 = vadd.f32 0.0, %v936
        %v938 = vpop.f32.mrb[0].mxu0
        %v939 = vadd.f32 0.0, %v938
        %940 = vmatprep.mubr.f32.mxu0 0.0
        %941 = vmatmul.mubr.f32.gmra.mrb[0].mxu0 %v700
        %v942 = vpop.f32.mrb[0].mxu0
        %v943 = vadd.f32 0.0, %v942
        %v944 = vpop.f32.mrb[0].mxu0
        %v945 = vadd.f32 0.0, %v944
        %946 = vmatprep.mubr.f32.mxu0 0.0
        %947 = vmatmul.mubr.f32.gmra.mrb[0].mxu0 %v702
        %v948 = vpop.f32.mrb[0].mxu0
        %v949 = vadd.f32 0.0, %v948
        %v950 = vpop.f32.mrb[0].mxu0
        %v951 = vadd.f32 0.0, %v950
        %952 = vmatprep.mubr.f32.mxu0 0.0
        %953 = vmatmul.mubr.f32.gmra.mrb[0].mxu0 %v704
        %v954 = vpop.f32.mrb[0].mxu0
        %v955 = vadd.f32 0.0, %v954
        %v956 = vpop.f32.mrb[0].mxu0
        %v957 = vadd.f32 0.0, %v956
        %958 = vmatprep.mubr.f32.mxu0 0.0
        %959 = vmatmul.mubr.f32.gmra.mrb[0].mxu0 %v706
        %v960 = vpop.f32.mrb[0].mxu0
        %v961 = vadd.f32 0.0, %v960
        %v962 = vpop.f32.mrb[0].mxu0
        %v963 = vadd.f32 0.0, %v962
        %964 = vdwg.mxu0
        %v965 = vsel %vm643, %v498, 0
        %v967 = vsel %vm643, %v499, 0
        %v969 = vsel %vm643, %v500, 0
        %v971 = vsel %vm643, %v501, 0
        %v973 = vsel %vm643, %v502, 0
        %v975 = vsel %vm643, %v503, 0
        %v977 = vsel %vm643, %v504, 0
        %v979 = vsel %vm643, %v505, 0
        %v981 = vsel %vm643, %v506, 0
        %v983 = vsel %vm643, %v507, 0
        %v985 = vsel %vm643, %v508, 0
        %v987 = vsel %vm643, %v509, 0
        %v989 = vsel %vm643, %v510, 0
        %v991 = vsel %vm643, %v511, 0
        %v993 = vsel %vm643, %v512, 0
        %v995 = vsel %vm643, %v513, 0
        %v997 = vsel %vm643, %v514, 0
        %v999 = vsel %vm643, %v515, 0
        %v1001 = vsel %vm643, %v516, 0
        %v1003 = vsel %vm643, %v517, 0
        %v1005 = vsel %vm643, %v518, 0
        %v1007 = vsel %vm643, %v519, 0
        %v1009 = vsel %vm643, %v520, 0
        %v1011 = vsel %vm643, %v521, 0
        %v1013 = vsel %vm643, %v522, 0
        %v1015 = vsel %vm643, %v523, 0
        %v1017 = vsel %vm643, %v524, 0
        %v1019 = vsel %vm643, %v525, 0
        %v1021 = vsel %vm643, %v526, 0
        %v1023 = vsel %vm643, %v527, 0
        %v1025 = vsel %vm643, %v528, 0
        %v1027 = vsel %vm643, %v529, 0
        %1029 = vmatprep.subr.mxu0 %v531
        %1030 = vmatpush1.msra.mxu0 %v530
        %1031 = vmatprep.subr.mxu0 %v533
        %1032 = vmatpush1.msra.mxu0 %v532
        %1033 = vmatprep.subr.mxu0 %v535
        %1034 = vmatpush1.msra.mxu0 %v534
        %1035 = vmatprep.subr.mxu0 %v537
        %1036 = vmatpush1.msra.mxu0 %v536
        %1037 = vmatprep.subr.mxu0 0.0
        %1038 = vmatpush1.msra.mxu0 0.0
        %1039 = vmatprep.subr.mxu0 0.0
        %1040 = vmatpush1.msra.mxu0 0.0
        %1041 = vmatprep.subr.mxu0 0.0
        %1042 = vmatpush1.msra.mxu0 0.0
        %1043 = vmatprep.subr.mxu0 0.0
        %1044 = vmatpush1.msra.mxu0 0.0
        %1045 = vmatprep.subr.mxu0 0.0
        %1046 = vmatpush1.msra.mxu0 0.0
        %1047 = vmatprep.subr.mxu0 0.0
        %1048 = vmatpush1.msra.mxu0 0.0
        %1049 = vmatprep.subr.mxu0 0.0
        %1050 = vmatpush1.msra.mxu0 0.0
        %1051 = vmatprep.subr.mxu0 0.0
        %1052 = vmatpush1.msra.mxu0 0.0
        %1053 = vmatprep.subr.mxu0 0.0
        %1054 = vmatpush1.msra.mxu0 0.0
        %1055 = vmatprep.subr.mxu0 0.0
        %1056 = vmatpush1.msra.mxu0 0.0
        %1057 = vmatprep.subr.mxu0 0.0
        %1058 = vmatpush1.msra.mxu0 0.0
        %1059 = vmatprep.subr.mxu0 0.0
        %1060 = vmatpush1.msra.mxu0 0.0
        %1061 = vmatprep.subr.mxu0 0.0
        %1062 = vmatpush1.msra.mxu0 0.0
        %1063 = vmatprep.subr.mxu0 0.0
        %1064 = vmatpush1.msra.mxu0 0.0
        %1065 = vmatprep.subr.mxu0 0.0
        %1066 = vmatpush1.msra.mxu0 0.0
        %1067 = vmatprep.subr.mxu0 0.0
        %1068 = vmatpush1.msra.mxu0 0.0
        %1069 = vmatprep.subr.mxu0 0.0
        %1070 = vmatpush1.msra.mxu0 0.0
        %1071 = vmatprep.subr.mxu0 0.0
        %1072 = vmatpush1.msra.mxu0 0.0
        %1073 = vmatprep.subr.mxu0 0.0
        %1074 = vmatpush1.msra.mxu0 0.0
        %1075 = vmatprep.subr.mxu0 0.0
        %1076 = vmatpush1.msra.mxu0 0.0
        %1077 = vmatprep.subr.mxu0 0.0
        %1078 = vmatpush1.msra.mxu0 0.0
        %1079 = vmatprep.subr.mxu0 0.0
        %1080 = vmatpush1.msra.mxu0 0.0
        %1081 = vmatprep.subr.mxu0 0.0
        %1082 = vmatpush1.msra.mxu0 0.0
        %1083 = vmatprep.subr.mxu0 0.0
        %1084 = vmatpush1.msra.mxu0 0.0
        %1085 = vmatprep.subr.mxu0 0.0
        %1086 = vmatpush1.msra.mxu0 0.0
        %1087 = vmatprep.subr.mxu0 0.0
        %1088 = vmatpush1.msra.mxu0 0.0
        %1089 = vmatprep.subr.mxu0 0.0
        %1090 = vmatpush1.msra.mxu0 0.0
        %1091 = vmatprep.subr.mxu0 0.0
        %1092 = vmatpush1.msra.mxu0 0.0
        %1093 = vmatprep.mubr.f32.mxu0 0.0
        %1094 = vmatmul.mubr.f32.gmra.mrb[0].mxu0 %v965
        %v1095 = vpop.f32.mrb[0].mxu0
        %v1096 = vadd.f32 %v775, %v1095
        %v1097 = vpop.f32.mrb[0].mxu0
        %v1098 = vadd.f32 %v777, %v1097
        %1099 = vmatprep.mubr.f32.mxu0 0.0
        %1100 = vmatmul.mubr.f32.gmra.mrb[0].mxu0 %v967
        %v1101 = vpop.f32.mrb[0].mxu0
        %v1102 = vadd.f32 %v781, %v1101
        %v1103 = vpop.f32.mrb[0].mxu0
        %v1104 = vadd.f32 %v783, %v1103
        %1105 = vmatprep.mubr.f32.mxu0 0.0
        %1106 = vmatmul.mubr.f32.gmra.mrb[0].mxu0 %v969
        %v1107 = vpop.f32.mrb[0].mxu0
        %v1108 = vadd.f32 %v787, %v1107
        %v1109 = vpop.f32.mrb[0].mxu0
        %v1110 = vadd.f32 %v789, %v1109
        %1111 = vmatprep.mubr.f32.mxu0 0.0
        %1112 = vmatmul.mubr.f32.gmra.mrb[0].mxu0 %v971
        %v1113 = vpop.f32.mrb[0].mxu0
        %v1114 = vadd.f32 %v793, %v1113
        %v1115 = vpop.f32.mrb[0].mxu0
        %v1116 = vadd.f32 %v795, %v1115
        %1117 = vmatprep.mubr.f32.mxu0 0.0
        %1118 = vmatmul.mubr.f32.gmra.mrb[0].mxu0 %v973
        %v1119 = vpop.f32.mrb[0].mxu0
        %v1120 = vadd.f32 %v799, %v1119
        %v1121 = vpop.f32.mrb[0].mxu0
        %v1122 = vadd.f32 %v801, %v1121
        %1123 = vmatprep.mubr.f32.mxu0 0.0
        %1124 = vmatmul.mubr.f32.gmra.mrb[0].mxu0 %v975
        %v1125 = vpop.f32.mrb[0].mxu0
        %v1126 = vadd.f32 %v805, %v1125
        %v1127 = vpop.f32.mrb[0].mxu0
        %v1128 = vadd.f32 %v807, %v1127
        %1129 = vmatprep.mubr.f32.mxu0 0.0
        %1130 = vmatmul.mubr.f32.gmra.mrb[0].mxu0 %v977
        %v1131 = vpop.f32.mrb[0].mxu0
        %v1132 = vadd.f32 %v811, %v1131
        %v1133 = vpop.f32.mrb[0].mxu0
        %v1134 = vadd.f32 %v813, %v1133
        %1135 = vmatprep.mubr.f32.mxu0 0.0
        %1136 = vmatmul.mubr.f32.gmra.mrb[0].mxu0 %v979
        %v1137 = vpop.f32.mrb[0].mxu0
        %v1138 = vadd.f32 %v817, %v1137
        %v1139 = vpop.f32.mrb[0].mxu0
        %v1140 = vadd.f32 %v819, %v1139
        %1141 = vmatprep.mubr.f32.mxu0 0.0
        %1142 = vmatmul.mubr.f32.gmra.mrb[0].mxu0 %v981
        %v1143 = vpop.f32.mrb[0].mxu0
        %v1144 = vadd.f32 %v823, %v1143
        %v1145 = vpop.f32.mrb[0].mxu0
        %v1146 = vadd.f32 %v825, %v1145
        %1147 = vmatprep.mubr.f32.mxu0 0.0
        %1148 = vmatmul.mubr.f32.gmra.mrb[0].mxu0 %v983
        %v1149 = vpop.f32.mrb[0].mxu0
        %v1150 = vadd.f32 %v829, %v1149
        %v1151 = vpop.f32.mrb[0].mxu0
        %v1152 = vadd.f32 %v831, %v1151
        %1153 = vmatprep.mubr.f32.mxu0 0.0
        %1154 = vmatmul.mubr.f32.gmra.mrb[0].mxu0 %v985
        %v1155 = vpop.f32.mrb[0].mxu0
        %v1156 = vadd.f32 %v835, %v1155
        %v1157 = vpop.f32.mrb[0].mxu0
        %v1158 = vadd.f32 %v837, %v1157
        %1159 = vmatprep.mubr.f32.mxu0 0.0
        %1160 = vmatmul.mubr.f32.gmra.mrb[0].mxu0 %v987
        %v1161 = vpop.f32.mrb[0].mxu0
        %v1162 = vadd.f32 %v841, %v1161
        %v1163 = vpop.f32.mrb[0].mxu0
        %v1164 = vadd.f32 %v843, %v1163
        %1165 = vmatprep.mubr.f32.mxu0 0.0
        %1166 = vmatmul.mubr.f32.gmra.mrb[0].mxu0 %v989
        %v1167 = vpop.f32.mrb[0].mxu0
        %v1168 = vadd.f32 %v847, %v1167
        %v1169 = vpop.f32.mrb[0].mxu0
        %v1170 = vadd.f32 %v849, %v1169
        %1171 = vmatprep.mubr.f32.mxu0 0.0
        %1172 = vmatmul.mubr.f32.gmra.mrb[0].mxu0 %v991
        %v1173 = vpop.f32.mrb[0].mxu0
        %v1174 = vadd.f32 %v853, %v1173
        %v1175 = vpop.f32.mrb[0].mxu0
        %v1176 = vadd.f32 %v855, %v1175
        %1177 = vmatprep.mubr.f32.mxu0 0.0
        %1178 = vmatmul.mubr.f32.gmra.mrb[0].mxu0 %v993
        %v1179 = vpop.f32.mrb[0].mxu0
        %v1180 = vadd.f32 %v859, %v1179
        %v1181 = vpop.f32.mrb[0].mxu0
        %v1182 = vadd.f32 %v861, %v1181
        %1183 = vmatprep.mubr.f32.mxu0 0.0
        %1184 = vmatmul.mubr.f32.gmra.mrb[0].mxu0 %v995
        %v1185 = vpop.f32.mrb[0].mxu0
        %v1186 = vadd.f32 %v865, %v1185
        %v1187 = vpop.f32.mrb[0].mxu0
        %v1188 = vadd.f32 %v867, %v1187
        %1189 = vmatprep.mubr.f32.mxu0 0.0
        %1190 = vmatmul.mubr.f32.gmra.mrb[0].mxu0 %v997
        %v1191 = vpop.f32.mrb[0].mxu0
        %v1192 = vadd.f32 %v871, %v1191
        %v1193 = vpop.f32.mrb[0].mxu0
        %v1194 = vadd.f32 %v873, %v1193
        %1195 = vmatprep.mubr.f32.mxu0 0.0
        %1196 = vmatmul.mubr.f32.gmra.mrb[0].mxu0 %v999
        %v1197 = vpop.f32.mrb[0].mxu0
        %v1198 = vadd.f32 %v877, %v1197
        %v1199 = vpop.f32.mrb[0].mxu0
        %v1200 = vadd.f32 %v879, %v1199
        %1201 = vmatprep.mubr.f32.mxu0 0.0
        %1202 = vmatmul.mubr.f32.gmra.mrb[0].mxu0 %v1001
        %v1203 = vpop.f32.mrb[0].mxu0
        %v1204 = vadd.f32 %v883, %v1203
        %v1205 = vpop.f32.mrb[0].mxu0
        %v1206 = vadd.f32 %v885, %v1205
        %1207 = vmatprep.mubr.f32.mxu0 0.0
        %1208 = vmatmul.mubr.f32.gmra.mrb[0].mxu0 %v1003
        %v1209 = vpop.f32.mrb[0].mxu0
        %v1210 = vadd.f32 %v889, %v1209
        %v1211 = vpop.f32.mrb[0].mxu0
        %v1212 = vadd.f32 %v891, %v1211
        %1213 = vmatprep.mubr.f32.mxu0 0.0
        %1214 = vmatmul.mubr.f32.gmra.mrb[0].mxu0 %v1005
        %v1215 = vpop.f32.mrb[0].mxu0
        %v1216 = vadd.f32 %v895, %v1215
        %v1217 = vpop.f32.mrb[0].mxu0
        %v1218 = vadd.f32 %v897, %v1217
        %1219 = vmatprep.mubr.f32.mxu0 0.0
        %1220 = vmatmul.mubr.f32.gmra.mrb[0].mxu0 %v1007
        %v1221 = vpop.f32.mrb[0].mxu0
        %v1222 = vadd.f32 %v901, %v1221
        %v1223 = vpop.f32.mrb[0].mxu0
        %v1224 = vadd.f32 %v903, %v1223
        %1225 = vmatprep.mubr.f32.mxu0 0.0
        %1226 = vmatmul.mubr.f32.gmra.mrb[0].mxu0 %v1009
        %v1227 = vpop.f32.mrb[0].mxu0
        %v1228 = vadd.f32 %v907, %v1227
        %v1229 = vpop.f32.mrb[0].mxu0
        %v1230 = vadd.f32 %v909, %v1229
        %1231 = vmatprep.mubr.f32.mxu0 0.0
        %1232 = vmatmul.mubr.f32.gmra.mrb[0].mxu0 %v1011
        %v1233 = vpop.f32.mrb[0].mxu0
        %v1234 = vadd.f32 %v913, %v1233
        %v1235 = vpop.f32.mrb[0].mxu0
        %v1236 = vadd.f32 %v915, %v1235
        %1237 = vmatprep.mubr.f32.mxu0 0.0
        %1238 = vmatmul.mubr.f32.gmra.mrb[0].mxu0 %v1013
        %v1239 = vpop.f32.mrb[0].mxu0
        %v1240 = vadd.f32 %v919, %v1239
        %v1241 = vpop.f32.mrb[0].mxu0
        %v1242 = vadd.f32 %v921, %v1241
        %1243 = vmatprep.mubr.f32.mxu0 0.0
        %1244 = vmatmul.mubr.f32.gmra.mrb[0].mxu0 %v1015
        %v1245 = vpop.f32.mrb[0].mxu0
        %v1246 = vadd.f32 %v925, %v1245
        %v1247 = vpop.f32.mrb[0].mxu0
        %v1248 = vadd.f32 %v927, %v1247
        %1249 = vmatprep.mubr.f32.mxu0 0.0
        %1250 = vmatmul.mubr.f32.gmra.mrb[0].mxu0 %v1017
        %v1251 = vpop.f32.mrb[0].mxu0
        %v1252 = vadd.f32 %v931, %v1251
        %v1253 = vpop.f32.mrb[0].mxu0
        %v1254 = vadd.f32 %v933, %v1253
        %1255 = vmatprep.mubr.f32.mxu0 0.0
        %1256 = vmatmul.mubr.f32.gmra.mrb[0].mxu0 %v1019
        %v1257 = vpop.f32.mrb[0].mxu0
        %v1258 = vadd.f32 %v937, %v1257
        %v1259 = vpop.f32.mrb[0].mxu0
        %v1260 = vadd.f32 %v939, %v1259
        %1261 = vmatprep.mubr.f32.mxu0 0.0
        %1262 = vmatmul.mubr.f32.gmra.mrb[0].mxu0 %v1021
        %v1263 = vpop.f32.mrb[0].mxu0
        %v1264 = vadd.f32 %v943, %v1263
        %v1265 = vpop.f32.mrb[0].mxu0
        %v1266 = vadd.f32 %v945, %v1265
        %1267 = vmatprep.mubr.f32.mxu0 0.0
        %1268 = vmatmul.mubr.f32.gmra.mrb[0].mxu0 %v1023
        %v1269 = vpop.f32.mrb[0].mxu0
        %v1270 = vadd.f32 %v949, %v1269
        %v1271 = vpop.f32.mrb[0].mxu0
        %v1272 = vadd.f32 %v951, %v1271
        %1273 = vmatprep.mubr.f32.mxu0 0.0
        %1274 = vmatmul.mubr.f32.gmra.mrb[0].mxu0 %v1025
        %v1275 = vpop.f32.mrb[0].mxu0
        %v1276 = vadd.f32 %v955, %v1275
        %v1277 = vpop.f32.mrb[0].mxu0
        %v1278 = vadd.f32 %v957, %v1277
        %1279 = vmatprep.mubr.f32.mxu0 0.0
        %1280 = vmatmul.mubr.f32.gmra.mrb[0].mxu0 %v1027
        %v1281 = vpop.f32.mrb[0].mxu0
        %v1282 = vadd.f32 %v961, %v1281
        %v1283 = vpop.f32.mrb[0].mxu0
        %v1284 = vadd.f32 %v963, %v1283
        %1285 = vdwg.mxu0
        %s1286 = scalar_lea.vmem %s1, 128
        %v1287 = vld [vmem:[%s1286] sm:$0xff]
        %v1288 = vld [vmem:[%s1286 + $0x8] sm:$0xff]
        %v1289 = vld [vmem:[%s1286 + $0x10] sm:$0xff]
        %v1290 = vld [vmem:[%s1286 + $0x18] sm:$0xff]
        %v1291 = vld [vmem:[%s1286 + $0x20] sm:$0xff]
        %v1292 = vld [vmem:[%s1286 + $0x28] sm:$0xff]
        %v1293 = vld [vmem:[%s1286 + $0x30] sm:$0xff]
        %v1294 = vld [vmem:[%s1286 + $0x38] sm:$0xff]
        %vm1295 = vcmask 1045504
        %v1296 = vrot.slane %v498, 2
        %v1297 = vrot.slane %v499, 2
        %v1298 = vsel %vm1295, %v1296, %v1297
        %v1299 = vrot.slane %v500, 2
        %v1300 = vsel %vm1295, %v1297, %v1299
        %v1301 = vrot.slane %v501, 2
        %v1302 = vsel %vm1295, %v1299, %v1301
        %v1303 = vrot.slane %v502, 2
        %v1304 = vsel %vm1295, %v1301, %v1303
        %v1305 = vrot.slane %v503, 2
        %v1306 = vsel %vm1295, %v1303, %v1305
        %v1307 = vrot.slane %v504, 2
        %v1308 = vsel %vm1295, %v1305, %v1307
        %v1309 = vrot.slane %v505, 2
        %v1310 = vsel %vm1295, %v1307, %v1309
        %v1311 = vrot.slane %v506, 2
        %v1312 = vsel %vm1295, %v1309, %v1311
        %v1313 = vrot.slane %v507, 2
        %v1314 = vsel %vm1295, %v1311, %v1313
        %v1315 = vrot.slane %v508, 2
        %v1316 = vsel %vm1295, %v1313, %v1315
        %v1317 = vrot.slane %v509, 2
        %v1318 = vsel %vm1295, %v1315, %v1317
        %v1319 = vrot.slane %v510, 2
        %v1320 = vsel %vm1295, %v1317, %v1319
        %v1321 = vrot.slane %v511, 2
        %v1322 = vsel %vm1295, %v1319, %v1321
        %v1323 = vrot.slane %v512, 2
        %v1324 = vsel %vm1295, %v1321, %v1323
        %v1325 = vrot.slane %v513, 2
        %v1326 = vsel %vm1295, %v1323, %v1325
        %v1327 = vrot.slane %v514, 2
        %v1328 = vsel %vm1295, %v1325, %v1327
        %v1329 = vrot.slane %v515, 2
        %v1330 = vsel %vm1295, %v1327, %v1329
        %v1331 = vrot.slane %v516, 2
        %v1332 = vsel %vm1295, %v1329, %v1331
        %v1333 = vrot.slane %v517, 2
        %v1334 = vsel %vm1295, %v1331, %v1333
        %v1335 = vrot.slane %v518, 2
        %v1336 = vsel %vm1295, %v1333, %v1335
        %v1337 = vrot.slane %v519, 2
        %v1338 = vsel %vm1295, %v1335, %v1337
        %v1339 = vrot.slane %v520, 2
        %v1340 = vsel %vm1295, %v1337, %v1339
        %v1341 = vrot.slane %v521, 2
        %v1342 = vsel %vm1295, %v1339, %v1341
        %v1343 = vrot.slane %v522, 2
        %v1344 = vsel %vm1295, %v1341, %v1343
        %v1345 = vrot.slane %v523, 2
        %v1346 = vsel %vm1295, %v1343, %v1345
        %v1347 = vrot.slane %v524, 2
        %v1348 = vsel %vm1295, %v1345, %v1347
        %v1349 = vrot.slane %v525, 2
        %v1350 = vsel %vm1295, %v1347, %v1349
        %v1351 = vrot.slane %v526, 2
        %v1352 = vsel %vm1295, %v1349, %v1351
        %v1353 = vrot.slane %v527, 2
        %v1354 = vsel %vm1295, %v1351, %v1353
        %v1355 = vrot.slane %v528, 2
        %v1356 = vsel %vm1295, %v1353, %v1355
        %v1357 = vrot.slane %v529, 2
        %v1358 = vsel %vm1295, %v1355, %v1357
        %v1359 = vsel %vm643, %v1298, 0
        %v1361 = vsel %vm643, %v1300, 0
        %v1363 = vsel %vm643, %v1302, 0
        %v1365 = vsel %vm643, %v1304, 0
        %v1367 = vsel %vm643, %v1306, 0
        %v1369 = vsel %vm643, %v1308, 0
        %v1371 = vsel %vm643, %v1310, 0
        %v1373 = vsel %vm643, %v1312, 0
        %v1375 = vsel %vm643, %v1314, 0
        %v1377 = vsel %vm643, %v1316, 0
        %v1379 = vsel %vm643, %v1318, 0
        %v1381 = vsel %vm643, %v1320, 0
        %v1383 = vsel %vm643, %v1322, 0
        %v1385 = vsel %vm643, %v1324, 0
        %v1387 = vsel %vm643, %v1326, 0
        %v1389 = vsel %vm643, %v1328, 0
        %v1391 = vsel %vm643, %v1330, 0
        %v1393 = vsel %vm643, %v1332, 0
        %v1395 = vsel %vm643, %v1334, 0
        %v1397 = vsel %vm643, %v1336, 0
        %v1399 = vsel %vm643, %v1338, 0
        %v1401 = vsel %vm643, %v1340, 0
        %v1403 = vsel %vm643, %v1342, 0
        %v1405 = vsel %vm643, %v1344, 0
        %v1407 = vsel %vm643, %v1346, 0
        %v1409 = vsel %vm643, %v1348, 0
        %v1411 = vsel %vm643, %v1350, 0
        %v1413 = vsel %vm643, %v1352, 0
        %v1415 = vsel %vm643, %v1354, 0
        %v1417 = vsel %vm643, %v1356, 0
        %v1419 = vsel %vm643, %v1358, 0
        %v1421 = vsel %vm643, %v1357, 0
        %1423 = vmatprep.subr.mxu0 %v1288
        %1424 = vmatpush1.msra.mxu0 %v1287
        %1425 = vmatprep.subr.mxu0 %v1290
        %1426 = vmatpush1.msra.mxu0 %v1289
        %1427 = vmatprep.subr.mxu0 %v1292
        %1428 = vmatpush1.msra.mxu0 %v1291
        %1429 = vmatprep.subr.mxu0 %v1294
        %1430 = vmatpush1.msra.mxu0 %v1293
        %1431 = vmatprep.subr.mxu0 0.0
        %1432 = vmatpush1.msra.mxu0 0.0
        %1433 = vmatprep.subr.mxu0 0.0
        %1434 = vmatpush1.msra.mxu0 0.0
        %1435 = vmatprep.subr.mxu0 0.0
        %1436 = vmatpush1.msra.mxu0 0.0
        %1437 = vmatprep.subr.mxu0 0.0
        %1438 = vmatpush1.msra.mxu0 0.0
        %1439 = vmatprep.subr.mxu0 0.0
        %1440 = vmatpush1.msra.mxu0 0.0
        %1441 = vmatprep.subr.mxu0 0.0
        %1442 = vmatpush1.msra.mxu0 0.0
        %1443 = vmatprep.subr.mxu0 0.0
        %1444 = vmatpush1.msra.mxu0 0.0
        %1445 = vmatprep.subr.mxu0 0.0
        %1446 = vmatpush1.msra.mxu0 0.0
        %1447 = vmatprep.subr.mxu0 0.0
        %1448 = vmatpush1.msra.mxu0 0.0
        %1449 = vmatprep.subr.mxu0 0.0
        %1450 = vmatpush1.msra.mxu0 0.0
        %1451 = vmatprep.subr.mxu0 0.0
        %1452 = vmatpush1.msra.mxu0 0.0
        %1453 = vmatprep.subr.mxu0 0.0
        %1454 = vmatpush1.msra.mxu0 0.0
        %1455 = vmatprep.subr.mxu0 0.0
        %1456 = vmatpush1.msra.mxu0 0.0
        %1457 = vmatprep.subr.mxu0 0.0
        %1458 = vmatpush1.msra.mxu0 0.0
        %1459 = vmatprep.subr.mxu0 0.0
        %1460 = vmatpush1.msra.mxu0 0.0
        %1461 = vmatprep.subr.mxu0 0.0
        %1462 = vmatpush1.msra.mxu0 0.0
        %1463 = vmatprep.subr.mxu0 0.0
        %1464 = vmatpush1.msra.mxu0 0.0
        %1465 = vmatprep.subr.mxu0 0.0
        %1466 = vmatpush1.msra.mxu0 0.0
        %1467 = vmatprep.subr.mxu0 0.0
        %1468 = vmatpush1.msra.mxu0 0.0
        %1469 = vmatprep.subr.mxu0 0.0
        %1470 = vmatpush1.msra.mxu0 0.0
        %1471 = vmatprep.subr.mxu0 0.0
        %1472 = vmatpush1.msra.mxu0 0.0
        %1473 = vmatprep.subr.mxu0 0.0
        %1474 = vmatpush1.msra.mxu0 0.0
        %1475 = vmatprep.subr.mxu0 0.0
        %1476 = vmatpush1.msra.mxu0 0.0
        %1477 = vmatprep.subr.mxu0 0.0
        %1478 = vmatpush1.msra.mxu0 0.0
        %1479 = vmatprep.subr.mxu0 0.0
        %1480 = vmatpush1.msra.mxu0 0.0
        %1481 = vmatprep.subr.mxu0 0.0
        %1482 = vmatpush1.msra.mxu0 0.0
        %1483 = vmatprep.subr.mxu0 0.0
        %1484 = vmatpush1.msra.mxu0 0.0
        %1485 = vmatprep.subr.mxu0 0.0
        %1486 = vmatpush1.msra.mxu0 0.0
        %1487 = vmatprep.mubr.f32.mxu0 0.0
        %1488 = vmatmul.mubr.f32.gmra.mrb[0].mxu0 %v1359
        %v1489 = vpop.f32.mrb[0].mxu0
        %v1490 = vadd.f32 0.0, %v1489
        %v1491 = vpop.f32.mrb[0].mxu0
        %v1492 = vadd.f32 0.0, %v1491
        %1493 = vmatprep.mubr.f32.mxu0 0.0
        %1494 = vmatmul.mubr.f32.gmra.mrb[0].mxu0 %v1361
        %v1495 = vpop.f32.mrb[0].mxu0
        %v1496 = vadd.f32 0.0, %v1495
        %v1497 = vpop.f32.mrb[0].mxu0
        %v1498 = vadd.f32 0.0, %v1497
        %1499 = vmatprep.mubr.f32.mxu0 0.0
        %1500 = vmatmul.mubr.f32.gmra.mrb[0].mxu0 %v1363
        %v1501 = vpop.f32.mrb[0].mxu0
        %v1502 = vadd.f32 0.0, %v1501
        %v1503 = vpop.f32.mrb[0].mxu0
        %v1504 = vadd.f32 0.0, %v1503
        %1505 = vmatprep.mubr.f32.mxu0 0.0
        %1506 = vmatmul.mubr.f32.gmra.mrb[0].mxu0 %v1365
        %v1507 = vpop.f32.mrb[0].mxu0
        %v1508 = vadd.f32 0.0, %v1507
        %v1509 = vpop.f32.mrb[0].mxu0
        %v1510 = vadd.f32 0.0, %v1509
        %1511 = vmatprep.mubr.f32.mxu0 0.0
        %1512 = vmatmul.mubr.f32.gmra.mrb[0].mxu0 %v1367
        %v1513 = vpop.f32.mrb[0].mxu0
        %v1514 = vadd.f32 0.0, %v1513
        %v1515 = vpop.f32.mrb[0].mxu0
        %v1516 = vadd.f32 0.0, %v1515
        %1517 = vmatprep.mubr.f32.mxu0 0.0
        %1518 = vmatmul.mubr.f32.gmra.mrb[0].mxu0 %v1369
        %v1519 = vpop.f32.mrb[0].mxu0
        %v1520 = vadd.f32 0.0, %v1519
        %v1521 = vpop.f32.mrb[0].mxu0
        %v1522 = vadd.f32 0.0, %v1521
        %1523 = vmatprep.mubr.f32.mxu0 0.0
        %1524 = vmatmul.mubr.f32.gmra.mrb[0].mxu0 %v1371
        %v1525 = vpop.f32.mrb[0].mxu0
        %v1526 = vadd.f32 0.0, %v1525
        %v1527 = vpop.f32.mrb[0].mxu0
        %v1528 = vadd.f32 0.0, %v1527
        %1529 = vmatprep.mubr.f32.mxu0 0.0
        %1530 = vmatmul.mubr.f32.gmra.mrb[0].mxu0 %v1373
        %v1531 = vpop.f32.mrb[0].mxu0
        %v1532 = vadd.f32 0.0, %v1531
        %v1533 = vpop.f32.mrb[0].mxu0
        %v1534 = vadd.f32 0.0, %v1533
        %1535 = vmatprep.mubr.f32.mxu0 0.0
        %1536 = vmatmul.mubr.f32.gmra.mrb[0].mxu0 %v1375
        %v1537 = vpop.f32.mrb[0].mxu0
        %v1538 = vadd.f32 0.0, %v1537
        %v1539 = vpop.f32.mrb[0].mxu0
        %v1540 = vadd.f32 0.0, %v1539
        %1541 = vmatprep.mubr.f32.mxu0 0.0
        %1542 = vmatmul.mubr.f32.gmra.mrb[0].mxu0 %v1377
        %v1543 = vpop.f32.mrb[0].mxu0
        %v1544 = vadd.f32 0.0, %v1543
        %v1545 = vpop.f32.mrb[0].mxu0
        %v1546 = vadd.f32 0.0, %v1545
        %1547 = vmatprep.mubr.f32.mxu0 0.0
        %1548 = vmatmul.mubr.f32.gmra.mrb[0].mxu0 %v1379
        %v1549 = vpop.f32.mrb[0].mxu0
        %v1550 = vadd.f32 0.0, %v1549
        %v1551 = vpop.f32.mrb[0].mxu0
        %v1552 = vadd.f32 0.0, %v1551
        %1553 = vmatprep.mubr.f32.mxu0 0.0
        %1554 = vmatmul.mubr.f32.gmra.mrb[0].mxu0 %v1381
        %v1555 = vpop.f32.mrb[0].mxu0
        %v1556 = vadd.f32 0.0, %v1555
        %v1557 = vpop.f32.mrb[0].mxu0
        %v1558 = vadd.f32 0.0, %v1557
        %1559 = vmatprep.mubr.f32.mxu0 0.0
        %1560 = vmatmul.mubr.f32.gmra.mrb[0].mxu0 %v1383
        %v1561 = vpop.f32.mrb[0].mxu0
        %v1562 = vadd.f32 0.0, %v1561
        %v1563 = vpop.f32.mrb[0].mxu0
        %v1564 = vadd.f32 0.0, %v1563
        %1565 = vmatprep.mubr.f32.mxu0 0.0
        %1566 = vmatmul.mubr.f32.gmra.mrb[0].mxu0 %v1385
        %v1567 = vpop.f32.mrb[0].mxu0
        %v1568 = vadd.f32 0.0, %v1567
        %v1569 = vpop.f32.mrb[0].mxu0
        %v1570 = vadd.f32 0.0, %v1569
        %1571 = vmatprep.mubr.f32.mxu0 0.0
        %1572 = vmatmul.mubr.f32.gmra.mrb[0].mxu0 %v1387
        %v1573 = vpop.f32.mrb[0].mxu0
        %v1574 = vadd.f32 0.0, %v1573
        %v1575 = vpop.f32.mrb[0].mxu0
        %v1576 = vadd.f32 0.0, %v1575
        %1577 = vmatprep.mubr.f32.mxu0 0.0
        %1578 = vmatmul.mubr.f32.gmra.mrb[0].mxu0 %v1389
        %v1579 = vpop.f32.mrb[0].mxu0
        %v1580 = vadd.f32 0.0, %v1579
        %v1581 = vpop.f32.mrb[0].mxu0
        %v1582 = vadd.f32 0.0, %v1581
        %1583 = vmatprep.mubr.f32.mxu0 0.0
        %1584 = vmatmul.mubr.f32.gmra.mrb[0].mxu0 %v1391
        %v1585 = vpop.f32.mrb[0].mxu0
        %v1586 = vadd.f32 0.0, %v1585
        %v1587 = vpop.f32.mrb[0].mxu0
        %v1588 = vadd.f32 0.0, %v1587
        %1589 = vmatprep.mubr.f32.mxu0 0.0
        %1590 = vmatmul.mubr.f32.gmra.mrb[0].mxu0 %v1393
        %v1591 = vpop.f32.mrb[0].mxu0
        %v1592 = vadd.f32 0.0, %v1591
        %v1593 = vpop.f32.mrb[0].mxu0
        %v1594 = vadd.f32 0.0, %v1593
        %1595 = vmatprep.mubr.f32.mxu0 0.0
        %1596 = vmatmul.mubr.f32.gmra.mrb[0].mxu0 %v1395
        %v1597 = vpop.f32.mrb[0].mxu0
        %v1598 = vadd.f32 0.0, %v1597
        %v1599 = vpop.f32.mrb[0].mxu0
        %v1600 = vadd.f32 0.0, %v1599
        %1601 = vmatprep.mubr.f32.mxu0 0.0
        %1602 = vmatmul.mubr.f32.gmra.mrb[0].mxu0 %v1397
        %v1603 = vpop.f32.mrb[0].mxu0
        %v1604 = vadd.f32 0.0, %v1603
        %v1605 = vpop.f32.mrb[0].mxu0
        %v1606 = vadd.f32 0.0, %v1605
        %1607 = vmatprep.mubr.f32.mxu0 0.0
        %1608 = vmatmul.mubr.f32.gmra.mrb[0].mxu0 %v1399
        %v1609 = vpop.f32.mrb[0].mxu0
        %v1610 = vadd.f32 0.0, %v1609
        %v1611 = vpop.f32.mrb[0].mxu0
        %v1612 = vadd.f32 0.0, %v1611
        %1613 = vmatprep.mubr.f32.mxu0 0.0
        %1614 = vmatmul.mubr.f32.gmra.mrb[0].mxu0 %v1401
        %v1615 = vpop.f32.mrb[0].mxu0
        %v1616 = vadd.f32 0.0, %v1615
        %v1617 = vpop.f32.mrb[0].mxu0
        %v1618 = vadd.f32 0.0, %v1617
        %1619 = vmatprep.mubr.f32.mxu0 0.0
        %1620 = vmatmul.mubr.f32.gmra.mrb[0].mxu0 %v1403
        %v1621 = vpop.f32.mrb[0].mxu0
        %v1622 = vadd.f32 0.0, %v1621
        %v1623 = vpop.f32.mrb[0].mxu0
        %v1624 = vadd.f32 0.0, %v1623
        %1625 = vmatprep.mubr.f32.mxu0 0.0
        %1626 = vmatmul.mubr.f32.gmra.mrb[0].mxu0 %v1405
        %v1627 = vpop.f32.mrb[0].mxu0
        %v1628 = vadd.f32 0.0, %v1627
        %v1629 = vpop.f32.mrb[0].mxu0
        %v1630 = vadd.f32 0.0, %v1629
        %1631 = vmatprep.mubr.f32.mxu0 0.0
        %1632 = vmatmul.mubr.f32.gmra.mrb[0].mxu0 %v1407
        %v1633 = vpop.f32.mrb[0].mxu0
        %v1634 = vadd.f32 0.0, %v1633
        %v1635 = vpop.f32.mrb[0].mxu0
        %v1636 = vadd.f32 0.0, %v1635
        %1637 = vmatprep.mubr.f32.mxu0 0.0
        %1638 = vmatmul.mubr.f32.gmra.mrb[0].mxu0 %v1409
        %v1639 = vpop.f32.mrb[0].mxu0
        %v1640 = vadd.f32 0.0, %v1639
        %v1641 = vpop.f32.mrb[0].mxu0
        %v1642 = vadd.f32 0.0, %v1641
        %1643 = vmatprep.mubr.f32.mxu0 0.0
        %1644 = vmatmul.mubr.f32.gmra.mrb[0].mxu0 %v1411
        %v1645 = vpop.f32.mrb[0].mxu0
        %v1646 = vadd.f32 0.0, %v1645
        %v1647 = vpop.f32.mrb[0].mxu0
        %v1648 = vadd.f32 0.0, %v1647
        %1649 = vmatprep.mubr.f32.mxu0 0.0
        %1650 = vmatmul.mubr.f32.gmra.mrb[0].mxu0 %v1413
        %v1651 = vpop.f32.mrb[0].mxu0
        %v1652 = vadd.f32 0.0, %v1651
        %v1653 = vpop.f32.mrb[0].mxu0
        %v1654 = vadd.f32 0.0, %v1653
        %1655 = vmatprep.mubr.f32.mxu0 0.0
        %1656 = vmatmul.mubr.f32.gmra.mrb[0].mxu0 %v1415
        %v1657 = vpop.f32.mrb[0].mxu0
        %v1658 = vadd.f32 0.0, %v1657
        %v1659 = vpop.f32.mrb[0].mxu0
        %v1660 = vadd.f32 0.0, %v1659
        %1661 = vmatprep.mubr.f32.mxu0 0.0
        %1662 = vmatmul.mubr.f32.gmra.mrb[0].mxu0 %v1417
        %v1663 = vpop.f32.mrb[0].mxu0
        %v1664 = vadd.f32 0.0, %v1663
        %v1665 = vpop.f32.mrb[0].mxu0
        %v1666 = vadd.f32 0.0, %v1665
        %1667 = vmatprep.mubr.f32.mxu0 0.0
        %1668 = vmatmul.mubr.f32.gmra.mrb[0].mxu0 %v1419
        %v1669 = vpop.f32.mrb[0].mxu0
        %v1670 = vadd.f32 0.0, %v1669
        %v1671 = vpop.f32.mrb[0].mxu0
        %v1672 = vadd.f32 0.0, %v1671
        %1673 = vmatprep.mubr.f32.mxu0 0.0
        %1674 = vmatmul.mubr.f32.gmra.mrb[0].mxu0 %v1421
        %v1675 = vpop.f32.mrb[0].mxu0
        %v1676 = vadd.f32 0.0, %v1675
        %v1677 = vpop.f32.mrb[0].mxu0
        %v1678 = vadd.f32 0.0, %v1677
        %1679 = vdwg.mxu0
        %v1680 = vadd.f32 %v1096, %v1490
        %v1681 = vadd.f32 %v1098, %v1492
        %v1682 = vadd.f32 %v1102, %v1496
        %v1683 = vadd.f32 %v1104, %v1498
        %v1684 = vadd.f32 %v1108, %v1502
        %v1685 = vadd.f32 %v1110, %v1504
        %v1686 = vadd.f32 %v1114, %v1508
        %v1687 = vadd.f32 %v1116, %v1510
        %v1688 = vadd.f32 %v1120, %v1514
        %v1689 = vadd.f32 %v1122, %v1516
        %v1690 = vadd.f32 %v1126, %v1520
        %v1691 = vadd.f32 %v1128, %v1522
        %v1692 = vadd.f32 %v1132, %v1526
        %v1693 = vadd.f32 %v1134, %v1528
        %v1694 = vadd.f32 %v1138, %v1532
        %v1695 = vadd.f32 %v1140, %v1534
        %v1696 = vadd.f32 %v1144, %v1538
        %v1697 = vadd.f32 %v1146, %v1540
        %v1698 = vadd.f32 %v1150, %v1544
        %v1699 = vadd.f32 %v1152, %v1546
        %v1700 = vadd.f32 %v1156, %v1550
        %v1701 = vadd.f32 %v1158, %v1552
        %v1702 = vadd.f32 %v1162, %v1556
        %v1703 = vadd.f32 %v1164, %v1558
        %v1704 = vadd.f32 %v1168, %v1562
        %v1705 = vadd.f32 %v1170, %v1564
        %v1706 = vadd.f32 %v1174, %v1568
        %v1707 = vadd.f32 %v1176, %v1570
        %v1708 = vadd.f32 %v1180, %v1574
        %v1709 = vadd.f32 %v1182, %v1576
        %v1710 = vadd.f32 %v1186, %v1580
        %v1711 = vadd.f32 %v1188, %v1582
        %v1712 = vadd.f32 %v1192, %v1586
        %v1713 = vadd.f32 %v1194, %v1588
        %v1714 = vadd.f32 %v1198, %v1592
        %v1715 = vadd.f32 %v1200, %v1594
        %v1716 = vadd.f32 %v1204, %v1598
        %v1717 = vadd.f32 %v1206, %v1600
        %v1718 = vadd.f32 %v1210, %v1604
        %v1719 = vadd.f32 %v1212, %v1606
        %v1720 = vadd.f32 %v1216, %v1610
        %v1721 = vadd.f32 %v1218, %v1612
        %v1722 = vadd.f32 %v1222, %v1616
        %v1723 = vadd.f32 %v1224, %v1618
        %v1724 = vadd.f32 %v1228, %v1622
        %v1725 = vadd.f32 %v1230, %v1624
        %v1726 = vadd.f32 %v1234, %v1628
        %v1727 = vadd.f32 %v1236, %v1630
        %v1728 = vadd.f32 %v1240, %v1634
        %v1729 = vadd.f32 %v1242, %v1636
        %v1730 = vadd.f32 %v1246, %v1640
        %v1731 = vadd.f32 %v1248, %v1642
        %v1732 = vadd.f32 %v1252, %v1646
        %v1733 = vadd.f32 %v1254, %v1648
        %v1734 = vadd.f32 %v1258, %v1652
        %v1735 = vadd.f32 %v1260, %v1654
        %v1736 = vadd.f32 %v1264, %v1658
        %v1737 = vadd.f32 %v1266, %v1660
        %v1738 = vadd.f32 %v1270, %v1664
        %v1739 = vadd.f32 %v1272, %v1666
        %v1740 = vadd.f32 %v1276, %v1670
        %v1741 = vadd.f32 %v1278, %v1672
        %v1742 = vadd.f32 %v1282, %v1676
        %v1743 = vadd.f32 %v1284, %v1678
        %s1744 = scalar_lea.vmem %s1, 192
        %v1745 = vld [vmem:[%s1744] sm:$0xff]
        %v1746 = vld [vmem:[%s1744 + $0x8] sm:$0xff]
        %v1747 = vld [vmem:[%s1744 + $0x10] sm:$0xff]
        %v1748 = vld [vmem:[%s1744 + $0x18] sm:$0xff]
        %v1749 = vld [vmem:[%s1744 + $0x20] sm:$0xff]
        %v1750 = vld [vmem:[%s1744 + $0x28] sm:$0xff]
        %v1751 = vld [vmem:[%s1744 + $0x30] sm:$0xff]
        %v1752 = vld [vmem:[%s1744 + $0x38] sm:$0xff]
        %vm1753 = vcmask 1044480
        %v1754 = vrot.slane %v498, 3
        %v1755 = vrot.slane %v499, 3
        %v1756 = vsel %vm1753, %v1754, %v1755
        %v1757 = vrot.slane %v500, 3
        %v1758 = vsel %vm1753, %v1755, %v1757
        %v1759 = vrot.slane %v501, 3
        %v1760 = vsel %vm1753, %v1757, %v1759
        %v1761 = vrot.slane %v502, 3
        %v1762 = vsel %vm1753, %v1759, %v1761
        %v1763 = vrot.slane %v503, 3
        %v1764 = vsel %vm1753, %v1761, %v1763
        %v1765 = vrot.slane %v504, 3
        %v1766 = vsel %vm1753, %v1763, %v1765
        %v1767 = vrot.slane %v505, 3
        %v1768 = vsel %vm1753, %v1765, %v1767
        %v1769 = vrot.slane %v506, 3
        %v1770 = vsel %vm1753, %v1767, %v1769
        %v1771 = vrot.slane %v507, 3
        %v1772 = vsel %vm1753, %v1769, %v1771
        %v1773 = vrot.slane %v508, 3
        %v1774 = vsel %vm1753, %v1771, %v1773
        %v1775 = vrot.slane %v509, 3
        %v1776 = vsel %vm1753, %v1773, %v1775
        %v1777 = vrot.slane %v510, 3
        %v1778 = vsel %vm1753, %v1775, %v1777
        %v1779 = vrot.slane %v511, 3
        %v1780 = vsel %vm1753, %v1777, %v1779
        %v1781 = vrot.slane %v512, 3
        %v1782 = vsel %vm1753, %v1779, %v1781
        %v1783 = vrot.slane %v513, 3
        %v1784 = vsel %vm1753, %v1781, %v1783
        %v1785 = vrot.slane %v514, 3
        %v1786 = vsel %vm1753, %v1783, %v1785
        %v1787 = vrot.slane %v515, 3
        %v1788 = vsel %vm1753, %v1785, %v1787
        %v1789 = vrot.slane %v516, 3
        %v1790 = vsel %vm1753, %v1787, %v1789
        %v1791 = vrot.slane %v517, 3
        %v1792 = vsel %vm1753, %v1789, %v1791
        %v1793 = vrot.slane %v518, 3
        %v1794 = vsel %vm1753, %v1791, %v1793
        %v1795 = vrot.slane %v519, 3
        %v1796 = vsel %vm1753, %v1793, %v1795
        %v1797 = vrot.slane %v520, 3
        %v1798 = vsel %vm1753, %v1795, %v1797
        %v1799 = vrot.slane %v521, 3
        %v1800 = vsel %vm1753, %v1797, %v1799
        %v1801 = vrot.slane %v522, 3
        %v1802 = vsel %vm1753, %v1799, %v1801
        %v1803 = vrot.slane %v523, 3
        %v1804 = vsel %vm1753, %v1801, %v1803
        %v1805 = vrot.slane %v524, 3
        %v1806 = vsel %vm1753, %v1803, %v1805
        %v1807 = vrot.slane %v525, 3
        %v1808 = vsel %vm1753, %v1805, %v1807
        %v1809 = vrot.slane %v526, 3
        %v1810 = vsel %vm1753, %v1807, %v1809
        %v1811 = vrot.slane %v527, 3
        %v1812 = vsel %vm1753, %v1809, %v1811
        %v1813 = vrot.slane %v528, 3
        %v1814 = vsel %vm1753, %v1811, %v1813
        %v1815 = vrot.slane %v529, 3
        %v1816 = vsel %vm1753, %v1813, %v1815
        %v1817 = vsel %vm643, %v1756, 0
        %v1819 = vsel %vm643, %v1758, 0
        %v1821 = vsel %vm643, %v1760, 0
        %v1823 = vsel %vm643, %v1762, 0
        %v1825 = vsel %vm643, %v1764, 0
        %v1827 = vsel %vm643, %v1766, 0
        %v1829 = vsel %vm643, %v1768, 0
        %v1831 = vsel %vm643, %v1770, 0
        %v1833 = vsel %vm643, %v1772, 0
        %v1835 = vsel %vm643, %v1774, 0
        %v1837 = vsel %vm643, %v1776, 0
        %v1839 = vsel %vm643, %v1778, 0
        %v1841 = vsel %vm643, %v1780, 0
        %v1843 = vsel %vm643, %v1782, 0
        %v1845 = vsel %vm643, %v1784, 0
        %v1847 = vsel %vm643, %v1786, 0
        %v1849 = vsel %vm643, %v1788, 0
        %v1851 = vsel %vm643, %v1790, 0
        %v1853 = vsel %vm643, %v1792, 0
        %v1855 = vsel %vm643, %v1794, 0
        %v1857 = vsel %vm643, %v1796, 0
        %v1859 = vsel %vm643, %v1798, 0
        %v1861 = vsel %vm643, %v1800, 0
        %v1863 = vsel %vm643, %v1802, 0
        %v1865 = vsel %vm643, %v1804, 0
        %v1867 = vsel %vm643, %v1806, 0
        %v1869 = vsel %vm643, %v1808, 0
        %v1871 = vsel %vm643, %v1810, 0
        %v1873 = vsel %vm643, %v1812, 0
        %v1875 = vsel %vm643, %v1814, 0
        %v1877 = vsel %vm643, %v1816, 0
        %v1879 = vsel %vm643, %v1815, 0
        %1881 = vmatprep.subr.mxu0 %v1746
        %1882 = vmatpush1.msra.mxu0 %v1745
        %1883 = vmatprep.subr.mxu0 %v1748
        %1884 = vmatpush1.msra.mxu0 %v1747
        %1885 = vmatprep.subr.mxu0 %v1750
        %1886 = vmatpush1.msra.mxu0 %v1749
        %1887 = vmatprep.subr.mxu0 %v1752
        %1888 = vmatpush1.msra.mxu0 %v1751
        %1889 = vmatprep.subr.mxu0 0.0
        %1890 = vmatpush1.msra.mxu0 0.0
        %1891 = vmatprep.subr.mxu0 0.0
        %1892 = vmatpush1.msra.mxu0 0.0
        %1893 = vmatprep.subr.mxu0 0.0
        %1894 = vmatpush1.msra.mxu0 0.0
        %1895 = vmatprep.subr.mxu0 0.0
        %1896 = vmatpush1.msra.mxu0 0.0
        %1897 = vmatprep.subr.mxu0 0.0
        %1898 = vmatpush1.msra.mxu0 0.0
        %1899 = vmatprep.subr.mxu0 0.0
        %1900 = vmatpush1.msra.mxu0 0.0
        %1901 = vmatprep.subr.mxu0 0.0
        %1902 = vmatpush1.msra.mxu0 0.0
        %1903 = vmatprep.subr.mxu0 0.0
        %1904 = vmatpush1.msra.mxu0 0.0
        %1905 = vmatprep.subr.mxu0 0.0
        %1906 = vmatpush1.msra.mxu0 0.0
        %1907 = vmatprep.subr.mxu0 0.0
        %1908 = vmatpush1.msra.mxu0 0.0
        %1909 = vmatprep.subr.mxu0 0.0
        %1910 = vmatpush1.msra.mxu0 0.0
        %1911 = vmatprep.subr.mxu0 0.0
        %1912 = vmatpush1.msra.mxu0 0.0
        %1913 = vmatprep.subr.mxu0 0.0
        %1914 = vmatpush1.msra.mxu0 0.0
        %1915 = vmatprep.subr.mxu0 0.0
        %1916 = vmatpush1.msra.mxu0 0.0
        %1917 = vmatprep.subr.mxu0 0.0
        %1918 = vmatpush1.msra.mxu0 0.0
        %1919 = vmatprep.subr.mxu0 0.0
        %1920 = vmatpush1.msra.mxu0 0.0
        %1921 = vmatprep.subr.mxu0 0.0
        %1922 = vmatpush1.msra.mxu0 0.0
        %1923 = vmatprep.subr.mxu0 0.0
        %1924 = vmatpush1.msra.mxu0 0.0
        %1925 = vmatprep.subr.mxu0 0.0
        %1926 = vmatpush1.msra.mxu0 0.0
        %1927 = vmatprep.subr.mxu0 0.0
        %1928 = vmatpush1.msra.mxu0 0.0
        %1929 = vmatprep.subr.mxu0 0.0
        %1930 = vmatpush1.msra.mxu0 0.0
        %1931 = vmatprep.subr.mxu0 0.0
        %1932 = vmatpush1.msra.mxu0 0.0
        %1933 = vmatprep.subr.mxu0 0.0
        %1934 = vmatpush1.msra.mxu0 0.0
        %1935 = vmatprep.subr.mxu0 0.0
        %1936 = vmatpush1.msra.mxu0 0.0
        %1937 = vmatprep.subr.mxu0 0.0
        %1938 = vmatpush1.msra.mxu0 0.0
        %1939 = vmatprep.subr.mxu0 0.0
        %1940 = vmatpush1.msra.mxu0 0.0
        %1941 = vmatprep.subr.mxu0 0.0
        %1942 = vmatpush1.msra.mxu0 0.0
        %1943 = vmatprep.subr.mxu0 0.0
        %1944 = vmatpush1.msra.mxu0 0.0
        %1945 = vmatprep.mubr.f32.mxu0 0.0
        %1946 = vmatmul.mubr.f32.gmra.mrb[0].mxu0 %v1817
        %v1947 = vpop.f32.mrb[0].mxu0
        %v1948 = vadd.f32 0.0, %v1947
        %v1949 = vpop.f32.mrb[0].mxu0
        %v1950 = vadd.f32 0.0, %v1949
        %1951 = vmatprep.mubr.f32.mxu0 0.0
        %1952 = vmatmul.mubr.f32.gmra.mrb[0].mxu0 %v1819
        %v1953 = vpop.f32.mrb[0].mxu0
        %v1954 = vadd.f32 0.0, %v1953
        %v1955 = vpop.f32.mrb[0].mxu0
        %v1956 = vadd.f32 0.0, %v1955
        %1957 = vmatprep.mubr.f32.mxu0 0.0
        %1958 = vmatmul.mubr.f32.gmra.mrb[0].mxu0 %v1821
        %v1959 = vpop.f32.mrb[0].mxu0
        %v1960 = vadd.f32 0.0, %v1959
        %v1961 = vpop.f32.mrb[0].mxu0
        %v1962 = vadd.f32 0.0, %v1961
        %1963 = vmatprep.mubr.f32.mxu0 0.0
        %1964 = vmatmul.mubr.f32.gmra.mrb[0].mxu0 %v1823
        %v1965 = vpop.f32.mrb[0].mxu0
        %v1966 = vadd.f32 0.0, %v1965
        %v1967 = vpop.f32.mrb[0].mxu0
        %v1968 = vadd.f32 0.0, %v1967
        %1969 = vmatprep.mubr.f32.mxu0 0.0
        %1970 = vmatmul.mubr.f32.gmra.mrb[0].mxu0 %v1825
        %v1971 = vpop.f32.mrb[0].mxu0
        %v1972 = vadd.f32 0.0, %v1971
        %v1973 = vpop.f32.mrb[0].mxu0
        %v1974 = vadd.f32 0.0, %v1973
        %1975 = vmatprep.mubr.f32.mxu0 0.0
        %1976 = vmatmul.mubr.f32.gmra.mrb[0].mxu0 %v1827
        %v1977 = vpop.f32.mrb[0].mxu0
        %v1978 = vadd.f32 0.0, %v1977
        %v1979 = vpop.f32.mrb[0].mxu0
        %v1980 = vadd.f32 0.0, %v1979
        %1981 = vmatprep.mubr.f32.mxu0 0.0
        %1982 = vmatmul.mubr.f32.gmra.mrb[0].mxu0 %v1829
        %v1983 = vpop.f32.mrb[0].mxu0
        %v1984 = vadd.f32 0.0, %v1983
        %v1985 = vpop.f32.mrb[0].mxu0
        %v1986 = vadd.f32 0.0, %v1985
        %1987 = vmatprep.mubr.f32.mxu0 0.0
        %1988 = vmatmul.mubr.f32.gmra.mrb[0].mxu0 %v1831
        %v1989 = vpop.f32.mrb[0].mxu0
        %v1990 = vadd.f32 0.0, %v1989
        %v1991 = vpop.f32.mrb[0].mxu0
        %v1992 = vadd.f32 0.0, %v1991
        %1993 = vmatprep.mubr.f32.mxu0 0.0
        %1994 = vmatmul.mubr.f32.gmra.mrb[0].mxu0 %v1833
        %v1995 = vpop.f32.mrb[0].mxu0
        %v1996 = vadd.f32 0.0, %v1995
        %v1997 = vpop.f32.mrb[0].mxu0
        %v1998 = vadd.f32 0.0, %v1997
        %1999 = vmatprep.mubr.f32.mxu0 0.0
        %2000 = vmatmul.mubr.f32.gmra.mrb[0].mxu0 %v1835
        %v2001 = vpop.f32.mrb[0].mxu0
        %v2002 = vadd.f32 0.0, %v2001
        %v2003 = vpop.f32.mrb[0].mxu0
        %v2004 = vadd.f32 0.0, %v2003
        %2005 = vmatprep.mubr.f32.mxu0 0.0
        %2006 = vmatmul.mubr.f32.gmra.mrb[0].mxu0 %v1837
        %v2007 = vpop.f32.mrb[0].mxu0
        %v2008 = vadd.f32 0.0, %v2007
        %v2009 = vpop.f32.mrb[0].mxu0
        %v2010 = vadd.f32 0.0, %v2009
        %2011 = vmatprep.mubr.f32.mxu0 0.0
        %2012 = vmatmul.mubr.f32.gmra.mrb[0].mxu0 %v1839
        %v2013 = vpop.f32.mrb[0].mxu0
        %v2014 = vadd.f32 0.0, %v2013
        %v2015 = vpop.f32.mrb[0].mxu0
        %v2016 = vadd.f32 0.0, %v2015
        %2017 = vmatprep.mubr.f32.mxu0 0.0
        %2018 = vmatmul.mubr.f32.gmra.mrb[0].mxu0 %v1841
        %v2019 = vpop.f32.mrb[0].mxu0
        %v2020 = vadd.f32 0.0, %v2019
        %v2021 = vpop.f32.mrb[0].mxu0
        %v2022 = vadd.f32 0.0, %v2021
        %2023 = vmatprep.mubr.f32.mxu0 0.0
        %2024 = vmatmul.mubr.f32.gmra.mrb[0].mxu0 %v1843
        %v2025 = vpop.f32.mrb[0].mxu0
        %v2026 = vadd.f32 0.0, %v2025
        %v2027 = vpop.f32.mrb[0].mxu0
        %v2028 = vadd.f32 0.0, %v2027
        %2029 = vmatprep.mubr.f32.mxu0 0.0
        %2030 = vmatmul.mubr.f32.gmra.mrb[0].mxu0 %v1845
        %v2031 = vpop.f32.mrb[0].mxu0
        %v2032 = vadd.f32 0.0, %v2031
        %v2033 = vpop.f32.mrb[0].mxu0
        %v2034 = vadd.f32 0.0, %v2033
        %2035 = vmatprep.mubr.f32.mxu0 0.0
        %2036 = vmatmul.mubr.f32.gmra.mrb[0].mxu0 %v1847
        %v2037 = vpop.f32.mrb[0].mxu0
        %v2038 = vadd.f32 0.0, %v2037
        %v2039 = vpop.f32.mrb[0].mxu0
        %v2040 = vadd.f32 0.0, %v2039
        %2041 = vmatprep.mubr.f32.mxu0 0.0
        %2042 = vmatmul.mubr.f32.gmra.mrb[0].mxu0 %v1849
        %v2043 = vpop.f32.mrb[0].mxu0
        %v2044 = vadd.f32 0.0, %v2043
        %v2045 = vpop.f32.mrb[0].mxu0
        %v2046 = vadd.f32 0.0, %v2045
        %2047 = vmatprep.mubr.f32.mxu0 0.0
        %2048 = vmatmul.mubr.f32.gmra.mrb[0].mxu0 %v1851
        %v2049 = vpop.f32.mrb[0].mxu0
        %v2050 = vadd.f32 0.0, %v2049
        %v2051 = vpop.f32.mrb[0].mxu0
        %v2052 = vadd.f32 0.0, %v2051
        %2053 = vmatprep.mubr.f32.mxu0 0.0
        %2054 = vmatmul.mubr.f32.gmra.mrb[0].mxu0 %v1853
        %v2055 = vpop.f32.mrb[0].mxu0
        %v2056 = vadd.f32 0.0, %v2055
        %v2057 = vpop.f32.mrb[0].mxu0
        %v2058 = vadd.f32 0.0, %v2057
        %2059 = vmatprep.mubr.f32.mxu0 0.0
        %2060 = vmatmul.mubr.f32.gmra.mrb[0].mxu0 %v1855
        %v2061 = vpop.f32.mrb[0].mxu0
        %v2062 = vadd.f32 0.0, %v2061
        %v2063 = vpop.f32.mrb[0].mxu0
        %v2064 = vadd.f32 0.0, %v2063
        %2065 = vmatprep.mubr.f32.mxu0 0.0
        %2066 = vmatmul.mubr.f32.gmra.mrb[0].mxu0 %v1857
        %v2067 = vpop.f32.mrb[0].mxu0
        %v2068 = vadd.f32 0.0, %v2067
        %v2069 = vpop.f32.mrb[0].mxu0
        %v2070 = vadd.f32 0.0, %v2069
        %2071 = vmatprep.mubr.f32.mxu0 0.0
        %2072 = vmatmul.mubr.f32.gmra.mrb[0].mxu0 %v1859
        %v2073 = vpop.f32.mrb[0].mxu0
        %v2074 = vadd.f32 0.0, %v2073
        %v2075 = vpop.f32.mrb[0].mxu0
        %v2076 = vadd.f32 0.0, %v2075
        %2077 = vmatprep.mubr.f32.mxu0 0.0
        %2078 = vmatmul.mubr.f32.gmra.mrb[0].mxu0 %v1861
        %v2079 = vpop.f32.mrb[0].mxu0
        %v2080 = vadd.f32 0.0, %v2079
        %v2081 = vpop.f32.mrb[0].mxu0
        %v2082 = vadd.f32 0.0, %v2081
        %2083 = vmatprep.mubr.f32.mxu0 0.0
        %2084 = vmatmul.mubr.f32.gmra.mrb[0].mxu0 %v1863
        %v2085 = vpop.f32.mrb[0].mxu0
        %v2086 = vadd.f32 0.0, %v2085
        %v2087 = vpop.f32.mrb[0].mxu0
        %v2088 = vadd.f32 0.0, %v2087
        %2089 = vmatprep.mubr.f32.mxu0 0.0
        %2090 = vmatmul.mubr.f32.gmra.mrb[0].mxu0 %v1865
        %v2091 = vpop.f32.mrb[0].mxu0
        %v2092 = vadd.f32 0.0, %v2091
        %v2093 = vpop.f32.mrb[0].mxu0
        %v2094 = vadd.f32 0.0, %v2093
        %2095 = vmatprep.mubr.f32.mxu0 0.0
        %2096 = vmatmul.mubr.f32.gmra.mrb[0].mxu0 %v1867
        %v2097 = vpop.f32.mrb[0].mxu0
        %v2098 = vadd.f32 0.0, %v2097
        %v2099 = vpop.f32.mrb[0].mxu0
        %v2100 = vadd.f32 0.0, %v2099
        %2101 = vmatprep.mubr.f32.mxu0 0.0
        %2102 = vmatmul.mubr.f32.gmra.mrb[0].mxu0 %v1869
        %v2103 = vpop.f32.mrb[0].mxu0
        %v2104 = vadd.f32 0.0, %v2103
        %v2105 = vpop.f32.mrb[0].mxu0
        %v2106 = vadd.f32 0.0, %v2105
        %2107 = vmatprep.mubr.f32.mxu0 0.0
        %2108 = vmatmul.mubr.f32.gmra.mrb[0].mxu0 %v1871
        %v2109 = vpop.f32.mrb[0].mxu0
        %v2110 = vadd.f32 0.0, %v2109
        %v2111 = vpop.f32.mrb[0].mxu0
        %v2112 = vadd.f32 0.0, %v2111
        %2113 = vmatprep.mubr.f32.mxu0 0.0
        %2114 = vmatmul.mubr.f32.gmra.mrb[0].mxu0 %v1873
        %v2115 = vpop.f32.mrb[0].mxu0
        %v2116 = vadd.f32 0.0, %v2115
        %v2117 = vpop.f32.mrb[0].mxu0
        %v2118 = vadd.f32 0.0, %v2117
        %2119 = vmatprep.mubr.f32.mxu0 0.0
        %2120 = vmatmul.mubr.f32.gmra.mrb[0].mxu0 %v1875
        %v2121 = vpop.f32.mrb[0].mxu0
        %v2122 = vadd.f32 0.0, %v2121
        %v2123 = vpop.f32.mrb[0].mxu0
        %v2124 = vadd.f32 0.0, %v2123
        %2125 = vmatprep.mubr.f32.mxu0 0.0
        %2126 = vmatmul.mubr.f32.gmra.mrb[0].mxu0 %v1877
        %v2127 = vpop.f32.mrb[0].mxu0
        %v2128 = vadd.f32 0.0, %v2127
        %v2129 = vpop.f32.mrb[0].mxu0
        %v2130 = vadd.f32 0.0, %v2129
        %2131 = vmatprep.mubr.f32.mxu0 0.0
        %2132 = vmatmul.mubr.f32.gmra.mrb[0].mxu0 %v1879
        %v2133 = vpop.f32.mrb[0].mxu0
        %v2134 = vadd.f32 0.0, %v2133
        %v2135 = vpop.f32.mrb[0].mxu0
        %v2136 = vadd.f32 0.0, %v2135
        %2137 = vdwg.mxu0
        %v2138 = vadd.f32 %v1680, %v1948
        %v2139 = vadd.f32 %v1681, %v1950
        %v2140 = vadd.f32 %v1682, %v1954
        %v2141 = vadd.f32 %v1683, %v1956
        %v2142 = vadd.f32 %v1684, %v1960
        %v2143 = vadd.f32 %v1685, %v1962
        %v2144 = vadd.f32 %v1686, %v1966
        %v2145 = vadd.f32 %v1687, %v1968
        %v2146 = vadd.f32 %v1688, %v1972
        %v2147 = vadd.f32 %v1689, %v1974
        %v2148 = vadd.f32 %v1690, %v1978
        %v2149 = vadd.f32 %v1691, %v1980
        %v2150 = vadd.f32 %v1692, %v1984
        %v2151 = vadd.f32 %v1693, %v1986
        %v2152 = vadd.f32 %v1694, %v1990
        %v2153 = vadd.f32 %v1695, %v1992
        %v2154 = vadd.f32 %v1696, %v1996
        %v2155 = vadd.f32 %v1697, %v1998
        %v2156 = vadd.f32 %v1698, %v2002
        %v2157 = vadd.f32 %v1699, %v2004
        %v2158 = vadd.f32 %v1700, %v2008
        %v2159 = vadd.f32 %v1701, %v2010
        %v2160 = vadd.f32 %v1702, %v2014
        %v2161 = vadd.f32 %v1703, %v2016
        %v2162 = vadd.f32 %v1704, %v2020
        %v2163 = vadd.f32 %v1705, %v2022
        %v2164 = vadd.f32 %v1706, %v2026
        %v2165 = vadd.f32 %v1707, %v2028
        %v2166 = vadd.f32 %v1708, %v2032
        %v2167 = vadd.f32 %v1709, %v2034
        %v2168 = vadd.f32 %v1710, %v2038
        %v2169 = vadd.f32 %v1711, %v2040
        %v2170 = vadd.f32 %v1712, %v2044
        %v2171 = vadd.f32 %v1713, %v2046
        %v2172 = vadd.f32 %v1714, %v2050
        %v2173 = vadd.f32 %v1715, %v2052
        %v2174 = vadd.f32 %v1716, %v2056
        %v2175 = vadd.f32 %v1717, %v2058
        %v2176 = vadd.f32 %v1718, %v2062
        %v2177 = vadd.f32 %v1719, %v2064
        %v2178 = vadd.f32 %v1720, %v2068
        %v2179 = vadd.f32 %v1721, %v2070
        %v2180 = vadd.f32 %v1722, %v2074
        %v2181 = vadd.f32 %v1723, %v2076
        %v2182 = vadd.f32 %v1724, %v2080
        %v2183 = vadd.f32 %v1725, %v2082
        %v2184 = vadd.f32 %v1726, %v2086
        %v2185 = vadd.f32 %v1727, %v2088
        %v2186 = vadd.f32 %v1728, %v2092
        %v2187 = vadd.f32 %v1729, %v2094
        %v2188 = vadd.f32 %v1730, %v2098
        %v2189 = vadd.f32 %v1731, %v2100
        %v2190 = vadd.f32 %v1732, %v2104
        %v2191 = vadd.f32 %v1733, %v2106
        %v2192 = vadd.f32 %v1734, %v2110
        %v2193 = vadd.f32 %v1735, %v2112
        %v2194 = vadd.f32 %v1736, %v2116
        %v2195 = vadd.f32 %v1737, %v2118
        %v2196 = vadd.f32 %v1738, %v2122
        %v2197 = vadd.f32 %v1739, %v2124
        %v2198 = vadd.f32 %v1740, %v2128
        %v2199 = vadd.f32 %v1741, %v2130
        %v2200 = vadd.f32 %v1742, %v2134
        %v2201 = vadd.f32 %v1743, %v2136
        %s2202 = scalar_lea.vmem %s1, 256
        %v2203 = vld [vmem:[%s2202] sm:$0xff]
        %v2204 = vld [vmem:[%s2202 + $0x8] sm:$0xff]
        %v2205 = vld [vmem:[%s2202 + $0x10] sm:$0xff]
        %v2206 = vld [vmem:[%s2202 + $0x18] sm:$0xff]
        %v2207 = vld [vmem:[%s2202 + $0x20] sm:$0xff]
        %v2208 = vld [vmem:[%s2202 + $0x28] sm:$0xff]
        %v2209 = vld [vmem:[%s2202 + $0x30] sm:$0xff]
        %v2210 = vld [vmem:[%s2202 + $0x38] sm:$0xff]
        %vm2211 = vcmask 1043456
        %v2212 = vrot.slane %v498, 4
        %v2213 = vrot.slane %v499, 4
        %v2214 = vsel %vm2211, %v2212, %v2213
        %v2215 = vrot.slane %v500, 4
        %v2216 = vsel %vm2211, %v2213, %v2215
        %v2217 = vrot.slane %v501, 4
        %v2218 = vsel %vm2211, %v2215, %v2217
        %v2219 = vrot.slane %v502, 4
        %v2220 = vsel %vm2211, %v2217, %v2219
        %v2221 = vrot.slane %v503, 4
        %v2222 = vsel %vm2211, %v2219, %v2221
        %v2223 = vrot.slane %v504, 4
        %v2224 = vsel %vm2211, %v2221, %v2223
        %v2225 = vrot.slane %v505, 4
        %v2226 = vsel %vm2211, %v2223, %v2225
        %v2227 = vrot.slane %v506, 4
        %v2228 = vsel %vm2211, %v2225, %v2227
        %v2229 = vrot.slane %v507, 4
        %v2230 = vsel %vm2211, %v2227, %v2229
        %v2231 = vrot.slane %v508, 4
        %v2232 = vsel %vm2211, %v2229, %v2231
        %v2233 = vrot.slane %v509, 4
        %v2234 = vsel %vm2211, %v2231, %v2233
        %v2235 = vrot.slane %v510, 4
        %v2236 = vsel %vm2211, %v2233, %v2235
        %v2237 = vrot.slane %v511, 4
        %v2238 = vsel %vm2211, %v2235, %v2237
        %v2239 = vrot.slane %v512, 4
        %v2240 = vsel %vm2211, %v2237, %v2239
        %v2241 = vrot.slane %v513, 4
        %v2242 = vsel %vm2211, %v2239, %v2241
        %v2243 = vrot.slane %v514, 4
        %v2244 = vsel %vm2211, %v2241, %v2243
        %v2245 = vrot.slane %v515, 4
        %v2246 = vsel %vm2211, %v2243, %v2245
        %v2247 = vrot.slane %v516, 4
        %v2248 = vsel %vm2211, %v2245, %v2247
        %v2249 = vrot.slane %v517, 4
        %v2250 = vsel %vm2211, %v2247, %v2249
        %v2251 = vrot.slane %v518, 4
        %v2252 = vsel %vm2211, %v2249, %v2251
        %v2253 = vrot.slane %v519, 4
        %v2254 = vsel %vm2211, %v2251, %v2253
        %v2255 = vrot.slane %v520, 4
        %v2256 = vsel %vm2211, %v2253, %v2255
        %v2257 = vrot.slane %v521, 4
        %v2258 = vsel %vm2211, %v2255, %v2257
        %v2259 = vrot.slane %v522, 4
        %v2260 = vsel %vm2211, %v2257, %v2259
        %v2261 = vrot.slane %v523, 4
        %v2262 = vsel %vm2211, %v2259, %v2261
        %v2263 = vrot.slane %v524, 4
        %v2264 = vsel %vm2211, %v2261, %v2263
        %v2265 = vrot.slane %v525, 4
        %v2266 = vsel %vm2211, %v2263, %v2265
        %v2267 = vrot.slane %v526, 4
        %v2268 = vsel %vm2211, %v2265, %v2267
        %v2269 = vrot.slane %v527, 4
        %v2270 = vsel %vm2211, %v2267, %v2269
        %v2271 = vrot.slane %v528, 4
        %v2272 = vsel %vm2211, %v2269, %v2271
        %v2273 = vrot.slane %v529, 4
        %v2274 = vsel %vm2211, %v2271, %v2273
        %v2275 = vsel %vm643, %v2214, 0
        %v2277 = vsel %vm643, %v2216, 0
        %v2279 = vsel %vm643, %v2218, 0
        %v2281 = vsel %vm643, %v2220, 0
        %v2283 = vsel %vm643, %v2222, 0
        %v2285 = vsel %vm643, %v2224, 0
        %v2287 = vsel %vm643, %v2226, 0
        %v2289 = vsel %vm643, %v2228, 0
        %v2291 = vsel %vm643, %v2230, 0
        %v2293 = vsel %vm643, %v2232, 0
        %v2295 = vsel %vm643, %v2234, 0
        %v2297 = vsel %vm643, %v2236, 0
        %v2299 = vsel %vm643, %v2238, 0
        %v2301 = vsel %vm643, %v2240, 0
        %v2303 = vsel %vm643, %v2242, 0
        %v2305 = vsel %vm643, %v2244, 0
        %v2307 = vsel %vm643, %v2246, 0
        %v2309 = vsel %vm643, %v2248, 0
        %v2311 = vsel %vm643, %v2250, 0
        %v2313 = vsel %vm643, %v2252, 0
        %v2315 = vsel %vm643, %v2254, 0
        %v2317 = vsel %vm643, %v2256, 0
        %v2319 = vsel %vm643, %v2258, 0
        %v2321 = vsel %vm643, %v2260, 0
        %v2323 = vsel %vm643, %v2262, 0
        %v2325 = vsel %vm643, %v2264, 0
        %v2327 = vsel %vm643, %v2266, 0
        %v2329 = vsel %vm643, %v2268, 0
        %v2331 = vsel %vm643, %v2270, 0
        %v2333 = vsel %vm643, %v2272, 0
        %v2335 = vsel %vm643, %v2274, 0
        %v2337 = vsel %vm643, %v2273, 0
        %2339 = vmatprep.subr.mxu0 %v2204
        %2340 = vmatpush1.msra.mxu0 %v2203
        %2341 = vmatprep.subr.mxu0 %v2206
        %2342 = vmatpush1.msra.mxu0 %v2205
        %2343 = vmatprep.subr.mxu0 %v2208
        %2344 = vmatpush1.msra.mxu0 %v2207
        %2345 = vmatprep.subr.mxu0 %v2210
        %2346 = vmatpush1.msra.mxu0 %v2209
        %2347 = vmatprep.subr.mxu0 0.0
        %2348 = vmatpush1.msra.mxu0 0.0
        %2349 = vmatprep.subr.mxu0 0.0
        %2350 = vmatpush1.msra.mxu0 0.0
        %2351 = vmatprep.subr.mxu0 0.0
        %2352 = vmatpush1.msra.mxu0 0.0
        %2353 = vmatprep.subr.mxu0 0.0
        %2354 = vmatpush1.msra.mxu0 0.0
        %2355 = vmatprep.subr.mxu0 0.0
        %2356 = vmatpush1.msra.mxu0 0.0
        %2357 = vmatprep.subr.mxu0 0.0
        %2358 = vmatpush1.msra.mxu0 0.0
        %2359 = vmatprep.subr.mxu0 0.0
        %2360 = vmatpush1.msra.mxu0 0.0
        %2361 = vmatprep.subr.mxu0 0.0
        %2362 = vmatpush1.msra.mxu0 0.0
        %2363 = vmatprep.subr.mxu0 0.0
        %2364 = vmatpush1.msra.mxu0 0.0
        %2365 = vmatprep.subr.mxu0 0.0
        %2366 = vmatpush1.msra.mxu0 0.0
        %2367 = vmatprep.subr.mxu0 0.0
        %2368 = vmatpush1.msra.mxu0 0.0
        %2369 = vmatprep.subr.mxu0 0.0
        %2370 = vmatpush1.msra.mxu0 0.0
        %2371 = vmatprep.subr.mxu0 0.0
        %2372 = vmatpush1.msra.mxu0 0.0
        %2373 = vmatprep.subr.mxu0 0.0
        %2374 = vmatpush1.msra.mxu0 0.0
        %2375 = vmatprep.subr.mxu0 0.0
        %2376 = vmatpush1.msra.mxu0 0.0
        %2377 = vmatprep.subr.mxu0 0.0
        %2378 = vmatpush1.msra.mxu0 0.0
        %2379 = vmatprep.subr.mxu0 0.0
        %2380 = vmatpush1.msra.mxu0 0.0
        %2381 = vmatprep.subr.mxu0 0.0
        %2382 = vmatpush1.msra.mxu0 0.0
        %2383 = vmatprep.subr.mxu0 0.0
        %2384 = vmatpush1.msra.mxu0 0.0
        %2385 = vmatprep.subr.mxu0 0.0
        %2386 = vmatpush1.msra.mxu0 0.0
        %2387 = vmatprep.subr.mxu0 0.0
        %2388 = vmatpush1.msra.mxu0 0.0
        %2389 = vmatprep.subr.mxu0 0.0
        %2390 = vmatpush1.msra.mxu0 0.0
        %2391 = vmatprep.subr.mxu0 0.0
        %2392 = vmatpush1.msra.mxu0 0.0
        %2393 = vmatprep.subr.mxu0 0.0
        %2394 = vmatpush1.msra.mxu0 0.0
        %2395 = vmatprep.subr.mxu0 0.0
        %2396 = vmatpush1.msra.mxu0 0.0
        %2397 = vmatprep.subr.mxu0 0.0
        %2398 = vmatpush1.msra.mxu0 0.0
        %2399 = vmatprep.subr.mxu0 0.0
        %2400 = vmatpush1.msra.mxu0 0.0
        %2401 = vmatprep.subr.mxu0 0.0
        %2402 = vmatpush1.msra.mxu0 0.0
        %2403 = vmatprep.mubr.f32.mxu0 0.0
        %2404 = vmatmul.mubr.f32.gmra.mrb[0].mxu0 %v2275
        %v2405 = vpop.f32.mrb[0].mxu0
        %v2406 = vadd.f32 0.0, %v2405
        %v2407 = vpop.f32.mrb[0].mxu0
        %v2408 = vadd.f32 0.0, %v2407
        %2409 = vmatprep.mubr.f32.mxu0 0.0
        %2410 = vmatmul.mubr.f32.gmra.mrb[0].mxu0 %v2277
        %v2411 = vpop.f32.mrb[0].mxu0
        %v2412 = vadd.f32 0.0, %v2411
        %v2413 = vpop.f32.mrb[0].mxu0
        %v2414 = vadd.f32 0.0, %v2413
        %2415 = vmatprep.mubr.f32.mxu0 0.0
        %2416 = vmatmul.mubr.f32.gmra.mrb[0].mxu0 %v2279
        %v2417 = vpop.f32.mrb[0].mxu0
        %v2418 = vadd.f32 0.0, %v2417
        %v2419 = vpop.f32.mrb[0].mxu0
        %v2420 = vadd.f32 0.0, %v2419
        %2421 = vmatprep.mubr.f32.mxu0 0.0
        %2422 = vmatmul.mubr.f32.gmra.mrb[0].mxu0 %v2281
        %v2423 = vpop.f32.mrb[0].mxu0
        %v2424 = vadd.f32 0.0, %v2423
        %v2425 = vpop.f32.mrb[0].mxu0
        %v2426 = vadd.f32 0.0, %v2425
        %2427 = vmatprep.mubr.f32.mxu0 0.0
        %2428 = vmatmul.mubr.f32.gmra.mrb[0].mxu0 %v2283
        %v2429 = vpop.f32.mrb[0].mxu0
        %v2430 = vadd.f32 0.0, %v2429
        %v2431 = vpop.f32.mrb[0].mxu0
        %v2432 = vadd.f32 0.0, %v2431
        %2433 = vmatprep.mubr.f32.mxu0 0.0
        %2434 = vmatmul.mubr.f32.gmra.mrb[0].mxu0 %v2285
        %v2435 = vpop.f32.mrb[0].mxu0
        %v2436 = vadd.f32 0.0, %v2435
        %v2437 = vpop.f32.mrb[0].mxu0
        %v2438 = vadd.f32 0.0, %v2437
        %2439 = vmatprep.mubr.f32.mxu0 0.0
        %2440 = vmatmul.mubr.f32.gmra.mrb[0].mxu0 %v2287
        %v2441 = vpop.f32.mrb[0].mxu0
        %v2442 = vadd.f32 0.0, %v2441
        %v2443 = vpop.f32.mrb[0].mxu0
        %v2444 = vadd.f32 0.0, %v2443
        %2445 = vmatprep.mubr.f32.mxu0 0.0
        %2446 = vmatmul.mubr.f32.gmra.mrb[0].mxu0 %v2289
        %v2447 = vpop.f32.mrb[0].mxu0
        %v2448 = vadd.f32 0.0, %v2447
        %v2449 = vpop.f32.mrb[0].mxu0
        %v2450 = vadd.f32 0.0, %v2449
        %2451 = vmatprep.mubr.f32.mxu0 0.0
        %2452 = vmatmul.mubr.f32.gmra.mrb[0].mxu0 %v2291
        %v2453 = vpop.f32.mrb[0].mxu0
        %v2454 = vadd.f32 0.0, %v2453
        %v2455 = vpop.f32.mrb[0].mxu0
        %v2456 = vadd.f32 0.0, %v2455
        %2457 = vmatprep.mubr.f32.mxu0 0.0
        %2458 = vmatmul.mubr.f32.gmra.mrb[0].mxu0 %v2293
        %v2459 = vpop.f32.mrb[0].mxu0
        %v2460 = vadd.f32 0.0, %v2459
        %v2461 = vpop.f32.mrb[0].mxu0
        %v2462 = vadd.f32 0.0, %v2461
        %2463 = vmatprep.mubr.f32.mxu0 0.0
        %2464 = vmatmul.mubr.f32.gmra.mrb[0].mxu0 %v2295
        %v2465 = vpop.f32.mrb[0].mxu0
        %v2466 = vadd.f32 0.0, %v2465
        %v2467 = vpop.f32.mrb[0].mxu0
        %v2468 = vadd.f32 0.0, %v2467
        %2469 = vmatprep.mubr.f32.mxu0 0.0
        %2470 = vmatmul.mubr.f32.gmra.mrb[0].mxu0 %v2297
        %v2471 = vpop.f32.mrb[0].mxu0
        %v2472 = vadd.f32 0.0, %v2471
        %v2473 = vpop.f32.mrb[0].mxu0
        %v2474 = vadd.f32 0.0, %v2473
        %2475 = vmatprep.mubr.f32.mxu0 0.0
        %2476 = vmatmul.mubr.f32.gmra.mrb[0].mxu0 %v2299
        %v2477 = vpop.f32.mrb[0].mxu0
        %v2478 = vadd.f32 0.0, %v2477
        %v2479 = vpop.f32.mrb[0].mxu0
        %v2480 = vadd.f32 0.0, %v2479
        %2481 = vmatprep.mubr.f32.mxu0 0.0
        %2482 = vmatmul.mubr.f32.gmra.mrb[0].mxu0 %v2301
        %v2483 = vpop.f32.mrb[0].mxu0
        %v2484 = vadd.f32 0.0, %v2483
        %v2485 = vpop.f32.mrb[0].mxu0
        %v2486 = vadd.f32 0.0, %v2485
        %2487 = vmatprep.mubr.f32.mxu0 0.0
        %2488 = vmatmul.mubr.f32.gmra.mrb[0].mxu0 %v2303
        %v2489 = vpop.f32.mrb[0].mxu0
        %v2490 = vadd.f32 0.0, %v2489
        %v2491 = vpop.f32.mrb[0].mxu0
        %v2492 = vadd.f32 0.0, %v2491
        %2493 = vmatprep.mubr.f32.mxu0 0.0
        %2494 = vmatmul.mubr.f32.gmra.mrb[0].mxu0 %v2305
        %v2495 = vpop.f32.mrb[0].mxu0
        %v2496 = vadd.f32 0.0, %v2495
        %v2497 = vpop.f32.mrb[0].mxu0
        %v2498 = vadd.f32 0.0, %v2497
        %2499 = vmatprep.mubr.f32.mxu0 0.0
        %2500 = vmatmul.mubr.f32.gmra.mrb[0].mxu0 %v2307
        %v2501 = vpop.f32.mrb[0].mxu0
        %v2502 = vadd.f32 0.0, %v2501
        %v2503 = vpop.f32.mrb[0].mxu0
        %v2504 = vadd.f32 0.0, %v2503
        %2505 = vmatprep.mubr.f32.mxu0 0.0
        %2506 = vmatmul.mubr.f32.gmra.mrb[0].mxu0 %v2309
        %v2507 = vpop.f32.mrb[0].mxu0
        %v2508 = vadd.f32 0.0, %v2507
        %v2509 = vpop.f32.mrb[0].mxu0
        %v2510 = vadd.f32 0.0, %v2509
        %2511 = vmatprep.mubr.f32.mxu0 0.0
        %2512 = vmatmul.mubr.f32.gmra.mrb[0].mxu0 %v2311
        %v2513 = vpop.f32.mrb[0].mxu0
        %v2514 = vadd.f32 0.0, %v2513
        %v2515 = vpop.f32.mrb[0].mxu0
        %v2516 = vadd.f32 0.0, %v2515
        %2517 = vmatprep.mubr.f32.mxu0 0.0
        %2518 = vmatmul.mubr.f32.gmra.mrb[0].mxu0 %v2313
        %v2519 = vpop.f32.mrb[0].mxu0
        %v2520 = vadd.f32 0.0, %v2519
        %v2521 = vpop.f32.mrb[0].mxu0
        %v2522 = vadd.f32 0.0, %v2521
        %2523 = vmatprep.mubr.f32.mxu0 0.0
        %2524 = vmatmul.mubr.f32.gmra.mrb[0].mxu0 %v2315
        %v2525 = vpop.f32.mrb[0].mxu0
        %v2526 = vadd.f32 0.0, %v2525
        %v2527 = vpop.f32.mrb[0].mxu0
        %v2528 = vadd.f32 0.0, %v2527
        %2529 = vmatprep.mubr.f32.mxu0 0.0
        %2530 = vmatmul.mubr.f32.gmra.mrb[0].mxu0 %v2317
        %v2531 = vpop.f32.mrb[0].mxu0
        %v2532 = vadd.f32 0.0, %v2531
        %v2533 = vpop.f32.mrb[0].mxu0
        %v2534 = vadd.f32 0.0, %v2533
        %2535 = vmatprep.mubr.f32.mxu0 0.0
        %2536 = vmatmul.mubr.f32.gmra.mrb[0].mxu0 %v2319
        %v2537 = vpop.f32.mrb[0].mxu0
        %v2538 = vadd.f32 0.0, %v2537
        %v2539 = vpop.f32.mrb[0].mxu0
        %v2540 = vadd.f32 0.0, %v2539
        %2541 = vmatprep.mubr.f32.mxu0 0.0
        %2542 = vmatmul.mubr.f32.gmra.mrb[0].mxu0 %v2321
        %v2543 = vpop.f32.mrb[0].mxu0
        %v2544 = vadd.f32 0.0, %v2543
        %v2545 = vpop.f32.mrb[0].mxu0
        %v2546 = vadd.f32 0.0, %v2545
        %2547 = vmatprep.mubr.f32.mxu0 0.0
        %2548 = vmatmul.mubr.f32.gmra.mrb[0].mxu0 %v2323
        %v2549 = vpop.f32.mrb[0].mxu0
        %v2550 = vadd.f32 0.0, %v2549
        %v2551 = vpop.f32.mrb[0].mxu0
        %v2552 = vadd.f32 0.0, %v2551
        %2553 = vmatprep.mubr.f32.mxu0 0.0
        %2554 = vmatmul.mubr.f32.gmra.mrb[0].mxu0 %v2325
        %v2555 = vpop.f32.mrb[0].mxu0
        %v2556 = vadd.f32 0.0, %v2555
        %v2557 = vpop.f32.mrb[0].mxu0
        %v2558 = vadd.f32 0.0, %v2557
        %2559 = vmatprep.mubr.f32.mxu0 0.0
        %2560 = vmatmul.mubr.f32.gmra.mrb[0].mxu0 %v2327
        %v2561 = vpop.f32.mrb[0].mxu0
        %v2562 = vadd.f32 0.0, %v2561
        %v2563 = vpop.f32.mrb[0].mxu0
        %v2564 = vadd.f32 0.0, %v2563
        %2565 = vmatprep.mubr.f32.mxu0 0.0
        %2566 = vmatmul.mubr.f32.gmra.mrb[0].mxu0 %v2329
        %v2567 = vpop.f32.mrb[0].mxu0
        %v2568 = vadd.f32 0.0, %v2567
        %v2569 = vpop.f32.mrb[0].mxu0
        %v2570 = vadd.f32 0.0, %v2569
        %2571 = vmatprep.mubr.f32.mxu0 0.0
        %2572 = vmatmul.mubr.f32.gmra.mrb[0].mxu0 %v2331
        %v2573 = vpop.f32.mrb[0].mxu0
        %v2574 = vadd.f32 0.0, %v2573
        %v2575 = vpop.f32.mrb[0].mxu0
        %v2576 = vadd.f32 0.0, %v2575
        %2577 = vmatprep.mubr.f32.mxu0 0.0
        %2578 = vmatmul.mubr.f32.gmra.mrb[0].mxu0 %v2333
        %v2579 = vpop.f32.mrb[0].mxu0
        %v2580 = vadd.f32 0.0, %v2579
        %v2581 = vpop.f32.mrb[0].mxu0
        %v2582 = vadd.f32 0.0, %v2581
        %2583 = vmatprep.mubr.f32.mxu0 0.0
        %2584 = vmatmul.mubr.f32.gmra.mrb[0].mxu0 %v2335
        %v2585 = vpop.f32.mrb[0].mxu0
        %v2586 = vadd.f32 0.0, %v2585
        %v2587 = vpop.f32.mrb[0].mxu0
        %v2588 = vadd.f32 0.0, %v2587
        %2589 = vmatprep.mubr.f32.mxu0 0.0
        %2590 = vmatmul.mubr.f32.gmra.mrb[0].mxu0 %v2337
        %v2591 = vpop.f32.mrb[0].mxu0
        %v2592 = vadd.f32 0.0, %v2591
        %v2593 = vpop.f32.mrb[0].mxu0
        %v2594 = vadd.f32 0.0, %v2593
        %2595 = vdwg.mxu0
        %v2596 = vadd.f32 %v2138, %v2406
        %v2597 = vadd.f32 %v2139, %v2408
        %v2598 = vadd.f32 %v2140, %v2412
        %v2599 = vadd.f32 %v2141, %v2414
        %v2600 = vadd.f32 %v2142, %v2418
        %v2601 = vadd.f32 %v2143, %v2420
        %v2602 = vadd.f32 %v2144, %v2424
        %v2603 = vadd.f32 %v2145, %v2426
        %v2604 = vadd.f32 %v2146, %v2430
        %v2605 = vadd.f32 %v2147, %v2432
        %v2606 = vadd.f32 %v2148, %v2436
        %v2607 = vadd.f32 %v2149, %v2438
        %v2608 = vadd.f32 %v2150, %v2442
        %v2609 = vadd.f32 %v2151, %v2444
        %v2610 = vadd.f32 %v2152, %v2448
        %v2611 = vadd.f32 %v2153, %v2450
        %v2612 = vadd.f32 %v2154, %v2454
        %v2613 = vadd.f32 %v2155, %v2456
        %v2614 = vadd.f32 %v2156, %v2460
        %v2615 = vadd.f32 %v2157, %v2462
        %v2616 = vadd.f32 %v2158, %v2466
        %v2617 = vadd.f32 %v2159, %v2468
        %v2618 = vadd.f32 %v2160, %v2472
        %v2619 = vadd.f32 %v2161, %v2474
        %v2620 = vadd.f32 %v2162, %v2478
        %v2621 = vadd.f32 %v2163, %v2480
        %v2622 = vadd.f32 %v2164, %v2484
        %v2623 = vadd.f32 %v2165, %v2486
        %v2624 = vadd.f32 %v2166, %v2490
        %v2625 = vadd.f32 %v2167, %v2492
        %v2626 = vadd.f32 %v2168, %v2496
        %v2627 = vadd.f32 %v2169, %v2498
        %v2628 = vadd.f32 %v2170, %v2502
        %v2629 = vadd.f32 %v2171, %v2504
        %v2630 = vadd.f32 %v2172, %v2508
        %v2631 = vadd.f32 %v2173, %v2510
        %v2632 = vadd.f32 %v2174, %v2514
        %v2633 = vadd.f32 %v2175, %v2516
        %v2634 = vadd.f32 %v2176, %v2520
        %v2635 = vadd.f32 %v2177, %v2522
        %v2636 = vadd.f32 %v2178, %v2526
        %v2637 = vadd.f32 %v2179, %v2528
        %v2638 = vadd.f32 %v2180, %v2532
        %v2639 = vadd.f32 %v2181, %v2534
        %v2640 = vadd.f32 %v2182, %v2538
        %v2641 = vadd.f32 %v2183, %v2540
        %v2642 = vadd.f32 %v2184, %v2544
        %v2643 = vadd.f32 %v2185, %v2546
        %v2644 = vadd.f32 %v2186, %v2550
        %v2645 = vadd.f32 %v2187, %v2552
        %v2646 = vadd.f32 %v2188, %v2556
        %v2647 = vadd.f32 %v2189, %v2558
        %v2648 = vadd.f32 %v2190, %v2562
        %v2649 = vadd.f32 %v2191, %v2564
        %v2650 = vadd.f32 %v2192, %v2568
        %v2651 = vadd.f32 %v2193, %v2570
        %v2652 = vadd.f32 %v2194, %v2574
        %v2653 = vadd.f32 %v2195, %v2576
        %v2654 = vadd.f32 %v2196, %v2580
        %v2655 = vadd.f32 %v2197, %v2582
        %v2656 = vadd.f32 %v2198, %v2586
        %v2657 = vadd.f32 %v2199, %v2588
        %v2658 = vadd.f32 %v2200, %v2592
        %v2659 = vadd.f32 %v2201, %v2594
        %v2660 = vld [vmem:[%s2] sm:$0x3]
        %v2662 = vlaneseq
        %v2663 = vshrl.u32 %v2662, 7
        %v2664 = vsub.s32 0, %v2663
        %v2665 = vrot.slane %v2660, %v2664
        %v2666 = vlaneseq
        %v2667 = vshrl.u32 %v2666, 7
        %v2668 = vsub.s32 1, %v2667
        %v2669 = vrot.slane %v2660, %v2668
        %v2672 = vadd.f32 %v2596, %v2665
        %v2673 = vadd.f32 %v2597, %v2669
        %v2674 = vadd.f32 %v2598, %v2665
        %v2675 = vadd.f32 %v2599, %v2669
        %v2676 = vadd.f32 %v2600, %v2665
        %v2677 = vadd.f32 %v2601, %v2669
        %v2678 = vadd.f32 %v2602, %v2665
        %v2679 = vadd.f32 %v2603, %v2669
        %v2680 = vadd.f32 %v2604, %v2665
        %v2681 = vadd.f32 %v2605, %v2669
        %v2682 = vadd.f32 %v2606, %v2665
        %v2683 = vadd.f32 %v2607, %v2669
        %v2684 = vadd.f32 %v2608, %v2665
        %v2685 = vadd.f32 %v2609, %v2669
        %v2686 = vadd.f32 %v2610, %v2665
        %v2687 = vadd.f32 %v2611, %v2669
        %v2688 = vadd.f32 %v2612, %v2665
        %v2689 = vadd.f32 %v2613, %v2669
        %v2690 = vadd.f32 %v2614, %v2665
        %v2691 = vadd.f32 %v2615, %v2669
        %v2692 = vadd.f32 %v2616, %v2665
        %v2693 = vadd.f32 %v2617, %v2669
        %v2694 = vadd.f32 %v2618, %v2665
        %v2695 = vadd.f32 %v2619, %v2669
        %v2696 = vadd.f32 %v2620, %v2665
        %v2697 = vadd.f32 %v2621, %v2669
        %v2698 = vadd.f32 %v2622, %v2665
        %v2699 = vadd.f32 %v2623, %v2669
        %v2700 = vadd.f32 %v2624, %v2665
        %v2701 = vadd.f32 %v2625, %v2669
        %v2702 = vadd.f32 %v2626, %v2665
        %v2703 = vadd.f32 %v2627, %v2669
        %v2704 = vadd.f32 %v2628, %v2665
        %v2705 = vadd.f32 %v2629, %v2669
        %v2706 = vadd.f32 %v2630, %v2665
        %v2707 = vadd.f32 %v2631, %v2669
        %v2708 = vadd.f32 %v2632, %v2665
        %v2709 = vadd.f32 %v2633, %v2669
        %v2710 = vadd.f32 %v2634, %v2665
        %v2711 = vadd.f32 %v2635, %v2669
        %v2712 = vadd.f32 %v2636, %v2665
        %v2713 = vadd.f32 %v2637, %v2669
        %v2714 = vadd.f32 %v2638, %v2665
        %v2715 = vadd.f32 %v2639, %v2669
        %v2716 = vadd.f32 %v2640, %v2665
        %v2717 = vadd.f32 %v2641, %v2669
        %v2718 = vadd.f32 %v2642, %v2665
        %v2719 = vadd.f32 %v2643, %v2669
        %v2720 = vadd.f32 %v2644, %v2665
        %v2721 = vadd.f32 %v2645, %v2669
        %v2722 = vadd.f32 %v2646, %v2665
        %v2723 = vadd.f32 %v2647, %v2669
        %v2724 = vadd.f32 %v2648, %v2665
        %v2725 = vadd.f32 %v2649, %v2669
        %v2726 = vadd.f32 %v2650, %v2665
        %v2727 = vadd.f32 %v2651, %v2669
        %v2728 = vadd.f32 %v2652, %v2665
        %v2729 = vadd.f32 %v2653, %v2669
        %v2730 = vadd.f32 %v2654, %v2665
        %v2731 = vadd.f32 %v2655, %v2669
        %v2732 = vadd.f32 %v2656, %v2665
        %v2733 = vadd.f32 %v2657, %v2669
        %v2734 = vadd.f32 %v2658, %v2665
        %v2735 = vadd.f32 %v2659, %v2669
        %v2736 = vmax.f32 %v2672, 0.0
        %v2737 = vmax.f32 %v2673, 0.0
        %v2738 = vmax.f32 %v2674, 0.0
        %v2739 = vmax.f32 %v2675, 0.0
        %v2740 = vmax.f32 %v2676, 0.0
        %v2741 = vmax.f32 %v2677, 0.0
        %v2742 = vmax.f32 %v2678, 0.0
        %v2743 = vmax.f32 %v2679, 0.0
        %v2744 = vmax.f32 %v2680, 0.0
        %v2745 = vmax.f32 %v2681, 0.0
        %v2746 = vmax.f32 %v2682, 0.0
        %v2747 = vmax.f32 %v2683, 0.0
        %v2748 = vmax.f32 %v2684, 0.0
        %v2749 = vmax.f32 %v2685, 0.0
        %v2750 = vmax.f32 %v2686, 0.0
        %v2751 = vmax.f32 %v2687, 0.0
        %v2752 = vmax.f32 %v2688, 0.0
        %v2753 = vmax.f32 %v2689, 0.0
        %v2754 = vmax.f32 %v2690, 0.0
        %v2755 = vmax.f32 %v2691, 0.0
        %v2756 = vmax.f32 %v2692, 0.0
        %v2757 = vmax.f32 %v2693, 0.0
        %v2758 = vmax.f32 %v2694, 0.0
        %v2759 = vmax.f32 %v2695, 0.0
        %v2760 = vmax.f32 %v2696, 0.0
        %v2761 = vmax.f32 %v2697, 0.0
        %v2762 = vmax.f32 %v2698, 0.0
        %v2763 = vmax.f32 %v2699, 0.0
        %v2764 = vmax.f32 %v2700, 0.0
        %v2765 = vmax.f32 %v2701, 0.0
        %v2766 = vmax.f32 %v2702, 0.0
        %v2767 = vmax.f32 %v2703, 0.0
        %v2768 = vmax.f32 %v2704, 0.0
        %v2769 = vmax.f32 %v2705, 0.0
        %v2770 = vmax.f32 %v2706, 0.0
        %v2771 = vmax.f32 %v2707, 0.0
        %v2772 = vmax.f32 %v2708, 0.0
        %v2773 = vmax.f32 %v2709, 0.0
        %v2774 = vmax.f32 %v2710, 0.0
        %v2775 = vmax.f32 %v2711, 0.0
        %v2776 = vmax.f32 %v2712, 0.0
        %v2777 = vmax.f32 %v2713, 0.0
        %v2778 = vmax.f32 %v2714, 0.0
        %v2779 = vmax.f32 %v2715, 0.0
        %v2780 = vmax.f32 %v2716, 0.0
        %v2781 = vmax.f32 %v2717, 0.0
        %v2782 = vmax.f32 %v2718, 0.0
        %v2783 = vmax.f32 %v2719, 0.0
        %v2784 = vmax.f32 %v2720, 0.0
        %v2785 = vmax.f32 %v2721, 0.0
        %v2786 = vmax.f32 %v2722, 0.0
        %v2787 = vmax.f32 %v2723, 0.0
        %v2788 = vmax.f32 %v2724, 0.0
        %v2789 = vmax.f32 %v2725, 0.0
        %v2790 = vmax.f32 %v2726, 0.0
        %v2791 = vmax.f32 %v2727, 0.0
        %v2792 = vmax.f32 %v2728, 0.0
        %v2793 = vmax.f32 %v2729, 0.0
        %v2794 = vmax.f32 %v2730, 0.0
        %v2795 = vmax.f32 %v2731, 0.0
        %v2796 = vmax.f32 %v2732, 0.0
        %v2797 = vmax.f32 %v2733, 0.0
        %v2798 = vmax.f32 %v2734, 0.0
        %v2799 = vmax.f32 %v2735, 0.0
        %v2864 = vrot.slane %v2736, 1
        %v2865 = vrot.slane %v2738, 1
        %v2866 = vsel %vm579, %v2864, %v2865
        %v2867 = vrot.slane %v2737, 1
        %v2868 = vrot.slane %v2739, 1
        %v2869 = vsel %vm579, %v2867, %v2868
        %v2870 = vrot.slane %v2740, 1
        %v2871 = vsel %vm579, %v2865, %v2870
        %v2872 = vrot.slane %v2741, 1
        %v2873 = vsel %vm579, %v2868, %v2872
        %v2874 = vrot.slane %v2742, 1
        %v2875 = vsel %vm579, %v2870, %v2874
        %v2876 = vrot.slane %v2743, 1
        %v2877 = vsel %vm579, %v2872, %v2876
        %v2878 = vrot.slane %v2744, 1
        %v2879 = vsel %vm579, %v2874, %v2878
        %v2880 = vrot.slane %v2745, 1
        %v2881 = vsel %vm579, %v2876, %v2880
        %v2882 = vrot.slane %v2746, 1
        %v2883 = vsel %vm579, %v2878, %v2882
        %v2884 = vrot.slane %v2747, 1
        %v2885 = vsel %vm579, %v2880, %v2884
        %v2886 = vrot.slane %v2748, 1
        %v2887 = vsel %vm579, %v2882, %v2886
        %v2888 = vrot.slane %v2749, 1
        %v2889 = vsel %vm579, %v2884, %v2888
        %v2890 = vrot.slane %v2750, 1
        %v2891 = vsel %vm579, %v2886, %v2890
        %v2892 = vrot.slane %v2751, 1
        %v2893 = vsel %vm579, %v2888, %v2892
        %v2894 = vrot.slane %v2752, 1
        %v2895 = vsel %vm579, %v2890, %v2894
        %v2896 = vrot.slane %v2753, 1
        %v2897 = vsel %vm579, %v2892, %v2896
        %v2898 = vrot.slane %v2754, 1
        %v2899 = vsel %vm579, %v2894, %v2898
        %v2900 = vrot.slane %v2755, 1
        %v2901 = vsel %vm579, %v2896, %v2900
        %v2902 = vrot.slane %v2756, 1
        %v2903 = vsel %vm579, %v2898, %v2902
        %v2904 = vrot.slane %v2757, 1
        %v2905 = vsel %vm579, %v2900, %v2904
        %v2906 = vrot.slane %v2758, 1
        %v2907 = vsel %vm579, %v2902, %v2906
        %v2908 = vrot.slane %v2759, 1
        %v2909 = vsel %vm579, %v2904, %v2908
        %v2910 = vrot.slane %v2760, 1
        %v2911 = vsel %vm579, %v2906, %v2910
        %v2912 = vrot.slane %v2761, 1
        %v2913 = vsel %vm579, %v2908, %v2912
        %v2914 = vrot.slane %v2762, 1
        %v2915 = vsel %vm579, %v2910, %v2914
        %v2916 = vrot.slane %v2763, 1
        %v2917 = vsel %vm579, %v2912, %v2916
        %v2918 = vrot.slane %v2764, 1
        %v2919 = vsel %vm579, %v2914, %v2918
        %v2920 = vrot.slane %v2765, 1
        %v2921 = vsel %vm579, %v2916, %v2920
        %v2922 = vrot.slane %v2766, 1
        %v2923 = vsel %vm579, %v2918, %v2922
        %v2924 = vrot.slane %v2767, 1
        %v2925 = vsel %vm579, %v2920, %v2924
        %v2926 = vrot.slane %v2768, 1
        %v2927 = vsel %vm579, %v2922, %v2926
        %v2928 = vrot.slane %v2769, 1
        %v2929 = vsel %vm579, %v2924, %v2928
        %v2930 = vrot.slane %v2770, 1
        %v2931 = vsel %vm579, %v2926, %v2930
        %v2932 = vrot.slane %v2771, 1
        %v2933 = vsel %vm579, %v2928, %v2932
        %v2934 = vrot.slane %v2772, 1
        %v2935 = vsel %vm579, %v2930, %v2934
        %v2936 = vrot.slane %v2773, 1
        %v2937 = vsel %vm579, %v2932, %v2936
        %v2938 = vrot.slane %v2774, 1
        %v2939 = vsel %vm579, %v2934, %v2938
        %v2940 = vrot.slane %v2775, 1
        %v2941 = vsel %vm579, %v2936, %v2940
        %v2942 = vrot.slane %v2776, 1
        %v2943 = vsel %vm579, %v2938, %v2942
        %v2944 = vrot.slane %v2777, 1
        %v2945 = vsel %vm579, %v2940, %v2944
        %v2946 = vrot.slane %v2778, 1
        %v2947 = vsel %vm579, %v2942, %v2946
        %v2948 = vrot.slane %v2779, 1
        %v2949 = vsel %vm579, %v2944, %v2948
        %v2950 = vrot.slane %v2780, 1
        %v2951 = vsel %vm579, %v2946, %v2950
        %v2952 = vrot.slane %v2781, 1
        %v2953 = vsel %vm579, %v2948, %v2952
        %v2954 = vrot.slane %v2782, 1
        %v2955 = vsel %vm579, %v2950, %v2954
        %v2956 = vrot.slane %v2783, 1
        %v2957 = vsel %vm579, %v2952, %v2956
        %v2958 = vrot.slane %v2784, 1
        %v2959 = vsel %vm579, %v2954, %v2958
        %v2960 = vrot.slane %v2785, 1
        %v2961 = vsel %vm579, %v2956, %v2960
        %v2962 = vrot.slane %v2786, 1
        %v2963 = vsel %vm579, %v2958, %v2962
        %v2964 = vrot.slane %v2787, 1
        %v2965 = vsel %vm579, %v2960, %v2964
        %v2966 = vrot.slane %v2788, 1
        %v2967 = vsel %vm579, %v2962, %v2966
        %v2968 = vrot.slane %v2789, 1
        %v2969 = vsel %vm579, %v2964, %v2968
        %v2970 = vrot.slane %v2790, 1
        %v2971 = vsel %vm579, %v2966, %v2970
        %v2972 = vrot.slane %v2791, 1
        %v2973 = vsel %vm579, %v2968, %v2972
        %v2974 = vrot.slane %v2792, 1
        %v2975 = vsel %vm579, %v2970, %v2974
        %v2976 = vrot.slane %v2793, 1
        %v2977 = vsel %vm579, %v2972, %v2976
        %v2978 = vrot.slane %v2794, 1
        %v2979 = vsel %vm579, %v2974, %v2978
        %v2980 = vrot.slane %v2795, 1
        %v2981 = vsel %vm579, %v2976, %v2980
        %v2982 = vrot.slane %v2796, 1
        %v2983 = vsel %vm579, %v2978, %v2982
        %v2984 = vrot.slane %v2797, 1
        %v2985 = vsel %vm579, %v2980, %v2984
        %v2986 = vrot.slane %v2798, 1
        %v2987 = vsel %vm579, %v2982, %v2986
        %v2988 = vrot.slane %v2799, 1
        %v2989 = vsel %vm579, %v2984, %v2988
        %v3054 = vmax.f32 %v2736, %v2866
        %v3055 = vmax.f32 %v2737, %v2869
        %v3056 = vmax.f32 %v2738, %v2871
        %v3057 = vmax.f32 %v2739, %v2873
        %v3058 = vmax.f32 %v2740, %v2875
        %v3059 = vmax.f32 %v2741, %v2877
        %v3060 = vmax.f32 %v2742, %v2879
        %v3061 = vmax.f32 %v2743, %v2881
        %v3062 = vmax.f32 %v2744, %v2883
        %v3063 = vmax.f32 %v2745, %v2885
        %v3064 = vmax.f32 %v2746, %v2887
        %v3065 = vmax.f32 %v2747, %v2889
        %v3066 = vmax.f32 %v2748, %v2891
        %v3067 = vmax.f32 %v2749, %v2893
        %v3068 = vmax.f32 %v2750, %v2895
        %v3069 = vmax.f32 %v2751, %v2897
        %v3070 = vmax.f32 %v2752, %v2899
        %v3071 = vmax.f32 %v2753, %v2901
        %v3072 = vmax.f32 %v2754, %v2903
        %v3073 = vmax.f32 %v2755, %v2905
        %v3074 = vmax.f32 %v2756, %v2907
        %v3075 = vmax.f32 %v2757, %v2909
        %v3076 = vmax.f32 %v2758, %v2911
        %v3077 = vmax.f32 %v2759, %v2913
        %v3078 = vmax.f32 %v2760, %v2915
        %v3079 = vmax.f32 %v2761, %v2917
        %v3080 = vmax.f32 %v2762, %v2919
        %v3081 = vmax.f32 %v2763, %v2921
        %v3082 = vmax.f32 %v2764, %v2923
        %v3083 = vmax.f32 %v2765, %v2925
        %v3084 = vmax.f32 %v2766, %v2927
        %v3085 = vmax.f32 %v2767, %v2929
        %v3086 = vmax.f32 %v2768, %v2931
        %v3087 = vmax.f32 %v2769, %v2933
        %v3088 = vmax.f32 %v2770, %v2935
        %v3089 = vmax.f32 %v2771, %v2937
        %v3090 = vmax.f32 %v2772, %v2939
        %v3091 = vmax.f32 %v2773, %v2941
        %v3092 = vmax.f32 %v2774, %v2943
        %v3093 = vmax.f32 %v2775, %v2945
        %v3094 = vmax.f32 %v2776, %v2947
        %v3095 = vmax.f32 %v2777, %v2949
        %v3096 = vmax.f32 %v2778, %v2951
        %v3097 = vmax.f32 %v2779, %v2953
        %v3098 = vmax.f32 %v2780, %v2955
        %v3099 = vmax.f32 %v2781, %v2957
        %v3100 = vmax.f32 %v2782, %v2959
        %v3101 = vmax.f32 %v2783, %v2961
        %v3102 = vmax.f32 %v2784, %v2963
        %v3103 = vmax.f32 %v2785, %v2965
        %v3104 = vmax.f32 %v2786, %v2967
        %v3105 = vmax.f32 %v2787, %v2969
        %v3106 = vmax.f32 %v2788, %v2971
        %v3107 = vmax.f32 %v2789, %v2973
        %v3108 = vmax.f32 %v2790, %v2975
        %v3109 = vmax.f32 %v2791, %v2977
        %v3110 = vmax.f32 %v2792, %v2979
        %v3111 = vmax.f32 %v2793, %v2981
        %v3112 = vmax.f32 %v2794, %v2983
        %v3113 = vmax.f32 %v2795, %v2985
        %v3114 = vmax.f32 %v2796, %v2987
        %v3115 = vmax.f32 %v2797, %v2989
        %v3116 = vmax.f32 %v2798, %v2986
        %v3117 = vmax.f32 %v2799, %v2988
        %3182 = vrot.lane.b32.xlu0 %v3054, 127
        %v3183 = vpop.permute.xlu0 %3182
        %3184 = vrot.lane.b32.xlu0 %v3055, 127
        %v3185 = vpop.permute.xlu0 %3184
        %3186 = vrot.lane.b32.xlu0 %v3056, 127
        %v3187 = vpop.permute.xlu0 %3186
        %3188 = vrot.lane.b32.xlu0 %v3057, 127
        %v3189 = vpop.permute.xlu0 %3188
        %3190 = vrot.lane.b32.xlu0 %v3058, 127
        %v3191 = vpop.permute.xlu0 %3190
        %3192 = vrot.lane.b32.xlu0 %v3059, 127
        %v3193 = vpop.permute.xlu0 %3192
        %3194 = vrot.lane.b32.xlu0 %v3060, 127
        %v3195 = vpop.permute.xlu0 %3194
        %3196 = vrot.lane.b32.xlu0 %v3061, 127
        %v3197 = vpop.permute.xlu0 %3196
        %3198 = vrot.lane.b32.xlu0 %v3062, 127
        %v3199 = vpop.permute.xlu0 %3198
        %3200 = vrot.lane.b32.xlu0 %v3063, 127
        %v3201 = vpop.permute.xlu0 %3200
        %3202 = vrot.lane.b32.xlu0 %v3064, 127
        %v3203 = vpop.permute.xlu0 %3202
        %3204 = vrot.lane.b32.xlu0 %v3065, 127
        %v3205 = vpop.permute.xlu0 %3204
        %3206 = vrot.lane.b32.xlu0 %v3066, 127
        %v3207 = vpop.permute.xlu0 %3206
        %3208 = vrot.lane.b32.xlu0 %v3067, 127
        %v3209 = vpop.permute.xlu0 %3208
        %3210 = vrot.lane.b32.xlu0 %v3068, 127
        %v3211 = vpop.permute.xlu0 %3210
        %3212 = vrot.lane.b32.xlu0 %v3069, 127
        %v3213 = vpop.permute.xlu0 %3212
        %3214 = vrot.lane.b32.xlu0 %v3070, 127
        %v3215 = vpop.permute.xlu0 %3214
        %3216 = vrot.lane.b32.xlu0 %v3071, 127
        %v3217 = vpop.permute.xlu0 %3216
        %3218 = vrot.lane.b32.xlu0 %v3072, 127
        %v3219 = vpop.permute.xlu0 %3218
        %3220 = vrot.lane.b32.xlu0 %v3073, 127
        %v3221 = vpop.permute.xlu0 %3220
        %3222 = vrot.lane.b32.xlu0 %v3074, 127
        %v3223 = vpop.permute.xlu0 %3222
        %3224 = vrot.lane.b32.xlu0 %v3075, 127
        %v3225 = vpop.permute.xlu0 %3224
        %3226 = vrot.lane.b32.xlu0 %v3076, 127
        %v3227 = vpop.permute.xlu0 %3226
        %3228 = vrot.lane.b32.xlu0 %v3077, 127
        %v3229 = vpop.permute.xlu0 %3228
        %3230 = vrot.lane.b32.xlu0 %v3078, 127
        %v3231 = vpop.permute.xlu0 %3230
        %3232 = vrot.lane.b32.xlu0 %v3079, 127
        %v3233 = vpop.permute.xlu0 %3232
        %3234 = vrot.lane.b32.xlu0 %v3080, 127
        %v3235 = vpop.permute.xlu0 %3234
        %3236 = vrot.lane.b32.xlu0 %v3081, 127
        %v3237 = vpop.permute.xlu0 %3236
        %3238 = vrot.lane.b32.xlu0 %v3082, 127
        %v3239 = vpop.permute.xlu0 %3238
        %3240 = vrot.lane.b32.xlu0 %v3083, 127
        %v3241 = vpop.permute.xlu0 %3240
        %3242 = vrot.lane.b32.xlu0 %v3084, 127
        %v3243 = vpop.permute.xlu0 %3242
        %3244 = vrot.lane.b32.xlu0 %v3085, 127
        %v3245 = vpop.permute.xlu0 %3244
        %3246 = vrot.lane.b32.xlu0 %v3086, 127
        %v3247 = vpop.permute.xlu0 %3246
        %3248 = vrot.lane.b32.xlu0 %v3087, 127
        %v3249 = vpop.permute.xlu0 %3248
        %3250 = vrot.lane.b32.xlu0 %v3088, 127
        %v3251 = vpop.permute.xlu0 %3250
        %3252 = vrot.lane.b32.xlu0 %v3089, 127
        %v3253 = vpop.permute.xlu0 %3252
        %3254 = vrot.lane.b32.xlu0 %v3090, 127
        %v3255 = vpop.permute.xlu0 %3254
        %3256 = vrot.lane.b32.xlu0 %v3091, 127
        %v3257 = vpop.permute.xlu0 %3256
        %3258 = vrot.lane.b32.xlu0 %v3092, 127
        %v3259 = vpop.permute.xlu0 %3258
        %3260 = vrot.lane.b32.xlu0 %v3093, 127
        %v3261 = vpop.permute.xlu0 %3260
        %3262 = vrot.lane.b32.xlu0 %v3094, 127
        %v3263 = vpop.permute.xlu0 %3262
        %3264 = vrot.lane.b32.xlu0 %v3095, 127
        %v3265 = vpop.permute.xlu0 %3264
        %3266 = vrot.lane.b32.xlu0 %v3096, 127
        %v3267 = vpop.permute.xlu0 %3266
        %3268 = vrot.lane.b32.xlu0 %v3097, 127
        %v3269 = vpop.permute.xlu0 %3268
        %3270 = vrot.lane.b32.xlu0 %v3098, 127
        %v3271 = vpop.permute.xlu0 %3270
        %3272 = vrot.lane.b32.xlu0 %v3099, 127
        %v3273 = vpop.permute.xlu0 %3272
        %3274 = vrot.lane.b32.xlu0 %v3100, 127
        %v3275 = vpop.permute.xlu0 %3274
        %3276 = vrot.lane.b32.xlu0 %v3101, 127
        %v3277 = vpop.permute.xlu0 %3276
        %3278 = vrot.lane.b32.xlu0 %v3102, 127
        %v3279 = vpop.permute.xlu0 %3278
        %3280 = vrot.lane.b32.xlu0 %v3103, 127
        %v3281 = vpop.permute.xlu0 %3280
        %3282 = vrot.lane.b32.xlu0 %v3104, 127
        %v3283 = vpop.permute.xlu0 %3282
        %3284 = vrot.lane.b32.xlu0 %v3105, 127
        %v3285 = vpop.permute.xlu0 %3284
        %3286 = vrot.lane.b32.xlu0 %v3106, 127
        %v3287 = vpop.permute.xlu0 %3286
        %3288 = vrot.lane.b32.xlu0 %v3107, 127
        %v3289 = vpop.permute.xlu0 %3288
        %3290 = vrot.lane.b32.xlu0 %v3108, 127
        %v3291 = vpop.permute.xlu0 %3290
        %3292 = vrot.lane.b32.xlu0 %v3109, 127
        %v3293 = vpop.permute.xlu0 %3292
        %3294 = vrot.lane.b32.xlu0 %v3110, 127
        %v3295 = vpop.permute.xlu0 %3294
        %3296 = vrot.lane.b32.xlu0 %v3111, 127
        %v3297 = vpop.permute.xlu0 %3296
        %3298 = vrot.lane.b32.xlu0 %v3112, 127
        %v3299 = vpop.permute.xlu0 %3298
        %3300 = vrot.lane.b32.xlu0 %v3113, 127
        %v3301 = vpop.permute.xlu0 %3300
        %3302 = vrot.lane.b32.xlu0 %v3114, 127
        %v3303 = vpop.permute.xlu0 %3302
        %3304 = vrot.lane.b32.xlu0 %v3115, 127
        %v3305 = vpop.permute.xlu0 %3304
        %3306 = vrot.lane.b32.xlu0 %v3116, 127
        %v3307 = vpop.permute.xlu0 %3306
        %3308 = vrot.lane.b32.xlu0 %v3117, 127
        %v3309 = vpop.permute.xlu0 %3308
        %vm3310 = vcmask 1039360
        %v3311 = vsel %vm3310, %v3183, %v3185
        %v3312 = vsel %vm3310, %v3187, %v3189
        %v3313 = vsel %vm3310, %v3191, %v3193
        %v3314 = vsel %vm3310, %v3195, %v3197
        %v3315 = vsel %vm3310, %v3199, %v3201
        %v3316 = vsel %vm3310, %v3203, %v3205
        %v3317 = vsel %vm3310, %v3207, %v3209
        %v3318 = vsel %vm3310, %v3211, %v3213
        %v3319 = vsel %vm3310, %v3215, %v3217
        %v3320 = vsel %vm3310, %v3219, %v3221
        %v3321 = vsel %vm3310, %v3223, %v3225
        %v3322 = vsel %vm3310, %v3227, %v3229
        %v3323 = vsel %vm3310, %v3231, %v3233
        %v3324 = vsel %vm3310, %v3235, %v3237
        %v3325 = vsel %vm3310, %v3239, %v3241
        %v3326 = vsel %vm3310, %v3243, %v3245
        %v3327 = vsel %vm3310, %v3247, %v3249
        %v3328 = vsel %vm3310, %v3251, %v3253
        %v3329 = vsel %vm3310, %v3255, %v3257
        %v3330 = vsel %vm3310, %v3259, %v3261
        %v3331 = vsel %vm3310, %v3263, %v3265
        %v3332 = vsel %vm3310, %v3267, %v3269
        %v3333 = vsel %vm3310, %v3271, %v3273
        %v3334 = vsel %vm3310, %v3275, %v3277
        %v3335 = vsel %vm3310, %v3279, %v3281
        %v3336 = vsel %vm3310, %v3283, %v3285
        %v3337 = vsel %vm3310, %v3287, %v3289
        %v3338 = vsel %vm3310, %v3291, %v3293
        %v3339 = vsel %vm3310, %v3295, %v3297
        %v3340 = vsel %vm3310, %v3299, %v3301
        %v3341 = vsel %vm3310, %v3303, %v3305
        %v3342 = vsel %vm3310, %v3307, %v3309
        %v3407 = vmax.f32 %v3054, %v3311
        %v3408 = vmax.f32 %v3055, %v3185
        %v3409 = vmax.f32 %v3056, %v3312
        %v3410 = vmax.f32 %v3057, %v3189
        %v3411 = vmax.f32 %v3058, %v3313
        %v3412 = vmax.f32 %v3059, %v3193
        %v3413 = vmax.f32 %v3060, %v3314
        %v3414 = vmax.f32 %v3061, %v3197
        %v3415 = vmax.f32 %v3062, %v3315
        %v3416 = vmax.f32 %v3063, %v3201
        %v3417 = vmax.f32 %v3064, %v3316
        %v3418 = vmax.f32 %v3065, %v3205
        %v3419 = vmax.f32 %v3066, %v3317
        %v3420 = vmax.f32 %v3067, %v3209
        %v3421 = vmax.f32 %v3068, %v3318
        %v3422 = vmax.f32 %v3069, %v3213
        %v3423 = vmax.f32 %v3070, %v3319
        %v3424 = vmax.f32 %v3071, %v3217
        %v3425 = vmax.f32 %v3072, %v3320
        %v3426 = vmax.f32 %v3073, %v3221
        %v3427 = vmax.f32 %v3074, %v3321
        %v3428 = vmax.f32 %v3075, %v3225
        %v3429 = vmax.f32 %v3076, %v3322
        %v3430 = vmax.f32 %v3077, %v3229
        %v3431 = vmax.f32 %v3078, %v3323
        %v3432 = vmax.f32 %v3079, %v3233
        %v3433 = vmax.f32 %v3080, %v3324
        %v3434 = vmax.f32 %v3081, %v3237
        %v3435 = vmax.f32 %v3082, %v3325
        %v3436 = vmax.f32 %v3083, %v3241
        %v3437 = vmax.f32 %v3084, %v3326
        %v3438 = vmax.f32 %v3085, %v3245
        %v3439 = vmax.f32 %v3086, %v3327
        %v3440 = vmax.f32 %v3087, %v3249
        %v3441 = vmax.f32 %v3088, %v3328
        %v3442 = vmax.f32 %v3089, %v3253
        %v3443 = vmax.f32 %v3090, %v3329
        %v3444 = vmax.f32 %v3091, %v3257
        %v3445 = vmax.f32 %v3092, %v3330
        %v3446 = vmax.f32 %v3093, %v3261
        %v3447 = vmax.f32 %v3094, %v3331
        %v3448 = vmax.f32 %v3095, %v3265
        %v3449 = vmax.f32 %v3096, %v3332
        %v3450 = vmax.f32 %v3097, %v3269
        %v3451 = vmax.f32 %v3098, %v3333
        %v3452 = vmax.f32 %v3099, %v3273
        %v3453 = vmax.f32 %v3100, %v3334
        %v3454 = vmax.f32 %v3101, %v3277
        %v3455 = vmax.f32 %v3102, %v3335
        %v3456 = vmax.f32 %v3103, %v3281
        %v3457 = vmax.f32 %v3104, %v3336
        %v3458 = vmax.f32 %v3105, %v3285
        %v3459 = vmax.f32 %v3106, %v3337
        %v3460 = vmax.f32 %v3107, %v3289
        %v3461 = vmax.f32 %v3108, %v3338
        %v3462 = vmax.f32 %v3109, %v3293
        %v3463 = vmax.f32 %v3110, %v3339
        %v3464 = vmax.f32 %v3111, %v3297
        %v3465 = vmax.f32 %v3112, %v3340
        %v3466 = vmax.f32 %v3113, %v3301
        %v3467 = vmax.f32 %v3114, %v3341
        %v3468 = vmax.f32 %v3115, %v3305
        %v3469 = vmax.f32 %v3116, %v3342
        %v3470 = vmax.f32 %v3117, %v3309
        %v3471 = vld [vmem:[%s3] sm:$0xff]
        %v3472 = vld [vmem:[%s3 + $0x8] sm:$0xff]
        %v3473 = vld [vmem:[%s3 + $0x10] sm:$0xff]
        %v3474 = vld [vmem:[%s3 + $0x18] sm:$0xff]
        %v3475 = vld [vmem:[%s3 + $0x20] sm:$0xff]
        %v3476 = vld [vmem:[%s3 + $0x28] sm:$0xff]
        %v3477 = vld [vmem:[%s3 + $0x30] sm:$0xff]
        %v3478 = vld [vmem:[%s3 + $0x38] sm:$0xff]
        %v3479 = vld [vmem:[%s3 + $0x40] sm:$0xff]
        %v3480 = vld [vmem:[%s3 + $0x48] sm:$0xff]
        %v3481 = vld [vmem:[%s3 + $0x50] sm:$0xff]
        %v3482 = vld [vmem:[%s3 + $0x58] sm:$0xff]
        %v3483 = vld [vmem:[%s3 + $0x60] sm:$0xff]
        %v3484 = vld [vmem:[%s3 + $0x68] sm:$0xff]
        %v3485 = vld [vmem:[%s3 + $0x70] sm:$0xff]
        %v3486 = vld [vmem:[%s3 + $0x78] sm:$0xff]
        %v3487 = vld [vmem:[%s3 + $0x80] sm:$0xff]
        %v3488 = vld [vmem:[%s3 + $0x88] sm:$0xff]
        %v3489 = vld [vmem:[%s3 + $0x90] sm:$0xff]
        %v3490 = vld [vmem:[%s3 + $0x98] sm:$0xff]
        %v3491 = vld [vmem:[%s3 + $0xa0] sm:$0x7f]
        %vm3492 = vcmask 318464
        %v3494 = vsel %vm3492, %v3408, 0
        %v3497 = vsel %vm3492, %v3410, 0
        %v3500 = vsel %vm3492, %v3412, 0
        %v3503 = vsel %vm3492, %v3414, 0
        %v3506 = vsel %vm3492, %v3416, 0
        %v3509 = vsel %vm3492, %v3418, 0
        %v3512 = vsel %vm3492, %v3420, 0
        %v3515 = vsel %vm3492, %v3422, 0
        %v3518 = vsel %vm3492, %v3424, 0
        %v3521 = vsel %vm3492, %v3426, 0
        %v3524 = vsel %vm3492, %v3428, 0
        %v3527 = vsel %vm3492, %v3430, 0
        %v3530 = vsel %vm3492, %v3432, 0
        %v3533 = vsel %vm3492, %v3434, 0
        %v3536 = vsel %vm3492, %v3436, 0
        %v3539 = vsel %vm3492, %v3438, 0
        %v3542 = vsel %vm3492, %v3440, 0
        %v3545 = vsel %vm3492, %v3442, 0
        %v3548 = vsel %vm3492, %v3444, 0
        %v3551 = vsel %vm3492, %v3446, 0
        %v3554 = vsel %vm3492, %v3448, 0
        %v3557 = vsel %vm3492, %v3450, 0
        %v3560 = vsel %vm3492, %v3452, 0
        %v3563 = vsel %vm3492, %v3454, 0
        %v3566 = vsel %vm3492, %v3456, 0
        %v3569 = vsel %vm3492, %v3458, 0
        %v3572 = vsel %vm3492, %v3460, 0
        %v3575 = vsel %vm3492, %v3462, 0
        %v3578 = vsel %vm3492, %v3464, 0
        %v3581 = vsel %vm3492, %v3466, 0
        %v3584 = vsel %vm3492, %v3468, 0
        %v3587 = vsel %vm3492, %v3470, 0
        %v3590 = vsel %vm579, %v3491, 0
        %3592 = vmatprep.subr.mxu0 0.0
        %3593 = vmatpush1.msra.mxu0 %v3471
        %3594 = vmatprep.subr.mxu0 0.0
        %3595 = vmatpush1.msra.mxu0 %v3472
        %3596 = vmatprep.subr.mxu0 0.0
        %3597 = vmatpush1.msra.mxu0 %v3473
        %3598 = vmatprep.subr.mxu0 0.0
        %3599 = vmatpush1.msra.mxu0 %v3474
        %3600 = vmatprep.subr.mxu0 0.0
        %3601 = vmatpush1.msra.mxu0 %v3475
        %3602 = vmatprep.subr.mxu0 0.0
        %3603 = vmatpush1.msra.mxu0 %v3476
        %3604 = vmatprep.subr.mxu0 0.0
        %3605 = vmatpush1.msra.mxu0 %v3477
        %3606 = vmatprep.subr.mxu0 0.0
        %3607 = vmatpush1.msra.mxu0 %v3478
        %3608 = vmatprep.subr.mxu0 0.0
        %3609 = vmatpush1.msra.mxu0 %v3479
        %3610 = vmatprep.subr.mxu0 0.0
        %3611 = vmatpush1.msra.mxu0 %v3480
        %3612 = vmatprep.subr.mxu0 0.0
        %3613 = vmatpush1.msra.mxu0 %v3481
        %3614 = vmatprep.subr.mxu0 0.0
        %3615 = vmatpush1.msra.mxu0 %v3482
        %3616 = vmatprep.subr.mxu0 0.0
        %3617 = vmatpush1.msra.mxu0 %v3483
        %3618 = vmatprep.subr.mxu0 0.0
        %3619 = vmatpush1.msra.mxu0 %v3484
        %3620 = vmatprep.subr.mxu0 0.0
        %3621 = vmatpush1.msra.mxu0 %v3485
        %3622 = vmatprep.subr.mxu0 0.0
        %3623 = vmatpush1.msra.mxu0 %v3486
        %3624 = vmatprep.subr.mxu0 0.0
        %3625 = vmatpush1.msra.mxu0 %v3487
        %3626 = vmatprep.subr.mxu0 0.0
        %3627 = vmatpush1.msra.mxu0 %v3488
        %3628 = vmatprep.subr.mxu0 0.0
        %3629 = vmatpush1.msra.mxu0 %v3489
        %3630 = vmatprep.subr.mxu0 0.0
        %3631 = vmatpush1.msra.mxu0 %v3490
        %3632 = vmatprep.subr.mxu0 0.0
        %3633 = vmatpush1.msra.mxu0 %v3590
        %3634 = vmatprep.subr.mxu0 0.0
        %3635 = vmatpush1.msra.mxu0 0.0
        %3636 = vmatprep.subr.mxu0 0.0
        %3637 = vmatpush1.msra.mxu0 0.0
        %3638 = vmatprep.subr.mxu0 0.0
        %3639 = vmatpush1.msra.mxu0 0.0
        %3640 = vmatprep.subr.mxu0 0.0
        %3641 = vmatpush1.msra.mxu0 0.0
        %3642 = vmatprep.subr.mxu0 0.0
        %3643 = vmatpush1.msra.mxu0 0.0
        %3644 = vmatprep.subr.mxu0 0.0
        %3645 = vmatpush1.msra.mxu0 0.0
        %3646 = vmatprep.subr.mxu0 0.0
        %3647 = vmatpush1.msra.mxu0 0.0
        %3648 = vmatprep.subr.mxu0 0.0
        %3649 = vmatpush1.msra.mxu0 0.0
        %3650 = vmatprep.subr.mxu0 0.0
        %3651 = vmatpush1.msra.mxu0 0.0
        %3652 = vmatprep.subr.mxu0 0.0
        %3653 = vmatpush1.msra.mxu0 0.0
        %3654 = vmatprep.subr.mxu0 0.0
        %3655 = vmatpush1.msra.mxu0 0.0
        %3656 = vmatprep.mubr.f32.mxu0 %v3494
        %3657 = vmatmul.mubr.f32.gmra.mrb[0].mxu0 %v3407
        %v3658 = vpop.f32.mrb[0].mxu0
        %v3659 = vadd.f32 0.0, %v3658
        %v3660 = vpop.f32.mrb[0].mxu0
        %3661 = vmatprep.mubr.f32.mxu0 %v3497
        %3662 = vmatmul.mubr.f32.gmra.mrb[0].mxu0 %v3409
        %v3663 = vpop.f32.mrb[0].mxu0
        %v3664 = vadd.f32 0.0, %v3663
        %v3665 = vpop.f32.mrb[0].mxu0
        %3666 = vmatprep.mubr.f32.mxu0 %v3500
        %3667 = vmatmul.mubr.f32.gmra.mrb[0].mxu0 %v3411
        %v3668 = vpop.f32.mrb[0].mxu0
        %v3669 = vadd.f32 0.0, %v3668
        %v3670 = vpop.f32.mrb[0].mxu0
        %3671 = vmatprep.mubr.f32.mxu0 %v3503
        %3672 = vmatmul.mubr.f32.gmra.mrb[0].mxu0 %v3413
        %v3673 = vpop.f32.mrb[0].mxu0
        %v3674 = vadd.f32 0.0, %v3673
        %v3675 = vpop.f32.mrb[0].mxu0
        %3676 = vmatprep.mubr.f32.mxu0 %v3506
        %3677 = vmatmul.mubr.f32.gmra.mrb[0].mxu0 %v3415
        %v3678 = vpop.f32.mrb[0].mxu0
        %v3679 = vadd.f32 0.0, %v3678
        %v3680 = vpop.f32.mrb[0].mxu0
        %3681 = vmatprep.mubr.f32.mxu0 %v3509
        %3682 = vmatmul.mubr.f32.gmra.mrb[0].mxu0 %v3417
        %v3683 = vpop.f32.mrb[0].mxu0
        %v3684 = vadd.f32 0.0, %v3683
        %v3685 = vpop.f32.mrb[0].mxu0
        %3686 = vmatprep.mubr.f32.mxu0 %v3512
        %3687 = vmatmul.mubr.f32.gmra.mrb[0].mxu0 %v3419
        %v3688 = vpop.f32.mrb[0].mxu0
        %v3689 = vadd.f32 0.0, %v3688
        %v3690 = vpop.f32.mrb[0].mxu0
        %3691 = vmatprep.mubr.f32.mxu0 %v3515
        %3692 = vmatmul.mubr.f32.gmra.mrb[0].mxu0 %v3421
        %v3693 = vpop.f32.mrb[0].mxu0
        %v3694 = vadd.f32 0.0, %v3693
        %v3695 = vpop.f32.mrb[0].mxu0
        %3696 = vmatprep.mubr.f32.mxu0 %v3518
        %3697 = vmatmul.mubr.f32.gmra.mrb[0].mxu0 %v3423
        %v3698 = vpop.f32.mrb[0].mxu0
        %v3699 = vadd.f32 0.0, %v3698
        %v3700 = vpop.f32.mrb[0].mxu0
        %3701 = vmatprep.mubr.f32.mxu0 %v3521
        %3702 = vmatmul.mubr.f32.gmra.mrb[0].mxu0 %v3425
        %v3703 = vpop.f32.mrb[0].mxu0
        %v3704 = vadd.f32 0.0, %v3703
        %v3705 = vpop.f32.mrb[0].mxu0
        %3706 = vmatprep.mubr.f32.mxu0 %v3524
        %3707 = vmatmul.mubr.f32.gmra.mrb[0].mxu0 %v3427
        %v3708 = vpop.f32.mrb[0].mxu0
        %v3709 = vadd.f32 0.0, %v3708
        %v3710 = vpop.f32.mrb[0].mxu0
        %3711 = vmatprep.mubr.f32.mxu0 %v3527
        %3712 = vmatmul.mubr.f32.gmra.mrb[0].mxu0 %v3429
        %v3713 = vpop.f32.mrb[0].mxu0
        %v3714 = vadd.f32 0.0, %v3713
        %v3715 = vpop.f32.mrb[0].mxu0
        %3716 = vmatprep.mubr.f32.mxu0 %v3530
        %3717 = vmatmul.mubr.f32.gmra.mrb[0].mxu0 %v3431
        %v3718 = vpop.f32.mrb[0].mxu0
        %v3719 = vadd.f32 0.0, %v3718
        %v3720 = vpop.f32.mrb[0].mxu0
        %3721 = vmatprep.mubr.f32.mxu0 %v3533
        %3722 = vmatmul.mubr.f32.gmra.mrb[0].mxu0 %v3433
        %v3723 = vpop.f32.mrb[0].mxu0
        %v3724 = vadd.f32 0.0, %v3723
        %v3725 = vpop.f32.mrb[0].mxu0
        %3726 = vmatprep.mubr.f32.mxu0 %v3536
        %3727 = vmatmul.mubr.f32.gmra.mrb[0].mxu0 %v3435
        %v3728 = vpop.f32.mrb[0].mxu0
        %v3729 = vadd.f32 0.0, %v3728
        %v3730 = vpop.f32.mrb[0].mxu0
        %3731 = vmatprep.mubr.f32.mxu0 %v3539
        %3732 = vmatmul.mubr.f32.gmra.mrb[0].mxu0 %v3437
        %v3733 = vpop.f32.mrb[0].mxu0
        %v3734 = vadd.f32 0.0, %v3733
        %v3735 = vpop.f32.mrb[0].mxu0
        %3736 = vmatprep.mubr.f32.mxu0 %v3542
        %3737 = vmatmul.mubr.f32.gmra.mrb[0].mxu0 %v3439
        %v3738 = vpop.f32.mrb[0].mxu0
        %v3739 = vadd.f32 0.0, %v3738
        %v3740 = vpop.f32.mrb[0].mxu0
        %3741 = vmatprep.mubr.f32.mxu0 %v3545
        %3742 = vmatmul.mubr.f32.gmra.mrb[0].mxu0 %v3441
        %v3743 = vpop.f32.mrb[0].mxu0
        %v3744 = vadd.f32 0.0, %v3743
        %v3745 = vpop.f32.mrb[0].mxu0
        %3746 = vmatprep.mubr.f32.mxu0 %v3548
        %3747 = vmatmul.mubr.f32.gmra.mrb[0].mxu0 %v3443
        %v3748 = vpop.f32.mrb[0].mxu0
        %v3749 = vadd.f32 0.0, %v3748
        %v3750 = vpop.f32.mrb[0].mxu0
        %3751 = vmatprep.mubr.f32.mxu0 %v3551
        %3752 = vmatmul.mubr.f32.gmra.mrb[0].mxu0 %v3445
        %v3753 = vpop.f32.mrb[0].mxu0
        %v3754 = vadd.f32 0.0, %v3753
        %v3755 = vpop.f32.mrb[0].mxu0
        %3756 = vmatprep.mubr.f32.mxu0 %v3554
        %3757 = vmatmul.mubr.f32.gmra.mrb[0].mxu0 %v3447
        %v3758 = vpop.f32.mrb[0].mxu0
        %v3759 = vadd.f32 0.0, %v3758
        %v3760 = vpop.f32.mrb[0].mxu0
        %3761 = vmatprep.mubr.f32.mxu0 %v3557
        %3762 = vmatmul.mubr.f32.gmra.mrb[0].mxu0 %v3449
        %v3763 = vpop.f32.mrb[0].mxu0
        %v3764 = vadd.f32 0.0, %v3763
        %v3765 = vpop.f32.mrb[0].mxu0
        %3766 = vmatprep.mubr.f32.mxu0 %v3560
        %3767 = vmatmul.mubr.f32.gmra.mrb[0].mxu0 %v3451
        %v3768 = vpop.f32.mrb[0].mxu0
        %v3769 = vadd.f32 0.0, %v3768
        %v3770 = vpop.f32.mrb[0].mxu0
        %3771 = vmatprep.mubr.f32.mxu0 %v3563
        %3772 = vmatmul.mubr.f32.gmra.mrb[0].mxu0 %v3453
        %v3773 = vpop.f32.mrb[0].mxu0
        %v3774 = vadd.f32 0.0, %v3773
        %v3775 = vpop.f32.mrb[0].mxu0
        %3776 = vmatprep.mubr.f32.mxu0 %v3566
        %3777 = vmatmul.mubr.f32.gmra.mrb[0].mxu0 %v3455
        %v3778 = vpop.f32.mrb[0].mxu0
        %v3779 = vadd.f32 0.0, %v3778
        %v3780 = vpop.f32.mrb[0].mxu0
        %3781 = vmatprep.mubr.f32.mxu0 %v3569
        %3782 = vmatmul.mubr.f32.gmra.mrb[0].mxu0 %v3457
        %v3783 = vpop.f32.mrb[0].mxu0
        %v3784 = vadd.f32 0.0, %v3783
        %v3785 = vpop.f32.mrb[0].mxu0
        %3786 = vmatprep.mubr.f32.mxu0 %v3572
        %3787 = vmatmul.mubr.f32.gmra.mrb[0].mxu0 %v3459
        %v3788 = vpop.f32.mrb[0].mxu0
        %v3789 = vadd.f32 0.0, %v3788
        %v3790 = vpop.f32.mrb[0].mxu0
        %3791 = vmatprep.mubr.f32.mxu0 %v3575
        %3792 = vmatmul.mubr.f32.gmra.mrb[0].mxu0 %v3461
        %v3793 = vpop.f32.mrb[0].mxu0
        %v3794 = vadd.f32 0.0, %v3793
        %v3795 = vpop.f32.mrb[0].mxu0
        %3796 = vmatprep.mubr.f32.mxu0 %v3578
        %3797 = vmatmul.mubr.f32.gmra.mrb[0].mxu0 %v3463
        %v3798 = vpop.f32.mrb[0].mxu0
        %v3799 = vadd.f32 0.0, %v3798
        %v3800 = vpop.f32.mrb[0].mxu0
        %3801 = vmatprep.mubr.f32.mxu0 %v3581
        %3802 = vmatmul.mubr.f32.gmra.mrb[0].mxu0 %v3465
        %v3803 = vpop.f32.mrb[0].mxu0
        %v3804 = vadd.f32 0.0, %v3803
        %v3805 = vpop.f32.mrb[0].mxu0
        %3806 = vmatprep.mubr.f32.mxu0 %v3584
        %3807 = vmatmul.mubr.f32.gmra.mrb[0].mxu0 %v3467
        %v3808 = vpop.f32.mrb[0].mxu0
        %v3809 = vadd.f32 0.0, %v3808
        %v3810 = vpop.f32.mrb[0].mxu0
        %3811 = vmatprep.mubr.f32.mxu0 %v3587
        %3812 = vmatmul.mubr.f32.gmra.mrb[0].mxu0 %v3469
        %v3813 = vpop.f32.mrb[0].mxu0
        %v3814 = vadd.f32 0.0, %v3813
        %v3815 = vpop.f32.mrb[0].mxu0
        %3816 = vdwg.mxu0
        %v3817 = vld [vmem:[%s4] sm:$0xff]
        %v3818 = vld [vmem:[%s4 + $0x8] sm:$0xff]
        %v3819 = vld [vmem:[%s4 + $0x10] sm:$0xff]
        %v3820 = vld [vmem:[%s4 + $0x18] sm:$0xff]
        %v3821 = vld [vmem:[%s4 + $0x20] sm:$0xff]
        %v3822 = vld [vmem:[%s4 + $0x28] sm:$0xff]
        %v3823 = vld [vmem:[%s4 + $0x30] sm:$0xff]
        %v3824 = vld [vmem:[%s4 + $0x38] sm:$0xff]
        %v3825 = vld [vmem:[%s4 + $0x40] sm:$0xff]
        %v3826 = vld [vmem:[%s4 + $0x48] sm:$0xff]
        %v3827 = vld [vmem:[%s4 + $0x50] sm:$0xff]
        %v3828 = vld [vmem:[%s4 + $0x58] sm:$0xff]
        %v3829 = vld [vmem:[%s4 + $0x60] sm:$0xff]
        %v3830 = vld [vmem:[%s4 + $0x68] sm:$0xff]
        %v3831 = vld [vmem:[%s4 + $0x70] sm:$0xff]
        %v3832 = vld [vmem:[%s4 + $0x78] sm:$0xff]
        %v3833 = vld [vmem:[%s4 + $0x80] sm:$0xff]
        %v3834 = vld [vmem:[%s4 + $0x88] sm:$0xff]
        %v3835 = vld [vmem:[%s4 + $0x90] sm:$0xff]
        %v3836 = vld [vmem:[%s4 + $0x98] sm:$0xff]
        %v3837 = vld [vmem:[%s4 + $0xa0] sm:$0xf]
        %v3838 = vld [vmem:[%s4 + $0xa8] sm:$0xf]
        %s3839 = scalar_lea.vmem %s4, 176
        %v3840 = vld [vmem:[%s3839] sm:$0xff]
        %v3841 = vld [vmem:[%s3839 + $0x8] sm:$0xff]
        %v3842 = vld [vmem:[%s3839 + $0x10] sm:$0xff]
        %v3843 = vld [vmem:[%s3839 + $0x18] sm:$0xff]
        %v3844 = vld [vmem:[%s3839 + $0x20] sm:$0xff]
        %v3845 = vld [vmem:[%s3839 + $0x28] sm:$0xff]
        %v3846 = vld [vmem:[%s3839 + $0x30] sm:$0xff]
        %v3847 = vld [vmem:[%s3839 + $0x38] sm:$0xff]
        %v3848 = vld [vmem:[%s3839 + $0x40] sm:$0xff]
        %v3849 = vld [vmem:[%s3839 + $0x48] sm:$0xff]
        %v3850 = vld [vmem:[%s3839 + $0x50] sm:$0xff]
        %v3851 = vld [vmem:[%s3839 + $0x58] sm:$0xff]
        %v3852 = vld [vmem:[%s3839 + $0x60] sm:$0xff]
        %v3853 = vld [vmem:[%s3839 + $0x68] sm:$0xff]
        %v3854 = vld [vmem:[%s3839 + $0x70] sm:$0xff]
        %v3855 = vld [vmem:[%s3839 + $0x78] sm:$0xff]
        %v3856 = vld [vmem:[%s3839 + $0x80] sm:$0xff]
        %v3857 = vld [vmem:[%s3839 + $0x88] sm:$0xff]
        %v3858 = vld [vmem:[%s3839 + $0x90] sm:$0xff]
        %v3859 = vld [vmem:[%s3839 + $0x98] sm:$0xff]
        %v3860 = vld [vmem:[%s3839 + $0xa0] sm:$0xf]
        %v3861 = vld [vmem:[%s3839 + $0xa8] sm:$0xf]
        %v3893 = vrot.slane %v3659, 2
        %v3894 = vrot.slane %v3664, 2
        %v3895 = vsel %vm1295, %v3893, %v3894
        %v3896 = vrot.slane %v3669, 2
        %v3897 = vsel %vm1295, %v3894, %v3896
        %v3898 = vrot.slane %v3674, 2
        %v3899 = vsel %vm1295, %v3896, %v3898
        %v3900 = vrot.slane %v3679, 2
        %v3901 = vsel %vm1295, %v3898, %v3900
        %v3902 = vrot.slane %v3684, 2
        %v3903 = vsel %vm1295, %v3900, %v3902
        %v3904 = vrot.slane %v3689, 2
        %v3905 = vsel %vm1295, %v3902, %v3904
        %v3906 = vrot.slane %v3694, 2
        %v3907 = vsel %vm1295, %v3904, %v3906
        %v3908 = vrot.slane %v3699, 2
        %v3909 = vsel %vm1295, %v3906, %v3908
        %v3910 = vrot.slane %v3704, 2
        %v3911 = vsel %vm1295, %v3908, %v3910
        %v3912 = vrot.slane %v3709, 2
        %v3913 = vsel %vm1295, %v3910, %v3912
        %v3914 = vrot.slane %v3714, 2
        %v3915 = vsel %vm1295, %v3912, %v3914
        %v3916 = vrot.slane %v3719, 2
        %v3917 = vsel %vm1295, %v3914, %v3916
        %v3918 = vrot.slane %v3724, 2
        %v3919 = vsel %vm1295, %v3916, %v3918
        %v3920 = vrot.slane %v3729, 2
        %v3921 = vsel %vm1295, %v3918, %v3920
        %v3922 = vrot.slane %v3734, 2
        %v3923 = vsel %vm1295, %v3920, %v3922
        %v3924 = vrot.slane %v3739, 2
        %v3925 = vsel %vm1295, %v3922, %v3924
        %v3926 = vrot.slane %v3744, 2
        %v3927 = vsel %vm1295, %v3924, %v3926
        %v3928 = vrot.slane %v3749, 2
        %v3929 = vsel %vm1295, %v3926, %v3928
        %v3930 = vrot.slane %v3754, 2
        %v3931 = vsel %vm1295, %v3928, %v3930
        %v3932 = vrot.slane %v3759, 2
        %v3933 = vsel %vm1295, %v3930, %v3932
        %v3934 = vrot.slane %v3764, 2
        %v3935 = vsel %vm1295, %v3932, %v3934
        %v3936 = vrot.slane %v3769, 2
        %v3937 = vsel %vm1295, %v3934, %v3936
        %v3938 = vrot.slane %v3774, 2
        %v3939 = vsel %vm1295, %v3936, %v3938
        %v3940 = vrot.slane %v3779, 2
        %v3941 = vsel %vm1295, %v3938, %v3940
        %v3942 = vrot.slane %v3784, 2
        %v3943 = vsel %vm1295, %v3940, %v3942
        %v3944 = vrot.slane %v3789, 2
        %v3945 = vsel %vm1295, %v3942, %v3944
        %v3946 = vrot.slane %v3794, 2
        %v3947 = vsel %vm1295, %v3944, %v3946
        %v3948 = vrot.slane %v3799, 2
        %v3949 = vsel %vm1295, %v3946, %v3948
        %v3950 = vrot.slane %v3804, 2
        %v3951 = vsel %vm1295, %v3948, %v3950
        %v3952 = vrot.slane %v3809, 2
        %v3953 = vsel %vm1295, %v3950, %v3952
        %vm3954 = vcmask 687104
        %v3955 = vsel %vm3954, %v3895, 0
        %v3957 = vsel %vm3954, %v3897, 0
        %v3959 = vsel %vm3954, %v3899, 0
        %v3961 = vsel %vm3954, %v3901, 0
        %v3963 = vsel %vm3954, %v3903, 0
        %v3965 = vsel %vm3954, %v3905, 0
        %v3967 = vsel %vm3954, %v3907, 0
        %v3969 = vsel %vm3954, %v3909, 0
        %v3971 = vsel %vm3954, %v3911, 0
        %v3973 = vsel %vm3954, %v3913, 0
        %v3975 = vsel %vm3954, %v3915, 0
        %v3977 = vsel %vm3954, %v3917, 0
        %v3979 = vsel %vm3954, %v3919, 0
        %v3981 = vsel %vm3954, %v3921, 0
        %v3983 = vsel %vm3954, %v3923, 0
        %v3985 = vsel %vm3954, %v3925, 0
        %v3987 = vsel %vm3954, %v3927, 0
        %v3989 = vsel %vm3954, %v3929, 0
        %v3991 = vsel %vm3954, %v3931, 0
        %v3993 = vsel %vm3954, %v3933, 0
        %v3995 = vsel %vm3954, %v3935, 0
        %v3997 = vsel %vm3954, %v3937, 0
        %v3999 = vsel %vm3954, %v3939, 0
        %v4001 = vsel %vm3954, %v3941, 0
        %v4003 = vsel %vm3954, %v3943, 0
        %v4005 = vsel %vm3954, %v3945, 0
        %v4007 = vsel %vm3954, %v3947, 0
        %v4009 = vsel %vm3954, %v3949, 0
        %v4011 = vsel %vm3954, %v3951, 0
        %v4013 = vsel %vm3954, %v3953, 0
        %v4015 = vsel %vm3954, %v3952, 0
        %v4018 = vsel %vm2211, %v3860, 0
        %v4021 = vsel %vm2211, %v3861, 0
        %4023 = vmatprep.subr.mxu0 %v3841
        %4024 = vmatpush1.msra.mxu0 %v3840
        %4025 = vmatprep.subr.mxu0 %v3843
        %4026 = vmatpush1.msra.mxu0 %v3842
        %4027 = vmatprep.subr.mxu0 %v3845
        %4028 = vmatpush1.msra.mxu0 %v3844
        %4029 = vmatprep.subr.mxu0 %v3847
        %4030 = vmatpush1.msra.mxu0 %v3846
        %4031 = vmatprep.subr.mxu0 %v3849
        %4032 = vmatpush1.msra.mxu0 %v3848
        %4033 = vmatprep.subr.mxu0 %v3851
        %4034 = vmatpush1.msra.mxu0 %v3850
        %4035 = vmatprep.subr.mxu0 %v3853
        %4036 = vmatpush1.msra.mxu0 %v3852
        %4037 = vmatprep.subr.mxu0 %v3855
        %4038 = vmatpush1.msra.mxu0 %v3854
        %4039 = vmatprep.subr.mxu0 %v3857
        %4040 = vmatpush1.msra.mxu0 %v3856
        %4041 = vmatprep.subr.mxu0 %v3859
        %4042 = vmatpush1.msra.mxu0 %v3858
        %4043 = vmatprep.subr.mxu0 %v4021
        %4044 = vmatpush1.msra.mxu0 %v4018
        %4045 = vmatprep.subr.mxu0 0.0
        %4046 = vmatpush1.msra.mxu0 0.0
        %4047 = vmatprep.subr.mxu0 0.0
        %4048 = vmatpush1.msra.mxu0 0.0
        %4049 = vmatprep.subr.mxu0 0.0
        %4050 = vmatpush1.msra.mxu0 0.0
        %4051 = vmatprep.subr.mxu0 0.0
        %4052 = vmatpush1.msra.mxu0 0.0
        %4053 = vmatprep.subr.mxu0 0.0
        %4054 = vmatpush1.msra.mxu0 0.0
        %4055 = vmatprep.subr.mxu0 0.0
        %4056 = vmatpush1.msra.mxu0 0.0
        %4057 = vmatprep.subr.mxu0 0.0
        %4058 = vmatpush1.msra.mxu0 0.0
        %4059 = vmatprep.subr.mxu0 0.0
        %4060 = vmatpush1.msra.mxu0 0.0
        %4061 = vmatprep.subr.mxu0 0.0
        %4062 = vmatpush1.msra.mxu0 0.0
        %4063 = vmatprep.subr.mxu0 0.0
        %4064 = vmatpush1.msra.mxu0 0.0
        %4065 = vmatprep.subr.mxu0 0.0
        %4066 = vmatpush1.msra.mxu0 0.0
        %4067 = vmatprep.subr.mxu0 0.0
        %4068 = vmatpush1.msra.mxu0 0.0
        %4069 = vmatprep.subr.mxu0 0.0
        %4070 = vmatpush1.msra.mxu0 0.0
        %4071 = vmatprep.subr.mxu0 0.0
        %4072 = vmatpush1.msra.mxu0 0.0
        %4073 = vmatprep.subr.mxu0 0.0
        %4074 = vmatpush1.msra.mxu0 0.0
        %4075 = vmatprep.subr.mxu0 0.0
        %4076 = vmatpush1.msra.mxu0 0.0
        %4077 = vmatprep.subr.mxu0 0.0
        %4078 = vmatpush1.msra.mxu0 0.0
        %4079 = vmatprep.subr.mxu0 0.0
        %4080 = vmatpush1.msra.mxu0 0.0
        %4081 = vmatprep.subr.mxu0 0.0
        %4082 = vmatpush1.msra.mxu0 0.0
        %4083 = vmatprep.subr.mxu0 0.0
        %4084 = vmatpush1.msra.mxu0 0.0
        %4085 = vmatprep.subr.mxu0 0.0
        %4086 = vmatpush1.msra.mxu0 0.0
        %4087 = vmatprep.mubr.f32.mxu0 0.0
        %4088 = vmatmul.mubr.f32.gmra.mrb[0].mxu0 %v3955
        %v4089 = vpop.f32.mrb[0].mxu0
        %v4090 = vadd.f32 0.0, %v4089
        %v4091 = vpop.f32.mrb[0].mxu0
        %v4092 = vadd.f32 0.0, %v4091
        %4093 = vmatprep.mubr.f32.mxu0 0.0
        %4094 = vmatmul.mubr.f32.gmra.mrb[0].mxu0 %v3957
        %v4095 = vpop.f32.mrb[0].mxu0
        %v4096 = vadd.f32 0.0, %v4095
        %v4097 = vpop.f32.mrb[0].mxu0
        %v4098 = vadd.f32 0.0, %v4097
        %4099 = vmatprep.mubr.f32.mxu0 0.0
        %4100 = vmatmul.mubr.f32.gmra.mrb[0].mxu0 %v3959
        %v4101 = vpop.f32.mrb[0].mxu0
        %v4102 = vadd.f32 0.0, %v4101
        %v4103 = vpop.f32.mrb[0].mxu0
        %v4104 = vadd.f32 0.0, %v4103
        %4105 = vmatprep.mubr.f32.mxu0 0.0
        %4106 = vmatmul.mubr.f32.gmra.mrb[0].mxu0 %v3961
        %v4107 = vpop.f32.mrb[0].mxu0
        %v4108 = vadd.f32 0.0, %v4107
        %v4109 = vpop.f32.mrb[0].mxu0
        %v4110 = vadd.f32 0.0, %v4109
        %4111 = vmatprep.mubr.f32.mxu0 0.0
        %4112 = vmatmul.mubr.f32.gmra.mrb[0].mxu0 %v3963
        %v4113 = vpop.f32.mrb[0].mxu0
        %v4114 = vadd.f32 0.0, %v4113
        %v4115 = vpop.f32.mrb[0].mxu0
        %v4116 = vadd.f32 0.0, %v4115
        %4117 = vmatprep.mubr.f32.mxu0 0.0
        %4118 = vmatmul.mubr.f32.gmra.mrb[0].mxu0 %v3965
        %v4119 = vpop.f32.mrb[0].mxu0
        %v4120 = vadd.f32 0.0, %v4119
        %v4121 = vpop.f32.mrb[0].mxu0
        %v4122 = vadd.f32 0.0, %v4121
        %4123 = vmatprep.mubr.f32.mxu0 0.0
        %4124 = vmatmul.mubr.f32.gmra.mrb[0].mxu0 %v3967
        %v4125 = vpop.f32.mrb[0].mxu0
        %v4126 = vadd.f32 0.0, %v4125
        %v4127 = vpop.f32.mrb[0].mxu0
        %v4128 = vadd.f32 0.0, %v4127
        %4129 = vmatprep.mubr.f32.mxu0 0.0
        %4130 = vmatmul.mubr.f32.gmra.mrb[0].mxu0 %v3969
        %v4131 = vpop.f32.mrb[0].mxu0
        %v4132 = vadd.f32 0.0, %v4131
        %v4133 = vpop.f32.mrb[0].mxu0
        %v4134 = vadd.f32 0.0, %v4133
        %4135 = vmatprep.mubr.f32.mxu0 0.0
        %4136 = vmatmul.mubr.f32.gmra.mrb[0].mxu0 %v3971
        %v4137 = vpop.f32.mrb[0].mxu0
        %v4138 = vadd.f32 0.0, %v4137
        %v4139 = vpop.f32.mrb[0].mxu0
        %v4140 = vadd.f32 0.0, %v4139
        %4141 = vmatprep.mubr.f32.mxu0 0.0
        %4142 = vmatmul.mubr.f32.gmra.mrb[0].mxu0 %v3973
        %v4143 = vpop.f32.mrb[0].mxu0
        %v4144 = vadd.f32 0.0, %v4143
        %v4145 = vpop.f32.mrb[0].mxu0
        %v4146 = vadd.f32 0.0, %v4145
        %4147 = vmatprep.mubr.f32.mxu0 0.0
        %4148 = vmatmul.mubr.f32.gmra.mrb[0].mxu0 %v3975
        %v4149 = vpop.f32.mrb[0].mxu0
        %v4150 = vadd.f32 0.0, %v4149
        %v4151 = vpop.f32.mrb[0].mxu0
        %v4152 = vadd.f32 0.0, %v4151
        %4153 = vmatprep.mubr.f32.mxu0 0.0
        %4154 = vmatmul.mubr.f32.gmra.mrb[0].mxu0 %v3977
        %v4155 = vpop.f32.mrb[0].mxu0
        %v4156 = vadd.f32 0.0, %v4155
        %v4157 = vpop.f32.mrb[0].mxu0
        %v4158 = vadd.f32 0.0, %v4157
        %4159 = vmatprep.mubr.f32.mxu0 0.0
        %4160 = vmatmul.mubr.f32.gmra.mrb[0].mxu0 %v3979
        %v4161 = vpop.f32.mrb[0].mxu0
        %v4162 = vadd.f32 0.0, %v4161
        %v4163 = vpop.f32.mrb[0].mxu0
        %v4164 = vadd.f32 0.0, %v4163
        %4165 = vmatprep.mubr.f32.mxu0 0.0
        %4166 = vmatmul.mubr.f32.gmra.mrb[0].mxu0 %v3981
        %v4167 = vpop.f32.mrb[0].mxu0
        %v4168 = vadd.f32 0.0, %v4167
        %v4169 = vpop.f32.mrb[0].mxu0
        %v4170 = vadd.f32 0.0, %v4169
        %4171 = vmatprep.mubr.f32.mxu0 0.0
        %4172 = vmatmul.mubr.f32.gmra.mrb[0].mxu0 %v3983
        %v4173 = vpop.f32.mrb[0].mxu0
        %v4174 = vadd.f32 0.0, %v4173
        %v4175 = vpop.f32.mrb[0].mxu0
        %v4176 = vadd.f32 0.0, %v4175
        %4177 = vmatprep.mubr.f32.mxu0 0.0
        %4178 = vmatmul.mubr.f32.gmra.mrb[0].mxu0 %v3985
        %v4179 = vpop.f32.mrb[0].mxu0
        %v4180 = vadd.f32 0.0, %v4179
        %v4181 = vpop.f32.mrb[0].mxu0
        %v4182 = vadd.f32 0.0, %v4181
        %4183 = vmatprep.mubr.f32.mxu0 0.0
        %4184 = vmatmul.mubr.f32.gmra.mrb[0].mxu0 %v3987
        %v4185 = vpop.f32.mrb[0].mxu0
        %v4186 = vadd.f32 0.0, %v4185
        %v4187 = vpop.f32.mrb[0].mxu0
        %v4188 = vadd.f32 0.0, %v4187
        %4189 = vmatprep.mubr.f32.mxu0 0.0
        %4190 = vmatmul.mubr.f32.gmra.mrb[0].mxu0 %v3989
        %v4191 = vpop.f32.mrb[0].mxu0
        %v4192 = vadd.f32 0.0, %v4191
        %v4193 = vpop.f32.mrb[0].mxu0
        %v4194 = vadd.f32 0.0, %v4193
        %4195 = vmatprep.mubr.f32.mxu0 0.0
        %4196 = vmatmul.mubr.f32.gmra.mrb[0].mxu0 %v3991
        %v4197 = vpop.f32.mrb[0].mxu0
        %v4198 = vadd.f32 0.0, %v4197
        %v4199 = vpop.f32.mrb[0].mxu0
        %v4200 = vadd.f32 0.0, %v4199
        %4201 = vmatprep.mubr.f32.mxu0 0.0
        %4202 = vmatmul.mubr.f32.gmra.mrb[0].mxu0 %v3993
        %v4203 = vpop.f32.mrb[0].mxu0
        %v4204 = vadd.f32 0.0, %v4203
        %v4205 = vpop.f32.mrb[0].mxu0
        %v4206 = vadd.f32 0.0, %v4205
        %4207 = vmatprep.mubr.f32.mxu0 0.0
        %4208 = vmatmul.mubr.f32.gmra.mrb[0].mxu0 %v3995
        %v4209 = vpop.f32.mrb[0].mxu0
        %v4210 = vadd.f32 0.0, %v4209
        %v4211 = vpop.f32.mrb[0].mxu0
        %v4212 = vadd.f32 0.0, %v4211
        %4213 = vmatprep.mubr.f32.mxu0 0.0
        %4214 = vmatmul.mubr.f32.gmra.mrb[0].mxu0 %v3997
        %v4215 = vpop.f32.mrb[0].mxu0
        %v4216 = vadd.f32 0.0, %v4215
        %v4217 = vpop.f32.mrb[0].mxu0
        %v4218 = vadd.f32 0.0, %v4217
        %4219 = vmatprep.mubr.f32.mxu0 0.0
        %4220 = vmatmul.mubr.f32.gmra.mrb[0].mxu0 %v3999
        %v4221 = vpop.f32.mrb[0].mxu0
        %v4222 = vadd.f32 0.0, %v4221
        %v4223 = vpop.f32.mrb[0].mxu0
        %v4224 = vadd.f32 0.0, %v4223
        %4225 = vmatprep.mubr.f32.mxu0 0.0
        %4226 = vmatmul.mubr.f32.gmra.mrb[0].mxu0 %v4001
        %v4227 = vpop.f32.mrb[0].mxu0
        %v4228 = vadd.f32 0.0, %v4227
        %v4229 = vpop.f32.mrb[0].mxu0
        %v4230 = vadd.f32 0.0, %v4229
        %4231 = vmatprep.mubr.f32.mxu0 0.0
        %4232 = vmatmul.mubr.f32.gmra.mrb[0].mxu0 %v4003
        %v4233 = vpop.f32.mrb[0].mxu0
        %v4234 = vadd.f32 0.0, %v4233
        %v4235 = vpop.f32.mrb[0].mxu0
        %v4236 = vadd.f32 0.0, %v4235
        %4237 = vmatprep.mubr.f32.mxu0 0.0
        %4238 = vmatmul.mubr.f32.gmra.mrb[0].mxu0 %v4005
        %v4239 = vpop.f32.mrb[0].mxu0
        %v4240 = vadd.f32 0.0, %v4239
        %v4241 = vpop.f32.mrb[0].mxu0
        %v4242 = vadd.f32 0.0, %v4241
        %4243 = vmatprep.mubr.f32.mxu0 0.0
        %4244 = vmatmul.mubr.f32.gmra.mrb[0].mxu0 %v4007
        %v4245 = vpop.f32.mrb[0].mxu0
        %v4246 = vadd.f32 0.0, %v4245
        %v4247 = vpop.f32.mrb[0].mxu0
        %v4248 = vadd.f32 0.0, %v4247
        %4249 = vmatprep.mubr.f32.mxu0 0.0
        %4250 = vmatmul.mubr.f32.gmra.mrb[0].mxu0 %v4009
        %v4251 = vpop.f32.mrb[0].mxu0
        %v4252 = vadd.f32 0.0, %v4251
        %v4253 = vpop.f32.mrb[0].mxu0
        %v4254 = vadd.f32 0.0, %v4253
        %4255 = vmatprep.mubr.f32.mxu0 0.0
        %4256 = vmatmul.mubr.f32.gmra.mrb[0].mxu0 %v4011
        %v4257 = vpop.f32.mrb[0].mxu0
        %v4258 = vadd.f32 0.0, %v4257
        %v4259 = vpop.f32.mrb[0].mxu0
        %v4260 = vadd.f32 0.0, %v4259
        %4261 = vmatprep.mubr.f32.mxu0 0.0
        %4262 = vmatmul.mubr.f32.gmra.mrb[0].mxu0 %v4013
        %v4263 = vpop.f32.mrb[0].mxu0
        %v4264 = vadd.f32 0.0, %v4263
        %v4265 = vpop.f32.mrb[0].mxu0
        %v4266 = vadd.f32 0.0, %v4265
        %4267 = vmatprep.mubr.f32.mxu0 0.0
        %4268 = vmatmul.mubr.f32.gmra.mrb[0].mxu0 %v4015
        %v4269 = vpop.f32.mrb[0].mxu0
        %v4270 = vadd.f32 0.0, %v4269
        %v4271 = vpop.f32.mrb[0].mxu0
        %v4272 = vadd.f32 0.0, %v4271
        %4273 = vdwg.mxu0
        %v4274 = vsel %vm3954, %v3659, 0
        %v4276 = vsel %vm3954, %v3664, 0
        %v4278 = vsel %vm3954, %v3669, 0
        %v4280 = vsel %vm3954, %v3674, 0
        %v4282 = vsel %vm3954, %v3679, 0
        %v4284 = vsel %vm3954, %v3684, 0
        %v4286 = vsel %vm3954, %v3689, 0
        %v4288 = vsel %vm3954, %v3694, 0
        %v4290 = vsel %vm3954, %v3699, 0
        %v4292 = vsel %vm3954, %v3704, 0
        %v4294 = vsel %vm3954, %v3709, 0
        %v4296 = vsel %vm3954, %v3714, 0
        %v4298 = vsel %vm3954, %v3719, 0
        %v4300 = vsel %vm3954, %v3724, 0
        %v4302 = vsel %vm3954, %v3729, 0
        %v4304 = vsel %vm3954, %v3734, 0
        %v4306 = vsel %vm3954, %v3739, 0
        %v4308 = vsel %vm3954, %v3744, 0
        %v4310 = vsel %vm3954, %v3749, 0
        %v4312 = vsel %vm3954, %v3754, 0
        %v4314 = vsel %vm3954, %v3759, 0
        %v4316 = vsel %vm3954, %v3764, 0
        %v4318 = vsel %vm3954, %v3769, 0
        %v4320 = vsel %vm3954, %v3774, 0
        %v4322 = vsel %vm3954, %v3779, 0
        %v4324 = vsel %vm3954, %v3784, 0
        %v4326 = vsel %vm3954, %v3789, 0
        %v4328 = vsel %vm3954, %v3794, 0
        %v4330 = vsel %vm3954, %v3799, 0
        %v4332 = vsel %vm3954, %v3804, 0
        %v4334 = vsel %vm3954, %v3809, 0
        %v4337 = vsel %vm2211, %v3837, 0
        %v4340 = vsel %vm2211, %v3838, 0
        %4342 = vmatprep.subr.mxu0 %v3818
        %4343 = vmatpush1.msra.mxu0 %v3817
        %4344 = vmatprep.subr.mxu0 %v3820
        %4345 = vmatpush1.msra.mxu0 %v3819
        %4346 = vmatprep.subr.mxu0 %v3822
        %4347 = vmatpush1.msra.mxu0 %v3821
        %4348 = vmatprep.subr.mxu0 %v3824
        %4349 = vmatpush1.msra.mxu0 %v3823
        %4350 = vmatprep.subr.mxu0 %v3826
        %4351 = vmatpush1.msra.mxu0 %v3825
        %4352 = vmatprep.subr.mxu0 %v3828
        %4353 = vmatpush1.msra.mxu0 %v3827
        %4354 = vmatprep.subr.mxu0 %v3830
        %4355 = vmatpush1.msra.mxu0 %v3829
        %4356 = vmatprep.subr.mxu0 %v3832
        %4357 = vmatpush1.msra.mxu0 %v3831
        %4358 = vmatprep.subr.mxu0 %v3834
        %4359 = vmatpush1.msra.mxu0 %v3833
        %4360 = vmatprep.subr.mxu0 %v3836
        %4361 = vmatpush1.msra.mxu0 %v3835
        %4362 = vmatprep.subr.mxu0 %v4340
        %4363 = vmatpush1.msra.mxu0 %v4337
        %4364 = vmatprep.subr.mxu0 0.0
        %4365 = vmatpush1.msra.mxu0 0.0
        %4366 = vmatprep.subr.mxu0 0.0
        %4367 = vmatpush1.msra.mxu0 0.0
        %4368 = vmatprep.subr.mxu0 0.0
        %4369 = vmatpush1.msra.mxu0 0.0
        %4370 = vmatprep.subr.mxu0 0.0
        %4371 = vmatpush1.msra.mxu0 0.0
        %4372 = vmatprep.subr.mxu0 0.0
        %4373 = vmatpush1.msra.mxu0 0.0
        %4374 = vmatprep.subr.mxu0 0.0
        %4375 = vmatpush1.msra.mxu0 0.0
        %4376 = vmatprep.subr.mxu0 0.0
        %4377 = vmatpush1.msra.mxu0 0.0
        %4378 = vmatprep.subr.mxu0 0.0
        %4379 = vmatpush1.msra.mxu0 0.0
        %4380 = vmatprep.subr.mxu0 0.0
        %4381 = vmatpush1.msra.mxu0 0.0
        %4382 = vmatprep.subr.mxu0 0.0
        %4383 = vmatpush1.msra.mxu0 0.0
        %4384 = vmatprep.subr.mxu0 0.0
        %4385 = vmatpush1.msra.mxu0 0.0
        %4386 = vmatprep.subr.mxu0 0.0
        %4387 = vmatpush1.msra.mxu0 0.0
        %4388 = vmatprep.subr.mxu0 0.0
        %4389 = vmatpush1.msra.mxu0 0.0
        %4390 = vmatprep.subr.mxu0 0.0
        %4391 = vmatpush1.msra.mxu0 0.0
        %4392 = vmatprep.subr.mxu0 0.0
        %4393 = vmatpush1.msra.mxu0 0.0
        %4394 = vmatprep.subr.mxu0 0.0
        %4395 = vmatpush1.msra.mxu0 0.0
        %4396 = vmatprep.subr.mxu0 0.0
        %4397 = vmatpush1.msra.mxu0 0.0
        %4398 = vmatprep.subr.mxu0 0.0
        %4399 = vmatpush1.msra.mxu0 0.0
        %4400 = vmatprep.subr.mxu0 0.0
        %4401 = vmatpush1.msra.mxu0 0.0
        %4402 = vmatprep.subr.mxu0 0.0
        %4403 = vmatpush1.msra.mxu0 0.0
        %4404 = vmatprep.subr.mxu0 0.0
        %4405 = vmatpush1.msra.mxu0 0.0
        %4406 = vmatprep.mubr.f32.mxu0 0.0
        %4407 = vmatmul.mubr.f32.gmra.mrb[0].mxu0 %v4274
        %v4408 = vpop.f32.mrb[0].mxu0
        %v4409 = vadd.f32 %v4090, %v4408
        %v4410 = vpop.f32.mrb[0].mxu0
        %v4411 = vadd.f32 %v4092, %v4410
        %4412 = vmatprep.mubr.f32.mxu0 0.0
        %4413 = vmatmul.mubr.f32.gmra.mrb[0].mxu0 %v4276
        %v4414 = vpop.f32.mrb[0].mxu0
        %v4415 = vadd.f32 %v4096, %v4414
        %v4416 = vpop.f32.mrb[0].mxu0
        %v4417 = vadd.f32 %v4098, %v4416
        %4418 = vmatprep.mubr.f32.mxu0 0.0
        %4419 = vmatmul.mubr.f32.gmra.mrb[0].mxu0 %v4278
        %v4420 = vpop.f32.mrb[0].mxu0
        %v4421 = vadd.f32 %v4102, %v4420
        %v4422 = vpop.f32.mrb[0].mxu0
        %v4423 = vadd.f32 %v4104, %v4422
        %4424 = vmatprep.mubr.f32.mxu0 0.0
        %4425 = vmatmul.mubr.f32.gmra.mrb[0].mxu0 %v4280
        %v4426 = vpop.f32.mrb[0].mxu0
        %v4427 = vadd.f32 %v4108, %v4426
        %v4428 = vpop.f32.mrb[0].mxu0
        %v4429 = vadd.f32 %v4110, %v4428
        %4430 = vmatprep.mubr.f32.mxu0 0.0
        %4431 = vmatmul.mubr.f32.gmra.mrb[0].mxu0 %v4282
        %v4432 = vpop.f32.mrb[0].mxu0
        %v4433 = vadd.f32 %v4114, %v4432
        %v4434 = vpop.f32.mrb[0].mxu0
        %v4435 = vadd.f32 %v4116, %v4434
        %4436 = vmatprep.mubr.f32.mxu0 0.0
        %4437 = vmatmul.mubr.f32.gmra.mrb[0].mxu0 %v4284
        %v4438 = vpop.f32.mrb[0].mxu0
        %v4439 = vadd.f32 %v4120, %v4438
        %v4440 = vpop.f32.mrb[0].mxu0
        %v4441 = vadd.f32 %v4122, %v4440
        %4442 = vmatprep.mubr.f32.mxu0 0.0
        %4443 = vmatmul.mubr.f32.gmra.mrb[0].mxu0 %v4286
        %v4444 = vpop.f32.mrb[0].mxu0
        %v4445 = vadd.f32 %v4126, %v4444
        %v4446 = vpop.f32.mrb[0].mxu0
        %v4447 = vadd.f32 %v4128, %v4446
        %4448 = vmatprep.mubr.f32.mxu0 0.0
        %4449 = vmatmul.mubr.f32.gmra.mrb[0].mxu0 %v4288
        %v4450 = vpop.f32.mrb[0].mxu0
        %v4451 = vadd.f32 %v4132, %v4450
        %v4452 = vpop.f32.mrb[0].mxu0
        %v4453 = vadd.f32 %v4134, %v4452
        %4454 = vmatprep.mubr.f32.mxu0 0.0
        %4455 = vmatmul.mubr.f32.gmra.mrb[0].mxu0 %v4290
        %v4456 = vpop.f32.mrb[0].mxu0
        %v4457 = vadd.f32 %v4138, %v4456
        %v4458 = vpop.f32.mrb[0].mxu0
        %v4459 = vadd.f32 %v4140, %v4458
        %4460 = vmatprep.mubr.f32.mxu0 0.0
        %4461 = vmatmul.mubr.f32.gmra.mrb[0].mxu0 %v4292
        %v4462 = vpop.f32.mrb[0].mxu0
        %v4463 = vadd.f32 %v4144, %v4462
        %v4464 = vpop.f32.mrb[0].mxu0
        %v4465 = vadd.f32 %v4146, %v4464
        %4466 = vmatprep.mubr.f32.mxu0 0.0
        %4467 = vmatmul.mubr.f32.gmra.mrb[0].mxu0 %v4294
        %v4468 = vpop.f32.mrb[0].mxu0
        %v4469 = vadd.f32 %v4150, %v4468
        %v4470 = vpop.f32.mrb[0].mxu0
        %v4471 = vadd.f32 %v4152, %v4470
        %4472 = vmatprep.mubr.f32.mxu0 0.0
        %4473 = vmatmul.mubr.f32.gmra.mrb[0].mxu0 %v4296
        %v4474 = vpop.f32.mrb[0].mxu0
        %v4475 = vadd.f32 %v4156, %v4474
        %v4476 = vpop.f32.mrb[0].mxu0
        %v4477 = vadd.f32 %v4158, %v4476
        %4478 = vmatprep.mubr.f32.mxu0 0.0
        %4479 = vmatmul.mubr.f32.gmra.mrb[0].mxu0 %v4298
        %v4480 = vpop.f32.mrb[0].mxu0
        %v4481 = vadd.f32 %v4162, %v4480
        %v4482 = vpop.f32.mrb[0].mxu0
        %v4483 = vadd.f32 %v4164, %v4482
        %4484 = vmatprep.mubr.f32.mxu0 0.0
        %4485 = vmatmul.mubr.f32.gmra.mrb[0].mxu0 %v4300
        %v4486 = vpop.f32.mrb[0].mxu0
        %v4487 = vadd.f32 %v4168, %v4486
        %v4488 = vpop.f32.mrb[0].mxu0
        %v4489 = vadd.f32 %v4170, %v4488
        %4490 = vmatprep.mubr.f32.mxu0 0.0
        %4491 = vmatmul.mubr.f32.gmra.mrb[0].mxu0 %v4302
        %v4492 = vpop.f32.mrb[0].mxu0
        %v4493 = vadd.f32 %v4174, %v4492
        %v4494 = vpop.f32.mrb[0].mxu0
        %v4495 = vadd.f32 %v4176, %v4494
        %4496 = vmatprep.mubr.f32.mxu0 0.0
        %4497 = vmatmul.mubr.f32.gmra.mrb[0].mxu0 %v4304
        %v4498 = vpop.f32.mrb[0].mxu0
        %v4499 = vadd.f32 %v4180, %v4498
        %v4500 = vpop.f32.mrb[0].mxu0
        %v4501 = vadd.f32 %v4182, %v4500
        %4502 = vmatprep.mubr.f32.mxu0 0.0
        %4503 = vmatmul.mubr.f32.gmra.mrb[0].mxu0 %v4306
        %v4504 = vpop.f32.mrb[0].mxu0
        %v4505 = vadd.f32 %v4186, %v4504
        %v4506 = vpop.f32.mrb[0].mxu0
        %v4507 = vadd.f32 %v4188, %v4506
        %4508 = vmatprep.mubr.f32.mxu0 0.0
        %4509 = vmatmul.mubr.f32.gmra.mrb[0].mxu0 %v4308
        %v4510 = vpop.f32.mrb[0].mxu0
        %v4511 = vadd.f32 %v4192, %v4510
        %v4512 = vpop.f32.mrb[0].mxu0
        %v4513 = vadd.f32 %v4194, %v4512
        %4514 = vmatprep.mubr.f32.mxu0 0.0
        %4515 = vmatmul.mubr.f32.gmra.mrb[0].mxu0 %v4310
        %v4516 = vpop.f32.mrb[0].mxu0
        %v4517 = vadd.f32 %v4198, %v4516
        %v4518 = vpop.f32.mrb[0].mxu0
        %v4519 = vadd.f32 %v4200, %v4518
        %4520 = vmatprep.mubr.f32.mxu0 0.0
        %4521 = vmatmul.mubr.f32.gmra.mrb[0].mxu0 %v4312
        %v4522 = vpop.f32.mrb[0].mxu0
        %v4523 = vadd.f32 %v4204, %v4522
        %v4524 = vpop.f32.mrb[0].mxu0
        %v4525 = vadd.f32 %v4206, %v4524
        %4526 = vmatprep.mubr.f32.mxu0 0.0
        %4527 = vmatmul.mubr.f32.gmra.mrb[0].mxu0 %v4314
        %v4528 = vpop.f32.mrb[0].mxu0
        %v4529 = vadd.f32 %v4210, %v4528
        %v4530 = vpop.f32.mrb[0].mxu0
        %v4531 = vadd.f32 %v4212, %v4530
        %4532 = vmatprep.mubr.f32.mxu0 0.0
        %4533 = vmatmul.mubr.f32.gmra.mrb[0].mxu0 %v4316
        %v4534 = vpop.f32.mrb[0].mxu0
        %v4535 = vadd.f32 %v4216, %v4534
        %v4536 = vpop.f32.mrb[0].mxu0
        %v4537 = vadd.f32 %v4218, %v4536
        %4538 = vmatprep.mubr.f32.mxu0 0.0
        %4539 = vmatmul.mubr.f32.gmra.mrb[0].mxu0 %v4318
        %v4540 = vpop.f32.mrb[0].mxu0
        %v4541 = vadd.f32 %v4222, %v4540
        %v4542 = vpop.f32.mrb[0].mxu0
        %v4543 = vadd.f32 %v4224, %v4542
        %4544 = vmatprep.mubr.f32.mxu0 0.0
        %4545 = vmatmul.mubr.f32.gmra.mrb[0].mxu0 %v4320
        %v4546 = vpop.f32.mrb[0].mxu0
        %v4547 = vadd.f32 %v4228, %v4546
        %v4548 = vpop.f32.mrb[0].mxu0
        %v4549 = vadd.f32 %v4230, %v4548
        %4550 = vmatprep.mubr.f32.mxu0 0.0
        %4551 = vmatmul.mubr.f32.gmra.mrb[0].mxu0 %v4322
        %v4552 = vpop.f32.mrb[0].mxu0
        %v4553 = vadd.f32 %v4234, %v4552
        %v4554 = vpop.f32.mrb[0].mxu0
        %v4555 = vadd.f32 %v4236, %v4554
        %4556 = vmatprep.mubr.f32.mxu0 0.0
        %4557 = vmatmul.mubr.f32.gmra.mrb[0].mxu0 %v4324
        %v4558 = vpop.f32.mrb[0].mxu0
        %v4559 = vadd.f32 %v4240, %v4558
        %v4560 = vpop.f32.mrb[0].mxu0
        %v4561 = vadd.f32 %v4242, %v4560
        %4562 = vmatprep.mubr.f32.mxu0 0.0
        %4563 = vmatmul.mubr.f32.gmra.mrb[0].mxu0 %v4326
        %v4564 = vpop.f32.mrb[0].mxu0
        %v4565 = vadd.f32 %v4246, %v4564
        %v4566 = vpop.f32.mrb[0].mxu0
        %v4567 = vadd.f32 %v4248, %v4566
        %4568 = vmatprep.mubr.f32.mxu0 0.0
        %4569 = vmatmul.mubr.f32.gmra.mrb[0].mxu0 %v4328
        %v4570 = vpop.f32.mrb[0].mxu0
        %v4571 = vadd.f32 %v4252, %v4570
        %v4572 = vpop.f32.mrb[0].mxu0
        %v4573 = vadd.f32 %v4254, %v4572
        %4574 = vmatprep.mubr.f32.mxu0 0.0
        %4575 = vmatmul.mubr.f32.gmra.mrb[0].mxu0 %v4330
        %v4576 = vpop.f32.mrb[0].mxu0
        %v4577 = vadd.f32 %v4258, %v4576
        %v4578 = vpop.f32.mrb[0].mxu0
        %v4579 = vadd.f32 %v4260, %v4578
        %4580 = vmatprep.mubr.f32.mxu0 0.0
        %4581 = vmatmul.mubr.f32.gmra.mrb[0].mxu0 %v4332
        %v4582 = vpop.f32.mrb[0].mxu0
        %v4583 = vadd.f32 %v4264, %v4582
        %v4584 = vpop.f32.mrb[0].mxu0
        %v4585 = vadd.f32 %v4266, %v4584
        %4586 = vmatprep.mubr.f32.mxu0 0.0
        %4587 = vmatmul.mubr.f32.gmra.mrb[0].mxu0 %v4334
        %v4588 = vpop.f32.mrb[0].mxu0
        %v4589 = vadd.f32 %v4270, %v4588
        %v4590 = vpop.f32.mrb[0].mxu0
        %v4591 = vadd.f32 %v4272, %v4590
        %4592 = vdwg.mxu0
        %s4593 = scalar_lea.vmem %s4, 352
        %v4594 = vld [vmem:[%s4593] sm:$0xff]
        %v4595 = vld [vmem:[%s4593 + $0x8] sm:$0xff]
        %v4596 = vld [vmem:[%s4593 + $0x10] sm:$0xff]
        %v4597 = vld [vmem:[%s4593 + $0x18] sm:$0xff]
        %v4598 = vld [vmem:[%s4593 + $0x20] sm:$0xff]
        %v4599 = vld [vmem:[%s4593 + $0x28] sm:$0xff]
        %v4600 = vld [vmem:[%s4593 + $0x30] sm:$0xff]
        %v4601 = vld [vmem:[%s4593 + $0x38] sm:$0xff]
        %v4602 = vld [vmem:[%s4593 + $0x40] sm:$0xff]
        %v4603 = vld [vmem:[%s4593 + $0x48] sm:$0xff]
        %v4604 = vld [vmem:[%s4593 + $0x50] sm:$0xff]
        %v4605 = vld [vmem:[%s4593 + $0x58] sm:$0xff]
        %v4606 = vld [vmem:[%s4593 + $0x60] sm:$0xff]
        %v4607 = vld [vmem:[%s4593 + $0x68] sm:$0xff]
        %v4608 = vld [vmem:[%s4593 + $0x70] sm:$0xff]
        %v4609 = vld [vmem:[%s4593 + $0x78] sm:$0xff]
        %v4610 = vld [vmem:[%s4593 + $0x80] sm:$0xff]
        %v4611 = vld [vmem:[%s4593 + $0x88] sm:$0xff]
        %v4612 = vld [vmem:[%s4593 + $0x90] sm:$0xff]
        %v4613 = vld [vmem:[%s4593 + $0x98] sm:$0xff]
        %v4614 = vld [vmem:[%s4593 + $0xa0] sm:$0xf]
        %v4615 = vld [vmem:[%s4593 + $0xa8] sm:$0xf]
        %v4616 = vrot.slane %v3659, 4
        %v4617 = vrot.slane %v3664, 4
        %v4618 = vsel %vm2211, %v4616, %v4617
        %v4619 = vrot.slane %v3669, 4
        %v4620 = vsel %vm2211, %v4617, %v4619
        %v4621 = vrot.slane %v3674, 4
        %v4622 = vsel %vm2211, %v4619, %v4621
        %v4623 = vrot.slane %v3679, 4
        %v4624 = vsel %vm2211, %v4621, %v4623
        %v4625 = vrot.slane %v3684, 4
        %v4626 = vsel %vm2211, %v4623, %v4625
        %v4627 = vrot.slane %v3689, 4
        %v4628 = vsel %vm2211, %v4625, %v4627
        %v4629 = vrot.slane %v3694, 4
        %v4630 = vsel %vm2211, %v4627, %v4629
        %v4631 = vrot.slane %v3699, 4
        %v4632 = vsel %vm2211, %v4629, %v4631
        %v4633 = vrot.slane %v3704, 4
        %v4634 = vsel %vm2211, %v4631, %v4633
        %v4635 = vrot.slane %v3709, 4
        %v4636 = vsel %vm2211, %v4633, %v4635
        %v4637 = vrot.slane %v3714, 4
        %v4638 = vsel %vm2211, %v4635, %v4637
        %v4639 = vrot.slane %v3719, 4
        %v4640 = vsel %vm2211, %v4637, %v4639
        %v4641 = vrot.slane %v3724, 4
        %v4642 = vsel %vm2211, %v4639, %v4641
        %v4643 = vrot.slane %v3729, 4
        %v4644 = vsel %vm2211, %v4641, %v4643
        %v4645 = vrot.slane %v3734, 4
        %v4646 = vsel %vm2211, %v4643, %v4645
        %v4647 = vrot.slane %v3739, 4
        %v4648 = vsel %vm2211, %v4645, %v4647
        %v4649 = vrot.slane %v3744, 4
        %v4650 = vsel %vm2211, %v4647, %v4649
        %v4651 = vrot.slane %v3749, 4
        %v4652 = vsel %vm2211, %v4649, %v4651
        %v4653 = vrot.slane %v3754, 4
        %v4654 = vsel %vm2211, %v4651, %v4653
        %v4655 = vrot.slane %v3759, 4
        %v4656 = vsel %vm2211, %v4653, %v4655
        %v4657 = vrot.slane %v3764, 4
        %v4658 = vsel %vm2211, %v4655, %v4657
        %v4659 = vrot.slane %v3769, 4
        %v4660 = vsel %vm2211, %v4657, %v4659
        %v4661 = vrot.slane %v3774, 4
        %v4662 = vsel %vm2211, %v4659, %v4661
        %v4663 = vrot.slane %v3779, 4
        %v4664 = vsel %vm2211, %v4661, %v4663
        %v4665 = vrot.slane %v3784, 4
        %v4666 = vsel %vm2211, %v4663, %v4665
        %v4667 = vrot.slane %v3789, 4
        %v4668 = vsel %vm2211, %v4665, %v4667
        %v4669 = vrot.slane %v3794, 4
        %v4670 = vsel %vm2211, %v4667, %v4669
        %v4671 = vrot.slane %v3799, 4
        %v4672 = vsel %vm2211, %v4669, %v4671
        %v4673 = vrot.slane %v3804, 4
        %v4674 = vsel %vm2211, %v4671, %v4673
        %v4675 = vrot.slane %v3809, 4
        %v4676 = vsel %vm2211, %v4673, %v4675
        %v4677 = vsel %vm3954, %v4618, 0
        %v4679 = vsel %vm3954, %v4620, 0
        %v4681 = vsel %vm3954, %v4622, 0
        %v4683 = vsel %vm3954, %v4624, 0
        %v4685 = vsel %vm3954, %v4626, 0
        %v4687 = vsel %vm3954, %v4628, 0
        %v4689 = vsel %vm3954, %v4630, 0
        %v4691 = vsel %vm3954, %v4632, 0
        %v4693 = vsel %vm3954, %v4634, 0
        %v4695 = vsel %vm3954, %v4636, 0
        %v4697 = vsel %vm3954, %v4638, 0
        %v4699 = vsel %vm3954, %v4640, 0
        %v4701 = vsel %vm3954, %v4642, 0
        %v4703 = vsel %vm3954, %v4644, 0
        %v4705 = vsel %vm3954, %v4646, 0
        %v4707 = vsel %vm3954, %v4648, 0
        %v4709 = vsel %vm3954, %v4650, 0
        %v4711 = vsel %vm3954, %v4652, 0
        %v4713 = vsel %vm3954, %v4654, 0
        %v4715 = vsel %vm3954, %v4656, 0
        %v4717 = vsel %vm3954, %v4658, 0
        %v4719 = vsel %vm3954, %v4660, 0
        %v4721 = vsel %vm3954, %v4662, 0
        %v4723 = vsel %vm3954, %v4664, 0
        %v4725 = vsel %vm3954, %v4666, 0
        %v4727 = vsel %vm3954, %v4668, 0
        %v4729 = vsel %vm3954, %v4670, 0
        %v4731 = vsel %vm3954, %v4672, 0
        %v4733 = vsel %vm3954, %v4674, 0
        %v4735 = vsel %vm3954, %v4676, 0
        %v4737 = vsel %vm3954, %v4675, 0
        %v4740 = vsel %vm2211, %v4614, 0
        %v4743 = vsel %vm2211, %v4615, 0
        %4745 = vmatprep.subr.mxu0 %v4595
        %4746 = vmatpush1.msra.mxu0 %v4594
        %4747 = vmatprep.subr.mxu0 %v4597
        %4748 = vmatpush1.msra.mxu0 %v4596
        %4749 = vmatprep.subr.mxu0 %v4599
        %4750 = vmatpush1.msra.mxu0 %v4598
        %4751 = vmatprep.subr.mxu0 %v4601
        %4752 = vmatpush1.msra.mxu0 %v4600
        %4753 = vmatprep.subr.mxu0 %v4603
        %4754 = vmatpush1.msra.mxu0 %v4602
        %4755 = vmatprep.subr.mxu0 %v4605
        %4756 = vmatpush1.msra.mxu0 %v4604
        %4757 = vmatprep.subr.mxu0 %v4607
        %4758 = vmatpush1.msra.mxu0 %v4606
        %4759 = vmatprep.subr.mxu0 %v4609
        %4760 = vmatpush1.msra.mxu0 %v4608
        %4761 = vmatprep.subr.mxu0 %v4611
        %4762 = vmatpush1.msra.mxu0 %v4610
        %4763 = vmatprep.subr.mxu0 %v4613
        %4764 = vmatpush1.msra.mxu0 %v4612
        %4765 = vmatprep.subr.mxu0 %v4743
        %4766 = vmatpush1.msra.mxu0 %v4740
        %4767 = vmatprep.subr.mxu0 0.0
        %4768 = vmatpush1.msra.mxu0 0.0
        %4769 = vmatprep.subr.mxu0 0.0
        %4770 = vmatpush1.msra.mxu0 0.0
        %4771 = vmatprep.subr.mxu0 0.0
        %4772 = vmatpush1.msra.mxu0 0.0
        %4773 = vmatprep.subr.mxu0 0.0
        %4774 = vmatpush1.msra.mxu0 0.0
        %4775 = vmatprep.subr.mxu0 0.0
        %4776 = vmatpush1.msra.mxu0 0.0
        %4777 = vmatprep.subr.mxu0 0.0
        %4778 = vmatpush1.msra.mxu0 0.0
        %4779 = vmatprep.subr.mxu0 0.0
        %4780 = vmatpush1.msra.mxu0 0.0
        %4781 = vmatprep.subr.mxu0 0.0
        %4782 = vmatpush1.msra.mxu0 0.0
        %4783 = vmatprep.subr.mxu0 0.0
        %4784 = vmatpush1.msra.mxu0 0.0
        %4785 = vmatprep.subr.mxu0 0.0
        %4786 = vmatpush1.msra.mxu0 0.0
        %4787 = vmatprep.subr.mxu0 0.0
        %4788 = vmatpush1.msra.mxu0 0.0
        %4789 = vmatprep.subr.mxu0 0.0
        %4790 = vmatpush1.msra.mxu0 0.0
        %4791 = vmatprep.subr.mxu0 0.0
        %4792 = vmatpush1.msra.mxu0 0.0
        %4793 = vmatprep.subr.mxu0 0.0
        %4794 = vmatpush1.msra.mxu0 0.0
        %4795 = vmatprep.subr.mxu0 0.0
        %4796 = vmatpush1.msra.mxu0 0.0
        %4797 = vmatprep.subr.mxu0 0.0
        %4798 = vmatpush1.msra.mxu0 0.0
        %4799 = vmatprep.subr.mxu0 0.0
        %4800 = vmatpush1.msra.mxu0 0.0
        %4801 = vmatprep.subr.mxu0 0.0
        %4802 = vmatpush1.msra.mxu0 0.0
        %4803 = vmatprep.subr.mxu0 0.0
        %4804 = vmatpush1.msra.mxu0 0.0
        %4805 = vmatprep.subr.mxu0 0.0
        %4806 = vmatpush1.msra.mxu0 0.0
        %4807 = vmatprep.subr.mxu0 0.0
        %4808 = vmatpush1.msra.mxu0 0.0
        %4809 = vmatprep.mubr.f32.mxu0 0.0
        %4810 = vmatmul.mubr.f32.gmra.mrb[0].mxu0 %v4677
        %v4811 = vpop.f32.mrb[0].mxu0
        %v4812 = vadd.f32 0.0, %v4811
        %v4813 = vpop.f32.mrb[0].mxu0
        %v4814 = vadd.f32 0.0, %v4813
        %4815 = vmatprep.mubr.f32.mxu0 0.0
        %4816 = vmatmul.mubr.f32.gmra.mrb[0].mxu0 %v4679
        %v4817 = vpop.f32.mrb[0].mxu0
        %v4818 = vadd.f32 0.0, %v4817
        %v4819 = vpop.f32.mrb[0].mxu0
        %v4820 = vadd.f32 0.0, %v4819
        %4821 = vmatprep.mubr.f32.mxu0 0.0
        %4822 = vmatmul.mubr.f32.gmra.mrb[0].mxu0 %v4681
        %v4823 = vpop.f32.mrb[0].mxu0
        %v4824 = vadd.f32 0.0, %v4823
        %v4825 = vpop.f32.mrb[0].mxu0
        %v4826 = vadd.f32 0.0, %v4825
        %4827 = vmatprep.mubr.f32.mxu0 0.0
        %4828 = vmatmul.mubr.f32.gmra.mrb[0].mxu0 %v4683
        %v4829 = vpop.f32.mrb[0].mxu0
        %v4830 = vadd.f32 0.0, %v4829
        %v4831 = vpop.f32.mrb[0].mxu0
        %v4832 = vadd.f32 0.0, %v4831
        %4833 = vmatprep.mubr.f32.mxu0 0.0
        %4834 = vmatmul.mubr.f32.gmra.mrb[0].mxu0 %v4685
        %v4835 = vpop.f32.mrb[0].mxu0
        %v4836 = vadd.f32 0.0, %v4835
        %v4837 = vpop.f32.mrb[0].mxu0
        %v4838 = vadd.f32 0.0, %v4837
        %4839 = vmatprep.mubr.f32.mxu0 0.0
        %4840 = vmatmul.mubr.f32.gmra.mrb[0].mxu0 %v4687
        %v4841 = vpop.f32.mrb[0].mxu0
        %v4842 = vadd.f32 0.0, %v4841
        %v4843 = vpop.f32.mrb[0].mxu0
        %v4844 = vadd.f32 0.0, %v4843
        %4845 = vmatprep.mubr.f32.mxu0 0.0
        %4846 = vmatmul.mubr.f32.gmra.mrb[0].mxu0 %v4689
        %v4847 = vpop.f32.mrb[0].mxu0
        %v4848 = vadd.f32 0.0, %v4847
        %v4849 = vpop.f32.mrb[0].mxu0
        %v4850 = vadd.f32 0.0, %v4849
        %4851 = vmatprep.mubr.f32.mxu0 0.0
        %4852 = vmatmul.mubr.f32.gmra.mrb[0].mxu0 %v4691
        %v4853 = vpop.f32.mrb[0].mxu0
        %v4854 = vadd.f32 0.0, %v4853
        %v4855 = vpop.f32.mrb[0].mxu0
        %v4856 = vadd.f32 0.0, %v4855
        %4857 = vmatprep.mubr.f32.mxu0 0.0
        %4858 = vmatmul.mubr.f32.gmra.mrb[0].mxu0 %v4693
        %v4859 = vpop.f32.mrb[0].mxu0
        %v4860 = vadd.f32 0.0, %v4859
        %v4861 = vpop.f32.mrb[0].mxu0
        %v4862 = vadd.f32 0.0, %v4861
        %4863 = vmatprep.mubr.f32.mxu0 0.0
        %4864 = vmatmul.mubr.f32.gmra.mrb[0].mxu0 %v4695
        %v4865 = vpop.f32.mrb[0].mxu0
        %v4866 = vadd.f32 0.0, %v4865
        %v4867 = vpop.f32.mrb[0].mxu0
        %v4868 = vadd.f32 0.0, %v4867
        %4869 = vmatprep.mubr.f32.mxu0 0.0
        %4870 = vmatmul.mubr.f32.gmra.mrb[0].mxu0 %v4697
        %v4871 = vpop.f32.mrb[0].mxu0
        %v4872 = vadd.f32 0.0, %v4871
        %v4873 = vpop.f32.mrb[0].mxu0
        %v4874 = vadd.f32 0.0, %v4873
        %4875 = vmatprep.mubr.f32.mxu0 0.0
        %4876 = vmatmul.mubr.f32.gmra.mrb[0].mxu0 %v4699
        %v4877 = vpop.f32.mrb[0].mxu0
        %v4878 = vadd.f32 0.0, %v4877
        %v4879 = vpop.f32.mrb[0].mxu0
        %v4880 = vadd.f32 0.0, %v4879
        %4881 = vmatprep.mubr.f32.mxu0 0.0
        %4882 = vmatmul.mubr.f32.gmra.mrb[0].mxu0 %v4701
        %v4883 = vpop.f32.mrb[0].mxu0
        %v4884 = vadd.f32 0.0, %v4883
        %v4885 = vpop.f32.mrb[0].mxu0
        %v4886 = vadd.f32 0.0, %v4885
        %4887 = vmatprep.mubr.f32.mxu0 0.0
        %4888 = vmatmul.mubr.f32.gmra.mrb[0].mxu0 %v4703
        %v4889 = vpop.f32.mrb[0].mxu0
        %v4890 = vadd.f32 0.0, %v4889
        %v4891 = vpop.f32.mrb[0].mxu0
        %v4892 = vadd.f32 0.0, %v4891
        %4893 = vmatprep.mubr.f32.mxu0 0.0
        %4894 = vmatmul.mubr.f32.gmra.mrb[0].mxu0 %v4705
        %v4895 = vpop.f32.mrb[0].mxu0
        %v4896 = vadd.f32 0.0, %v4895
        %v4897 = vpop.f32.mrb[0].mxu0
        %v4898 = vadd.f32 0.0, %v4897
        %4899 = vmatprep.mubr.f32.mxu0 0.0
        %4900 = vmatmul.mubr.f32.gmra.mrb[0].mxu0 %v4707
        %v4901 = vpop.f32.mrb[0].mxu0
        %v4902 = vadd.f32 0.0, %v4901
        %v4903 = vpop.f32.mrb[0].mxu0
        %v4904 = vadd.f32 0.0, %v4903
        %4905 = vmatprep.mubr.f32.mxu0 0.0
        %4906 = vmatmul.mubr.f32.gmra.mrb[0].mxu0 %v4709
        %v4907 = vpop.f32.mrb[0].mxu0
        %v4908 = vadd.f32 0.0, %v4907
        %v4909 = vpop.f32.mrb[0].mxu0
        %v4910 = vadd.f32 0.0, %v4909
        %4911 = vmatprep.mubr.f32.mxu0 0.0
        %4912 = vmatmul.mubr.f32.gmra.mrb[0].mxu0 %v4711
        %v4913 = vpop.f32.mrb[0].mxu0
        %v4914 = vadd.f32 0.0, %v4913
        %v4915 = vpop.f32.mrb[0].mxu0
        %v4916 = vadd.f32 0.0, %v4915
        %4917 = vmatprep.mubr.f32.mxu0 0.0
        %4918 = vmatmul.mubr.f32.gmra.mrb[0].mxu0 %v4713
        %v4919 = vpop.f32.mrb[0].mxu0
        %v4920 = vadd.f32 0.0, %v4919
        %v4921 = vpop.f32.mrb[0].mxu0
        %v4922 = vadd.f32 0.0, %v4921
        %4923 = vmatprep.mubr.f32.mxu0 0.0
        %4924 = vmatmul.mubr.f32.gmra.mrb[0].mxu0 %v4715
        %v4925 = vpop.f32.mrb[0].mxu0
        %v4926 = vadd.f32 0.0, %v4925
        %v4927 = vpop.f32.mrb[0].mxu0
        %v4928 = vadd.f32 0.0, %v4927
        %4929 = vmatprep.mubr.f32.mxu0 0.0
        %4930 = vmatmul.mubr.f32.gmra.mrb[0].mxu0 %v4717
        %v4931 = vpop.f32.mrb[0].mxu0
        %v4932 = vadd.f32 0.0, %v4931
        %v4933 = vpop.f32.mrb[0].mxu0
        %v4934 = vadd.f32 0.0, %v4933
        %4935 = vmatprep.mubr.f32.mxu0 0.0
        %4936 = vmatmul.mubr.f32.gmra.mrb[0].mxu0 %v4719
        %v4937 = vpop.f32.mrb[0].mxu0
        %v4938 = vadd.f32 0.0, %v4937
        %v4939 = vpop.f32.mrb[0].mxu0
        %v4940 = vadd.f32 0.0, %v4939
        %4941 = vmatprep.mubr.f32.mxu0 0.0
        %4942 = vmatmul.mubr.f32.gmra.mrb[0].mxu0 %v4721
        %v4943 = vpop.f32.mrb[0].mxu0
        %v4944 = vadd.f32 0.0, %v4943
        %v4945 = vpop.f32.mrb[0].mxu0
        %v4946 = vadd.f32 0.0, %v4945
        %4947 = vmatprep.mubr.f32.mxu0 0.0
        %4948 = vmatmul.mubr.f32.gmra.mrb[0].mxu0 %v4723
        %v4949 = vpop.f32.mrb[0].mxu0
        %v4950 = vadd.f32 0.0, %v4949
        %v4951 = vpop.f32.mrb[0].mxu0
        %v4952 = vadd.f32 0.0, %v4951
        %4953 = vmatprep.mubr.f32.mxu0 0.0
        %4954 = vmatmul.mubr.f32.gmra.mrb[0].mxu0 %v4725
        %v4955 = vpop.f32.mrb[0].mxu0
        %v4956 = vadd.f32 0.0, %v4955
        %v4957 = vpop.f32.mrb[0].mxu0
        %v4958 = vadd.f32 0.0, %v4957
        %4959 = vmatprep.mubr.f32.mxu0 0.0
        %4960 = vmatmul.mubr.f32.gmra.mrb[0].mxu0 %v4727
        %v4961 = vpop.f32.mrb[0].mxu0
        %v4962 = vadd.f32 0.0, %v4961
        %v4963 = vpop.f32.mrb[0].mxu0
        %v4964 = vadd.f32 0.0, %v4963
        %4965 = vmatprep.mubr.f32.mxu0 0.0
        %4966 = vmatmul.mubr.f32.gmra.mrb[0].mxu0 %v4729
        %v4967 = vpop.f32.mrb[0].mxu0
        %v4968 = vadd.f32 0.0, %v4967
        %v4969 = vpop.f32.mrb[0].mxu0
        %v4970 = vadd.f32 0.0, %v4969
        %4971 = vmatprep.mubr.f32.mxu0 0.0
        %4972 = vmatmul.mubr.f32.gmra.mrb[0].mxu0 %v4731
        %v4973 = vpop.f32.mrb[0].mxu0
        %v4974 = vadd.f32 0.0, %v4973
        %v4975 = vpop.f32.mrb[0].mxu0
        %v4976 = vadd.f32 0.0, %v4975
        %4977 = vmatprep.mubr.f32.mxu0 0.0
        %4978 = vmatmul.mubr.f32.gmra.mrb[0].mxu0 %v4733
        %v4979 = vpop.f32.mrb[0].mxu0
        %v4980 = vadd.f32 0.0, %v4979
        %v4981 = vpop.f32.mrb[0].mxu0
        %v4982 = vadd.f32 0.0, %v4981
        %4983 = vmatprep.mubr.f32.mxu0 0.0
        %4984 = vmatmul.mubr.f32.gmra.mrb[0].mxu0 %v4735
        %v4985 = vpop.f32.mrb[0].mxu0
        %v4986 = vadd.f32 0.0, %v4985
        %v4987 = vpop.f32.mrb[0].mxu0
        %v4988 = vadd.f32 0.0, %v4987
        %4989 = vmatprep.mubr.f32.mxu0 0.0
        %4990 = vmatmul.mubr.f32.gmra.mrb[0].mxu0 %v4737
        %v4991 = vpop.f32.mrb[0].mxu0
        %v4992 = vadd.f32 0.0, %v4991
        %v4993 = vpop.f32.mrb[0].mxu0
        %v4994 = vadd.f32 0.0, %v4993
        %4995 = vdwg.mxu0
        %v4996 = vadd.f32 %v4409, %v4812
        %v4997 = vadd.f32 %v4411, %v4814
        %v4998 = vadd.f32 %v4415, %v4818
        %v4999 = vadd.f32 %v4417, %v4820
        %v5000 = vadd.f32 %v4421, %v4824
        %v5001 = vadd.f32 %v4423, %v4826
        %v5002 = vadd.f32 %v4427, %v4830
        %v5003 = vadd.f32 %v4429, %v4832
        %v5004 = vadd.f32 %v4433, %v4836
        %v5005 = vadd.f32 %v4435, %v4838
        %v5006 = vadd.f32 %v4439, %v4842
        %v5007 = vadd.f32 %v4441, %v4844
        %v5008 = vadd.f32 %v4445, %v4848
        %v5009 = vadd.f32 %v4447, %v4850
        %v5010 = vadd.f32 %v4451, %v4854
        %v5011 = vadd.f32 %v4453, %v4856
        %v5012 = vadd.f32 %v4457, %v4860
        %v5013 = vadd.f32 %v4459, %v4862
        %v5014 = vadd.f32 %v4463, %v4866
        %v5015 = vadd.f32 %v4465, %v4868
        %v5016 = vadd.f32 %v4469, %v4872
        %v5017 = vadd.f32 %v4471, %v4874
        %v5018 = vadd.f32 %v4475, %v4878
        %v5019 = vadd.f32 %v4477, %v4880
        %v5020 = vadd.f32 %v4481, %v4884
        %v5021 = vadd.f32 %v4483, %v4886
        %v5022 = vadd.f32 %v4487, %v4890
        %v5023 = vadd.f32 %v4489, %v4892
        %v5024 = vadd.f32 %v4493, %v4896
        %v5025 = vadd.f32 %v4495, %v4898
        %v5026 = vadd.f32 %v4499, %v4902
        %v5027 = vadd.f32 %v4501, %v4904
        %v5028 = vadd.f32 %v4505, %v4908
        %v5029 = vadd.f32 %v4507, %v4910
        %v5030 = vadd.f32 %v4511, %v4914
        %v5031 = vadd.f32 %v4513, %v4916
        %v5032 = vadd.f32 %v4517, %v4920
        %v5033 = vadd.f32 %v4519, %v4922
        %v5034 = vadd.f32 %v4523, %v4926
        %v5035 = vadd.f32 %v4525, %v4928
        %v5036 = vadd.f32 %v4529, %v4932
        %v5037 = vadd.f32 %v4531, %v4934
        %v5038 = vadd.f32 %v4535, %v4938
        %v5039 = vadd.f32 %v4537, %v4940
        %v5040 = vadd.f32 %v4541, %v4944
        %v5041 = vadd.f32 %v4543, %v4946
        %v5042 = vadd.f32 %v4547, %v4950
        %v5043 = vadd.f32 %v4549, %v4952
        %v5044 = vadd.f32 %v4553, %v4956
        %v5045 = vadd.f32 %v4555, %v4958
        %v5046 = vadd.f32 %v4559, %v4962
        %v5047 = vadd.f32 %v4561, %v4964
        %v5048 = vadd.f32 %v4565, %v4968
        %v5049 = vadd.f32 %v4567, %v4970
        %v5050 = vadd.f32 %v4571, %v4974
        %v5051 = vadd.f32 %v4573, %v4976
        %v5052 = vadd.f32 %v4577, %v4980
        %v5053 = vadd.f32 %v4579, %v4982
        %v5054 = vadd.f32 %v4583, %v4986
        %v5055 = vadd.f32 %v4585, %v4988
        %v5056 = vadd.f32 %v4589, %v4992
        %v5057 = vadd.f32 %v4591, %v4994
        %s5058 = scalar_lea.vmem %s4, 528
        %v5059 = vld [vmem:[%s5058] sm:$0xff]
        %v5060 = vld [vmem:[%s5058 + $0x8] sm:$0xff]
        %v5061 = vld [vmem:[%s5058 + $0x10] sm:$0xff]
        %v5062 = vld [vmem:[%s5058 + $0x18] sm:$0xff]
        %v5063 = vld [vmem:[%s5058 + $0x20] sm:$0xff]
        %v5064 = vld [vmem:[%s5058 + $0x28] sm:$0xff]
        %v5065 = vld [vmem:[%s5058 + $0x30] sm:$0xff]
        %v5066 = vld [vmem:[%s5058 + $0x38] sm:$0xff]
        %v5067 = vld [vmem:[%s5058 + $0x40] sm:$0xff]
        %v5068 = vld [vmem:[%s5058 + $0x48] sm:$0xff]
        %v5069 = vld [vmem:[%s5058 + $0x50] sm:$0xff]
        %v5070 = vld [vmem:[%s5058 + $0x58] sm:$0xff]
        %v5071 = vld [vmem:[%s5058 + $0x60] sm:$0xff]
        %v5072 = vld [vmem:[%s5058 + $0x68] sm:$0xff]
        %v5073 = vld [vmem:[%s5058 + $0x70] sm:$0xff]
        %v5074 = vld [vmem:[%s5058 + $0x78] sm:$0xff]
        %v5075 = vld [vmem:[%s5058 + $0x80] sm:$0xff]
        %v5076 = vld [vmem:[%s5058 + $0x88] sm:$0xff]
        %v5077 = vld [vmem:[%s5058 + $0x90] sm:$0xff]
        %v5078 = vld [vmem:[%s5058 + $0x98] sm:$0xff]
        %v5079 = vld [vmem:[%s5058 + $0xa0] sm:$0xf]
        %v5080 = vld [vmem:[%s5058 + $0xa8] sm:$0xf]
        %vm5082 = vcmask 1041408
        %v5083 = vrot.slane %v3659, 6
        %v5084 = vrot.slane %v3664, 6
        %v5085 = vsel %vm5082, %v5083, %v5084
        %v5086 = vrot.slane %v3669, 6
        %v5087 = vsel %vm5082, %v5084, %v5086
        %v5088 = vrot.slane %v3674, 6
        %v5089 = vsel %vm5082, %v5086, %v5088
        %v5090 = vrot.slane %v3679, 6
        %v5091 = vsel %vm5082, %v5088, %v5090
        %v5092 = vrot.slane %v3684, 6
        %v5093 = vsel %vm5082, %v5090, %v5092
        %v5094 = vrot.slane %v3689, 6
        %v5095 = vsel %vm5082, %v5092, %v5094
        %v5096 = vrot.slane %v3694, 6
        %v5097 = vsel %vm5082, %v5094, %v5096
        %v5098 = vrot.slane %v3699, 6
        %v5099 = vsel %vm5082, %v5096, %v5098
        %v5100 = vrot.slane %v3704, 6
        %v5101 = vsel %vm5082, %v5098, %v5100
        %v5102 = vrot.slane %v3709, 6
        %v5103 = vsel %vm5082, %v5100, %v5102
        %v5104 = vrot.slane %v3714, 6
        %v5105 = vsel %vm5082, %v5102, %v5104
        %v5106 = vrot.slane %v3719, 6
        %v5107 = vsel %vm5082, %v5104, %v5106
        %v5108 = vrot.slane %v3724, 6
        %v5109 = vsel %vm5082, %v5106, %v5108
        %v5110 = vrot.slane %v3729, 6
        %v5111 = vsel %vm5082, %v5108, %v5110
        %v5112 = vrot.slane %v3734, 6
        %v5113 = vsel %vm5082, %v5110, %v5112
        %v5114 = vrot.slane %v3739, 6
        %v5115 = vsel %vm5082, %v5112, %v5114
        %v5116 = vrot.slane %v3744, 6
        %v5117 = vsel %vm5082, %v5114, %v5116
        %v5118 = vrot.slane %v3749, 6
        %v5119 = vsel %vm5082, %v5116, %v5118
        %v5120 = vrot.slane %v3754, 6
        %v5121 = vsel %vm5082, %v5118, %v5120
        %v5122 = vrot.slane %v3759, 6
        %v5123 = vsel %vm5082, %v5120, %v5122
        %v5124 = vrot.slane %v3764, 6
        %v5125 = vsel %vm5082, %v5122, %v5124
        %v5126 = vrot.slane %v3769, 6
        %v5127 = vsel %vm5082, %v5124, %v5126
        %v5128 = vrot.slane %v3774, 6
        %v5129 = vsel %vm5082, %v5126, %v5128
        %v5130 = vrot.slane %v3779, 6
        %v5131 = vsel %vm5082, %v5128, %v5130
        %v5132 = vrot.slane %v3784, 6
        %v5133 = vsel %vm5082, %v5130, %v5132
        %v5134 = vrot.slane %v3789, 6
        %v5135 = vsel %vm5082, %v5132, %v5134
        %v5136 = vrot.slane %v3794, 6
        %v5137 = vsel %vm5082, %v5134, %v5136
        %v5138 = vrot.slane %v3799, 6
        %v5139 = vsel %vm5082, %v5136, %v5138
        %v5140 = vrot.slane %v3804, 6
        %v5141 = vsel %vm5082, %v5138, %v5140
        %v5142 = vrot.slane %v3809, 6
        %v5143 = vsel %vm5082, %v5140, %v5142
        %v5144 = vrot.slane %v3814, 6
        %v5145 = vsel %vm5082, %v5142, %v5144
        %v5146 = vsel %vm3954, %v5085, 0
        %v5148 = vsel %vm3954, %v5087, 0
        %v5150 = vsel %vm3954, %v5089, 0
        %v5152 = vsel %vm3954, %v5091, 0
        %v5154 = vsel %vm3954, %v5093, 0
        %v5156 = vsel %vm3954, %v5095, 0
        %v5158 = vsel %vm3954, %v5097, 0
        %v5160 = vsel %vm3954, %v5099, 0
        %v5162 = vsel %vm3954, %v5101, 0
        %v5164 = vsel %vm3954, %v5103, 0
        %v5166 = vsel %vm3954, %v5105, 0
        %v5168 = vsel %vm3954, %v5107, 0
        %v5170 = vsel %vm3954, %v5109, 0
        %v5172 = vsel %vm3954, %v5111, 0
        %v5174 = vsel %vm3954, %v5113, 0
        %v5176 = vsel %vm3954, %v5115, 0
        %v5178 = vsel %vm3954, %v5117, 0
        %v5180 = vsel %vm3954, %v5119, 0
        %v5182 = vsel %vm3954, %v5121, 0
        %v5184 = vsel %vm3954, %v5123, 0
        %v5186 = vsel %vm3954, %v5125, 0
        %v5188 = vsel %vm3954, %v5127, 0
        %v5190 = vsel %vm3954, %v5129, 0
        %v5192 = vsel %vm3954, %v5131, 0
        %v5194 = vsel %vm3954, %v5133, 0
        %v5196 = vsel %vm3954, %v5135, 0
        %v5198 = vsel %vm3954, %v5137, 0
        %v5200 = vsel %vm3954, %v5139, 0
        %v5202 = vsel %vm3954, %v5141, 0
        %v5204 = vsel %vm3954, %v5143, 0
        %v5206 = vsel %vm3954, %v5145, 0
        %v5209 = vsel %vm2211, %v5079, 0
        %v5212 = vsel %vm2211, %v5080, 0
        %5214 = vmatprep.subr.mxu0 %v5060
        %5215 = vmatpush1.msra.mxu0 %v5059
        %5216 = vmatprep.subr.mxu0 %v5062
        %5217 = vmatpush1.msra.mxu0 %v5061
        %5218 = vmatprep.subr.mxu0 %v5064
        %5219 = vmatpush1.msra.mxu0 %v5063
        %5220 = vmatprep.subr.mxu0 %v5066
        %5221 = vmatpush1.msra.mxu0 %v5065
        %5222 = vmatprep.subr.mxu0 %v5068
        %5223 = vmatpush1.msra.mxu0 %v5067
        %5224 = vmatprep.subr.mxu0 %v5070
        %5225 = vmatpush1.msra.mxu0 %v5069
        %5226 = vmatprep.subr.mxu0 %v5072
        %5227 = vmatpush1.msra.mxu0 %v5071
        %5228 = vmatprep.subr.mxu0 %v5074
        %5229 = vmatpush1.msra.mxu0 %v5073
        %5230 = vmatprep.subr.mxu0 %v5076
        %5231 = vmatpush1.msra.mxu0 %v5075
        %5232 = vmatprep.subr.mxu0 %v5078
        %5233 = vmatpush1.msra.mxu0 %v5077
        %5234 = vmatprep.subr.mxu0 %v5212
        %5235 = vmatpush1.msra.mxu0 %v5209
        %5236 = vmatprep.subr.mxu0 0.0
        %5237 = vmatpush1.msra.mxu0 0.0
        %5238 = vmatprep.subr.mxu0 0.0
        %5239 = vmatpush1.msra.mxu0 0.0
        %5240 = vmatprep.subr.mxu0 0.0
        %5241 = vmatpush1.msra.mxu0 0.0
        %5242 = vmatprep.subr.mxu0 0.0
        %5243 = vmatpush1.msra.mxu0 0.0
        %5244 = vmatprep.subr.mxu0 0.0
        %5245 = vmatpush1.msra.mxu0 0.0
        %5246 = vmatprep.subr.mxu0 0.0
        %5247 = vmatpush1.msra.mxu0 0.0
        %5248 = vmatprep.subr.mxu0 0.0
        %5249 = vmatpush1.msra.mxu0 0.0
        %5250 = vmatprep.subr.mxu0 0.0
        %5251 = vmatpush1.msra.mxu0 0.0
        %5252 = vmatprep.subr.mxu0 0.0
        %5253 = vmatpush1.msra.mxu0 0.0
        %5254 = vmatprep.subr.mxu0 0.0
        %5255 = vmatpush1.msra.mxu0 0.0
        %5256 = vmatprep.subr.mxu0 0.0
        %5257 = vmatpush1.msra.mxu0 0.0
        %5258 = vmatprep.subr.mxu0 0.0
        %5259 = vmatpush1.msra.mxu0 0.0
        %5260 = vmatprep.subr.mxu0 0.0
        %5261 = vmatpush1.msra.mxu0 0.0
        %5262 = vmatprep.subr.mxu0 0.0
        %5263 = vmatpush1.msra.mxu0 0.0
        %5264 = vmatprep.subr.mxu0 0.0
        %5265 = vmatpush1.msra.mxu0 0.0
        %5266 = vmatprep.subr.mxu0 0.0
        %5267 = vmatpush1.msra.mxu0 0.0
        %5268 = vmatprep.subr.mxu0 0.0
        %5269 = vmatpush1.msra.mxu0 0.0
        %5270 = vmatprep.subr.mxu0 0.0
        %5271 = vmatpush1.msra.mxu0 0.0
        %5272 = vmatprep.subr.mxu0 0.0
        %5273 = vmatpush1.msra.mxu0 0.0
        %5274 = vmatprep.subr.mxu0 0.0
        %5275 = vmatpush1.msra.mxu0 0.0
        %5276 = vmatprep.subr.mxu0 0.0
        %5277 = vmatpush1.msra.mxu0 0.0
        %5278 = vmatprep.mubr.f32.mxu0 0.0
        %5279 = vmatmul.mubr.f32.gmra.mrb[0].mxu0 %v5146
        %v5280 = vpop.f32.mrb[0].mxu0
        %v5281 = vadd.f32 0.0, %v5280
        %v5282 = vpop.f32.mrb[0].mxu0
        %v5283 = vadd.f32 0.0, %v5282
        %5284 = vmatprep.mubr.f32.mxu0 0.0
        %5285 = vmatmul.mubr.f32.gmra.mrb[0].mxu0 %v5148
        %v5286 = vpop.f32.mrb[0].mxu0
        %v5287 = vadd.f32 0.0, %v5286
        %v5288 = vpop.f32.mrb[0].mxu0
        %v5289 = vadd.f32 0.0, %v5288
        %5290 = vmatprep.mubr.f32.mxu0 0.0
        %5291 = vmatmul.mubr.f32.gmra.mrb[0].mxu0 %v5150
        %v5292 = vpop.f32.mrb[0].mxu0
        %v5293 = vadd.f32 0.0, %v5292
        %v5294 = vpop.f32.mrb[0].mxu0
        %v5295 = vadd.f32 0.0, %v5294
        %5296 = vmatprep.mubr.f32.mxu0 0.0
        %5297 = vmatmul.mubr.f32.gmra.mrb[0].mxu0 %v5152
        %v5298 = vpop.f32.mrb[0].mxu0
        %v5299 = vadd.f32 0.0, %v5298
        %v5300 = vpop.f32.mrb[0].mxu0
        %v5301 = vadd.f32 0.0, %v5300
        %5302 = vmatprep.mubr.f32.mxu0 0.0
        %5303 = vmatmul.mubr.f32.gmra.mrb[0].mxu0 %v5154
        %v5304 = vpop.f32.mrb[0].mxu0
        %v5305 = vadd.f32 0.0, %v5304
        %v5306 = vpop.f32.mrb[0].mxu0
        %v5307 = vadd.f32 0.0, %v5306
        %5308 = vmatprep.mubr.f32.mxu0 0.0
        %5309 = vmatmul.mubr.f32.gmra.mrb[0].mxu0 %v5156
        %v5310 = vpop.f32.mrb[0].mxu0
        %v5311 = vadd.f32 0.0, %v5310
        %v5312 = vpop.f32.mrb[0].mxu0
        %v5313 = vadd.f32 0.0, %v5312
        %5314 = vmatprep.mubr.f32.mxu0 0.0
        %5315 = vmatmul.mubr.f32.gmra.mrb[0].mxu0 %v5158
        %v5316 = vpop.f32.mrb[0].mxu0
        %v5317 = vadd.f32 0.0, %v5316
        %v5318 = vpop.f32.mrb[0].mxu0
        %v5319 = vadd.f32 0.0, %v5318
        %5320 = vmatprep.mubr.f32.mxu0 0.0
        %5321 = vmatmul.mubr.f32.gmra.mrb[0].mxu0 %v5160
        %v5322 = vpop.f32.mrb[0].mxu0
        %v5323 = vadd.f32 0.0, %v5322
        %v5324 = vpop.f32.mrb[0].mxu0
        %v5325 = vadd.f32 0.0, %v5324
        %5326 = vmatprep.mubr.f32.mxu0 0.0
        %5327 = vmatmul.mubr.f32.gmra.mrb[0].mxu0 %v5162
        %v5328 = vpop.f32.mrb[0].mxu0
        %v5329 = vadd.f32 0.0, %v5328
        %v5330 = vpop.f32.mrb[0].mxu0
        %v5331 = vadd.f32 0.0, %v5330
        %5332 = vmatprep.mubr.f32.mxu0 0.0
        %5333 = vmatmul.mubr.f32.gmra.mrb[0].mxu0 %v5164
        %v5334 = vpop.f32.mrb[0].mxu0
        %v5335 = vadd.f32 0.0, %v5334
        %v5336 = vpop.f32.mrb[0].mxu0
        %v5337 = vadd.f32 0.0, %v5336
        %5338 = vmatprep.mubr.f32.mxu0 0.0
        %5339 = vmatmul.mubr.f32.gmra.mrb[0].mxu0 %v5166
        %v5340 = vpop.f32.mrb[0].mxu0
        %v5341 = vadd.f32 0.0, %v5340
        %v5342 = vpop.f32.mrb[0].mxu0
        %v5343 = vadd.f32 0.0, %v5342
        %5344 = vmatprep.mubr.f32.mxu0 0.0
        %5345 = vmatmul.mubr.f32.gmra.mrb[0].mxu0 %v5168
        %v5346 = vpop.f32.mrb[0].mxu0
        %v5347 = vadd.f32 0.0, %v5346
        %v5348 = vpop.f32.mrb[0].mxu0
        %v5349 = vadd.f32 0.0, %v5348
        %5350 = vmatprep.mubr.f32.mxu0 0.0
        %5351 = vmatmul.mubr.f32.gmra.mrb[0].mxu0 %v5170
        %v5352 = vpop.f32.mrb[0].mxu0
        %v5353 = vadd.f32 0.0, %v5352
        %v5354 = vpop.f32.mrb[0].mxu0
        %v5355 = vadd.f32 0.0, %v5354
        %5356 = vmatprep.mubr.f32.mxu0 0.0
        %5357 = vmatmul.mubr.f32.gmra.mrb[0].mxu0 %v5172
        %v5358 = vpop.f32.mrb[0].mxu0
        %v5359 = vadd.f32 0.0, %v5358
        %v5360 = vpop.f32.mrb[0].mxu0
        %v5361 = vadd.f32 0.0, %v5360
        %5362 = vmatprep.mubr.f32.mxu0 0.0
        %5363 = vmatmul.mubr.f32.gmra.mrb[0].mxu0 %v5174
        %v5364 = vpop.f32.mrb[0].mxu0
        %v5365 = vadd.f32 0.0, %v5364
        %v5366 = vpop.f32.mrb[0].mxu0
        %v5367 = vadd.f32 0.0, %v5366
        %5368 = vmatprep.mubr.f32.mxu0 0.0
        %5369 = vmatmul.mubr.f32.gmra.mrb[0].mxu0 %v5176
        %v5370 = vpop.f32.mrb[0].mxu0
        %v5371 = vadd.f32 0.0, %v5370
        %v5372 = vpop.f32.mrb[0].mxu0
        %v5373 = vadd.f32 0.0, %v5372
        %5374 = vmatprep.mubr.f32.mxu0 0.0
        %5375 = vmatmul.mubr.f32.gmra.mrb[0].mxu0 %v5178
        %v5376 = vpop.f32.mrb[0].mxu0
        %v5377 = vadd.f32 0.0, %v5376
        %v5378 = vpop.f32.mrb[0].mxu0
        %v5379 = vadd.f32 0.0, %v5378
        %5380 = vmatprep.mubr.f32.mxu0 0.0
        %5381 = vmatmul.mubr.f32.gmra.mrb[0].mxu0 %v5180
        %v5382 = vpop.f32.mrb[0].mxu0
        %v5383 = vadd.f32 0.0, %v5382
        %v5384 = vpop.f32.mrb[0].mxu0
        %v5385 = vadd.f32 0.0, %v5384
        %5386 = vmatprep.mubr.f32.mxu0 0.0
        %5387 = vmatmul.mubr.f32.gmra.mrb[0].mxu0 %v5182
        %v5388 = vpop.f32.mrb[0].mxu0
        %v5389 = vadd.f32 0.0, %v5388
        %v5390 = vpop.f32.mrb[0].mxu0
        %v5391 = vadd.f32 0.0, %v5390
        %5392 = vmatprep.mubr.f32.mxu0 0.0
        %5393 = vmatmul.mubr.f32.gmra.mrb[0].mxu0 %v5184
        %v5394 = vpop.f32.mrb[0].mxu0
        %v5395 = vadd.f32 0.0, %v5394
        %v5396 = vpop.f32.mrb[0].mxu0
        %v5397 = vadd.f32 0.0, %v5396
        %5398 = vmatprep.mubr.f32.mxu0 0.0
        %5399 = vmatmul.mubr.f32.gmra.mrb[0].mxu0 %v5186
        %v5400 = vpop.f32.mrb[0].mxu0
        %v5401 = vadd.f32 0.0, %v5400
        %v5402 = vpop.f32.mrb[0].mxu0
        %v5403 = vadd.f32 0.0, %v5402
        %5404 = vmatprep.mubr.f32.mxu0 0.0
        %5405 = vmatmul.mubr.f32.gmra.mrb[0].mxu0 %v5188
        %v5406 = vpop.f32.mrb[0].mxu0
        %v5407 = vadd.f32 0.0, %v5406
        %v5408 = vpop.f32.mrb[0].mxu0
        %v5409 = vadd.f32 0.0, %v5408
        %5410 = vmatprep.mubr.f32.mxu0 0.0
        %5411 = vmatmul.mubr.f32.gmra.mrb[0].mxu0 %v5190
        %v5412 = vpop.f32.mrb[0].mxu0
        %v5413 = vadd.f32 0.0, %v5412
        %v5414 = vpop.f32.mrb[0].mxu0
        %v5415 = vadd.f32 0.0, %v5414
        %5416 = vmatprep.mubr.f32.mxu0 0.0
        %5417 = vmatmul.mubr.f32.gmra.mrb[0].mxu0 %v5192
        %v5418 = vpop.f32.mrb[0].mxu0
        %v5419 = vadd.f32 0.0, %v5418
        %v5420 = vpop.f32.mrb[0].mxu0
        %v5421 = vadd.f32 0.0, %v5420
        %5422 = vmatprep.mubr.f32.mxu0 0.0
        %5423 = vmatmul.mubr.f32.gmra.mrb[0].mxu0 %v5194
        %v5424 = vpop.f32.mrb[0].mxu0
        %v5425 = vadd.f32 0.0, %v5424
        %v5426 = vpop.f32.mrb[0].mxu0
        %v5427 = vadd.f32 0.0, %v5426
        %5428 = vmatprep.mubr.f32.mxu0 0.0
        %5429 = vmatmul.mubr.f32.gmra.mrb[0].mxu0 %v5196
        %v5430 = vpop.f32.mrb[0].mxu0
        %v5431 = vadd.f32 0.0, %v5430
        %v5432 = vpop.f32.mrb[0].mxu0
        %v5433 = vadd.f32 0.0, %v5432
        %5434 = vmatprep.mubr.f32.mxu0 0.0
        %5435 = vmatmul.mubr.f32.gmra.mrb[0].mxu0 %v5198
        %v5436 = vpop.f32.mrb[0].mxu0
        %v5437 = vadd.f32 0.0, %v5436
        %v5438 = vpop.f32.mrb[0].mxu0
        %v5439 = vadd.f32 0.0, %v5438
        %5440 = vmatprep.mubr.f32.mxu0 0.0
        %5441 = vmatmul.mubr.f32.gmra.mrb[0].mxu0 %v5200
        %v5442 = vpop.f32.mrb[0].mxu0
        %v5443 = vadd.f32 0.0, %v5442
        %v5444 = vpop.f32.mrb[0].mxu0
        %v5445 = vadd.f32 0.0, %v5444
        %5446 = vmatprep.mubr.f32.mxu0 0.0
        %5447 = vmatmul.mubr.f32.gmra.mrb[0].mxu0 %v5202
        %v5448 = vpop.f32.mrb[0].mxu0
        %v5449 = vadd.f32 0.0, %v5448
        %v5450 = vpop.f32.mrb[0].mxu0
        %v5451 = vadd.f32 0.0, %v5450
        %5452 = vmatprep.mubr.f32.mxu0 0.0
        %5453 = vmatmul.mubr.f32.gmra.mrb[0].mxu0 %v5204
        %v5454 = vpop.f32.mrb[0].mxu0
        %v5455 = vadd.f32 0.0, %v5454
        %v5456 = vpop.f32.mrb[0].mxu0
        %v5457 = vadd.f32 0.0, %v5456
        %5458 = vmatprep.mubr.f32.mxu0 0.0
        %5459 = vmatmul.mubr.f32.gmra.mrb[0].mxu0 %v5206
        %v5460 = vpop.f32.mrb[0].mxu0
        %v5461 = vadd.f32 0.0, %v5460
        %v5462 = vpop.f32.mrb[0].mxu0
        %v5463 = vadd.f32 0.0, %v5462
        %5464 = vdwg.mxu0
        %v5465 = vadd.f32 %v4996, %v5281
        %v5466 = vadd.f32 %v4997, %v5283
        %v5467 = vadd.f32 %v4998, %v5287
        %v5468 = vadd.f32 %v4999, %v5289
        %v5469 = vadd.f32 %v5000, %v5293
        %v5470 = vadd.f32 %v5001, %v5295
        %v5471 = vadd.f32 %v5002, %v5299
        %v5472 = vadd.f32 %v5003, %v5301
        %v5473 = vadd.f32 %v5004, %v5305
        %v5474 = vadd.f32 %v5005, %v5307
        %v5475 = vadd.f32 %v5006, %v5311
        %v5476 = vadd.f32 %v5007, %v5313
        %v5477 = vadd.f32 %v5008, %v5317
        %v5478 = vadd.f32 %v5009, %v5319
        %v5479 = vadd.f32 %v5010, %v5323
        %v5480 = vadd.f32 %v5011, %v5325
        %v5481 = vadd.f32 %v5012, %v5329
        %v5482 = vadd.f32 %v5013, %v5331
        %v5483 = vadd.f32 %v5014, %v5335
        %v5484 = vadd.f32 %v5015, %v5337
        %v5485 = vadd.f32 %v5016, %v5341
        %v5486 = vadd.f32 %v5017, %v5343
        %v5487 = vadd.f32 %v5018, %v5347
        %v5488 = vadd.f32 %v5019, %v5349
        %v5489 = vadd.f32 %v5020, %v5353
        %v5490 = vadd.f32 %v5021, %v5355
        %v5491 = vadd.f32 %v5022, %v5359
        %v5492 = vadd.f32 %v5023, %v5361
        %v5493 = vadd.f32 %v5024, %v5365
        %v5494 = vadd.f32 %v5025, %v5367
        %v5495 = vadd.f32 %v5026, %v5371
        %v5496 = vadd.f32 %v5027, %v5373
        %v5497 = vadd.f32 %v5028, %v5377
        %v5498 = vadd.f32 %v5029, %v5379
        %v5499 = vadd.f32 %v5030, %v5383
        %v5500 = vadd.f32 %v5031, %v5385
        %v5501 = vadd.f32 %v5032, %v5389
        %v5502 = vadd.f32 %v5033, %v5391
        %v5503 = vadd.f32 %v5034, %v5395
        %v5504 = vadd.f32 %v5035, %v5397
        %v5505 = vadd.f32 %v5036, %v5401
        %v5506 = vadd.f32 %v5037, %v5403
        %v5507 = vadd.f32 %v5038, %v5407
        %v5508 = vadd.f32 %v5039, %v5409
        %v5509 = vadd.f32 %v5040, %v5413
        %v5510 = vadd.f32 %v5041, %v5415
        %v5511 = vadd.f32 %v5042, %v5419
        %v5512 = vadd.f32 %v5043, %v5421
        %v5513 = vadd.f32 %v5044, %v5425
        %v5514 = vadd.f32 %v5045, %v5427
        %v5515 = vadd.f32 %v5046, %v5431
        %v5516 = vadd.f32 %v5047, %v5433
        %v5517 = vadd.f32 %v5048, %v5437
        %v5518 = vadd.f32 %v5049, %v5439
        %v5519 = vadd.f32 %v5050, %v5443
        %v5520 = vadd.f32 %v5051, %v5445
        %v5521 = vadd.f32 %v5052, %v5449
        %v5522 = vadd.f32 %v5053, %v5451
        %v5523 = vadd.f32 %v5054, %v5455
        %v5524 = vadd.f32 %v5055, %v5457
        %v5525 = vadd.f32 %v5056, %v5461
        %v5526 = vadd.f32 %v5057, %v5463
        %s5527 = scalar_lea.vmem %s4, 704
        %v5528 = vld [vmem:[%s5527] sm:$0xff]
        %v5529 = vld [vmem:[%s5527 + $0x8] sm:$0xff]
        %v5530 = vld [vmem:[%s5527 + $0x10] sm:$0xff]
        %v5531 = vld [vmem:[%s5527 + $0x18] sm:$0xff]
        %v5532 = vld [vmem:[%s5527 + $0x20] sm:$0xff]
        %v5533 = vld [vmem:[%s5527 + $0x28] sm:$0xff]
        %v5534 = vld [vmem:[%s5527 + $0x30] sm:$0xff]
        %v5535 = vld [vmem:[%s5527 + $0x38] sm:$0xff]
        %v5536 = vld [vmem:[%s5527 + $0x40] sm:$0xff]
        %v5537 = vld [vmem:[%s5527 + $0x48] sm:$0xff]
        %v5538 = vld [vmem:[%s5527 + $0x50] sm:$0xff]
        %v5539 = vld [vmem:[%s5527 + $0x58] sm:$0xff]
        %v5540 = vld [vmem:[%s5527 + $0x60] sm:$0xff]
        %v5541 = vld [vmem:[%s5527 + $0x68] sm:$0xff]
        %v5542 = vld [vmem:[%s5527 + $0x70] sm:$0xff]
        %v5543 = vld [vmem:[%s5527 + $0x78] sm:$0xff]
        %v5544 = vld [vmem:[%s5527 + $0x80] sm:$0xff]
        %v5545 = vld [vmem:[%s5527 + $0x88] sm:$0xff]
        %v5546 = vld [vmem:[%s5527 + $0x90] sm:$0xff]
        %v5547 = vld [vmem:[%s5527 + $0x98] sm:$0xff]
        %v5548 = vld [vmem:[%s5527 + $0xa0] sm:$0xf]
        %v5549 = vld [vmem:[%s5527 + $0xa8] sm:$0xf]
        %v5550 = vsel %vm3954, %v3814, 0
        %v5553 = vsel %vm2211, %v5548, 0
        %v5556 = vsel %vm2211, %v5549, 0
        %5558 = vmatprep.subr.mxu0 %v5529
        %5559 = vmatpush1.msra.mxu0 %v5528
        %5560 = vmatprep.subr.mxu0 %v5531
        %5561 = vmatpush1.msra.mxu0 %v5530
        %5562 = vmatprep.subr.mxu0 %v5533
        %5563 = vmatpush1.msra.mxu0 %v5532
        %5564 = vmatprep.subr.mxu0 %v5535
        %5565 = vmatpush1.msra.mxu0 %v5534
        %5566 = vmatprep.subr.mxu0 %v5537
        %5567 = vmatpush1.msra.mxu0 %v5536
        %5568 = vmatprep.subr.mxu0 %v5539
        %5569 = vmatpush1.msra.mxu0 %v5538
        %5570 = vmatprep.subr.mxu0 %v5541
        %5571 = vmatpush1.msra.mxu0 %v5540
        %5572 = vmatprep.subr.mxu0 %v5543
        %5573 = vmatpush1.msra.mxu0 %v5542
        %5574 = vmatprep.subr.mxu0 %v5545
        %5575 = vmatpush1.msra.mxu0 %v5544
        %5576 = vmatprep.subr.mxu0 %v5547
        %5577 = vmatpush1.msra.mxu0 %v5546
        %5578 = vmatprep.subr.mxu0 %v5556
        %5579 = vmatpush1.msra.mxu0 %v5553
        %5580 = vmatprep.subr.mxu0 0.0
        %5581 = vmatpush1.msra.mxu0 0.0
        %5582 = vmatprep.subr.mxu0 0.0
        %5583 = vmatpush1.msra.mxu0 0.0
        %5584 = vmatprep.subr.mxu0 0.0
        %5585 = vmatpush1.msra.mxu0 0.0
        %5586 = vmatprep.subr.mxu0 0.0
        %5587 = vmatpush1.msra.mxu0 0.0
        %5588 = vmatprep.subr.mxu0 0.0
        %5589 = vmatpush1.msra.mxu0 0.0
        %5590 = vmatprep.subr.mxu0 0.0
        %5591 = vmatpush1.msra.mxu0 0.0
        %5592 = vmatprep.subr.mxu0 0.0
        %5593 = vmatpush1.msra.mxu0 0.0
        %5594 = vmatprep.subr.mxu0 0.0
        %5595 = vmatpush1.msra.mxu0 0.0
        %5596 = vmatprep.subr.mxu0 0.0
        %5597 = vmatpush1.msra.mxu0 0.0
        %5598 = vmatprep.subr.mxu0 0.0
        %5599 = vmatpush1.msra.mxu0 0.0
        %5600 = vmatprep.subr.mxu0 0.0
        %5601 = vmatpush1.msra.mxu0 0.0
        %5602 = vmatprep.subr.mxu0 0.0
        %5603 = vmatpush1.msra.mxu0 0.0
        %5604 = vmatprep.subr.mxu0 0.0
        %5605 = vmatpush1.msra.mxu0 0.0
        %5606 = vmatprep.subr.mxu0 0.0
        %5607 = vmatpush1.msra.mxu0 0.0
        %5608 = vmatprep.subr.mxu0 0.0
        %5609 = vmatpush1.msra.mxu0 0.0
        %5610 = vmatprep.subr.mxu0 0.0
        %5611 = vmatpush1.msra.mxu0 0.0
        %5612 = vmatprep.subr.mxu0 0.0
        %5613 = vmatpush1.msra.mxu0 0.0
        %5614 = vmatprep.subr.mxu0 0.0
        %5615 = vmatpush1.msra.mxu0 0.0
        %5616 = vmatprep.subr.mxu0 0.0
        %5617 = vmatpush1.msra.mxu0 0.0
        %5618 = vmatprep.subr.mxu0 0.0
        %5619 = vmatpush1.msra.mxu0 0.0
        %5620 = vmatprep.subr.mxu0 0.0
        %5621 = vmatpush1.msra.mxu0 0.0
        %5622 = vmatprep.mubr.f32.mxu0 0.0
        %5623 = vmatmul.mubr.f32.gmra.mrb[0].mxu0 %v4276
        %v5624 = vpop.f32.mrb[0].mxu0
        %v5625 = vadd.f32 0.0, %v5624
        %v5626 = vpop.f32.mrb[0].mxu0
        %v5627 = vadd.f32 0.0, %v5626
        %5628 = vmatprep.mubr.f32.mxu0 0.0
        %5629 = vmatmul.mubr.f32.gmra.mrb[0].mxu0 %v4278
        %v5630 = vpop.f32.mrb[0].mxu0
        %v5631 = vadd.f32 0.0, %v5630
        %v5632 = vpop.f32.mrb[0].mxu0
        %v5633 = vadd.f32 0.0, %v5632
        %5634 = vmatprep.mubr.f32.mxu0 0.0
        %5635 = vmatmul.mubr.f32.gmra.mrb[0].mxu0 %v4280
        %v5636 = vpop.f32.mrb[0].mxu0
        %v5637 = vadd.f32 0.0, %v5636
        %v5638 = vpop.f32.mrb[0].mxu0
        %v5639 = vadd.f32 0.0, %v5638
        %5640 = vmatprep.mubr.f32.mxu0 0.0
        %5641 = vmatmul.mubr.f32.gmra.mrb[0].mxu0 %v4282
        %v5642 = vpop.f32.mrb[0].mxu0
        %v5643 = vadd.f32 0.0, %v5642
        %v5644 = vpop.f32.mrb[0].mxu0
        %v5645 = vadd.f32 0.0, %v5644
        %5646 = vmatprep.mubr.f32.mxu0 0.0
        %5647 = vmatmul.mubr.f32.gmra.mrb[0].mxu0 %v4284
        %v5648 = vpop.f32.mrb[0].mxu0
        %v5649 = vadd.f32 0.0, %v5648
        %v5650 = vpop.f32.mrb[0].mxu0
        %v5651 = vadd.f32 0.0, %v5650
        %5652 = vmatprep.mubr.f32.mxu0 0.0
        %5653 = vmatmul.mubr.f32.gmra.mrb[0].mxu0 %v4286
        %v5654 = vpop.f32.mrb[0].mxu0
        %v5655 = vadd.f32 0.0, %v5654
        %v5656 = vpop.f32.mrb[0].mxu0
        %v5657 = vadd.f32 0.0, %v5656
        %5658 = vmatprep.mubr.f32.mxu0 0.0
        %5659 = vmatmul.mubr.f32.gmra.mrb[0].mxu0 %v4288
        %v5660 = vpop.f32.mrb[0].mxu0
        %v5661 = vadd.f32 0.0, %v5660
        %v5662 = vpop.f32.mrb[0].mxu0
        %v5663 = vadd.f32 0.0, %v5662
        %5664 = vmatprep.mubr.f32.mxu0 0.0
        %5665 = vmatmul.mubr.f32.gmra.mrb[0].mxu0 %v4290
        %v5666 = vpop.f32.mrb[0].mxu0
        %v5667 = vadd.f32 0.0, %v5666
        %v5668 = vpop.f32.mrb[0].mxu0
        %v5669 = vadd.f32 0.0, %v5668
        %5670 = vmatprep.mubr.f32.mxu0 0.0
        %5671 = vmatmul.mubr.f32.gmra.mrb[0].mxu0 %v4292
        %v5672 = vpop.f32.mrb[0].mxu0
        %v5673 = vadd.f32 0.0, %v5672
        %v5674 = vpop.f32.mrb[0].mxu0
        %v5675 = vadd.f32 0.0, %v5674
        %5676 = vmatprep.mubr.f32.mxu0 0.0
        %5677 = vmatmul.mubr.f32.gmra.mrb[0].mxu0 %v4294
        %v5678 = vpop.f32.mrb[0].mxu0
        %v5679 = vadd.f32 0.0, %v5678
        %v5680 = vpop.f32.mrb[0].mxu0
        %v5681 = vadd.f32 0.0, %v5680
        %5682 = vmatprep.mubr.f32.mxu0 0.0
        %5683 = vmatmul.mubr.f32.gmra.mrb[0].mxu0 %v4296
        %v5684 = vpop.f32.mrb[0].mxu0
        %v5685 = vadd.f32 0.0, %v5684
        %v5686 = vpop.f32.mrb[0].mxu0
        %v5687 = vadd.f32 0.0, %v5686
        %5688 = vmatprep.mubr.f32.mxu0 0.0
        %5689 = vmatmul.mubr.f32.gmra.mrb[0].mxu0 %v4298
        %v5690 = vpop.f32.mrb[0].mxu0
        %v5691 = vadd.f32 0.0, %v5690
        %v5692 = vpop.f32.mrb[0].mxu0
        %v5693 = vadd.f32 0.0, %v5692
        %5694 = vmatprep.mubr.f32.mxu0 0.0
        %5695 = vmatmul.mubr.f32.gmra.mrb[0].mxu0 %v4300
        %v5696 = vpop.f32.mrb[0].mxu0
        %v5697 = vadd.f32 0.0, %v5696
        %v5698 = vpop.f32.mrb[0].mxu0
        %v5699 = vadd.f32 0.0, %v5698
        %5700 = vmatprep.mubr.f32.mxu0 0.0
        %5701 = vmatmul.mubr.f32.gmra.mrb[0].mxu0 %v4302
        %v5702 = vpop.f32.mrb[0].mxu0
        %v5703 = vadd.f32 0.0, %v5702
        %v5704 = vpop.f32.mrb[0].mxu0
        %v5705 = vadd.f32 0.0, %v5704
        %5706 = vmatprep.mubr.f32.mxu0 0.0
        %5707 = vmatmul.mubr.f32.gmra.mrb[0].mxu0 %v4304
        %v5708 = vpop.f32.mrb[0].mxu0
        %v5709 = vadd.f32 0.0, %v5708
        %v5710 = vpop.f32.mrb[0].mxu0
        %v5711 = vadd.f32 0.0, %v5710
        %5712 = vmatprep.mubr.f32.mxu0 0.0
        %5713 = vmatmul.mubr.f32.gmra.mrb[0].mxu0 %v4306
        %v5714 = vpop.f32.mrb[0].mxu0
        %v5715 = vadd.f32 0.0, %v5714
        %v5716 = vpop.f32.mrb[0].mxu0
        %v5717 = vadd.f32 0.0, %v5716
        %5718 = vmatprep.mubr.f32.mxu0 0.0
        %5719 = vmatmul.mubr.f32.gmra.mrb[0].mxu0 %v4308
        %v5720 = vpop.f32.mrb[0].mxu0
        %v5721 = vadd.f32 0.0, %v5720
        %v5722 = vpop.f32.mrb[0].mxu0
        %v5723 = vadd.f32 0.0, %v5722
        %5724 = vmatprep.mubr.f32.mxu0 0.0
        %5725 = vmatmul.mubr.f32.gmra.mrb[0].mxu0 %v4310
        %v5726 = vpop.f32.mrb[0].mxu0
        %v5727 = vadd.f32 0.0, %v5726
        %v5728 = vpop.f32.mrb[0].mxu0
        %v5729 = vadd.f32 0.0, %v5728
        %5730 = vmatprep.mubr.f32.mxu0 0.0
        %5731 = vmatmul.mubr.f32.gmra.mrb[0].mxu0 %v4312
        %v5732 = vpop.f32.mrb[0].mxu0
        %v5733 = vadd.f32 0.0, %v5732
        %v5734 = vpop.f32.mrb[0].mxu0
        %v5735 = vadd.f32 0.0, %v5734
        %5736 = vmatprep.mubr.f32.mxu0 0.0
        %5737 = vmatmul.mubr.f32.gmra.mrb[0].mxu0 %v4314
        %v5738 = vpop.f32.mrb[0].mxu0
        %v5739 = vadd.f32 0.0, %v5738
        %v5740 = vpop.f32.mrb[0].mxu0
        %v5741 = vadd.f32 0.0, %v5740
        %5742 = vmatprep.mubr.f32.mxu0 0.0
        %5743 = vmatmul.mubr.f32.gmra.mrb[0].mxu0 %v4316
        %v5744 = vpop.f32.mrb[0].mxu0
        %v5745 = vadd.f32 0.0, %v5744
        %v5746 = vpop.f32.mrb[0].mxu0
        %v5747 = vadd.f32 0.0, %v5746
        %5748 = vmatprep.mubr.f32.mxu0 0.0
        %5749 = vmatmul.mubr.f32.gmra.mrb[0].mxu0 %v4318
        %v5750 = vpop.f32.mrb[0].mxu0
        %v5751 = vadd.f32 0.0, %v5750
        %v5752 = vpop.f32.mrb[0].mxu0
        %v5753 = vadd.f32 0.0, %v5752
        %5754 = vmatprep.mubr.f32.mxu0 0.0
        %5755 = vmatmul.mubr.f32.gmra.mrb[0].mxu0 %v4320
        %v5756 = vpop.f32.mrb[0].mxu0
        %v5757 = vadd.f32 0.0, %v5756
        %v5758 = vpop.f32.mrb[0].mxu0
        %v5759 = vadd.f32 0.0, %v5758
        %5760 = vmatprep.mubr.f32.mxu0 0.0
        %5761 = vmatmul.mubr.f32.gmra.mrb[0].mxu0 %v4322
        %v5762 = vpop.f32.mrb[0].mxu0
        %v5763 = vadd.f32 0.0, %v5762
        %v5764 = vpop.f32.mrb[0].mxu0
        %v5765 = vadd.f32 0.0, %v5764
        %5766 = vmatprep.mubr.f32.mxu0 0.0
        %5767 = vmatmul.mubr.f32.gmra.mrb[0].mxu0 %v4324
        %v5768 = vpop.f32.mrb[0].mxu0
        %v5769 = vadd.f32 0.0, %v5768
        %v5770 = vpop.f32.mrb[0].mxu0
        %v5771 = vadd.f32 0.0, %v5770
        %5772 = vmatprep.mubr.f32.mxu0 0.0
        %5773 = vmatmul.mubr.f32.gmra.mrb[0].mxu0 %v4326
        %v5774 = vpop.f32.mrb[0].mxu0
        %v5775 = vadd.f32 0.0, %v5774
        %v5776 = vpop.f32.mrb[0].mxu0
        %v5777 = vadd.f32 0.0, %v5776
        %5778 = vmatprep.mubr.f32.mxu0 0.0
        %5779 = vmatmul.mubr.f32.gmra.mrb[0].mxu0 %v4328
        %v5780 = vpop.f32.mrb[0].mxu0
        %v5781 = vadd.f32 0.0, %v5780
        %v5782 = vpop.f32.mrb[0].mxu0
        %v5783 = vadd.f32 0.0, %v5782
        %5784 = vmatprep.mubr.f32.mxu0 0.0
        %5785 = vmatmul.mubr.f32.gmra.mrb[0].mxu0 %v4330
        %v5786 = vpop.f32.mrb[0].mxu0
        %v5787 = vadd.f32 0.0, %v5786
        %v5788 = vpop.f32.mrb[0].mxu0
        %v5789 = vadd.f32 0.0, %v5788
        %5790 = vmatprep.mubr.f32.mxu0 0.0
        %5791 = vmatmul.mubr.f32.gmra.mrb[0].mxu0 %v4332
        %v5792 = vpop.f32.mrb[0].mxu0
        %v5793 = vadd.f32 0.0, %v5792
        %v5794 = vpop.f32.mrb[0].mxu0
        %v5795 = vadd.f32 0.0, %v5794
        %5796 = vmatprep.mubr.f32.mxu0 0.0
        %5797 = vmatmul.mubr.f32.gmra.mrb[0].mxu0 %v4334
        %v5798 = vpop.f32.mrb[0].mxu0
        %v5799 = vadd.f32 0.0, %v5798
        %v5800 = vpop.f32.mrb[0].mxu0
        %v5801 = vadd.f32 0.0, %v5800
        %5802 = vmatprep.mubr.f32.mxu0 0.0
        %5803 = vmatmul.mubr.f32.gmra.mrb[0].mxu0 %v5550
        %v5804 = vpop.f32.mrb[0].mxu0
        %v5805 = vadd.f32 0.0, %v5804
        %v5806 = vpop.f32.mrb[0].mxu0
        %v5807 = vadd.f32 0.0, %v5806
        %5808 = vdwg.mxu0
        %v5809 = vadd.f32 %v5465, %v5625
        %v5810 = vadd.f32 %v5466, %v5627
        %v5811 = vadd.f32 %v5467, %v5631
        %v5812 = vadd.f32 %v5468, %v5633
        %v5813 = vadd.f32 %v5469, %v5637
        %v5814 = vadd.f32 %v5470, %v5639
        %v5815 = vadd.f32 %v5471, %v5643
        %v5816 = vadd.f32 %v5472, %v5645
        %v5817 = vadd.f32 %v5473, %v5649
        %v5818 = vadd.f32 %v5474, %v5651
        %v5819 = vadd.f32 %v5475, %v5655
        %v5820 = vadd.f32 %v5476, %v5657
        %v5821 = vadd.f32 %v5477, %v5661
        %v5822 = vadd.f32 %v5478, %v5663
        %v5823 = vadd.f32 %v5479, %v5667
        %v5824 = vadd.f32 %v5480, %v5669
        %v5825 = vadd.f32 %v5481, %v5673
        %v5826 = vadd.f32 %v5482, %v5675
        %v5827 = vadd.f32 %v5483, %v5679
        %v5828 = vadd.f32 %v5484, %v5681
        %v5829 = vadd.f32 %v5485, %v5685
        %v5830 = vadd.f32 %v5486, %v5687
        %v5831 = vadd.f32 %v5487, %v5691
        %v5832 = vadd.f32 %v5488, %v5693
        %v5833 = vadd.f32 %v5489, %v5697
        %v5834 = vadd.f32 %v5490, %v5699
        %v5835 = vadd.f32 %v5491, %v5703
        %v5836 = vadd.f32 %v5492, %v5705
        %v5837 = vadd.f32 %v5493, %v5709
        %v5838 = vadd.f32 %v5494, %v5711
        %v5839 = vadd.f32 %v5495, %v5715
        %v5840 = vadd.f32 %v5496, %v5717
        %v5841 = vadd.f32 %v5497, %v5721
        %v5842 = vadd.f32 %v5498, %v5723
        %v5843 = vadd.f32 %v5499, %v5727
        %v5844 = vadd.f32 %v5500, %v5729
        %v5845 = vadd.f32 %v5501, %v5733
        %v5846 = vadd.f32 %v5502, %v5735
        %v5847 = vadd.f32 %v5503, %v5739
        %v5848 = vadd.f32 %v5504, %v5741
        %v5849 = vadd.f32 %v5505, %v5745
        %v5850 = vadd.f32 %v5506, %v5747
        %v5851 = vadd.f32 %v5507, %v5751
        %v5852 = vadd.f32 %v5508, %v5753
        %v5853 = vadd.f32 %v5509, %v5757
        %v5854 = vadd.f32 %v5510, %v5759
        %v5855 = vadd.f32 %v5511, %v5763
        %v5856 = vadd.f32 %v5512, %v5765
        %v5857 = vadd.f32 %v5513, %v5769
        %v5858 = vadd.f32 %v5514, %v5771
        %v5859 = vadd.f32 %v5515, %v5775
        %v5860 = vadd.f32 %v5516, %v5777
        %v5861 = vadd.f32 %v5517, %v5781
        %v5862 = vadd.f32 %v5518, %v5783
        %v5863 = vadd.f32 %v5519, %v5787
        %v5864 = vadd.f32 %v5520, %v5789
        %v5865 = vadd.f32 %v5521, %v5793
        %v5866 = vadd.f32 %v5522, %v5795
        %v5867 = vadd.f32 %v5523, %v5799
        %v5868 = vadd.f32 %v5524, %v5801
        %v5869 = vadd.f32 %v5525, %v5805
        %v5870 = vadd.f32 %v5526, %v5807
        %v5871 = vld [vmem:[%s5] sm:$0x3]
        %v5873 = vlaneseq
        %v5874 = vshrl.u32 %v5873, 7
        %v5875 = vsub.s32 0, %v5874
        %v5876 = vrot.slane %v5871, %v5875
        %v5877 = vlaneseq
        %v5878 = vshrl.u32 %v5877, 7
        %v5879 = vsub.s32 1, %v5878
        %v5880 = vrot.slane %v5871, %v5879
        %v5883 = vadd.f32 %v5809, %v5876
        %v5884 = vadd.f32 %v5810, %v5880
        %v5885 = vadd.f32 %v5811, %v5876
        %v5886 = vadd.f32 %v5812, %v5880
        %v5887 = vadd.f32 %v5813, %v5876
        %v5888 = vadd.f32 %v5814, %v5880
        %v5889 = vadd.f32 %v5815, %v5876
        %v5890 = vadd.f32 %v5816, %v5880
        %v5891 = vadd.f32 %v5817, %v5876
        %v5892 = vadd.f32 %v5818, %v5880
        %v5893 = vadd.f32 %v5819, %v5876
        %v5894 = vadd.f32 %v5820, %v5880
        %v5895 = vadd.f32 %v5821, %v5876
        %v5896 = vadd.f32 %v5822, %v5880
        %v5897 = vadd.f32 %v5823, %v5876
        %v5898 = vadd.f32 %v5824, %v5880
        %v5899 = vadd.f32 %v5825, %v5876
        %v5900 = vadd.f32 %v5826, %v5880
        %v5901 = vadd.f32 %v5827, %v5876
        %v5902 = vadd.f32 %v5828, %v5880
        %v5903 = vadd.f32 %v5829, %v5876
        %v5904 = vadd.f32 %v5830, %v5880
        %v5905 = vadd.f32 %v5831, %v5876
        %v5906 = vadd.f32 %v5832, %v5880
        %v5907 = vadd.f32 %v5833, %v5876
        %v5908 = vadd.f32 %v5834, %v5880
        %v5909 = vadd.f32 %v5835, %v5876
        %v5910 = vadd.f32 %v5836, %v5880
        %v5911 = vadd.f32 %v5837, %v5876
        %v5912 = vadd.f32 %v5838, %v5880
        %v5913 = vadd.f32 %v5839, %v5876
        %v5914 = vadd.f32 %v5840, %v5880
        %v5915 = vadd.f32 %v5841, %v5876
        %v5916 = vadd.f32 %v5842, %v5880
        %v5917 = vadd.f32 %v5843, %v5876
        %v5918 = vadd.f32 %v5844, %v5880
        %v5919 = vadd.f32 %v5845, %v5876
        %v5920 = vadd.f32 %v5846, %v5880
        %v5921 = vadd.f32 %v5847, %v5876
        %v5922 = vadd.f32 %v5848, %v5880
        %v5923 = vadd.f32 %v5849, %v5876
        %v5924 = vadd.f32 %v5850, %v5880
        %v5925 = vadd.f32 %v5851, %v5876
        %v5926 = vadd.f32 %v5852, %v5880
        %v5927 = vadd.f32 %v5853, %v5876
        %v5928 = vadd.f32 %v5854, %v5880
        %v5929 = vadd.f32 %v5855, %v5876
        %v5930 = vadd.f32 %v5856, %v5880
        %v5931 = vadd.f32 %v5857, %v5876
        %v5932 = vadd.f32 %v5858, %v5880
        %v5933 = vadd.f32 %v5859, %v5876
        %v5934 = vadd.f32 %v5860, %v5880
        %v5935 = vadd.f32 %v5861, %v5876
        %v5936 = vadd.f32 %v5862, %v5880
        %v5937 = vadd.f32 %v5863, %v5876
        %v5938 = vadd.f32 %v5864, %v5880
        %v5939 = vadd.f32 %v5865, %v5876
        %v5940 = vadd.f32 %v5866, %v5880
        %v5941 = vadd.f32 %v5867, %v5876
        %v5942 = vadd.f32 %v5868, %v5880
        %v5943 = vadd.f32 %v5869, %v5876
        %v5944 = vadd.f32 %v5870, %v5880
        %v5945 = vmax.f32 %v5883, 0.0
        %v5946 = vmax.f32 %v5884, 0.0
        %v5947 = vmax.f32 %v5885, 0.0
        %v5948 = vmax.f32 %v5886, 0.0
        %v5949 = vmax.f32 %v5887, 0.0
        %v5950 = vmax.f32 %v5888, 0.0
        %v5951 = vmax.f32 %v5889, 0.0
        %v5952 = vmax.f32 %v5890, 0.0
        %v5953 = vmax.f32 %v5891, 0.0
        %v5954 = vmax.f32 %v5892, 0.0
        %v5955 = vmax.f32 %v5893, 0.0
        %v5956 = vmax.f32 %v5894, 0.0
        %v5957 = vmax.f32 %v5895, 0.0
        %v5958 = vmax.f32 %v5896, 0.0
        %v5959 = vmax.f32 %v5897, 0.0
        %v5960 = vmax.f32 %v5898, 0.0
        %v5961 = vmax.f32 %v5899, 0.0
        %v5962 = vmax.f32 %v5900, 0.0
        %v5963 = vmax.f32 %v5901, 0.0
        %v5964 = vmax.f32 %v5902, 0.0
        %v5965 = vmax.f32 %v5903, 0.0
        %v5966 = vmax.f32 %v5904, 0.0
        %v5967 = vmax.f32 %v5905, 0.0
        %v5968 = vmax.f32 %v5906, 0.0
        %v5969 = vmax.f32 %v5907, 0.0
        %v5970 = vmax.f32 %v5908, 0.0
        %v5971 = vmax.f32 %v5909, 0.0
        %v5972 = vmax.f32 %v5910, 0.0
        %v5973 = vmax.f32 %v5911, 0.0
        %v5974 = vmax.f32 %v5912, 0.0
        %v5975 = vmax.f32 %v5913, 0.0
        %v5976 = vmax.f32 %v5914, 0.0
        %v5977 = vmax.f32 %v5915, 0.0
        %v5978 = vmax.f32 %v5916, 0.0
        %v5979 = vmax.f32 %v5917, 0.0
        %v5980 = vmax.f32 %v5918, 0.0
        %v5981 = vmax.f32 %v5919, 0.0
        %v5982 = vmax.f32 %v5920, 0.0
        %v5983 = vmax.f32 %v5921, 0.0
        %v5984 = vmax.f32 %v5922, 0.0
        %v5985 = vmax.f32 %v5923, 0.0
        %v5986 = vmax.f32 %v5924, 0.0
        %v5987 = vmax.f32 %v5925, 0.0
        %v5988 = vmax.f32 %v5926, 0.0
        %v5989 = vmax.f32 %v5927, 0.0
        %v5990 = vmax.f32 %v5928, 0.0
        %v5991 = vmax.f32 %v5929, 0.0
        %v5992 = vmax.f32 %v5930, 0.0
        %v5993 = vmax.f32 %v5931, 0.0
        %v5994 = vmax.f32 %v5932, 0.0
        %v5995 = vmax.f32 %v5933, 0.0
        %v5996 = vmax.f32 %v5934, 0.0
        %v5997 = vmax.f32 %v5935, 0.0
        %v5998 = vmax.f32 %v5936, 0.0
        %v5999 = vmax.f32 %v5937, 0.0
        %v6000 = vmax.f32 %v5938, 0.0
        %v6001 = vmax.f32 %v5939, 0.0
        %v6002 = vmax.f32 %v5940, 0.0
        %v6003 = vmax.f32 %v5941, 0.0
        %v6004 = vmax.f32 %v5942, 0.0
        %v6005 = vmax.f32 %v5943, 0.0
        %v6006 = vmax.f32 %v5944, 0.0
        %v6069 = vrot.slane %v5945, 2
        %v6070 = vrot.slane %v5947, 2
        %v6071 = vsel %vm1295, %v6069, %v6070
        %v6072 = vrot.slane %v5946, 2
        %v6073 = vrot.slane %v5948, 2
        %v6074 = vsel %vm1295, %v6072, %v6073
        %v6075 = vrot.slane %v5949, 2
        %v6076 = vsel %vm1295, %v6070, %v6075
        %v6077 = vrot.slane %v5950, 2
        %v6078 = vsel %vm1295, %v6073, %v6077
        %v6079 = vrot.slane %v5951, 2
        %v6080 = vsel %vm1295, %v6075, %v6079
        %v6081 = vrot.slane %v5952, 2
        %v6082 = vsel %vm1295, %v6077, %v6081
        %v6083 = vrot.slane %v5953, 2
        %v6084 = vsel %vm1295, %v6079, %v6083
        %v6085 = vrot.slane %v5954, 2
        %v6086 = vsel %vm1295, %v6081, %v6085
        %v6087 = vrot.slane %v5955, 2
        %v6088 = vsel %vm1295, %v6083, %v6087
        %v6089 = vrot.slane %v5956, 2
        %v6090 = vsel %vm1295, %v6085, %v6089
        %v6091 = vrot.slane %v5957, 2
        %v6092 = vsel %vm1295, %v6087, %v6091
        %v6093 = vrot.slane %v5958, 2
        %v6094 = vsel %vm1295, %v6089, %v6093
        %v6095 = vrot.slane %v5959, 2
        %v6096 = vsel %vm1295, %v6091, %v6095
        %v6097 = vrot.slane %v5960, 2
        %v6098 = vsel %vm1295, %v6093, %v6097
        %v6099 = vrot.slane %v5961, 2
        %v6100 = vsel %vm1295, %v6095, %v6099
        %v6101 = vrot.slane %v5962, 2
        %v6102 = vsel %vm1295, %v6097, %v6101
        %v6103 = vrot.slane %v5963, 2
        %v6104 = vsel %vm1295, %v6099, %v6103
        %v6105 = vrot.slane %v5964, 2
        %v6106 = vsel %vm1295, %v6101, %v6105
        %v6107 = vrot.slane %v5965, 2
        %v6108 = vsel %vm1295, %v6103, %v6107
        %v6109 = vrot.slane %v5966, 2
        %v6110 = vsel %vm1295, %v6105, %v6109
        %v6111 = vrot.slane %v5967, 2
        %v6112 = vsel %vm1295, %v6107, %v6111
        %v6113 = vrot.slane %v5968, 2
        %v6114 = vsel %vm1295, %v6109, %v6113
        %v6115 = vrot.slane %v5969, 2
        %v6116 = vsel %vm1295, %v6111, %v6115
        %v6117 = vrot.slane %v5970, 2
        %v6118 = vsel %vm1295, %v6113, %v6117
        %v6119 = vrot.slane %v5971, 2
        %v6120 = vsel %vm1295, %v6115, %v6119
        %v6121 = vrot.slane %v5972, 2
        %v6122 = vsel %vm1295, %v6117, %v6121
        %v6123 = vrot.slane %v5973, 2
        %v6124 = vsel %vm1295, %v6119, %v6123
        %v6125 = vrot.slane %v5974, 2
        %v6126 = vsel %vm1295, %v6121, %v6125
        %v6127 = vrot.slane %v5975, 2
        %v6128 = vsel %vm1295, %v6123, %v6127
        %v6129 = vrot.slane %v5976, 2
        %v6130 = vsel %vm1295, %v6125, %v6129
        %v6131 = vrot.slane %v5977, 2
        %v6132 = vsel %vm1295, %v6127, %v6131
        %v6133 = vrot.slane %v5978, 2
        %v6134 = vsel %vm1295, %v6129, %v6133
        %v6135 = vrot.slane %v5979, 2
        %v6136 = vsel %vm1295, %v6131, %v6135
        %v6137 = vrot.slane %v5980, 2
        %v6138 = vsel %vm1295, %v6133, %v6137
        %v6139 = vrot.slane %v5981, 2
        %v6140 = vsel %vm1295, %v6135, %v6139
        %v6141 = vrot.slane %v5982, 2
        %v6142 = vsel %vm1295, %v6137, %v6141
        %v6143 = vrot.slane %v5983, 2
        %v6144 = vsel %vm1295, %v6139, %v6143
        %v6145 = vrot.slane %v5984, 2
        %v6146 = vsel %vm1295, %v6141, %v6145
        %v6147 = vrot.slane %v5985, 2
        %v6148 = vsel %vm1295, %v6143, %v6147
        %v6149 = vrot.slane %v5986, 2
        %v6150 = vsel %vm1295, %v6145, %v6149
        %v6151 = vrot.slane %v5987, 2
        %v6152 = vsel %vm1295, %v6147, %v6151
        %v6153 = vrot.slane %v5988, 2
        %v6154 = vsel %vm1295, %v6149, %v6153
        %v6155 = vrot.slane %v5989, 2
        %v6156 = vsel %vm1295, %v6151, %v6155
        %v6157 = vrot.slane %v5990, 2
        %v6158 = vsel %vm1295, %v6153, %v6157
        %v6159 = vrot.slane %v5991, 2
        %v6160 = vsel %vm1295, %v6155, %v6159
        %v6161 = vrot.slane %v5992, 2
        %v6162 = vsel %vm1295, %v6157, %v6161
        %v6163 = vrot.slane %v5993, 2
        %v6164 = vsel %vm1295, %v6159, %v6163
        %v6165 = vrot.slane %v5994, 2
        %v6166 = vsel %vm1295, %v6161, %v6165
        %v6167 = vrot.slane %v5995, 2
        %v6168 = vsel %vm1295, %v6163, %v6167
        %v6169 = vrot.slane %v5996, 2
        %v6170 = vsel %vm1295, %v6165, %v6169
        %v6171 = vrot.slane %v5997, 2
        %v6172 = vsel %vm1295, %v6167, %v6171
        %v6173 = vrot.slane %v5998, 2
        %v6174 = vsel %vm1295, %v6169, %v6173
        %v6175 = vrot.slane %v5999, 2
        %v6176 = vsel %vm1295, %v6171, %v6175
        %v6177 = vrot.slane %v6000, 2
        %v6178 = vsel %vm1295, %v6173, %v6177
        %v6179 = vrot.slane %v6001, 2
        %v6180 = vsel %vm1295, %v6175, %v6179
        %v6181 = vrot.slane %v6002, 2
        %v6182 = vsel %vm1295, %v6177, %v6181
        %v6183 = vrot.slane %v6003, 2
        %v6184 = vsel %vm1295, %v6179, %v6183
        %v6185 = vrot.slane %v6004, 2
        %v6186 = vsel %vm1295, %v6181, %v6185
        %v6187 = vrot.slane %v6005, 2
        %v6188 = vsel %vm1295, %v6183, %v6187
        %v6189 = vrot.slane %v6006, 2
        %v6190 = vsel %vm1295, %v6185, %v6189
        %v6253 = vmax.f32 %v5945, %v6071
        %v6254 = vmax.f32 %v5946, %v6074
        %v6255 = vmax.f32 %v5947, %v6076
        %v6256 = vmax.f32 %v5948, %v6078
        %v6257 = vmax.f32 %v5949, %v6080
        %v6258 = vmax.f32 %v5950, %v6082
        %v6259 = vmax.f32 %v5951, %v6084
        %v6260 = vmax.f32 %v5952, %v6086
        %v6261 = vmax.f32 %v5953, %v6088
        %v6262 = vmax.f32 %v5954, %v6090
        %v6263 = vmax.f32 %v5955, %v6092
        %v6264 = vmax.f32 %v5956, %v6094
        %v6265 = vmax.f32 %v5957, %v6096
        %v6266 = vmax.f32 %v5958, %v6098
        %v6267 = vmax.f32 %v5959, %v6100
        %v6268 = vmax.f32 %v5960, %v6102
        %v6269 = vmax.f32 %v5961, %v6104
        %v6270 = vmax.f32 %v5962, %v6106
        %v6271 = vmax.f32 %v5963, %v6108
        %v6272 = vmax.f32 %v5964, %v6110
        %v6273 = vmax.f32 %v5965, %v6112
        %v6274 = vmax.f32 %v5966, %v6114
        %v6275 = vmax.f32 %v5967, %v6116
        %v6276 = vmax.f32 %v5968, %v6118
        %v6277 = vmax.f32 %v5969, %v6120
        %v6278 = vmax.f32 %v5970, %v6122
        %v6279 = vmax.f32 %v5971, %v6124
        %v6280 = vmax.f32 %v5972, %v6126
        %v6281 = vmax.f32 %v5973, %v6128
        %v6282 = vmax.f32 %v5974, %v6130
        %v6283 = vmax.f32 %v5975, %v6132
        %v6284 = vmax.f32 %v5976, %v6134
        %v6285 = vmax.f32 %v5977, %v6136
        %v6286 = vmax.f32 %v5978, %v6138
        %v6287 = vmax.f32 %v5979, %v6140
        %v6288 = vmax.f32 %v5980, %v6142
        %v6289 = vmax.f32 %v5981, %v6144
        %v6290 = vmax.f32 %v5982, %v6146
        %v6291 = vmax.f32 %v5983, %v6148
        %v6292 = vmax.f32 %v5984, %v6150
        %v6293 = vmax.f32 %v5985, %v6152
        %v6294 = vmax.f32 %v5986, %v6154
        %v6295 = vmax.f32 %v5987, %v6156
        %v6296 = vmax.f32 %v5988, %v6158
        %v6297 = vmax.f32 %v5989, %v6160
        %v6298 = vmax.f32 %v5990, %v6162
        %v6299 = vmax.f32 %v5991, %v6164
        %v6300 = vmax.f32 %v5992, %v6166
        %v6301 = vmax.f32 %v5993, %v6168
        %v6302 = vmax.f32 %v5994, %v6170
        %v6303 = vmax.f32 %v5995, %v6172
        %v6304 = vmax.f32 %v5996, %v6174
        %v6305 = vmax.f32 %v5997, %v6176
        %v6306 = vmax.f32 %v5998, %v6178
        %v6307 = vmax.f32 %v5999, %v6180
        %v6308 = vmax.f32 %v6000, %v6182
        %v6309 = vmax.f32 %v6001, %v6184
        %v6310 = vmax.f32 %v6002, %v6186
        %v6311 = vmax.f32 %v6003, %v6188
        %v6312 = vmax.f32 %v6004, %v6190
        %v6313 = vmax.f32 %v6005, %v6187
        %v6314 = vmax.f32 %v6006, %v6189
        %6377 = vrot.lane.b32.xlu0 %v6253, 127
        %v6378 = vpop.permute.xlu0 %6377
        %6379 = vrot.lane.b32.xlu0 %v6254, 127
        %v6380 = vpop.permute.xlu0 %6379
        %6381 = vrot.lane.b32.xlu0 %v6255, 127
        %v6382 = vpop.permute.xlu0 %6381
        %6383 = vrot.lane.b32.xlu0 %v6256, 127
        %v6384 = vpop.permute.xlu0 %6383
        %6385 = vrot.lane.b32.xlu0 %v6257, 127
        %v6386 = vpop.permute.xlu0 %6385
        %6387 = vrot.lane.b32.xlu0 %v6258, 127
        %v6388 = vpop.permute.xlu0 %6387
        %6389 = vrot.lane.b32.xlu0 %v6259, 127
        %v6390 = vpop.permute.xlu0 %6389
        %6391 = vrot.lane.b32.xlu0 %v6260, 127
        %v6392 = vpop.permute.xlu0 %6391
        %6393 = vrot.lane.b32.xlu0 %v6261, 127
        %v6394 = vpop.permute.xlu0 %6393
        %6395 = vrot.lane.b32.xlu0 %v6262, 127
        %v6396 = vpop.permute.xlu0 %6395
        %6397 = vrot.lane.b32.xlu0 %v6263, 127
        %v6398 = vpop.permute.xlu0 %6397
        %6399 = vrot.lane.b32.xlu0 %v6264, 127
        %v6400 = vpop.permute.xlu0 %6399
        %6401 = vrot.lane.b32.xlu0 %v6265, 127
        %v6402 = vpop.permute.xlu0 %6401
        %6403 = vrot.lane.b32.xlu0 %v6266, 127
        %v6404 = vpop.permute.xlu0 %6403
        %6405 = vrot.lane.b32.xlu0 %v6267, 127
        %v6406 = vpop.permute.xlu0 %6405
        %6407 = vrot.lane.b32.xlu0 %v6268, 127
        %v6408 = vpop.permute.xlu0 %6407
        %6409 = vrot.lane.b32.xlu0 %v6269, 127
        %v6410 = vpop.permute.xlu0 %6409
        %6411 = vrot.lane.b32.xlu0 %v6270, 127
        %v6412 = vpop.permute.xlu0 %6411
        %6413 = vrot.lane.b32.xlu0 %v6271, 127
        %v6414 = vpop.permute.xlu0 %6413
        %6415 = vrot.lane.b32.xlu0 %v6272, 127
        %v6416 = vpop.permute.xlu0 %6415
        %6417 = vrot.lane.b32.xlu0 %v6273, 127
        %v6418 = vpop.permute.xlu0 %6417
        %6419 = vrot.lane.b32.xlu0 %v6274, 127
        %v6420 = vpop.permute.xlu0 %6419
        %6421 = vrot.lane.b32.xlu0 %v6275, 127
        %v6422 = vpop.permute.xlu0 %6421
        %6423 = vrot.lane.b32.xlu0 %v6276, 127
        %v6424 = vpop.permute.xlu0 %6423
        %6425 = vrot.lane.b32.xlu0 %v6277, 127
        %v6426 = vpop.permute.xlu0 %6425
        %6427 = vrot.lane.b32.xlu0 %v6278, 127
        %v6428 = vpop.permute.xlu0 %6427
        %6429 = vrot.lane.b32.xlu0 %v6279, 127
        %v6430 = vpop.permute.xlu0 %6429
        %6431 = vrot.lane.b32.xlu0 %v6280, 127
        %v6432 = vpop.permute.xlu0 %6431
        %6433 = vrot.lane.b32.xlu0 %v6281, 127
        %v6434 = vpop.permute.xlu0 %6433
        %6435 = vrot.lane.b32.xlu0 %v6282, 127
        %v6436 = vpop.permute.xlu0 %6435
        %6437 = vrot.lane.b32.xlu0 %v6283, 127
        %v6438 = vpop.permute.xlu0 %6437
        %6439 = vrot.lane.b32.xlu0 %v6284, 127
        %v6440 = vpop.permute.xlu0 %6439
        %6441 = vrot.lane.b32.xlu0 %v6285, 127
        %v6442 = vpop.permute.xlu0 %6441
        %6443 = vrot.lane.b32.xlu0 %v6286, 127
        %v6444 = vpop.permute.xlu0 %6443
        %6445 = vrot.lane.b32.xlu0 %v6287, 127
        %v6446 = vpop.permute.xlu0 %6445
        %6447 = vrot.lane.b32.xlu0 %v6288, 127
        %v6448 = vpop.permute.xlu0 %6447
        %6449 = vrot.lane.b32.xlu0 %v6289, 127
        %v6450 = vpop.permute.xlu0 %6449
        %6451 = vrot.lane.b32.xlu0 %v6290, 127
        %v6452 = vpop.permute.xlu0 %6451
        %6453 = vrot.lane.b32.xlu0 %v6291, 127
        %v6454 = vpop.permute.xlu0 %6453
        %6455 = vrot.lane.b32.xlu0 %v6292, 127
        %v6456 = vpop.permute.xlu0 %6455
        %6457 = vrot.lane.b32.xlu0 %v6293, 127
        %v6458 = vpop.permute.xlu0 %6457
        %6459 = vrot.lane.b32.xlu0 %v6294, 127
        %v6460 = vpop.permute.xlu0 %6459
        %6461 = vrot.lane.b32.xlu0 %v6295, 127
        %v6462 = vpop.permute.xlu0 %6461
        %6463 = vrot.lane.b32.xlu0 %v6296, 127
        %v6464 = vpop.permute.xlu0 %6463
        %6465 = vrot.lane.b32.xlu0 %v6297, 127
        %v6466 = vpop.permute.xlu0 %6465
        %6467 = vrot.lane.b32.xlu0 %v6298, 127
        %v6468 = vpop.permute.xlu0 %6467
        %6469 = vrot.lane.b32.xlu0 %v6299, 127
        %v6470 = vpop.permute.xlu0 %6469
        %6471 = vrot.lane.b32.xlu0 %v6300, 127
        %v6472 = vpop.permute.xlu0 %6471
        %6473 = vrot.lane.b32.xlu0 %v6301, 127
        %v6474 = vpop.permute.xlu0 %6473
        %6475 = vrot.lane.b32.xlu0 %v6302, 127
        %v6476 = vpop.permute.xlu0 %6475
        %6477 = vrot.lane.b32.xlu0 %v6303, 127
        %v6478 = vpop.permute.xlu0 %6477
        %6479 = vrot.lane.b32.xlu0 %v6304, 127
        %v6480 = vpop.permute.xlu0 %6479
        %6481 = vrot.lane.b32.xlu0 %v6305, 127
        %v6482 = vpop.permute.xlu0 %6481
        %6483 = vrot.lane.b32.xlu0 %v6306, 127
        %v6484 = vpop.permute.xlu0 %6483
        %6485 = vrot.lane.b32.xlu0 %v6307, 127
        %v6486 = vpop.permute.xlu0 %6485
        %6487 = vrot.lane.b32.xlu0 %v6308, 127
        %v6488 = vpop.permute.xlu0 %6487
        %6489 = vrot.lane.b32.xlu0 %v6309, 127
        %v6490 = vpop.permute.xlu0 %6489
        %6491 = vrot.lane.b32.xlu0 %v6310, 127
        %v6492 = vpop.permute.xlu0 %6491
        %6493 = vrot.lane.b32.xlu0 %v6311, 127
        %v6494 = vpop.permute.xlu0 %6493
        %6495 = vrot.lane.b32.xlu0 %v6312, 127
        %v6496 = vpop.permute.xlu0 %6495
        %6497 = vrot.lane.b32.xlu0 %v6313, 127
        %v6498 = vpop.permute.xlu0 %6497
        %6499 = vrot.lane.b32.xlu0 %v6314, 127
        %v6500 = vpop.permute.xlu0 %6499
        %v6501 = vsel %vm3310, %v6378, %v6380
        %v6502 = vsel %vm3310, %v6382, %v6384
        %v6503 = vsel %vm3310, %v6386, %v6388
        %v6504 = vsel %vm3310, %v6390, %v6392
        %v6505 = vsel %vm3310, %v6394, %v6396
        %v6506 = vsel %vm3310, %v6398, %v6400
        %v6507 = vsel %vm3310, %v6402, %v6404
        %v6508 = vsel %vm3310, %v6406, %v6408
        %v6509 = vsel %vm3310, %v6410, %v6412
        %v6510 = vsel %vm3310, %v6414, %v6416
        %v6511 = vsel %vm3310, %v6418, %v6420
        %v6512 = vsel %vm3310, %v6422, %v6424
        %v6513 = vsel %vm3310, %v6426, %v6428
        %v6514 = vsel %vm3310, %v6430, %v6432
        %v6515 = vsel %vm3310, %v6434, %v6436
        %v6516 = vsel %vm3310, %v6438, %v6440
        %v6517 = vsel %vm3310, %v6442, %v6444
        %v6518 = vsel %vm3310, %v6446, %v6448
        %v6519 = vsel %vm3310, %v6450, %v6452
        %v6520 = vsel %vm3310, %v6454, %v6456
        %v6521 = vsel %vm3310, %v6458, %v6460
        %v6522 = vsel %vm3310, %v6462, %v6464
        %v6523 = vsel %vm3310, %v6466, %v6468
        %v6524 = vsel %vm3310, %v6470, %v6472
        %v6525 = vsel %vm3310, %v6474, %v6476
        %v6526 = vsel %vm3310, %v6478, %v6480
        %v6527 = vsel %vm3310, %v6482, %v6484
        %v6528 = vsel %vm3310, %v6486, %v6488
        %v6529 = vsel %vm3310, %v6490, %v6492
        %v6530 = vsel %vm3310, %v6494, %v6496
        %v6531 = vsel %vm3310, %v6498, %v6500
        %v6594 = vmax.f32 %v6253, %v6501
        %v6595 = vmax.f32 %v6254, %v6380
        %v6596 = vmax.f32 %v6255, %v6502
        %v6597 = vmax.f32 %v6256, %v6384
        %v6598 = vmax.f32 %v6257, %v6503
        %v6599 = vmax.f32 %v6258, %v6388
        %v6600 = vmax.f32 %v6259, %v6504
        %v6601 = vmax.f32 %v6260, %v6392
        %v6602 = vmax.f32 %v6261, %v6505
        %v6603 = vmax.f32 %v6262, %v6396
        %v6604 = vmax.f32 %v6263, %v6506
        %v6605 = vmax.f32 %v6264, %v6400
        %v6606 = vmax.f32 %v6265, %v6507
        %v6607 = vmax.f32 %v6266, %v6404
        %v6608 = vmax.f32 %v6267, %v6508
        %v6609 = vmax.f32 %v6268, %v6408
        %v6610 = vmax.f32 %v6269, %v6509
        %v6611 = vmax.f32 %v6270, %v6412
        %v6612 = vmax.f32 %v6271, %v6510
        %v6613 = vmax.f32 %v6272, %v6416
        %v6614 = vmax.f32 %v6273, %v6511
        %v6615 = vmax.f32 %v6274, %v6420
        %v6616 = vmax.f32 %v6275, %v6512
        %v6617 = vmax.f32 %v6276, %v6424
        %v6618 = vmax.f32 %v6277, %v6513
        %v6619 = vmax.f32 %v6278, %v6428
        %v6620 = vmax.f32 %v6279, %v6514
        %v6621 = vmax.f32 %v6280, %v6432
        %v6622 = vmax.f32 %v6281, %v6515
        %v6623 = vmax.f32 %v6282, %v6436
        %v6624 = vmax.f32 %v6283, %v6516
        %v6625 = vmax.f32 %v6284, %v6440
        %v6626 = vmax.f32 %v6285, %v6517
        %v6627 = vmax.f32 %v6286, %v6444
        %v6628 = vmax.f32 %v6287, %v6518
        %v6629 = vmax.f32 %v6288, %v6448
        %v6630 = vmax.f32 %v6289, %v6519
        %v6631 = vmax.f32 %v6290, %v6452
        %v6632 = vmax.f32 %v6291, %v6520
        %v6633 = vmax.f32 %v6292, %v6456
        %v6634 = vmax.f32 %v6293, %v6521
        %v6635 = vmax.f32 %v6294, %v6460
        %v6636 = vmax.f32 %v6295, %v6522
        %v6637 = vmax.f32 %v6296, %v6464
        %v6638 = vmax.f32 %v6297, %v6523
        %v6639 = vmax.f32 %v6298, %v6468
        %v6640 = vmax.f32 %v6299, %v6524
        %v6641 = vmax.f32 %v6300, %v6472
        %v6642 = vmax.f32 %v6301, %v6525
        %v6643 = vmax.f32 %v6302, %v6476
        %v6644 = vmax.f32 %v6303, %v6526
        %v6645 = vmax.f32 %v6304, %v6480
        %v6646 = vmax.f32 %v6305, %v6527
        %v6647 = vmax.f32 %v6306, %v6484
        %v6648 = vmax.f32 %v6307, %v6528
        %v6649 = vmax.f32 %v6308, %v6488
        %v6650 = vmax.f32 %v6309, %v6529
        %v6651 = vmax.f32 %v6310, %v6492
        %v6652 = vmax.f32 %v6311, %v6530
        %v6653 = vmax.f32 %v6312, %v6496
        %v6654 = vmax.f32 %v6313, %v6531
        %v6655 = vmax.f32 %v6314, %v6500
        %v6656 = vld [vmem:[%s6] sm:$0xff]
        %v6657 = vld [vmem:[%s6 + $0x8] sm:$0xff]
        %v6658 = vld [vmem:[%s6 + $0x10] sm:$0xff]
        %v6659 = vld [vmem:[%s6 + $0x18] sm:$0xff]
        %v6660 = vld [vmem:[%s6 + $0x20] sm:$0xff]
        %v6661 = vld [vmem:[%s6 + $0x28] sm:$0xff]
        %v6662 = vld [vmem:[%s6 + $0x30] sm:$0xff]
        %v6663 = vld [vmem:[%s6 + $0x38] sm:$0xff]
        %v6664 = vld [vmem:[%s6 + $0x40] sm:$0xff]
        %v6665 = vld [vmem:[%s6 + $0x48] sm:$0xff]
        %v6666 = vld [vmem:[%s6 + $0x50] sm:$0xff]
        %v6667 = vld [vmem:[%s6 + $0x58] sm:$0xff]
        %v6668 = vld [vmem:[%s6 + $0x60] sm:$0xff]
        %v6669 = vld [vmem:[%s6 + $0x68] sm:$0xff]
        %v6670 = vld [vmem:[%s6 + $0x70] sm:$0xff]
        %v6671 = vld [vmem:[%s6 + $0x78] sm:$0xff]
        %v6672 = vld [vmem:[%s6 + $0x80] sm:$0xff]
        %v6673 = vld [vmem:[%s6 + $0x88] sm:$0xff]
        %v6674 = vld [vmem:[%s6 + $0x90] sm:$0xff]
        %v6675 = vld [vmem:[%s6 + $0x98] sm:$0x7f]
        %vm6676 = vcmask 252928
        %v6678 = vsel %vm6676, %v6595, 0
        %v6681 = vsel %vm6676, %v6597, 0
        %v6684 = vsel %vm6676, %v6599, 0
        %v6687 = vsel %vm6676, %v6601, 0
        %v6690 = vsel %vm6676, %v6603, 0
        %v6693 = vsel %vm6676, %v6605, 0
        %v6696 = vsel %vm6676, %v6607, 0
        %v6699 = vsel %vm6676, %v6609, 0
        %v6702 = vsel %vm6676, %v6611, 0
        %v6705 = vsel %vm6676, %v6613, 0
        %v6708 = vsel %vm6676, %v6615, 0
        %v6711 = vsel %vm6676, %v6617, 0
        %v6714 = vsel %vm6676, %v6619, 0
        %v6717 = vsel %vm6676, %v6621, 0
        %v6720 = vsel %vm6676, %v6623, 0
        %v6723 = vsel %vm6676, %v6625, 0
        %v6726 = vsel %vm6676, %v6627, 0
        %v6729 = vsel %vm6676, %v6629, 0
        %v6732 = vsel %vm6676, %v6631, 0
        %v6735 = vsel %vm6676, %v6633, 0
        %v6738 = vsel %vm6676, %v6635, 0
        %v6741 = vsel %vm6676, %v6637, 0
        %v6744 = vsel %vm6676, %v6639, 0
        %v6747 = vsel %vm6676, %v6641, 0
        %v6750 = vsel %vm6676, %v6643, 0
        %v6753 = vsel %vm6676, %v6645, 0
        %v6756 = vsel %vm6676, %v6647, 0
        %v6759 = vsel %vm6676, %v6649, 0
        %v6762 = vsel %vm6676, %v6651, 0
        %v6765 = vsel %vm6676, %v6653, 0
        %v6768 = vsel %vm6676, %v6655, 0
        %v6771 = vsel %vm579, %v6675, 0
        %6773 = vmatprep.subr.mxu0 0.0
        %6774 = vmatpush1.msra.mxu0 %v6656
        %6775 = vmatprep.subr.mxu0 0.0
        %6776 = vmatpush1.msra.mxu0 %v6657
        %6777 = vmatprep.subr.mxu0 0.0
        %6778 = vmatpush1.msra.mxu0 %v6658
        %6779 = vmatprep.subr.mxu0 0.0
        %6780 = vmatpush1.msra.mxu0 %v6659
        %6781 = vmatprep.subr.mxu0 0.0
        %6782 = vmatpush1.msra.mxu0 %v6660
        %6783 = vmatprep.subr.mxu0 0.0
        %6784 = vmatpush1.msra.mxu0 %v6661
        %6785 = vmatprep.subr.mxu0 0.0
        %6786 = vmatpush1.msra.mxu0 %v6662
        %6787 = vmatprep.subr.mxu0 0.0
        %6788 = vmatpush1.msra.mxu0 %v6663
        %6789 = vmatprep.subr.mxu0 0.0
        %6790 = vmatpush1.msra.mxu0 %v6664
        %6791 = vmatprep.subr.mxu0 0.0
        %6792 = vmatpush1.msra.mxu0 %v6665
        %6793 = vmatprep.subr.mxu0 0.0
        %6794 = vmatpush1.msra.mxu0 %v6666
        %6795 = vmatprep.subr.mxu0 0.0
        %6796 = vmatpush1.msra.mxu0 %v6667
        %6797 = vmatprep.subr.mxu0 0.0
        %6798 = vmatpush1.msra.mxu0 %v6668
        %6799 = vmatprep.subr.mxu0 0.0
        %6800 = vmatpush1.msra.mxu0 %v6669
        %6801 = vmatprep.subr.mxu0 0.0
        %6802 = vmatpush1.msra.mxu0 %v6670
        %6803 = vmatprep.subr.mxu0 0.0
        %6804 = vmatpush1.msra.mxu0 %v6671
        %6805 = vmatprep.subr.mxu0 0.0
        %6806 = vmatpush1.msra.mxu0 %v6672
        %6807 = vmatprep.subr.mxu0 0.0
        %6808 = vmatpush1.msra.mxu0 %v6673
        %6809 = vmatprep.subr.mxu0 0.0
        %6810 = vmatpush1.msra.mxu0 %v6674
        %6811 = vmatprep.subr.mxu0 0.0
        %6812 = vmatpush1.msra.mxu0 %v6771
        %6813 = vmatprep.subr.mxu0 0.0
        %6814 = vmatpush1.msra.mxu0 0.0
        %6815 = vmatprep.subr.mxu0 0.0
        %6816 = vmatpush1.msra.mxu0 0.0
        %6817 = vmatprep.subr.mxu0 0.0
        %6818 = vmatpush1.msra.mxu0 0.0
        %6819 = vmatprep.subr.mxu0 0.0
        %6820 = vmatpush1.msra.mxu0 0.0
        %6821 = vmatprep.subr.mxu0 0.0
        %6822 = vmatpush1.msra.mxu0 0.0
        %6823 = vmatprep.subr.mxu0 0.0
        %6824 = vmatpush1.msra.mxu0 0.0
        %6825 = vmatprep.subr.mxu0 0.0
        %6826 = vmatpush1.msra.mxu0 0.0
        %6827 = vmatprep.subr.mxu0 0.0
        %6828 = vmatpush1.msra.mxu0 0.0
        %6829 = vmatprep.subr.mxu0 0.0
        %6830 = vmatpush1.msra.mxu0 0.0
        %6831 = vmatprep.subr.mxu0 0.0
        %6832 = vmatpush1.msra.mxu0 0.0
        %6833 = vmatprep.subr.mxu0 0.0
        %6834 = vmatpush1.msra.mxu0 0.0
        %6835 = vmatprep.subr.mxu0 0.0
        %6836 = vmatpush1.msra.mxu0 0.0
        %6837 = vmatprep.mubr.f32.mxu0 %v6678
        %6838 = vmatmul.mubr.f32.gmra.mrb[0].mxu0 %v6594
        %v6839 = vpop.f32.mrb[0].mxu0
        %v6840 = vadd.f32 0.0, %v6839
        %v6841 = vpop.f32.mrb[0].mxu0
        %6842 = vmatprep.mubr.f32.mxu0 %v6681
        %6843 = vmatmul.mubr.f32.gmra.mrb[0].mxu0 %v6596
        %v6844 = vpop.f32.mrb[0].mxu0
        %v6845 = vadd.f32 0.0, %v6844
        %v6846 = vpop.f32.mrb[0].mxu0
        %6847 = vmatprep.mubr.f32.mxu0 %v6684
        %6848 = vmatmul.mubr.f32.gmra.mrb[0].mxu0 %v6598
        %v6849 = vpop.f32.mrb[0].mxu0
        %v6850 = vadd.f32 0.0, %v6849
        %v6851 = vpop.f32.mrb[0].mxu0
        %6852 = vmatprep.mubr.f32.mxu0 %v6687
        %6853 = vmatmul.mubr.f32.gmra.mrb[0].mxu0 %v6600
        %v6854 = vpop.f32.mrb[0].mxu0
        %v6855 = vadd.f32 0.0, %v6854
        %v6856 = vpop.f32.mrb[0].mxu0
        %6857 = vmatprep.mubr.f32.mxu0 %v6690
        %6858 = vmatmul.mubr.f32.gmra.mrb[0].mxu0 %v6602
        %v6859 = vpop.f32.mrb[0].mxu0
        %v6860 = vadd.f32 0.0, %v6859
        %v6861 = vpop.f32.mrb[0].mxu0
        %6862 = vmatprep.mubr.f32.mxu0 %v6693
        %6863 = vmatmul.mubr.f32.gmra.mrb[0].mxu0 %v6604
        %v6864 = vpop.f32.mrb[0].mxu0
        %v6865 = vadd.f32 0.0, %v6864
        %v6866 = vpop.f32.mrb[0].mxu0
        %6867 = vmatprep.mubr.f32.mxu0 %v6696
        %6868 = vmatmul.mubr.f32.gmra.mrb[0].mxu0 %v6606
        %v6869 = vpop.f32.mrb[0].mxu0
        %v6870 = vadd.f32 0.0, %v6869
        %v6871 = vpop.f32.mrb[0].mxu0
        %6872 = vmatprep.mubr.f32.mxu0 %v6699
        %6873 = vmatmul.mubr.f32.gmra.mrb[0].mxu0 %v6608
        %v6874 = vpop.f32.mrb[0].mxu0
        %v6875 = vadd.f32 0.0, %v6874
        %v6876 = vpop.f32.mrb[0].mxu0
        %6877 = vmatprep.mubr.f32.mxu0 %v6702
        %6878 = vmatmul.mubr.f32.gmra.mrb[0].mxu0 %v6610
        %v6879 = vpop.f32.mrb[0].mxu0
        %v6880 = vadd.f32 0.0, %v6879
        %v6881 = vpop.f32.mrb[0].mxu0
        %6882 = vmatprep.mubr.f32.mxu0 %v6705
        %6883 = vmatmul.mubr.f32.gmra.mrb[0].mxu0 %v6612
        %v6884 = vpop.f32.mrb[0].mxu0
        %v6885 = vadd.f32 0.0, %v6884
        %v6886 = vpop.f32.mrb[0].mxu0
        %6887 = vmatprep.mubr.f32.mxu0 %v6708
        %6888 = vmatmul.mubr.f32.gmra.mrb[0].mxu0 %v6614
        %v6889 = vpop.f32.mrb[0].mxu0
        %v6890 = vadd.f32 0.0, %v6889
        %v6891 = vpop.f32.mrb[0].mxu0
        %6892 = vmatprep.mubr.f32.mxu0 %v6711
        %6893 = vmatmul.mubr.f32.gmra.mrb[0].mxu0 %v6616
        %v6894 = vpop.f32.mrb[0].mxu0
        %v6895 = vadd.f32 0.0, %v6894
        %v6896 = vpop.f32.mrb[0].mxu0
        %6897 = vmatprep.mubr.f32.mxu0 %v6714
        %6898 = vmatmul.mubr.f32.gmra.mrb[0].mxu0 %v6618
        %v6899 = vpop.f32.mrb[0].mxu0
        %v6900 = vadd.f32 0.0, %v6899
        %v6901 = vpop.f32.mrb[0].mxu0
        %6902 = vmatprep.mubr.f32.mxu0 %v6717
        %6903 = vmatmul.mubr.f32.gmra.mrb[0].mxu0 %v6620
        %v6904 = vpop.f32.mrb[0].mxu0
        %v6905 = vadd.f32 0.0, %v6904
        %v6906 = vpop.f32.mrb[0].mxu0
        %6907 = vmatprep.mubr.f32.mxu0 %v6720
        %6908 = vmatmul.mubr.f32.gmra.mrb[0].mxu0 %v6622
        %v6909 = vpop.f32.mrb[0].mxu0
        %v6910 = vadd.f32 0.0, %v6909
        %v6911 = vpop.f32.mrb[0].mxu0
        %6912 = vmatprep.mubr.f32.mxu0 %v6723
        %6913 = vmatmul.mubr.f32.gmra.mrb[0].mxu0 %v6624
        %v6914 = vpop.f32.mrb[0].mxu0
        %v6915 = vadd.f32 0.0, %v6914
        %v6916 = vpop.f32.mrb[0].mxu0
        %6917 = vmatprep.mubr.f32.mxu0 %v6726
        %6918 = vmatmul.mubr.f32.gmra.mrb[0].mxu0 %v6626
        %v6919 = vpop.f32.mrb[0].mxu0
        %v6920 = vadd.f32 0.0, %v6919
        %v6921 = vpop.f32.mrb[0].mxu0
        %6922 = vmatprep.mubr.f32.mxu0 %v6729
        %6923 = vmatmul.mubr.f32.gmra.mrb[0].mxu0 %v6628
        %v6924 = vpop.f32.mrb[0].mxu0
        %v6925 = vadd.f32 0.0, %v6924
        %v6926 = vpop.f32.mrb[0].mxu0
        %6927 = vmatprep.mubr.f32.mxu0 %v6732
        %6928 = vmatmul.mubr.f32.gmra.mrb[0].mxu0 %v6630
        %v6929 = vpop.f32.mrb[0].mxu0
        %v6930 = vadd.f32 0.0, %v6929
        %v6931 = vpop.f32.mrb[0].mxu0
        %6932 = vmatprep.mubr.f32.mxu0 %v6735
        %6933 = vmatmul.mubr.f32.gmra.mrb[0].mxu0 %v6632
        %v6934 = vpop.f32.mrb[0].mxu0
        %v6935 = vadd.f32 0.0, %v6934
        %v6936 = vpop.f32.mrb[0].mxu0
        %6937 = vmatprep.mubr.f32.mxu0 %v6738
        %6938 = vmatmul.mubr.f32.gmra.mrb[0].mxu0 %v6634
        %v6939 = vpop.f32.mrb[0].mxu0
        %v6940 = vadd.f32 0.0, %v6939
        %v6941 = vpop.f32.mrb[0].mxu0
        %6942 = vmatprep.mubr.f32.mxu0 %v6741
        %6943 = vmatmul.mubr.f32.gmra.mrb[0].mxu0 %v6636
        %v6944 = vpop.f32.mrb[0].mxu0
        %v6945 = vadd.f32 0.0, %v6944
        %v6946 = vpop.f32.mrb[0].mxu0
        %6947 = vmatprep.mubr.f32.mxu0 %v6744
        %6948 = vmatmul.mubr.f32.gmra.mrb[0].mxu0 %v6638
        %v6949 = vpop.f32.mrb[0].mxu0
        %v6950 = vadd.f32 0.0, %v6949
        %v6951 = vpop.f32.mrb[0].mxu0
        %6952 = vmatprep.mubr.f32.mxu0 %v6747
        %6953 = vmatmul.mubr.f32.gmra.mrb[0].mxu0 %v6640
        %v6954 = vpop.f32.mrb[0].mxu0
        %v6955 = vadd.f32 0.0, %v6954
        %v6956 = vpop.f32.mrb[0].mxu0
        %6957 = vmatprep.mubr.f32.mxu0 %v6750
        %6958 = vmatmul.mubr.f32.gmra.mrb[0].mxu0 %v6642
        %v6959 = vpop.f32.mrb[0].mxu0
        %v6960 = vadd.f32 0.0, %v6959
        %v6961 = vpop.f32.mrb[0].mxu0
        %6962 = vmatprep.mubr.f32.mxu0 %v6753
        %6963 = vmatmul.mubr.f32.gmra.mrb[0].mxu0 %v6644
        %v6964 = vpop.f32.mrb[0].mxu0
        %v6965 = vadd.f32 0.0, %v6964
        %v6966 = vpop.f32.mrb[0].mxu0
        %6967 = vmatprep.mubr.f32.mxu0 %v6756
        %6968 = vmatmul.mubr.f32.gmra.mrb[0].mxu0 %v6646
        %v6969 = vpop.f32.mrb[0].mxu0
        %v6970 = vadd.f32 0.0, %v6969
        %v6971 = vpop.f32.mrb[0].mxu0
        %6972 = vmatprep.mubr.f32.mxu0 %v6759
        %6973 = vmatmul.mubr.f32.gmra.mrb[0].mxu0 %v6648
        %v6974 = vpop.f32.mrb[0].mxu0
        %v6975 = vadd.f32 0.0, %v6974
        %v6976 = vpop.f32.mrb[0].mxu0
        %6977 = vmatprep.mubr.f32.mxu0 %v6762
        %6978 = vmatmul.mubr.f32.gmra.mrb[0].mxu0 %v6650
        %v6979 = vpop.f32.mrb[0].mxu0
        %v6980 = vadd.f32 0.0, %v6979
        %v6981 = vpop.f32.mrb[0].mxu0
        %6982 = vmatprep.mubr.f32.mxu0 %v6765
        %6983 = vmatmul.mubr.f32.gmra.mrb[0].mxu0 %v6652
        %v6984 = vpop.f32.mrb[0].mxu0
        %v6985 = vadd.f32 0.0, %v6984
        %v6986 = vpop.f32.mrb[0].mxu0
        %6987 = vmatprep.mubr.f32.mxu0 %v6768
        %6988 = vmatmul.mubr.f32.gmra.mrb[0].mxu0 %v6654
        %v6989 = vpop.f32.mrb[0].mxu0
        %v6990 = vadd.f32 0.0, %v6989
        %v6991 = vpop.f32.mrb[0].mxu0
        %6992 = vdwg.mxu0
        %v6993 = vld [vmem:[#allocation2] sm:$0xff]
        %v6994 = vld [vmem:[#allocation2 + $0x8] sm:$0xff]
        %vm6995 = vcmask 924672
        %v6997 = vsel %vm6995, %v6994, 0
        %vm6999 = vcmask 1040384
        %v7001 = vsel %vm6999, %v6990, 0
        %7003 = vmatprep.subr.mxu0 0.0
        %7004 = vmatpush1.msra.mxu0 %v6840
        %7005 = vmatprep.subr.mxu0 0.0
        %7006 = vmatpush1.msra.mxu0 %v6845
        %7007 = vmatprep.subr.mxu0 0.0
        %7008 = vmatpush1.msra.mxu0 %v6850
        %7009 = vmatprep.subr.mxu0 0.0
        %7010 = vmatpush1.msra.mxu0 %v6855
        %7011 = vmatprep.subr.mxu0 0.0
        %7012 = vmatpush1.msra.mxu0 %v6860
        %7013 = vmatprep.subr.mxu0 0.0
        %7014 = vmatpush1.msra.mxu0 %v6865
        %7015 = vmatprep.subr.mxu0 0.0
        %7016 = vmatpush1.msra.mxu0 %v6870
        %7017 = vmatprep.subr.mxu0 0.0
        %7018 = vmatpush1.msra.mxu0 %v6875
        %7019 = vmatprep.subr.mxu0 0.0
        %7020 = vmatpush1.msra.mxu0 %v6880
        %7021 = vmatprep.subr.mxu0 0.0
        %7022 = vmatpush1.msra.mxu0 %v6885
        %7023 = vmatprep.subr.mxu0 0.0
        %7024 = vmatpush1.msra.mxu0 %v6890
        %7025 = vmatprep.subr.mxu0 0.0
        %7026 = vmatpush1.msra.mxu0 %v6895
        %7027 = vmatprep.subr.mxu0 0.0
        %7028 = vmatpush1.msra.mxu0 %v6900
        %7029 = vmatprep.subr.mxu0 0.0
        %7030 = vmatpush1.msra.mxu0 %v6905
        %7031 = vmatprep.subr.mxu0 0.0
        %7032 = vmatpush1.msra.mxu0 %v6910
        %7033 = vmatprep.subr.mxu0 0.0
        %7034 = vmatpush1.msra.mxu0 %v6915
        %7035 = vmatprep.subr.mxu0 0.0
        %7036 = vmatpush1.msra.mxu0 %v6920
        %7037 = vmatprep.subr.mxu0 0.0
        %7038 = vmatpush1.msra.mxu0 %v6925
        %7039 = vmatprep.subr.mxu0 0.0
        %7040 = vmatpush1.msra.mxu0 %v6930
        %7041 = vmatprep.subr.mxu0 0.0
        %7042 = vmatpush1.msra.mxu0 %v6935
        %7043 = vmatprep.subr.mxu0 0.0
        %7044 = vmatpush1.msra.mxu0 %v6940
        %7045 = vmatprep.subr.mxu0 0.0
        %7046 = vmatpush1.msra.mxu0 %v6945
        %7047 = vmatprep.subr.mxu0 0.0
        %7048 = vmatpush1.msra.mxu0 %v6950
        %7049 = vmatprep.subr.mxu0 0.0
        %7050 = vmatpush1.msra.mxu0 %v6955
        %7051 = vmatprep.subr.mxu0 0.0
        %7052 = vmatpush1.msra.mxu0 %v6960
        %7053 = vmatprep.subr.mxu0 0.0
        %7054 = vmatpush1.msra.mxu0 %v6965
        %7055 = vmatprep.subr.mxu0 0.0
        %7056 = vmatpush1.msra.mxu0 %v6970
        %7057 = vmatprep.subr.mxu0 0.0
        %7058 = vmatpush1.msra.mxu0 %v6975
        %7059 = vmatprep.subr.mxu0 0.0
        %7060 = vmatpush1.msra.mxu0 %v6980
        %7061 = vmatprep.subr.mxu0 0.0
        %7062 = vmatpush1.msra.mxu0 %v6985
        %7063 = vmatprep.subr.mxu0 0.0
        %7064 = vmatpush1.msra.mxu0 %v7001
        %7065 = vmatprep.subr.mxu0 0.0
        %7066 = vmatpush1.msra.mxu0 0.0
        %7067 = vmatprep.mubr.f32.mxu0 %v6997
        %7068 = vmatmul.mubr.f32.gmra.mrb[0].mxu0 %v6993
        %v7069 = vpop.f32.mrb[0].mxu0
        %v7070 = vadd.f32 0.0, %v7069
        %v7071 = vpop.f32.mrb[0].mxu0
        %7072 = vdwg.mxu0
        %v7073 = vld [vmem:[%s8] sm:$0xff]
        %v7074 = vld [vmem:[%s8 + $0x8] sm:$0xff]
        %v7075 = vld [vmem:[%s8 + $0x10] sm:$0xff]
        %v7076 = vld [vmem:[%s8 + $0x18] sm:$0xff]
        %v7077 = vld [vmem:[%s8 + $0x20] sm:$0xff]
        %v7078 = vld [vmem:[%s8 + $0x28] sm:$0xff]
        %v7079 = vld [vmem:[%s8 + $0x30] sm:$0xff]
        %v7080 = vld [vmem:[%s8 + $0x38] sm:$0xff]
        %v7081 = vld [vmem:[%s8 + $0x40] sm:$0xff]
        %v7082 = vld [vmem:[%s8 + $0x48] sm:$0xff]
        %s7083 = scalar_lea.vmem [#allocation2], 16
        %v7084 = vld [vmem:[%s7083] sm:$0xff]
        %v7085 = vld [vmem:[%s7083 + $0x8] sm:$0xff]
        %v7087 = vsel %vm6995, %v7085, 0
        %7089 = vmatprep.subr.mxu0 0.0
        %7090 = vmatpush1.msra.mxu0 %v6840
        %7091 = vmatprep.subr.mxu0 0.0
        %7092 = vmatpush1.msra.mxu0 %v6845
        %7093 = vmatprep.subr.mxu0 0.0
        %7094 = vmatpush1.msra.mxu0 %v6850
        %7095 = vmatprep.subr.mxu0 0.0
        %7096 = vmatpush1.msra.mxu0 %v6855
        %7097 = vmatprep.subr.mxu0 0.0
        %7098 = vmatpush1.msra.mxu0 %v6860
        %7099 = vmatprep.subr.mxu0 0.0
        %7100 = vmatpush1.msra.mxu0 %v6865
        %7101 = vmatprep.subr.mxu0 0.0
        %7102 = vmatpush1.msra.mxu0 %v6870
        %7103 = vmatprep.subr.mxu0 0.0
        %7104 = vmatpush1.msra.mxu0 %v6875
        %7105 = vmatprep.subr.mxu0 0.0
        %7106 = vmatpush1.msra.mxu0 %v6880
        %7107 = vmatprep.subr.mxu0 0.0
        %7108 = vmatpush1.msra.mxu0 %v6885
        %7109 = vmatprep.subr.mxu0 0.0
        %7110 = vmatpush1.msra.mxu0 %v6890
        %7111 = vmatprep.subr.mxu0 0.0
        %7112 = vmatpush1.msra.mxu0 %v6895
        %7113 = vmatprep.subr.mxu0 0.0
        %7114 = vmatpush1.msra.mxu0 %v6900
        %7115 = vmatprep.subr.mxu0 0.0
        %7116 = vmatpush1.msra.mxu0 %v6905
        %7117 = vmatprep.subr.mxu0 0.0
        %7118 = vmatpush1.msra.mxu0 %v6910
        %7119 = vmatprep.subr.mxu0 0.0
        %7120 = vmatpush1.msra.mxu0 %v6915
        %7121 = vmatprep.subr.mxu0 0.0
        %7122 = vmatpush1.msra.mxu0 %v6920
        %7123 = vmatprep.subr.mxu0 0.0
        %7124 = vmatpush1.msra.mxu0 %v6925
        %7125 = vmatprep.subr.mxu0 0.0
        %7126 = vmatpush1.msra.mxu0 %v6930
        %7127 = vmatprep.subr.mxu0 0.0
        %7128 = vmatpush1.msra.mxu0 %v6935
        %7129 = vmatprep.subr.mxu0 0.0
        %7130 = vmatpush1.msra.mxu0 %v6940
        %7131 = vmatprep.subr.mxu0 0.0
        %7132 = vmatpush1.msra.mxu0 %v6945
        %7133 = vmatprep.subr.mxu0 0.0
        %7134 = vmatpush1.msra.mxu0 %v6950
        %7135 = vmatprep.subr.mxu0 0.0
        %7136 = vmatpush1.msra.mxu0 %v6955
        %7137 = vmatprep.subr.mxu0 0.0
        %7138 = vmatpush1.msra.mxu0 %v6960
        %7139 = vmatprep.subr.mxu0 0.0
        %7140 = vmatpush1.msra.mxu0 %v6965
        %7141 = vmatprep.subr.mxu0 0.0
        %7142 = vmatpush1.msra.mxu0 %v6970
        %7143 = vmatprep.subr.mxu0 0.0
        %7144 = vmatpush1.msra.mxu0 %v6975
        %7145 = vmatprep.subr.mxu0 0.0
        %7146 = vmatpush1.msra.mxu0 %v6980
        %7147 = vmatprep.subr.mxu0 0.0
        %7148 = vmatpush1.msra.mxu0 %v6985
        %7149 = vmatprep.subr.mxu0 0.0
        %7150 = vmatpush1.msra.mxu0 %v7001
        %7151 = vmatprep.subr.mxu0 0.0
        %7152 = vmatpush1.msra.mxu0 0.0
        %7153 = vmatprep.mubr.f32.mxu0 %v7087
        %7154 = vmatmul.mubr.f32.gmra.mrb[0].mxu0 %v7084
        %v7155 = vpop.f32.mrb[0].mxu0
        %v7156 = vadd.f32 0.0, %v7155
        %v7157 = vpop.f32.mrb[0].mxu0
        %7158 = vdwg.mxu0
        %s7159 = scalar_lea.vmem %s8, 80
        %v7160 = vld [vmem:[%s7159] sm:$0xff]
        %v7161 = vld [vmem:[%s7159 + $0x8] sm:$0xff]
        %v7162 = vld [vmem:[%s7159 + $0x10] sm:$0xff]
        %v7163 = vld [vmem:[%s7159 + $0x18] sm:$0xff]
        %v7164 = vld [vmem:[%s7159 + $0x20] sm:$0xff]
        %v7165 = vld [vmem:[%s7159 + $0x28] sm:$0xff]
        %v7166 = vld [vmem:[%s7159 + $0x30] sm:$0xff]
        %v7167 = vld [vmem:[%s7159 + $0x38] sm:$0xff]
        %v7168 = vld [vmem:[%s7159 + $0x40] sm:$0xff]
        %v7169 = vld [vmem:[%s7159 + $0x48] sm:$0xff]
        %vm7170 = vcmask 654336
        %v7172 = vsel %vm7170, %v7156, 0
        %7174 = vmatprep.subr.mxu0 0.0
        %7175 = vmatpush1.msra.mxu0 %v7160
        %7176 = vmatprep.subr.mxu0 0.0
        %7177 = vmatpush1.msra.mxu0 %v7161
        %7178 = vmatprep.subr.mxu0 0.0
        %7179 = vmatpush1.msra.mxu0 %v7162
        %7180 = vmatprep.subr.mxu0 0.0
        %7181 = vmatpush1.msra.mxu0 %v7163
        %7182 = vmatprep.subr.mxu0 0.0
        %7183 = vmatpush1.msra.mxu0 %v7164
        %7184 = vmatprep.subr.mxu0 0.0
        %7185 = vmatpush1.msra.mxu0 %v7165
        %7186 = vmatprep.subr.mxu0 0.0
        %7187 = vmatpush1.msra.mxu0 %v7166
        %7188 = vmatprep.subr.mxu0 0.0
        %7189 = vmatpush1.msra.mxu0 %v7167
        %7190 = vmatprep.subr.mxu0 0.0
        %7191 = vmatpush1.msra.mxu0 %v7168
        %7192 = vmatprep.subr.mxu0 0.0
        %7193 = vmatpush1.msra.mxu0 %v7169
        %7194 = vmatprep.subr.mxu0 0.0
        %7195 = vmatpush1.msra.mxu0 0.0
        %7196 = vmatprep.subr.mxu0 0.0
        %7197 = vmatpush1.msra.mxu0 0.0
        %7198 = vmatprep.subr.mxu0 0.0
        %7199 = vmatpush1.msra.mxu0 0.0
        %7200 = vmatprep.subr.mxu0 0.0
        %7201 = vmatpush1.msra.mxu0 0.0
        %7202 = vmatprep.subr.mxu0 0.0
        %7203 = vmatpush1.msra.mxu0 0.0
        %7204 = vmatprep.subr.mxu0 0.0
        %7205 = vmatpush1.msra.mxu0 0.0
        %7206 = vmatprep.subr.mxu0 0.0
        %7207 = vmatpush1.msra.mxu0 0.0
        %7208 = vmatprep.subr.mxu0 0.0
        %7209 = vmatpush1.msra.mxu0 0.0
        %7210 = vmatprep.subr.mxu0 0.0
        %7211 = vmatpush1.msra.mxu0 0.0
        %7212 = vmatprep.subr.mxu0 0.0
        %7213 = vmatpush1.msra.mxu0 0.0
        %7214 = vmatprep.subr.mxu0 0.0
        %7215 = vmatpush1.msra.mxu0 0.0
        %7216 = vmatprep.subr.mxu0 0.0
        %7217 = vmatpush1.msra.mxu0 0.0
        %7218 = vmatprep.subr.mxu0 0.0
        %7219 = vmatpush1.msra.mxu0 0.0
        %7220 = vmatprep.subr.mxu0 0.0
        %7221 = vmatpush1.msra.mxu0 0.0
        %7222 = vmatprep.subr.mxu0 0.0
        %7223 = vmatpush1.msra.mxu0 0.0
        %7224 = vmatprep.subr.mxu0 0.0
        %7225 = vmatpush1.msra.mxu0 0.0
        %7226 = vmatprep.subr.mxu0 0.0
        %7227 = vmatpush1.msra.mxu0 0.0
        %7228 = vmatprep.subr.mxu0 0.0
        %7229 = vmatpush1.msra.mxu0 0.0
        %7230 = vmatprep.subr.mxu0 0.0
        %7231 = vmatpush1.msra.mxu0 0.0
        %7232 = vmatprep.subr.mxu0 0.0
        %7233 = vmatpush1.msra.mxu0 0.0
        %7234 = vmatprep.subr.mxu0 0.0
        %7235 = vmatpush1.msra.mxu0 0.0
        %7236 = vmatprep.subr.mxu0 0.0
        %7237 = vmatpush1.msra.mxu0 0.0
        %7238 = vmatprep.mubr.f32.mxu0 0.0
        %7239 = vmatmul.mubr.f32.gmra.mrb[0].mxu0 %v7172
        %v7240 = vpop.f32.mrb[0].mxu0
        %v7241 = vadd.f32 0.0, %v7240
        %v7242 = vpop.f32.mrb[0].mxu0
        %7243 = vdwg.mxu0
        %v7245 = vsel %vm7170, %v7070, 0
        %7247 = vmatprep.subr.mxu0 0.0
        %7248 = vmatpush1.msra.mxu0 %v7073
        %7249 = vmatprep.subr.mxu0 0.0
        %7250 = vmatpush1.msra.mxu0 %v7074
        %7251 = vmatprep.subr.mxu0 0.0
        %7252 = vmatpush1.msra.mxu0 %v7075
        %7253 = vmatprep.subr.mxu0 0.0
        %7254 = vmatpush1.msra.mxu0 %v7076
        %7255 = vmatprep.subr.mxu0 0.0
        %7256 = vmatpush1.msra.mxu0 %v7077
        %7257 = vmatprep.subr.mxu0 0.0
        %7258 = vmatpush1.msra.mxu0 %v7078
        %7259 = vmatprep.subr.mxu0 0.0
        %7260 = vmatpush1.msra.mxu0 %v7079
        %7261 = vmatprep.subr.mxu0 0.0
        %7262 = vmatpush1.msra.mxu0 %v7080
        %7263 = vmatprep.subr.mxu0 0.0
        %7264 = vmatpush1.msra.mxu0 %v7081
        %7265 = vmatprep.subr.mxu0 0.0
        %7266 = vmatpush1.msra.mxu0 %v7082
        %7267 = vmatprep.subr.mxu0 0.0
        %7268 = vmatpush1.msra.mxu0 0.0
        %7269 = vmatprep.subr.mxu0 0.0
        %7270 = vmatpush1.msra.mxu0 0.0
        %7271 = vmatprep.subr.mxu0 0.0
        %7272 = vmatpush1.msra.mxu0 0.0
        %7273 = vmatprep.subr.mxu0 0.0
        %7274 = vmatpush1.msra.mxu0 0.0
        %7275 = vmatprep.subr.mxu0 0.0
        %7276 = vmatpush1.msra.mxu0 0.0
        %7277 = vmatprep.subr.mxu0 0.0
        %7278 = vmatpush1.msra.mxu0 0.0
        %7279 = vmatprep.subr.mxu0 0.0
        %7280 = vmatpush1.msra.mxu0 0.0
        %7281 = vmatprep.subr.mxu0 0.0
        %7282 = vmatpush1.msra.mxu0 0.0
        %7283 = vmatprep.subr.mxu0 0.0
        %7284 = vmatpush1.msra.mxu0 0.0
        %7285 = vmatprep.subr.mxu0 0.0
        %7286 = vmatpush1.msra.mxu0 0.0
        %7287 = vmatprep.subr.mxu0 0.0
        %7288 = vmatpush1.msra.mxu0 0.0
        %7289 = vmatprep.subr.mxu0 0.0
        %7290 = vmatpush1.msra.mxu0 0.0
        %7291 = vmatprep.subr.mxu0 0.0
        %7292 = vmatpush1.msra.mxu0 0.0
        %7293 = vmatprep.subr.mxu0 0.0
        %7294 = vmatpush1.msra.mxu0 0.0
        %7295 = vmatprep.subr.mxu0 0.0
        %7296 = vmatpush1.msra.mxu0 0.0
        %7297 = vmatprep.subr.mxu0 0.0
        %7298 = vmatpush1.msra.mxu0 0.0
        %7299 = vmatprep.subr.mxu0 0.0
        %7300 = vmatpush1.msra.mxu0 0.0
        %7301 = vmatprep.subr.mxu0 0.0
        %7302 = vmatpush1.msra.mxu0 0.0
        %7303 = vmatprep.subr.mxu0 0.0
        %7304 = vmatpush1.msra.mxu0 0.0
        %7305 = vmatprep.subr.mxu0 0.0
        %7306 = vmatpush1.msra.mxu0 0.0
        %7307 = vmatprep.subr.mxu0 0.0
        %7308 = vmatpush1.msra.mxu0 0.0
        %7309 = vmatprep.subr.mxu0 0.0
        %7310 = vmatpush1.msra.mxu0 0.0
        %7311 = vmatprep.mubr.f32.mxu0 0.0
        %7312 = vmatmul.mubr.f32.gmra.mrb[0].mxu0 %v7245
        %v7313 = vpop.f32.mrb[0].mxu0
        %v7314 = vadd.f32 %v7241, %v7313
        %v7315 = vpop.f32.mrb[0].mxu0
        %7316 = vdwg.mxu0
        %s7317 = scalar_lea.vmem [#allocation2], 32
        %v7318 = vld [vmem:[%s7317] sm:$0xff]
        %v7319 = vld [vmem:[%s7317 + $0x8] sm:$0xff]
        %v7321 = vsel %vm6995, %v7319, 0
        %7323 = vmatprep.subr.mxu0 0.0
        %7324 = vmatpush1.msra.mxu0 %v6840
        %7325 = vmatprep.subr.mxu0 0.0
        %7326 = vmatpush1.msra.mxu0 %v6845
        %7327 = vmatprep.subr.mxu0 0.0
        %7328 = vmatpush1.msra.mxu0 %v6850
        %7329 = vmatprep.subr.mxu0 0.0
        %7330 = vmatpush1.msra.mxu0 %v6855
        %7331 = vmatprep.subr.mxu0 0.0
        %7332 = vmatpush1.msra.mxu0 %v6860
        %7333 = vmatprep.subr.mxu0 0.0
        %7334 = vmatpush1.msra.mxu0 %v6865
        %7335 = vmatprep.subr.mxu0 0.0
        %7336 = vmatpush1.msra.mxu0 %v6870
        %7337 = vmatprep.subr.mxu0 0.0
        %7338 = vmatpush1.msra.mxu0 %v6875
        %7339 = vmatprep.subr.mxu0 0.0
        %7340 = vmatpush1.msra.mxu0 %v6880
        %7341 = vmatprep.subr.mxu0 0.0
        %7342 = vmatpush1.msra.mxu0 %v6885
        %7343 = vmatprep.subr.mxu0 0.0
        %7344 = vmatpush1.msra.mxu0 %v6890
        %7345 = vmatprep.subr.mxu0 0.0
        %7346 = vmatpush1.msra.mxu0 %v6895
        %7347 = vmatprep.subr.mxu0 0.0
        %7348 = vmatpush1.msra.mxu0 %v6900
        %7349 = vmatprep.subr.mxu0 0.0
        %7350 = vmatpush1.msra.mxu0 %v6905
        %7351 = vmatprep.subr.mxu0 0.0
        %7352 = vmatpush1.msra.mxu0 %v6910
        %7353 = vmatprep.subr.mxu0 0.0
        %7354 = vmatpush1.msra.mxu0 %v6915
        %7355 = vmatprep.subr.mxu0 0.0
        %7356 = vmatpush1.msra.mxu0 %v6920
        %7357 = vmatprep.subr.mxu0 0.0
        %7358 = vmatpush1.msra.mxu0 %v6925
        %7359 = vmatprep.subr.mxu0 0.0
        %7360 = vmatpush1.msra.mxu0 %v6930
        %7361 = vmatprep.subr.mxu0 0.0
        %7362 = vmatpush1.msra.mxu0 %v6935
        %7363 = vmatprep.subr.mxu0 0.0
        %7364 = vmatpush1.msra.mxu0 %v6940
        %7365 = vmatprep.subr.mxu0 0.0
        %7366 = vmatpush1.msra.mxu0 %v6945
        %7367 = vmatprep.subr.mxu0 0.0
        %7368 = vmatpush1.msra.mxu0 %v6950
        %7369 = vmatprep.subr.mxu0 0.0
        %7370 = vmatpush1.msra.mxu0 %v6955
        %7371 = vmatprep.subr.mxu0 0.0
        %7372 = vmatpush1.msra.mxu0 %v6960
        %7373 = vmatprep.subr.mxu0 0.0
        %7374 = vmatpush1.msra.mxu0 %v6965
        %7375 = vmatprep.subr.mxu0 0.0
        %7376 = vmatpush1.msra.mxu0 %v6970
        %7377 = vmatprep.subr.mxu0 0.0
        %7378 = vmatpush1.msra.mxu0 %v6975
        %7379 = vmatprep.subr.mxu0 0.0
        %7380 = vmatpush1.msra.mxu0 %v6980
        %7381 = vmatprep.subr.mxu0 0.0
        %7382 = vmatpush1.msra.mxu0 %v6985
        %7383 = vmatprep.subr.mxu0 0.0
        %7384 = vmatpush1.msra.mxu0 %v7001
        %7385 = vmatprep.subr.mxu0 0.0
        %7386 = vmatpush1.msra.mxu0 0.0
        %7387 = vmatprep.mubr.f32.mxu0 %v7321
        %7388 = vmatmul.mubr.f32.gmra.mrb[0].mxu0 %v7318
        %v7389 = vpop.f32.mrb[0].mxu0
        %v7390 = vadd.f32 0.0, %v7389
        %v7391 = vpop.f32.mrb[0].mxu0
        %7392 = vdwg.mxu0
        %s7393 = scalar_lea.vmem %s8, 160
        %v7394 = vld [vmem:[%s7393] sm:$0xff]
        %v7395 = vld [vmem:[%s7393 + $0x8] sm:$0xff]
        %v7396 = vld [vmem:[%s7393 + $0x10] sm:$0xff]
        %v7397 = vld [vmem:[%s7393 + $0x18] sm:$0xff]
        %v7398 = vld [vmem:[%s7393 + $0x20] sm:$0xff]
        %v7399 = vld [vmem:[%s7393 + $0x28] sm:$0xff]
        %v7400 = vld [vmem:[%s7393 + $0x30] sm:$0xff]
        %v7401 = vld [vmem:[%s7393 + $0x38] sm:$0xff]
        %v7402 = vld [vmem:[%s7393 + $0x40] sm:$0xff]
        %v7403 = vld [vmem:[%s7393 + $0x48] sm:$0xff]
        %v7405 = vsel %vm7170, %v7390, 0
        %7407 = vmatprep.subr.mxu0 0.0
        %7408 = vmatpush1.msra.mxu0 %v7394
        %7409 = vmatprep.subr.mxu0 0.0
        %7410 = vmatpush1.msra.mxu0 %v7395
        %7411 = vmatprep.subr.mxu0 0.0
        %7412 = vmatpush1.msra.mxu0 %v7396
        %7413 = vmatprep.subr.mxu0 0.0
        %7414 = vmatpush1.msra.mxu0 %v7397
        %7415 = vmatprep.subr.mxu0 0.0
        %7416 = vmatpush1.msra.mxu0 %v7398
        %7417 = vmatprep.subr.mxu0 0.0
        %7418 = vmatpush1.msra.mxu0 %v7399
        %7419 = vmatprep.subr.mxu0 0.0
        %7420 = vmatpush1.msra.mxu0 %v7400
        %7421 = vmatprep.subr.mxu0 0.0
        %7422 = vmatpush1.msra.mxu0 %v7401
        %7423 = vmatprep.subr.mxu0 0.0
        %7424 = vmatpush1.msra.mxu0 %v7402
        %7425 = vmatprep.subr.mxu0 0.0
        %7426 = vmatpush1.msra.mxu0 %v7403
        %7427 = vmatprep.subr.mxu0 0.0
        %7428 = vmatpush1.msra.mxu0 0.0
        %7429 = vmatprep.subr.mxu0 0.0
        %7430 = vmatpush1.msra.mxu0 0.0
        %7431 = vmatprep.subr.mxu0 0.0
        %7432 = vmatpush1.msra.mxu0 0.0
        %7433 = vmatprep.subr.mxu0 0.0
        %7434 = vmatpush1.msra.mxu0 0.0
        %7435 = vmatprep.subr.mxu0 0.0
        %7436 = vmatpush1.msra.mxu0 0.0
        %7437 = vmatprep.subr.mxu0 0.0
        %7438 = vmatpush1.msra.mxu0 0.0
        %7439 = vmatprep.subr.mxu0 0.0
        %7440 = vmatpush1.msra.mxu0 0.0
        %7441 = vmatprep.subr.mxu0 0.0
        %7442 = vmatpush1.msra.mxu0 0.0
        %7443 = vmatprep.subr.mxu0 0.0
        %7444 = vmatpush1.msra.mxu0 0.0
        %7445 = vmatprep.subr.mxu0 0.0
        %7446 = vmatpush1.msra.mxu0 0.0
        %7447 = vmatprep.subr.mxu0 0.0
        %7448 = vmatpush1.msra.mxu0 0.0
        %7449 = vmatprep.subr.mxu0 0.0
        %7450 = vmatpush1.msra.mxu0 0.0
        %7451 = vmatprep.subr.mxu0 0.0
        %7452 = vmatpush1.msra.mxu0 0.0
        %7453 = vmatprep.subr.mxu0 0.0
        %7454 = vmatpush1.msra.mxu0 0.0
        %7455 = vmatprep.subr.mxu0 0.0
        %7456 = vmatpush1.msra.mxu0 0.0
        %7457 = vmatprep.subr.mxu0 0.0
        %7458 = vmatpush1.msra.mxu0 0.0
        %7459 = vmatprep.subr.mxu0 0.0
        %7460 = vmatpush1.msra.mxu0 0.0
        %7461 = vmatprep.subr.mxu0 0.0
        %7462 = vmatpush1.msra.mxu0 0.0
        %7463 = vmatprep.subr.mxu0 0.0
        %7464 = vmatpush1.msra.mxu0 0.0
        %7465 = vmatprep.subr.mxu0 0.0
        %7466 = vmatpush1.msra.mxu0 0.0
        %7467 = vmatprep.subr.mxu0 0.0
        %7468 = vmatpush1.msra.mxu0 0.0
        %7469 = vmatprep.subr.mxu0 0.0
        %7470 = vmatpush1.msra.mxu0 0.0
        %7471 = vmatprep.mubr.f32.mxu0 0.0
        %7472 = vmatmul.mubr.f32.gmra.mrb[0].mxu0 %v7405
        %v7473 = vpop.f32.mrb[0].mxu0
        %v7474 = vadd.f32 0.0, %v7473
        %v7475 = vpop.f32.mrb[0].mxu0
        %7476 = vdwg.mxu0
        %v7477 = vadd.f32 %v7314, %v7474
        %s7478 = scalar_lea.vmem [#allocation2], 48
        %v7479 = vld [vmem:[%s7478] sm:$0xff]
        %v7480 = vld [vmem:[%s7478 + $0x8] sm:$0xff]
        %v7482 = vsel %vm6995, %v7480, 0
        %7484 = vmatprep.subr.mxu0 0.0
        %7485 = vmatpush1.msra.mxu0 %v6840
        %7486 = vmatprep.subr.mxu0 0.0
        %7487 = vmatpush1.msra.mxu0 %v6845
        %7488 = vmatprep.subr.mxu0 0.0
        %7489 = vmatpush1.msra.mxu0 %v6850
        %7490 = vmatprep.subr.mxu0 0.0
        %7491 = vmatpush1.msra.mxu0 %v6855
        %7492 = vmatprep.subr.mxu0 0.0
        %7493 = vmatpush1.msra.mxu0 %v6860
        %7494 = vmatprep.subr.mxu0 0.0
        %7495 = vmatpush1.msra.mxu0 %v6865
        %7496 = vmatprep.subr.mxu0 0.0
        %7497 = vmatpush1.msra.mxu0 %v6870
        %7498 = vmatprep.subr.mxu0 0.0
        %7499 = vmatpush1.msra.mxu0 %v6875
        %7500 = vmatprep.subr.mxu0 0.0
        %7501 = vmatpush1.msra.mxu0 %v6880
        %7502 = vmatprep.subr.mxu0 0.0
        %7503 = vmatpush1.msra.mxu0 %v6885
        %7504 = vmatprep.subr.mxu0 0.0
        %7505 = vmatpush1.msra.mxu0 %v6890
        %7506 = vmatprep.subr.mxu0 0.0
        %7507 = vmatpush1.msra.mxu0 %v6895
        %7508 = vmatprep.subr.mxu0 0.0
        %7509 = vmatpush1.msra.mxu0 %v6900
        %7510 = vmatprep.subr.mxu0 0.0
        %7511 = vmatpush1.msra.mxu0 %v6905
        %7512 = vmatprep.subr.mxu0 0.0
        %7513 = vmatpush1.msra.mxu0 %v6910
        %7514 = vmatprep.subr.mxu0 0.0
        %7515 = vmatpush1.msra.mxu0 %v6915
        %7516 = vmatprep.subr.mxu0 0.0
        %7517 = vmatpush1.msra.mxu0 %v6920
        %7518 = vmatprep.subr.mxu0 0.0
        %7519 = vmatpush1.msra.mxu0 %v6925
        %7520 = vmatprep.subr.mxu0 0.0
        %7521 = vmatpush1.msra.mxu0 %v6930
        %7522 = vmatprep.subr.mxu0 0.0
        %7523 = vmatpush1.msra.mxu0 %v6935
        %7524 = vmatprep.subr.mxu0 0.0
        %7525 = vmatpush1.msra.mxu0 %v6940
        %7526 = vmatprep.subr.mxu0 0.0
        %7527 = vmatpush1.msra.mxu0 %v6945
        %7528 = vmatprep.subr.mxu0 0.0
        %7529 = vmatpush1.msra.mxu0 %v6950
        %7530 = vmatprep.subr.mxu0 0.0
        %7531 = vmatpush1.msra.mxu0 %v6955
        %7532 = vmatprep.subr.mxu0 0.0
        %7533 = vmatpush1.msra.mxu0 %v6960
        %7534 = vmatprep.subr.mxu0 0.0
        %7535 = vmatpush1.msra.mxu0 %v6965
        %7536 = vmatprep.subr.mxu0 0.0
        %7537 = vmatpush1.msra.mxu0 %v6970
        %7538 = vmatprep.subr.mxu0 0.0
        %7539 = vmatpush1.msra.mxu0 %v6975
        %7540 = vmatprep.subr.mxu0 0.0
        %7541 = vmatpush1.msra.mxu0 %v6980
        %7542 = vmatprep.subr.mxu0 0.0
        %7543 = vmatpush1.msra.mxu0 %v6985
        %7544 = vmatprep.subr.mxu0 0.0
        %7545 = vmatpush1.msra.mxu0 %v7001
        %7546 = vmatprep.subr.mxu0 0.0
        %7547 = vmatpush1.msra.mxu0 0.0
        %7548 = vmatprep.mubr.f32.mxu0 %v7482
        %7549 = vmatmul.mubr.f32.gmra.mrb[0].mxu0 %v7479
        %v7550 = vpop.f32.mrb[0].mxu0
        %v7551 = vadd.f32 0.0, %v7550
        %v7552 = vpop.f32.mrb[0].mxu0
        %7553 = vdwg.mxu0
        %s7554 = scalar_lea.vmem %s8, 240
        %v7555 = vld [vmem:[%s7554] sm:$0xff]
        %v7556 = vld [vmem:[%s7554 + $0x8] sm:$0xff]
        %v7557 = vld [vmem:[%s7554 + $0x10] sm:$0xff]
        %v7558 = vld [vmem:[%s7554 + $0x18] sm:$0xff]
        %v7559 = vld [vmem:[%s7554 + $0x20] sm:$0xff]
        %v7560 = vld [vmem:[%s7554 + $0x28] sm:$0xff]
        %v7561 = vld [vmem:[%s7554 + $0x30] sm:$0xff]
        %v7562 = vld [vmem:[%s7554 + $0x38] sm:$0xff]
        %v7563 = vld [vmem:[%s7554 + $0x40] sm:$0xff]
        %v7564 = vld [vmem:[%s7554 + $0x48] sm:$0xff]
        %v7566 = vsel %vm7170, %v7551, 0
        %7568 = vmatprep.subr.mxu0 0.0
        %7569 = vmatpush1.msra.mxu0 %v7555
        %7570 = vmatprep.subr.mxu0 0.0
        %7571 = vmatpush1.msra.mxu0 %v7556
        %7572 = vmatprep.subr.mxu0 0.0
        %7573 = vmatpush1.msra.mxu0 %v7557
        %7574 = vmatprep.subr.mxu0 0.0
        %7575 = vmatpush1.msra.mxu0 %v7558
        %7576 = vmatprep.subr.mxu0 0.0
        %7577 = vmatpush1.msra.mxu0 %v7559
        %7578 = vmatprep.subr.mxu0 0.0
        %7579 = vmatpush1.msra.mxu0 %v7560
        %7580 = vmatprep.subr.mxu0 0.0
        %7581 = vmatpush1.msra.mxu0 %v7561
        %7582 = vmatprep.subr.mxu0 0.0
        %7583 = vmatpush1.msra.mxu0 %v7562
        %7584 = vmatprep.subr.mxu0 0.0
        %7585 = vmatpush1.msra.mxu0 %v7563
        %7586 = vmatprep.subr.mxu0 0.0
        %7587 = vmatpush1.msra.mxu0 %v7564
        %7588 = vmatprep.subr.mxu0 0.0
        %7589 = vmatpush1.msra.mxu0 0.0
        %7590 = vmatprep.subr.mxu0 0.0
        %7591 = vmatpush1.msra.mxu0 0.0
        %7592 = vmatprep.subr.mxu0 0.0
        %7593 = vmatpush1.msra.mxu0 0.0
        %7594 = vmatprep.subr.mxu0 0.0
        %7595 = vmatpush1.msra.mxu0 0.0
        %7596 = vmatprep.subr.mxu0 0.0
        %7597 = vmatpush1.msra.mxu0 0.0
        %7598 = vmatprep.subr.mxu0 0.0
        %7599 = vmatpush1.msra.mxu0 0.0
        %7600 = vmatprep.subr.mxu0 0.0
        %7601 = vmatpush1.msra.mxu0 0.0
        %7602 = vmatprep.subr.mxu0 0.0
        %7603 = vmatpush1.msra.mxu0 0.0
        %7604 = vmatprep.subr.mxu0 0.0
        %7605 = vmatpush1.msra.mxu0 0.0
        %7606 = vmatprep.subr.mxu0 0.0
        %7607 = vmatpush1.msra.mxu0 0.0
        %7608 = vmatprep.subr.mxu0 0.0
        %7609 = vmatpush1.msra.mxu0 0.0
        %7610 = vmatprep.subr.mxu0 0.0
        %7611 = vmatpush1.msra.mxu0 0.0
        %7612 = vmatprep.subr.mxu0 0.0
        %7613 = vmatpush1.msra.mxu0 0.0
        %7614 = vmatprep.subr.mxu0 0.0
        %7615 = vmatpush1.msra.mxu0 0.0
        %7616 = vmatprep.subr.mxu0 0.0
        %7617 = vmatpush1.msra.mxu0 0.0
        %7618 = vmatprep.subr.mxu0 0.0
        %7619 = vmatpush1.msra.mxu0 0.0
        %7620 = vmatprep.subr.mxu0 0.0
        %7621 = vmatpush1.msra.mxu0 0.0
        %7622 = vmatprep.subr.mxu0 0.0
        %7623 = vmatpush1.msra.mxu0 0.0
        %7624 = vmatprep.subr.mxu0 0.0
        %7625 = vmatpush1.msra.mxu0 0.0
        %7626 = vmatprep.subr.mxu0 0.0
        %7627 = vmatpush1.msra.mxu0 0.0
        %7628 = vmatprep.subr.mxu0 0.0
        %7629 = vmatpush1.msra.mxu0 0.0
        %7630 = vmatprep.subr.mxu0 0.0
        %7631 = vmatpush1.msra.mxu0 0.0
        %7632 = vmatprep.mubr.f32.mxu0 0.0
        %7633 = vmatmul.mubr.f32.gmra.mrb[0].mxu0 %v7566
        %v7634 = vpop.f32.mrb[0].mxu0
        %v7635 = vadd.f32 0.0, %v7634
        %v7636 = vpop.f32.mrb[0].mxu0
        %7637 = vdwg.mxu0
        %v7638 = vadd.f32 %v7477, %v7635
        %s7639 = scalar_lea.vmem [#allocation2], 64
        %v7640 = vld [vmem:[%s7639] sm:$0xff]
        %v7641 = vld [vmem:[%s7639 + $0x8] sm:$0xff]
        %v7643 = vsel %vm6995, %v7641, 0
        %7645 = vmatprep.subr.mxu0 0.0
        %7646 = vmatpush1.msra.mxu0 %v6840
        %7647 = vmatprep.subr.mxu0 0.0
        %7648 = vmatpush1.msra.mxu0 %v6845
        %7649 = vmatprep.subr.mxu0 0.0
        %7650 = vmatpush1.msra.mxu0 %v6850
        %7651 = vmatprep.subr.mxu0 0.0
        %7652 = vmatpush1.msra.mxu0 %v6855
        %7653 = vmatprep.subr.mxu0 0.0
        %7654 = vmatpush1.msra.mxu0 %v6860
        %7655 = vmatprep.subr.mxu0 0.0
        %7656 = vmatpush1.msra.mxu0 %v6865
        %7657 = vmatprep.subr.mxu0 0.0
        %7658 = vmatpush1.msra.mxu0 %v6870
        %7659 = vmatprep.subr.mxu0 0.0
        %7660 = vmatpush1.msra.mxu0 %v6875
        %7661 = vmatprep.subr.mxu0 0.0
        %7662 = vmatpush1.msra.mxu0 %v6880
        %7663 = vmatprep.subr.mxu0 0.0
        %7664 = vmatpush1.msra.mxu0 %v6885
        %7665 = vmatprep.subr.mxu0 0.0
        %7666 = vmatpush1.msra.mxu0 %v6890
        %7667 = vmatprep.subr.mxu0 0.0
        %7668 = vmatpush1.msra.mxu0 %v6895
        %7669 = vmatprep.subr.mxu0 0.0
        %7670 = vmatpush1.msra.mxu0 %v6900
        %7671 = vmatprep.subr.mxu0 0.0
        %7672 = vmatpush1.msra.mxu0 %v6905
        %7673 = vmatprep.subr.mxu0 0.0
        %7674 = vmatpush1.msra.mxu0 %v6910
        %7675 = vmatprep.subr.mxu0 0.0
        %7676 = vmatpush1.msra.mxu0 %v6915
        %7677 = vmatprep.subr.mxu0 0.0
        %7678 = vmatpush1.msra.mxu0 %v6920
        %7679 = vmatprep.subr.mxu0 0.0
        %7680 = vmatpush1.msra.mxu0 %v6925
        %7681 = vmatprep.subr.mxu0 0.0
        %7682 = vmatpush1.msra.mxu0 %v6930
        %7683 = vmatprep.subr.mxu0 0.0
        %7684 = vmatpush1.msra.mxu0 %v6935
        %7685 = vmatprep.subr.mxu0 0.0
        %7686 = vmatpush1.msra.mxu0 %v6940
        %7687 = vmatprep.subr.mxu0 0.0
        %7688 = vmatpush1.msra.mxu0 %v6945
        %7689 = vmatprep.subr.mxu0 0.0
        %7690 = vmatpush1.msra.mxu0 %v6950
        %7691 = vmatprep.subr.mxu0 0.0
        %7692 = vmatpush1.msra.mxu0 %v6955
        %7693 = vmatprep.subr.mxu0 0.0
        %7694 = vmatpush1.msra.mxu0 %v6960
        %7695 = vmatprep.subr.mxu0 0.0
        %7696 = vmatpush1.msra.mxu0 %v6965
        %7697 = vmatprep.subr.mxu0 0.0
        %7698 = vmatpush1.msra.mxu0 %v6970
        %7699 = vmatprep.subr.mxu0 0.0
        %7700 = vmatpush1.msra.mxu0 %v6975
        %7701 = vmatprep.subr.mxu0 0.0
        %7702 = vmatpush1.msra.mxu0 %v6980
        %7703 = vmatprep.subr.mxu0 0.0
        %7704 = vmatpush1.msra.mxu0 %v6985
        %7705 = vmatprep.subr.mxu0 0.0
        %7706 = vmatpush1.msra.mxu0 %v7001
        %7707 = vmatprep.subr.mxu0 0.0
        %7708 = vmatpush1.msra.mxu0 0.0
        %7709 = vmatprep.mubr.f32.mxu0 %v7643
        %7710 = vmatmul.mubr.f32.gmra.mrb[0].mxu0 %v7640
        %v7711 = vpop.f32.mrb[0].mxu0
        %v7712 = vadd.f32 0.0, %v7711
        %v7713 = vpop.f32.mrb[0].mxu0
        %7714 = vdwg.mxu0
        %s7715 = scalar_lea.vmem %s8, 320
        %v7716 = vld [vmem:[%s7715] sm:$0xff]
        %v7717 = vld [vmem:[%s7715 + $0x8] sm:$0xff]
        %v7718 = vld [vmem:[%s7715 + $0x10] sm:$0xff]
        %v7719 = vld [vmem:[%s7715 + $0x18] sm:$0xff]
        %v7720 = vld [vmem:[%s7715 + $0x20] sm:$0xff]
        %v7721 = vld [vmem:[%s7715 + $0x28] sm:$0xff]
        %v7722 = vld [vmem:[%s7715 + $0x30] sm:$0xff]
        %v7723 = vld [vmem:[%s7715 + $0x38] sm:$0xff]
        %v7724 = vld [vmem:[%s7715 + $0x40] sm:$0xff]
        %v7725 = vld [vmem:[%s7715 + $0x48] sm:$0xff]
        %v7727 = vsel %vm7170, %v7712, 0
        %7729 = vmatprep.subr.mxu0 0.0
        %7730 = vmatpush1.msra.mxu0 %v7716
        %7731 = vmatprep.subr.mxu0 0.0
        %7732 = vmatpush1.msra.mxu0 %v7717
        %7733 = vmatprep.subr.mxu0 0.0
        %7734 = vmatpush1.msra.mxu0 %v7718
        %7735 = vmatprep.subr.mxu0 0.0
        %7736 = vmatpush1.msra.mxu0 %v7719
        %7737 = vmatprep.subr.mxu0 0.0
        %7738 = vmatpush1.msra.mxu0 %v7720
        %7739 = vmatprep.subr.mxu0 0.0
        %7740 = vmatpush1.msra.mxu0 %v7721
        %7741 = vmatprep.subr.mxu0 0.0
        %7742 = vmatpush1.msra.mxu0 %v7722
        %7743 = vmatprep.subr.mxu0 0.0
        %7744 = vmatpush1.msra.mxu0 %v7723
        %7745 = vmatprep.subr.mxu0 0.0
        %7746 = vmatpush1.msra.mxu0 %v7724
        %7747 = vmatprep.subr.mxu0 0.0
        %7748 = vmatpush1.msra.mxu0 %v7725
        %7749 = vmatprep.subr.mxu0 0.0
        %7750 = vmatpush1.msra.mxu0 0.0
        %7751 = vmatprep.subr.mxu0 0.0
        %7752 = vmatpush1.msra.mxu0 0.0
        %7753 = vmatprep.subr.mxu0 0.0
        %7754 = vmatpush1.msra.mxu0 0.0
        %7755 = vmatprep.subr.mxu0 0.0
        %7756 = vmatpush1.msra.mxu0 0.0
        %7757 = vmatprep.subr.mxu0 0.0
        %7758 = vmatpush1.msra.mxu0 0.0
        %7759 = vmatprep.subr.mxu0 0.0
        %7760 = vmatpush1.msra.mxu0 0.0
        %7761 = vmatprep.subr.mxu0 0.0
        %7762 = vmatpush1.msra.mxu0 0.0
        %7763 = vmatprep.subr.mxu0 0.0
        %7764 = vmatpush1.msra.mxu0 0.0
        %7765 = vmatprep.subr.mxu0 0.0
        %7766 = vmatpush1.msra.mxu0 0.0
        %7767 = vmatprep.subr.mxu0 0.0
        %7768 = vmatpush1.msra.mxu0 0.0
        %7769 = vmatprep.subr.mxu0 0.0
        %7770 = vmatpush1.msra.mxu0 0.0
        %7771 = vmatprep.subr.mxu0 0.0
        %7772 = vmatpush1.msra.mxu0 0.0
        %7773 = vmatprep.subr.mxu0 0.0
        %7774 = vmatpush1.msra.mxu0 0.0
        %7775 = vmatprep.subr.mxu0 0.0
        %7776 = vmatpush1.msra.mxu0 0.0
        %7777 = vmatprep.subr.mxu0 0.0
        %7778 = vmatpush1.msra.mxu0 0.0
        %7779 = vmatprep.subr.mxu0 0.0
        %7780 = vmatpush1.msra.mxu0 0.0
        %7781 = vmatprep.subr.mxu0 0.0
        %7782 = vmatpush1.msra.mxu0 0.0
        %7783 = vmatprep.subr.mxu0 0.0
        %7784 = vmatpush1.msra.mxu0 0.0
        %7785 = vmatprep.subr.mxu0 0.0
        %7786 = vmatpush1.msra.mxu0 0.0
        %7787 = vmatprep.subr.mxu0 0.0
        %7788 = vmatpush1.msra.mxu0 0.0
        %7789 = vmatprep.subr.mxu0 0.0
        %7790 = vmatpush1.msra.mxu0 0.0
        %7791 = vmatprep.subr.mxu0 0.0
        %7792 = vmatpush1.msra.mxu0 0.0
        %7793 = vmatprep.mubr.f32.mxu0 0.0
        %7794 = vmatmul.mubr.f32.gmra.mrb[0].mxu0 %v7727
        %v7795 = vpop.f32.mrb[0].mxu0
        %v7796 = vadd.f32 0.0, %v7795
        %v7797 = vpop.f32.mrb[0].mxu0
        %7798 = vdwg.mxu0
        %v7799 = vadd.f32 %v7638, %v7796
        %v7800 = vld [vmem:[%s9] sm:$0x1]
        %v7802 = vlaneseq
        %v7803 = vshrl.u32 %v7802, 7
        %v7804 = vsub.s32 0, %v7803
        %v7805 = vrot.slane %v7800, %v7804
        %v7807 = vadd.f32 %v7799, %v7805
        %v7808 = vmax.f32 %v7807, 0.0
        %v7809 = vld [vmem:[%s10] sm:$0xff]
        %v7810 = vld [vmem:[%s10 + $0x8] sm:$0xff]
        %v7811 = vld [vmem:[%s10 + $0x10] sm:$0xff]
        %v7812 = vld [vmem:[%s10 + $0x18] sm:$0xff]
        %v7813 = vld [vmem:[%s10 + $0x20] sm:$0xff]
        %v7814 = vld [vmem:[%s10 + $0x28] sm:$0xff]
        %v7815 = vld [vmem:[%s10 + $0x30] sm:$0xff]
        %v7816 = vld [vmem:[%s10 + $0x38] sm:$0xff]
        %v7817 = vld [vmem:[%s10 + $0x40] sm:$0xff]
        %v7818 = vld [vmem:[%s10 + $0x48] sm:$0xff]
        %v7819 = vld [vmem:[%s10 + $0x50] sm:$0xff]
        %v7820 = vld [vmem:[%s10 + $0x58] sm:$0xff]
        %v7821 = vld [vmem:[%s10 + $0x60] sm:$0xff]
        %v7822 = vld [vmem:[%s10 + $0x68] sm:$0xff]
        %v7823 = vld [vmem:[%s10 + $0x70] sm:$0xff]
        %v7824 = vld [vmem:[%s10 + $0x78] sm:$0xff]
        %v7825 = vld [vmem:[%s11] sm:$0x1]
        %v7827 = vlaneseq
        %v7828 = vshrl.u32 %v7827, 7
        %v7829 = vsub.s32 0, %v7828
        %v7830 = vrot.slane %v7825, %v7829
        %7832 = vmatprep.subr.mxu0 0.0
        %7833 = vmatpush1.msra.mxu0 %v7809
        %7834 = vmatprep.subr.mxu0 0.0
        %7835 = vmatpush1.msra.mxu0 %v7810
        %7836 = vmatprep.subr.mxu0 0.0
        %7837 = vmatpush1.msra.mxu0 %v7811
        %7838 = vmatprep.subr.mxu0 0.0
        %7839 = vmatpush1.msra.mxu0 %v7812
        %7840 = vmatprep.subr.mxu0 0.0
        %7841 = vmatpush1.msra.mxu0 %v7813
        %7842 = vmatprep.subr.mxu0 0.0
        %7843 = vmatpush1.msra.mxu0 %v7814
        %7844 = vmatprep.subr.mxu0 0.0
        %7845 = vmatpush1.msra.mxu0 %v7815
        %7846 = vmatprep.subr.mxu0 0.0
        %7847 = vmatpush1.msra.mxu0 %v7816
        %7848 = vmatprep.subr.mxu0 0.0
        %7849 = vmatpush1.msra.mxu0 %v7817
        %7850 = vmatprep.subr.mxu0 0.0
        %7851 = vmatpush1.msra.mxu0 %v7818
        %7852 = vmatprep.subr.mxu0 0.0
        %7853 = vmatpush1.msra.mxu0 %v7819
        %7854 = vmatprep.subr.mxu0 0.0
        %7855 = vmatpush1.msra.mxu0 %v7820
        %7856 = vmatprep.subr.mxu0 0.0
        %7857 = vmatpush1.msra.mxu0 %v7821
        %7858 = vmatprep.subr.mxu0 0.0
        %7859 = vmatpush1.msra.mxu0 %v7822
        %7860 = vmatprep.subr.mxu0 0.0
        %7861 = vmatpush1.msra.mxu0 %v7823
        %7862 = vmatprep.subr.mxu0 0.0
        %7863 = vmatpush1.msra.mxu0 %v7824
        %7864 = vmatprep.subr.mxu0 0.0
        %7865 = vmatpush1.msra.mxu0 0.0
        %7866 = vmatprep.subr.mxu0 0.0
        %7867 = vmatpush1.msra.mxu0 0.0
        %7868 = vmatprep.subr.mxu0 0.0
        %7869 = vmatpush1.msra.mxu0 0.0
        %7870 = vmatprep.subr.mxu0 0.0
        %7871 = vmatpush1.msra.mxu0 0.0
        %7872 = vmatprep.subr.mxu0 0.0
        %7873 = vmatpush1.msra.mxu0 0.0
        %7874 = vmatprep.subr.mxu0 0.0
        %7875 = vmatpush1.msra.mxu0 0.0
        %7876 = vmatprep.subr.mxu0 0.0
        %7877 = vmatpush1.msra.mxu0 0.0
        %7878 = vmatprep.subr.mxu0 0.0
        %7879 = vmatpush1.msra.mxu0 0.0
        %7880 = vmatprep.subr.mxu0 0.0
        %7881 = vmatpush1.msra.mxu0 0.0
        %7882 = vmatprep.subr.mxu0 0.0
        %7883 = vmatpush1.msra.mxu0 0.0
        %7884 = vmatprep.subr.mxu0 0.0
        %7885 = vmatpush1.msra.mxu0 0.0
        %7886 = vmatprep.subr.mxu0 0.0
        %7887 = vmatpush1.msra.mxu0 0.0
        %7888 = vmatprep.subr.mxu0 0.0
        %7889 = vmatpush1.msra.mxu0 0.0
        %7890 = vmatprep.subr.mxu0 0.0
        %7891 = vmatpush1.msra.mxu0 0.0
        %7892 = vmatprep.subr.mxu0 0.0
        %7893 = vmatpush1.msra.mxu0 0.0
        %7894 = vmatprep.subr.mxu0 0.0
        %7895 = vmatpush1.msra.mxu0 0.0
        %7896 = vmatprep.mubr.f32.mxu0 0.0
        %7897 = vmatmul.mubr.f32.gmra.mrb[0].mxu0 %v7808
        %v7898 = vpop.f32.mrb[0].mxu0
        %v7899 = vadd.f32 %v7830, %v7898
        %v7900 = vpop.f32.mrb[0].mxu0
        %7901 = vdwg.mxu0
        %v7902 = vmax.f32 %v7899, 0.0
        %v7903 = vld [vmem:[#allocation5] sm:$0xff]
        %v7904 = vld [vmem:[#allocation5 + $0x8] sm:$0xff]
        %v7905 = vld [vmem:[#allocation5 + $0x10] sm:$0xff]
        %v7906 = vld [vmem:[#allocation5 + $0x18] sm:$0xff]
        %v7907 = vld [vmem:[#allocation5 + $0x20] sm:$0xff]
        %v7908 = vld [vmem:[#allocation5 + $0x28] sm:$0xff]
        %v7909 = vld [vmem:[#allocation5 + $0x30] sm:$0xff]
        %v7910 = vld [vmem:[#allocation5 + $0x38] sm:$0xff]
        %v7911 = vld [vmem:[#allocation5 + $0x40] sm:$0xff]
        %v7912 = vld [vmem:[#allocation5 + $0x48] sm:$0xff]
        %v7913 = vld [vmem:[#allocation5 + $0x50] sm:$0xff]
        %v7914 = vld [vmem:[#allocation5 + $0x58] sm:$0xff]
        %v7915 = vld [vmem:[#allocation5 + $0x60] sm:$0xff]
        %v7916 = vld [vmem:[#allocation5 + $0x68] sm:$0xff]
        %v7917 = vld [vmem:[#allocation5 + $0x70] sm:$0xff]
        %v7918 = vld [vmem:[#allocation5 + $0x78] sm:$0xff]
        %v7919 = vld [vmem:[%s13] sm:$0x1]
        %v7921 = vlaneseq
        %v7922 = vshrl.u32 %v7921, 7
        %v7923 = vsub.s32 0, %v7922
        %v7924 = vrot.slane %v7919, %v7923
        %7926 = vmatprep.subr.mxu0 0.0
        %7927 = vmatpush1.msra.mxu0 %v7903
        %7928 = vmatprep.subr.mxu0 0.0
        %7929 = vmatpush1.msra.mxu0 %v7904
        %7930 = vmatprep.subr.mxu0 0.0
        %7931 = vmatpush1.msra.mxu0 %v7905
        %7932 = vmatprep.subr.mxu0 0.0
        %7933 = vmatpush1.msra.mxu0 %v7906
        %7934 = vmatprep.subr.mxu0 0.0
        %7935 = vmatpush1.msra.mxu0 %v7907
        %7936 = vmatprep.subr.mxu0 0.0
        %7937 = vmatpush1.msra.mxu0 %v7908
        %7938 = vmatprep.subr.mxu0 0.0
        %7939 = vmatpush1.msra.mxu0 %v7909
        %7940 = vmatprep.subr.mxu0 0.0
        %7941 = vmatpush1.msra.mxu0 %v7910
        %7942 = vmatprep.subr.mxu0 0.0
        %7943 = vmatpush1.msra.mxu0 %v7911
        %7944 = vmatprep.subr.mxu0 0.0
        %7945 = vmatpush1.msra.mxu0 %v7912
        %7946 = vmatprep.subr.mxu0 0.0
        %7947 = vmatpush1.msra.mxu0 %v7913
        %7948 = vmatprep.subr.mxu0 0.0
        %7949 = vmatpush1.msra.mxu0 %v7914
        %7950 = vmatprep.subr.mxu0 0.0
        %7951 = vmatpush1.msra.mxu0 %v7915
        %7952 = vmatprep.subr.mxu0 0.0
        %7953 = vmatpush1.msra.mxu0 %v7916
        %7954 = vmatprep.subr.mxu0 0.0
        %7955 = vmatpush1.msra.mxu0 %v7917
        %7956 = vmatprep.subr.mxu0 0.0
        %7957 = vmatpush1.msra.mxu0 %v7918
        %7958 = vmatprep.subr.mxu0 0.0
        %7959 = vmatpush1.msra.mxu0 0.0
        %7960 = vmatprep.subr.mxu0 0.0
        %7961 = vmatpush1.msra.mxu0 0.0
        %7962 = vmatprep.subr.mxu0 0.0
        %7963 = vmatpush1.msra.mxu0 0.0
        %7964 = vmatprep.subr.mxu0 0.0
        %7965 = vmatpush1.msra.mxu0 0.0
        %7966 = vmatprep.subr.mxu0 0.0
        %7967 = vmatpush1.msra.mxu0 0.0
        %7968 = vmatprep.subr.mxu0 0.0
        %7969 = vmatpush1.msra.mxu0 0.0
        %7970 = vmatprep.subr.mxu0 0.0
        %7971 = vmatpush1.msra.mxu0 0.0
        %7972 = vmatprep.subr.mxu0 0.0
        %7973 = vmatpush1.msra.mxu0 0.0
        %7974 = vmatprep.subr.mxu0 0.0
        %7975 = vmatpush1.msra.mxu0 0.0
        %7976 = vmatprep.subr.mxu0 0.0
        %7977 = vmatpush1.msra.mxu0 0.0
        %7978 = vmatprep.subr.mxu0 0.0
        %7979 = vmatpush1.msra.mxu0 0.0
        %7980 = vmatprep.subr.mxu0 0.0
        %7981 = vmatpush1.msra.mxu0 0.0
        %7982 = vmatprep.subr.mxu0 0.0
        %7983 = vmatpush1.msra.mxu0 0.0
        %7984 = vmatprep.subr.mxu0 0.0
        %7985 = vmatpush1.msra.mxu0 0.0
        %7986 = vmatprep.subr.mxu0 0.0
        %7987 = vmatpush1.msra.mxu0 0.0
        %7988 = vmatprep.subr.mxu0 0.0
        %7989 = vmatpush1.msra.mxu0 0.0
        %7990 = vmatprep.mubr.f32.mxu0 0.0
        %7991 = vmatmul.mubr.f32.gmra.mrb[0].mxu0 %v7902
        %v7992 = vpop.f32.mrb[0].mxu0
        %v7993 = vadd.f32 %v7924, %v7992
        %v7994 = vpop.f32.mrb[0].mxu0
        %7995 = vdwg.mxu0
        %7996 = vst [vmem:[%s491] sm:$0xff] %v7993
        %s7997 = sand.u32 %s337, 1
        %s7998 = scalar_lea.sflag [#allocation4], %s7997
        %s7999 = sand.u32 %s337, 1
        %s8000 = smul.addr %s7999, 8
        %s8001 = scalar_lea.vmem [#allocation7], %s8000
        // Predicated region
        $region85: #{lenet_apply.1} parent=75 // pred_check
          %p8002 = pneg %p347
        $region86: #{lenet_apply.1} parent=75 // pred_check_branch
          %8004 = sbr.rel (%p8002) target = $region88
        $region87: #{lenet_apply.1} parent=75 // pred_region
          %s8006 = ssub.s32 128, 128
          %8007 = vsyncadd %s7998, %s8006
          %s8008 = smul.addr %s30, 128
          %s8009 = scalar_lea.hbm %s14, %s8008
          %s8011 = sshll.u32 %s8001, 4
          %s8012 = int_to_ptr.vmem [resolvable:$true] %s8011
          %8014 = dma.vmem_to_hbm [thread:$0]  %s8012, 128, %s8009, %s7998
        $region88: #{lenet_apply.1} parent=75 // pred_fallthru
          _
      $region76: #{lenet_apply.1} parent=5 // pred_fallthru
        _
      %p8015 = scmp.le.s32.totalorder 2, %s25
      // Predicated region
      $region89: #{lenet_apply.1} parent=5 // pred_check
        %p8016 = pneg %p8015
      $region90: #{lenet_apply.1} parent=5 // pred_check_branch
        %8018 = sbr.rel (%p8016) target = $region92
      $region91: #{lenet_apply.1} parent=5 // pred_region
        %s8019 = ssub.s32 %s25, 2
        // Predicated region
        $region93: #{lenet_apply.1} parent=91 // pred_check
          %p8020 = pneg %p353
        $region94: #{lenet_apply.1} parent=91 // pred_check_branch
          %8022 = sbr.rel (%p8020) target = $region96
        $region95: #{lenet_apply.1} parent=91 // pred_region
          %s8023 = sand.u32 %s338, 1
          %s8024 = scalar_lea.sflag [#allocation4], %s8023
          %s8025 = sand.u32 %s338, 1
          %s8026 = smul.addr %s8025, 8
          %s8027 = scalar_lea.vmem [#allocation7], %s8026
          %8028 = dma.done %s8024, 128
        $region96: #{lenet_apply.1} parent=91 // pred_fallthru
          _
      $region92: #{lenet_apply.1} parent=5 // pred_fallthru
        _
    $region6: #{lenet_apply.1} parent=1 // loop_footer
      %s29 = sadd.s32 1, %s25
    $region7: #{lenet_apply.1} parent=1 // loop_footer_branch
      %24 = sbr.rel target = $region3
    $region8: #{lenet_apply.1} parent=1 // loop_exit
      _
    %8029 = vsyncpa [#allocation3], 1
    %s8030 = scalar_lea.sflag [#allocation3], 1
    %8031 = vsyncpa %s8030, 1
    %8032 = vsyncpa [#allocation6], 1
    %8033 = vsyncpa [#allocation4], 1
    %s8034 = scalar_lea.sflag [#allocation4], 1
    %8035 = vsyncpa %s8034, 1

</llo_original>
